<compile_context>
chip_gen: v6e
topology: v6e:2x2x1
jax: 0.10.0
libtpu: 0.0.40
codegen_flags: <defaults>
</compile_context>

<pallas_src>
import jax
import jax.numpy as jnp
import numpy as np
from jax.experimental import pallas as pl
from jax.experimental.pallas import tpu as pltpu

# ----------------------------- model dimensions -----------------------------
BATCH = 2
SIGNAL_SIZE = 128          # scaled-down signal_size
KSIZE = 11                 # kernel_size (same as module)
C1 = 31                    # Conv1 out channels (same as module)
C2 = 62                    # Conv2 out channels (same as module)
NUM_CLASSES = 17

L_CONV1 = SIGNAL_SIZE - KSIZE + 1          # 118
P1 = (L_CONV1 - 2) // 2 + 1                # 59   (MaxPool1d(2,2))
L_CONV2 = P1 - KSIZE + 1                   # 49
P2 = (L_CONV2 - 2) // 2 + 1                # 24
FLAT = C2 * P2                             # 1488

D1 = 512                   # scaled-down DENSE1 (orig 4927)
D2 = 256                   # scaled-down DENSE2 (orig 2785)
D3 = 256                   # DENSE3 (same as module)
N_HEADS = NUM_CLASSES + 3  # fc_fg ++ fc_c ++ fc_o ++ fc_mw (fc_n unused in forward)
HPAD = 128                 # heads padded to one full lane tile (lane-dense store)

C1PAD = 128                # conv1 channels padded to a full lane tile
C2PAD = 64                 # conv2 channels padded so DENSE1 slabs are 64 rows
TAP_SLOT = 128             # lane-aligned slot per conv2 tap in the im2col scratch
KCOL = KSIZE * TAP_SLOT    # 1408

# per-batch row blocks padded to multiples of 8 so every store is aligned
L1PAD = 120                # >= L_CONV1
P1PAD = 64                 # >= P1
L2PAD = 56                 # >= L_CONV2

VMEM_LIMIT = 16 * 1024 * 1024


# ------------------------------ the fused kernel -----------------------------
def _mol_filter_kernel(x_ref, w1_ref, st1_ref, st2_ref,
                       bd1_ref, bd2_ref, bd3_ref, bh_ref,
                       w2p_hbm, wd1_hbm, wd2_hbm, wd3_hbm, wh_hbm,
                       out_ref,
                       w2p_v, wd1_v, wd2_v, wd3_v, wh_v, sems,
                       y1_ref, p1_ref, col_ref, y2_ref, act_ref):
    """Whole MolFilter forward in one body; all activations stay in VMEM.

    x_ref:   (B, SIGNAL, 1)        input signal (channels-last)
    w1_ref:  (K, 1, 128)           conv1 weight, lanes >= C1 zero
    st*_ref: (2, C)                row0 = BN scale, row1 = bias*scale + shift
    w2p_hbm: (K*128, 64)           conv2 weight, taps in 128-lane slots (HBM)
    wd*_hbm / wh_hbm:              bf16 dense / head weights (HBM)
    out_ref: (B, 128)              concatenated (padded) head outputs
    """
    # --- kick off all large-weight DMAs; each is waited right before its use,
    # --- so the HBM stream overlaps the conv-stack compute.
    copies = []
    for i, (src, dst) in enumerate(((w2p_hbm, w2p_v), (wd1_hbm, wd1_v),
                                    (wd2_hbm, wd2_v), (wd3_hbm, wd3_v),
                                    (wh_hbm, wh_v))):
        cp = pltpu.make_async_copy(src, dst, sems.at[i])
        cp.start()
        copies.append(cp)

    s1 = st1_ref[0:1, :]
    t1 = st1_ref[1:2, :]

    # ------------- Conv1 + BN + ReLU + MaxPool, then conv2 im2col -----------
    for b in range(BATCH):                         # static, tiny batch
        # Conv1 (C_in = 1): per-tap VPU multiply-accumulate in f32.
        acc1 = jnp.zeros((L_CONV1, C1PAD), jnp.float32)
        for k in range(KSIZE):                     # static unrolled taps
            acc1 = acc1 + x_ref[b, pl.ds(k, L_CONV1), :] * w1_ref[k]
        # pad lanes stay exactly 0: weight / scale / shift pads are 0, ReLU(0)=0
        y1_ref[pl.ds(b * L1PAD, L_CONV1), :] = jnp.maximum(acc1 * s1 + t1, 0.0)

        # MaxPool1d(2, 2): strided reads of the scratch buffer.
        p1_ref[pl.ds(b * P1PAD, P1), :] = jnp.maximum(
            y1_ref[pl.ds(b * L1PAD, P1, stride=2), :],
            y1_ref[pl.ds(b * L1PAD + 1, P1, stride=2), :])

        # Conv2 im2col: one full 128-lane slot per tap (unmasked stores; the
        # padded rows 49..55 of each block are never written and never read).
        for k in range(KSIZE):
            col_ref[pl.ds(b * L2PAD, L_CONV2), pl.ds(k * TAP_SLOT, TAP_SLOT)] = \
                p1_ref[pl.ds(b * P1PAD + k, L_CONV2), :]

    # --------------- Conv2 + BN + ReLU: one batched MXU matmul ---------------
    copies[0].wait()                               # w2p now in VMEM
    a2 = jnp.dot(col_ref[...], w2p_v[...], preferred_element_type=jnp.float32)
    s2 = st2_ref[0:1, :]
    t2 = st2_ref[1:2, :]
    y2_ref[...] = jnp.maximum(a2 * s2 + t2, 0.0)   # garbage rows unused below

    # MaxPool1d(2, 2) per batch (L_CONV2 odd: last position dropped, as torch).
    for b in range(BATCH):
        act_ref[pl.ds(b * P2, P2), :] = jnp.maximum(
            y2_ref[pl.ds(b * L2PAD, P2, stride=2), :],
            y2_ref[pl.ds(b * L2PAD + 1, P2, stride=2), :])

    # --------- DENSE1: P2 position-slab matmuls; act never leaves VMEM -------
    copies[1].wait()                               # wd1 now in VMEM
    acc = jnp.zeros((BATCH, D1), jnp.float32) + bd1_ref[...]
    for p in range(P2):                            # static unrolled slabs
        lhs = act_ref[pl.ds(p, BATCH, stride=P2), :]        # (B, 64) rows p, P2+p
        acc = acc + jnp.dot(lhs.astype(jnp.bfloat16),
                            wd1_v[pl.ds(p * C2PAD, C2PAD), :],
                            preferred_element_type=jnp.float32)
    h = jnp.maximum(acc, 0.0)

    # --------------- DENSE2 / DENSE3 / heads (dropout = identity) ------------
    copies[2].wait()
    h = jnp.maximum(jnp.dot(h.astype(jnp.bfloat16), wd2_v[...],
                            preferred_element_type=jnp.float32) + bd2_ref[...], 0.0)
    copies[3].wait()
    h = jnp.maximum(jnp.dot(h.astype(jnp.bfloat16), wd3_v[...],
                            preferred_element_type=jnp.float32) + bd3_ref[...], 0.0)
    copies[4].wait()
    # fc_fg ++ fc_c ++ fc_o ++ fc_mw, zero-padded to 128 lane-dense columns.
    out_ref[...] = jnp.dot(h.astype(jnp.bfloat16), wh_v[...],
                           preferred_element_type=jnp.float32) + bh_ref[...]


def _cost_estimate(args):
    bytes_accessed = sum(int(np.prod(a.shape)) * a.dtype.itemsize for a in args)
    bytes_accessed += BATCH * HPAD * 4
    flops = 2 * BATCH * (L_CONV1 * KSIZE * C1PAD
                         + L_CONV2 * KCOL * C2PAD
                         + P2 * C2PAD * D1 + D1 * D2 + D2 * D3 + D3 * HPAD)
    return pl.CostEstimate(flops=int(flops), transcendentals=0,
                           bytes_accessed=int(bytes_accessed))


def mol_filter_pallas(signal, kp):
    x = signal[:, :, None]                                       # (B, L, 1)
    args = (x, kp["w1p"], kp["st1"], kp["st2"],
            kp["bd1"], kp["bd2"], kp["bd3"], kp["bh_k"],
            kp["w2p"], kp["wd1_k"], kp["wd2_k"], kp["wd3_k"], kp["wh_k"])
    return pl.pallas_call(
        _mol_filter_kernel,
        out_shape=jax.ShapeDtypeStruct((BATCH, HPAD), jnp.float32),
        in_specs=[pl.BlockSpec(memory_space=pltpu.MemorySpace.VMEM)] * 8
                 + [pl.BlockSpec(memory_space=pl.ANY)] * 5,
        out_specs=pl.BlockSpec(memory_space=pltpu.MemorySpace.VMEM),
        scratch_shapes=[
            pltpu.VMEM((KCOL, C2PAD), jnp.float32),              # w2p_v
            pltpu.VMEM((P2 * C2PAD, D1), jnp.bfloat16),          # wd1_v
            pltpu.VMEM((D1, D2), jnp.bfloat16),                  # wd2_v
            pltpu.VMEM((D2, D3), jnp.bfloat16),                  # wd3_v
            pltpu.VMEM((D3, HPAD), jnp.bfloat16),                # wh_v
            pltpu.SemaphoreType.DMA((5,)),                       # sems
            pltpu.VMEM((BATCH * L1PAD, C1PAD), jnp.float32),     # y1
            pltpu.VMEM((BATCH * P1PAD, C1PAD), jnp.float32),     # p1
            pltpu.VMEM((BATCH * L2PAD, KCOL), jnp.float32),      # col (im2col)
            pltpu.VMEM((BATCH * L2PAD, C2PAD), jnp.float32),     # y2
            pltpu.VMEM((BATCH * P2, C2PAD), jnp.float32),        # act
        ],
        compiler_params=pltpu.CompilerParams(vmem_limit_bytes=VMEM_LIMIT),
        cost_estimate=_cost_estimate(args),
    )(*args)


# ------------------------------ forward (Pallas) -----------------------------
def mol_filter_forward(signal, kp):
    heads = mol_filter_pallas(signal, kp)             # (B, HPAD)
    nc = NUM_CLASSES
    y_fg = heads[:, :nc]
    y_num_c = heads[:, nc:nc + 1]
    y_num_n = y_num_c               # module applies fc_c twice; fc_n is unused
    y_num_o = heads[:, nc + 1:nc + 2]
    y_mw = heads[:, nc + 2:nc + 3]
    return y_fg, y_num_c, y_num_n, y_num_o, y_mw


# --------------------------- pure-JAX reference ------------------------------
def reference_forward(signal, p):
    x = signal[:, None, :]                                        # (B, 1, L) NCH

    def block(x, w, b, s, t):
        w_oih = jnp.transpose(w, (2, 1, 0))                       # (Cout, Cin, K)
        y = jax.lax.conv_general_dilated(
            x, w_oih, window_strides=(1,), padding="VALID",
            dimension_numbers=("NCH", "OIH", "NCH"))
        y = (y + b[0][None, :, None]) * s[0][None, :, None] + t[0][None, :, None]
        y = jnp.maximum(y, 0.0)
        lp = (y.shape[-1] - 2) // 2 + 1
        return jnp.maximum(y[:, :, 0:2 * lp:2], y[:, :, 1:2 * lp:2])

    x = block(x, p["w1"], p["b1"], p["s1"], p["t1"])
    x = block(x, p["w2"], p["b2"], p["s2"], p["t2"])
    flat = x.reshape(x.shape[0], -1)                  # channel-major (torch flatten)

    def dense(h, w_bf16, b, relu):
        y = jnp.dot(h.astype(jnp.bfloat16), w_bf16,
                    preferred_element_type=jnp.float32) + b[0]
        return jnp.maximum(y, 0.0) if relu else y

    h = dense(flat, p["wd1"], p["bd1"], True)
    h = dense(h, p["wd2"], p["bd2"], True)
    h = dense(h, p["wd3"], p["bd3"], True)
    heads = dense(h, p["w_heads"], p["b_heads"], False)
    nc = NUM_CLASSES
    return (heads[:, :nc], heads[:, nc:nc + 1], heads[:, nc:nc + 1],
            heads[:, nc + 1:nc + 2], heads[:, nc + 2:nc + 3])


# ------------------------------- parameters ----------------------------------
def init_params(key):
    ks = list(jax.random.split(key, 24))

    def nrm(k, shape, scale, dtype=jnp.float32):
        return (scale * jax.random.normal(k, shape)).astype(dtype)

    def bn_fold(k, c):
        kg, kb, km, kv = jax.random.split(k, 4)
        gamma = 1.0 + 0.1 * jax.random.normal(kg, (c,))
        beta = 0.1 * jax.random.normal(kb, (c,))
        mean = 0.1 * jax.random.normal(km, (c,))
        var = 0.5 + jax.random.uniform(kv, (c,))
        scale = gamma * jax.lax.rsqrt(var + 1e-5)
        shift = beta - mean * scale
        return (scale.reshape(1, c).astype(jnp.float32),
                shift.reshape(1, c).astype(jnp.float32))

    bf16 = jnp.bfloat16
    p = {}
    p["w1"] = nrm(ks[0], (KSIZE, 1, C1), (KSIZE * 1) ** -0.5)
    p["b1"] = nrm(ks[1], (1, C1), 0.1)
    p["s1"], p["t1"] = bn_fold(ks[2], C1)
    p["w2"] = nrm(ks[3], (KSIZE, C1, C2), (KSIZE * C1) ** -0.5)
    p["b2"] = nrm(ks[4], (1, C2), 0.1)
    p["s2"], p["t2"] = bn_fold(ks[5], C2)

    # Dense weights stored in bf16 (canonical values shared by kernel + reference).
    p["wd1"] = nrm(ks[6], (FLAT, D1), FLAT ** -0.5, bf16)   # rows in channel-major order
    p["bd1"] = nrm(ks[7], (1, D1), 0.1)
    p["wd2"] = nrm(ks[8], (D1, D2), D1 ** -0.5, bf16)
    p["bd2"] = nrm(ks[9], (1, D2), 0.1)
    p["wd3"] = nrm(ks[10], (D2, D3), D2 ** -0.5, bf16)
    p["bd3"] = nrm(ks[11], (1, D3), 0.1)

    w_fg = nrm(ks[12], (D3, NUM_CLASSES), D3 ** -0.5, bf16)
    b_fg = nrm(ks[13], (1, NUM_CLASSES), 0.1)
    w_c = nrm(ks[14], (D3, 1), D3 ** -0.5, bf16)
    b_c = nrm(ks[15], (1, 1), 0.1)
    _w_n = nrm(ks[16], (D3, 1), D3 ** -0.5, bf16)   # fc_n: defined but unused in forward
    _b_n = nrm(ks[17], (1, 1), 0.1)
    w_o = nrm(ks[18], (D3, 1), D3 ** -0.5, bf16)
    b_o = nrm(ks[19], (1, 1), 0.1)
    w_mw = nrm(ks[20], (D3, 1), D3 ** -0.5, bf16)
    b_mw = nrm(ks[21], (1, 1), 0.1)
    p["w_heads"] = jnp.concatenate([w_fg, w_c, w_o, w_mw], axis=1)   # (D3, 20) bf16
    p["b_heads"] = jnp.concatenate([b_fg, b_c, b_o, b_mw], axis=1)   # (1, 20)  f32
    return p


def prepare_kernel_params(p):
    """Kernel-layout weights: lane-padded convs, folded biases, permuted wd1,
    padded heads."""
    kp = {}
    # Conv1: weight padded to 128 lanes, bias folded into BN shift.
    kp["w1p"] = jnp.zeros((KSIZE, 1, C1PAD), jnp.float32).at[:, :, :C1].set(p["w1"])
    st1 = jnp.zeros((2, C1PAD), jnp.float32)
    st1 = st1.at[0, :C1].set(p["s1"][0])
    st1 = st1.at[1, :C1].set(p["b1"][0] * p["s1"][0] + p["t1"][0])
    kp["st1"] = st1
    # Conv2: each tap in its own 128-lane slot (rows >= C1 and cols >= C2 zero).
    w2p = jnp.zeros((KSIZE, TAP_SLOT, C2PAD), jnp.float32).at[:, :C1, :C2].set(p["w2"])
    kp["w2p"] = w2p.reshape(KCOL, C2PAD)
    st2 = jnp.zeros((2, C2PAD), jnp.float32)
    st2 = st2.at[0, :C2].set(p["s2"][0])
    st2 = st2.at[1, :C2].set(p["b2"][0] * p["s2"][0] + p["t2"][0])
    kp["st2"] = st2
    # DENSE1: permute rows from channel-major (c*P2+p) to position-major slabs
    # of 64 rows (p*64+c), zero-padding channels 62..63.
    wd1_pm = p["wd1"].reshape(C2, P2, D1).transpose(1, 0, 2)           # (P2, C2, D1)
    wd1_k = jnp.zeros((P2, C2PAD, D1), jnp.bfloat16).at[:, :C2, :].set(wd1_pm)
    kp["wd1_k"] = wd1_k.reshape(P2 * C2PAD, D1)
    kp["wd2_k"] = p["wd2"]
    kp["wd3_k"] = p["wd3"]
    kp["bd1"] = p["bd1"]
    kp["bd2"] = p["bd2"]
    kp["bd3"] = p["bd3"]
    # Heads: pad 20 -> 128 output columns (zero weights/bias) for lane-dense stores.
    kp["wh_k"] = jnp.zeros((D3, HPAD), jnp.bfloat16).at[:, :N_HEADS].set(p["w_heads"])
    kp["bh_k"] = jnp.zeros((1, HPAD), jnp.float32).at[:, :N_HEADS].set(p["b_heads"])
    return kp


# ---------------------------------- main --------------------------------------
if __name__ == "__main__":
    key = jax.random.PRNGKey(0)
    k_sig, k_par = jax.random.split(key)
    signal = jax.random.normal(k_sig, (BATCH, SIGNAL_SIZE), dtype=jnp.float32)
    params = init_params(k_par)
    kparams = prepare_kernel_params(params)

    fwd = jax.jit(mol_filter_forward)
    outs = fwd(signal, kparams)
    outs = jax.block_until_ready(outs)

    refs = jax.block_until_ready(jax.jit(reference_forward)(signal, params))
    expected_shapes = [(BATCH, NUM_CLASSES), (BATCH, 1), (BATCH, 1), (BATCH, 1), (BATCH, 1)]
    for o, r, s in zip(outs, refs, expected_shapes):
        assert o.shape == s, (o.shape, s)
        np.testing.assert_allclose(np.asarray(o), np.asarray(r), rtol=1e-2, atol=1e-2)

    print("KERNEL_OK")
</pallas_src>

<mosaic_0001>
module attributes {stable_mosaic.version = 11 : i64} {
  func.func @_mol_filter_kernel(%arg0: memref<2x128x1xf32, #tpu.memory_space<vmem>>, %arg1: memref<11x1x128xf32, #tpu.memory_space<vmem>>, %arg2: memref<2x128xf32, #tpu.memory_space<vmem>>, %arg3: memref<2x64xf32, #tpu.memory_space<vmem>>, %arg4: memref<1x512xf32, #tpu.memory_space<vmem>>, %arg5: memref<1x256xf32, #tpu.memory_space<vmem>>, %arg6: memref<1x256xf32, #tpu.memory_space<vmem>>, %arg7: memref<1x128xf32, #tpu.memory_space<vmem>>, %arg8: memref<1408x64xf32, #tpu.memory_space<any>>, %arg9: memref<1536x512xbf16, #tpu.memory_space<any>>, %arg10: memref<512x256xbf16, #tpu.memory_space<any>>, %arg11: memref<256x256xbf16, #tpu.memory_space<any>>, %arg12: memref<256x128xbf16, #tpu.memory_space<any>>, %arg13: memref<2x128xf32, #tpu.memory_space<vmem>>, %arg14: memref<1408x64xf32, #tpu.memory_space<vmem>>, %arg15: memref<1536x512xbf16, #tpu.memory_space<vmem>>, %arg16: memref<512x256xbf16, #tpu.memory_space<vmem>>, %arg17: memref<256x256xbf16, #tpu.memory_space<vmem>>, %arg18: memref<256x128xbf16, #tpu.memory_space<vmem>>, %arg19: memref<5x!tpu.dma_semaphore, #tpu.memory_space<semaphore_mem>>, %arg20: memref<240x128xf32, #tpu.memory_space<vmem>>, %arg21: memref<128x128xf32, #tpu.memory_space<vmem>>, %arg22: memref<112x1408xf32, #tpu.memory_space<vmem>>, %arg23: memref<112x64xf32, #tpu.memory_space<vmem>>, %arg24: memref<48x64xf32, #tpu.memory_space<vmem>>) attributes {dimension_semantics = [], scalar_prefetch = 0 : i64, scratch_operands = 11 : i64, tpu.core_type = #tpu.core_type<tc>} {
    %c0_i32 = arith.constant 0 : i32
    %0 = tpu.memref_slice %arg19[%c0_i32] : memref<5x!tpu.dma_semaphore, #tpu.memory_space<semaphore_mem>> -> memref<1x!tpu.dma_semaphore, #tpu.memory_space<semaphore_mem>>
    %1 = tpu.memref_squeeze %0 : memref<1x!tpu.dma_semaphore, #tpu.memory_space<semaphore_mem>> -> memref<!tpu.dma_semaphore, #tpu.memory_space<semaphore_mem>>
    tpu.enqueue_dma source(%arg8 : memref<1408x64xf32, #tpu.memory_space<any>>) target(%arg14 : memref<1408x64xf32, #tpu.memory_space<vmem>>) target_semaphore(%1 : memref<!tpu.dma_semaphore, #tpu.memory_space<semaphore_mem>>)
    %c1_i32 = arith.constant 1 : i32
    %2 = tpu.memref_slice %arg19[%c1_i32] : memref<5x!tpu.dma_semaphore, #tpu.memory_space<semaphore_mem>> -> memref<1x!tpu.dma_semaphore, #tpu.memory_space<semaphore_mem>>
    %3 = tpu.memref_squeeze %2 : memref<1x!tpu.dma_semaphore, #tpu.memory_space<semaphore_mem>> -> memref<!tpu.dma_semaphore, #tpu.memory_space<semaphore_mem>>
    tpu.enqueue_dma source(%arg9 : memref<1536x512xbf16, #tpu.memory_space<any>>) target(%arg15 : memref<1536x512xbf16, #tpu.memory_space<vmem>>) target_semaphore(%3 : memref<!tpu.dma_semaphore, #tpu.memory_space<semaphore_mem>>)
    %c2_i32 = arith.constant 2 : i32
    %4 = tpu.memref_slice %arg19[%c2_i32] : memref<5x!tpu.dma_semaphore, #tpu.memory_space<semaphore_mem>> -> memref<1x!tpu.dma_semaphore, #tpu.memory_space<semaphore_mem>>
    %5 = tpu.memref_squeeze %4 : memref<1x!tpu.dma_semaphore, #tpu.memory_space<semaphore_mem>> -> memref<!tpu.dma_semaphore, #tpu.memory_space<semaphore_mem>>
    tpu.enqueue_dma source(%arg10 : memref<512x256xbf16, #tpu.memory_space<any>>) target(%arg16 : memref<512x256xbf16, #tpu.memory_space<vmem>>) target_semaphore(%5 : memref<!tpu.dma_semaphore, #tpu.memory_space<semaphore_mem>>)
    %c3_i32 = arith.constant 3 : i32
    %6 = tpu.memref_slice %arg19[%c3_i32] : memref<5x!tpu.dma_semaphore, #tpu.memory_space<semaphore_mem>> -> memref<1x!tpu.dma_semaphore, #tpu.memory_space<semaphore_mem>>
    %7 = tpu.memref_squeeze %6 : memref<1x!tpu.dma_semaphore, #tpu.memory_space<semaphore_mem>> -> memref<!tpu.dma_semaphore, #tpu.memory_space<semaphore_mem>>
    tpu.enqueue_dma source(%arg11 : memref<256x256xbf16, #tpu.memory_space<any>>) target(%arg17 : memref<256x256xbf16, #tpu.memory_space<vmem>>) target_semaphore(%7 : memref<!tpu.dma_semaphore, #tpu.memory_space<semaphore_mem>>)
    %c4_i32 = arith.constant 4 : i32
    %8 = tpu.memref_slice %arg19[%c4_i32] : memref<5x!tpu.dma_semaphore, #tpu.memory_space<semaphore_mem>> -> memref<1x!tpu.dma_semaphore, #tpu.memory_space<semaphore_mem>>
    %9 = tpu.memref_squeeze %8 : memref<1x!tpu.dma_semaphore, #tpu.memory_space<semaphore_mem>> -> memref<!tpu.dma_semaphore, #tpu.memory_space<semaphore_mem>>
    tpu.enqueue_dma source(%arg12 : memref<256x128xbf16, #tpu.memory_space<any>>) target(%arg18 : memref<256x128xbf16, #tpu.memory_space<vmem>>) target_semaphore(%9 : memref<!tpu.dma_semaphore, #tpu.memory_space<semaphore_mem>>)
    %c0 = arith.constant 0 : index
    %c0_0 = arith.constant 0 : index
    %10 = vector.load %arg2[%c0, %c0_0] : memref<2x128xf32, #tpu.memory_space<vmem>>, vector<1x128xf32>
    %c1 = arith.constant 1 : index
    %c0_1 = arith.constant 0 : index
    %11 = vector.load %arg2[%c1, %c0_1] : memref<2x128xf32, #tpu.memory_space<vmem>>, vector<1x128xf32>
    %cst = arith.constant 0.000000e+00 : f32
    %12 = vector.broadcast %cst : f32 to vector<118x128xf32>
    %c0_2 = arith.constant 0 : index
    %c0_3 = arith.constant 0 : index
    %c0_4 = arith.constant 0 : index
    %13 = vector.load %arg0[%c0_2, %c0_3, %c0_4] : memref<2x128x1xf32, #tpu.memory_space<vmem>>, vector<1x118x1xf32>
    %14 = vector.shape_cast %13 : vector<1x118x1xf32> to vector<118x1xf32>
    %c0_5 = arith.constant 0 : index
    %c0_6 = arith.constant 0 : index
    %c0_7 = arith.constant 0 : index
    %15 = vector.load %arg1[%c0_5, %c0_6, %c0_7] : memref<11x1x128xf32, #tpu.memory_space<vmem>>, vector<1x1x128xf32>
    %16 = vector.shape_cast %15 : vector<1x1x128xf32> to vector<1x128xf32>
    %17 = vector.broadcast %14 : vector<118x1xf32> to vector<118x128xf32>
    %18 = vector.broadcast %16 : vector<1x128xf32> to vector<118x128xf32>
    %19 = arith.mulf %17, %18 : vector<118x128xf32>
    %20 = arith.addf %12, %19 : vector<118x128xf32>
    %c0_8 = arith.constant 0 : index
    %c1_9 = arith.constant 1 : index
    %c0_10 = arith.constant 0 : index
    %21 = vector.load %arg0[%c0_8, %c1_9, %c0_10] : memref<2x128x1xf32, #tpu.memory_space<vmem>>, vector<1x118x1xf32>
    %22 = vector.shape_cast %21 : vector<1x118x1xf32> to vector<118x1xf32>
    %c1_11 = arith.constant 1 : index
    %c0_12 = arith.constant 0 : index
    %c0_13 = arith.constant 0 : index
    %23 = vector.load %arg1[%c1_11, %c0_12, %c0_13] : memref<11x1x128xf32, #tpu.memory_space<vmem>>, vector<1x1x128xf32>
    %24 = vector.shape_cast %23 : vector<1x1x128xf32> to vector<1x128xf32>
    %25 = vector.broadcast %22 : vector<118x1xf32> to vector<118x128xf32>
    %26 = vector.broadcast %24 : vector<1x128xf32> to vector<118x128xf32>
    %27 = arith.mulf %25, %26 : vector<118x128xf32>
    %28 = arith.addf %20, %27 : vector<118x128xf32>
    %c0_14 = arith.constant 0 : index
    %c2 = arith.constant 2 : index
    %c0_15 = arith.constant 0 : index
    %29 = vector.load %arg0[%c0_14, %c2, %c0_15] : memref<2x128x1xf32, #tpu.memory_space<vmem>>, vector<1x118x1xf32>
    %30 = vector.shape_cast %29 : vector<1x118x1xf32> to vector<118x1xf32>
    %c2_16 = arith.constant 2 : index
    %c0_17 = arith.constant 0 : index
    %c0_18 = arith.constant 0 : index
    %31 = vector.load %arg1[%c2_16, %c0_17, %c0_18] : memref<11x1x128xf32, #tpu.memory_space<vmem>>, vector<1x1x128xf32>
    %32 = vector.shape_cast %31 : vector<1x1x128xf32> to vector<1x128xf32>
    %33 = vector.broadcast %30 : vector<118x1xf32> to vector<118x128xf32>
    %34 = vector.broadcast %32 : vector<1x128xf32> to vector<118x128xf32>
    %35 = arith.mulf %33, %34 : vector<118x128xf32>
    %36 = arith.addf %28, %35 : vector<118x128xf32>
    %c0_19 = arith.constant 0 : index
    %c3 = arith.constant 3 : index
    %c0_20 = arith.constant 0 : index
    %37 = vector.load %arg0[%c0_19, %c3, %c0_20] : memref<2x128x1xf32, #tpu.memory_space<vmem>>, vector<1x118x1xf32>
    %38 = vector.shape_cast %37 : vector<1x118x1xf32> to vector<118x1xf32>
    %c3_21 = arith.constant 3 : index
    %c0_22 = arith.constant 0 : index
    %c0_23 = arith.constant 0 : index
    %39 = vector.load %arg1[%c3_21, %c0_22, %c0_23] : memref<11x1x128xf32, #tpu.memory_space<vmem>>, vector<1x1x128xf32>
    %40 = vector.shape_cast %39 : vector<1x1x128xf32> to vector<1x128xf32>
    %41 = vector.broadcast %38 : vector<118x1xf32> to vector<118x128xf32>
    %42 = vector.broadcast %40 : vector<1x128xf32> to vector<118x128xf32>
    %43 = arith.mulf %41, %42 : vector<118x128xf32>
    %44 = arith.addf %36, %43 : vector<118x128xf32>
    %c0_24 = arith.constant 0 : index
    %c4 = arith.constant 4 : index
    %c0_25 = arith.constant 0 : index
    %45 = vector.load %arg0[%c0_24, %c4, %c0_25] : memref<2x128x1xf32, #tpu.memory_space<vmem>>, vector<1x118x1xf32>
    %46 = vector.shape_cast %45 : vector<1x118x1xf32> to vector<118x1xf32>
    %c4_26 = arith.constant 4 : index
    %c0_27 = arith.constant 0 : index
    %c0_28 = arith.constant 0 : index
    %47 = vector.load %arg1[%c4_26, %c0_27, %c0_28] : memref<11x1x128xf32, #tpu.memory_space<vmem>>, vector<1x1x128xf32>
    %48 = vector.shape_cast %47 : vector<1x1x128xf32> to vector<1x128xf32>
    %49 = vector.broadcast %46 : vector<118x1xf32> to vector<118x128xf32>
    %50 = vector.broadcast %48 : vector<1x128xf32> to vector<118x128xf32>
    %51 = arith.mulf %49, %50 : vector<118x128xf32>
    %52 = arith.addf %44, %51 : vector<118x128xf32>
    %c0_29 = arith.constant 0 : index
    %c5 = arith.constant 5 : index
    %c0_30 = arith.constant 0 : index
    %53 = vector.load %arg0[%c0_29, %c5, %c0_30] : memref<2x128x1xf32, #tpu.memory_space<vmem>>, vector<1x118x1xf32>
    %54 = vector.shape_cast %53 : vector<1x118x1xf32> to vector<118x1xf32>
    %c5_31 = arith.constant 5 : index
    %c0_32 = arith.constant 0 : index
    %c0_33 = arith.constant 0 : index
    %55 = vector.load %arg1[%c5_31, %c0_32, %c0_33] : memref<11x1x128xf32, #tpu.memory_space<vmem>>, vector<1x1x128xf32>
    %56 = vector.shape_cast %55 : vector<1x1x128xf32> to vector<1x128xf32>
    %57 = vector.broadcast %54 : vector<118x1xf32> to vector<118x128xf32>
    %58 = vector.broadcast %56 : vector<1x128xf32> to vector<118x128xf32>
    %59 = arith.mulf %57, %58 : vector<118x128xf32>
    %60 = arith.addf %52, %59 : vector<118x128xf32>
    %c0_34 = arith.constant 0 : index
    %c6 = arith.constant 6 : index
    %c0_35 = arith.constant 0 : index
    %61 = vector.load %arg0[%c0_34, %c6, %c0_35] : memref<2x128x1xf32, #tpu.memory_space<vmem>>, vector<1x118x1xf32>
    %62 = vector.shape_cast %61 : vector<1x118x1xf32> to vector<118x1xf32>
    %c6_36 = arith.constant 6 : index
    %c0_37 = arith.constant 0 : index
    %c0_38 = arith.constant 0 : index
    %63 = vector.load %arg1[%c6_36, %c0_37, %c0_38] : memref<11x1x128xf32, #tpu.memory_space<vmem>>, vector<1x1x128xf32>
    %64 = vector.shape_cast %63 : vector<1x1x128xf32> to vector<1x128xf32>
    %65 = vector.broadcast %62 : vector<118x1xf32> to vector<118x128xf32>
    %66 = vector.broadcast %64 : vector<1x128xf32> to vector<118x128xf32>
    %67 = arith.mulf %65, %66 : vector<118x128xf32>
    %68 = arith.addf %60, %67 : vector<118x128xf32>
    %c0_39 = arith.constant 0 : index
    %c7 = arith.constant 7 : index
    %c0_40 = arith.constant 0 : index
    %69 = vector.load %arg0[%c0_39, %c7, %c0_40] : memref<2x128x1xf32, #tpu.memory_space<vmem>>, vector<1x118x1xf32>
    %70 = vector.shape_cast %69 : vector<1x118x1xf32> to vector<118x1xf32>
    %c7_41 = arith.constant 7 : index
    %c0_42 = arith.constant 0 : index
    %c0_43 = arith.constant 0 : index
    %71 = vector.load %arg1[%c7_41, %c0_42, %c0_43] : memref<11x1x128xf32, #tpu.memory_space<vmem>>, vector<1x1x128xf32>
    %72 = vector.shape_cast %71 : vector<1x1x128xf32> to vector<1x128xf32>
    %73 = vector.broadcast %70 : vector<118x1xf32> to vector<118x128xf32>
    %74 = vector.broadcast %72 : vector<1x128xf32> to vector<118x128xf32>
    %75 = arith.mulf %73, %74 : vector<118x128xf32>
    %76 = arith.addf %68, %75 : vector<118x128xf32>
    %c0_44 = arith.constant 0 : index
    %c8 = arith.constant 8 : index
    %c0_45 = arith.constant 0 : index
    %77 = vector.load %arg0[%c0_44, %c8, %c0_45] : memref<2x128x1xf32, #tpu.memory_space<vmem>>, vector<1x118x1xf32>
    %78 = vector.shape_cast %77 : vector<1x118x1xf32> to vector<118x1xf32>
    %c8_46 = arith.constant 8 : index
    %c0_47 = arith.constant 0 : index
    %c0_48 = arith.constant 0 : index
    %79 = vector.load %arg1[%c8_46, %c0_47, %c0_48] : memref<11x1x128xf32, #tpu.memory_space<vmem>>, vector<1x1x128xf32>
    %80 = vector.shape_cast %79 : vector<1x1x128xf32> to vector<1x128xf32>
    %81 = vector.broadcast %78 : vector<118x1xf32> to vector<118x128xf32>
    %82 = vector.broadcast %80 : vector<1x128xf32> to vector<118x128xf32>
    %83 = arith.mulf %81, %82 : vector<118x128xf32>
    %84 = arith.addf %76, %83 : vector<118x128xf32>
    %c0_49 = arith.constant 0 : index
    %c9 = arith.constant 9 : index
    %c0_50 = arith.constant 0 : index
    %85 = vector.load %arg0[%c0_49, %c9, %c0_50] : memref<2x128x1xf32, #tpu.memory_space<vmem>>, vector<1x118x1xf32>
    %86 = vector.shape_cast %85 : vector<1x118x1xf32> to vector<118x1xf32>
    %c9_51 = arith.constant 9 : index
    %c0_52 = arith.constant 0 : index
    %c0_53 = arith.constant 0 : index
    %87 = vector.load %arg1[%c9_51, %c0_52, %c0_53] : memref<11x1x128xf32, #tpu.memory_space<vmem>>, vector<1x1x128xf32>
    %88 = vector.shape_cast %87 : vector<1x1x128xf32> to vector<1x128xf32>
    %89 = vector.broadcast %86 : vector<118x1xf32> to vector<118x128xf32>
    %90 = vector.broadcast %88 : vector<1x128xf32> to vector<118x128xf32>
    %91 = arith.mulf %89, %90 : vector<118x128xf32>
    %92 = arith.addf %84, %91 : vector<118x128xf32>
    %c0_54 = arith.constant 0 : index
    %c10 = arith.constant 10 : index
    %c0_55 = arith.constant 0 : index
    %93 = vector.load %arg0[%c0_54, %c10, %c0_55] : memref<2x128x1xf32, #tpu.memory_space<vmem>>, vector<1x118x1xf32>
    %94 = vector.shape_cast %93 : vector<1x118x1xf32> to vector<118x1xf32>
    %c10_56 = arith.constant 10 : index
    %c0_57 = arith.constant 0 : index
    %c0_58 = arith.constant 0 : index
    %95 = vector.load %arg1[%c10_56, %c0_57, %c0_58] : memref<11x1x128xf32, #tpu.memory_space<vmem>>, vector<1x1x128xf32>
    %96 = vector.shape_cast %95 : vector<1x1x128xf32> to vector<1x128xf32>
    %97 = vector.broadcast %94 : vector<118x1xf32> to vector<118x128xf32>
    %98 = vector.broadcast %96 : vector<1x128xf32> to vector<118x128xf32>
    %99 = arith.mulf %97, %98 : vector<118x128xf32>
    %100 = arith.addf %92, %99 : vector<118x128xf32>
    %101 = vector.broadcast %10 : vector<1x128xf32> to vector<118x128xf32>
    %102 = arith.mulf %100, %101 : vector<118x128xf32>
    %103 = vector.broadcast %11 : vector<1x128xf32> to vector<118x128xf32>
    %104 = arith.addf %102, %103 : vector<118x128xf32>
    %cst_59 = arith.constant 0.000000e+00 : f32
    %105 = vector.broadcast %cst_59 : f32 to vector<118x128xf32>
    %106 = arith.maximumf %104, %105 : vector<118x128xf32>
    %c0_60 = arith.constant 0 : index
    %c0_61 = arith.constant 0 : index
    %107 = vector.load %arg20[%c0_60, %c0_61] : memref<240x128xf32, #tpu.memory_space<vmem>>, vector<118x128xf32>
    tpu.vector_store %arg20[%c0_60, %c0_61], %106 {strides = array<i32>} : memref<240x128xf32, #tpu.memory_space<vmem>>, vector<118x128xf32>,
    %c0_62 = arith.constant 0 : index
    %c0_63 = arith.constant 0 : index
    %108 = tpu.strided_load %arg20[%c0_62, %c0_63] {strides = array<i32: 2, 1>} : memref<240x128xf32, #tpu.memory_space<vmem>>, vector<59x128xf32>
    %c1_64 = arith.constant 1 : index
    %c0_65 = arith.constant 0 : index
    %109 = tpu.strided_load %arg20[%c1_64, %c0_65] {strides = array<i32: 2, 1>} : memref<240x128xf32, #tpu.memory_space<vmem>>, vector<59x128xf32>
    %110 = arith.maximumf %108, %109 : vector<59x128xf32>
    %c0_66 = arith.constant 0 : index
    %c0_67 = arith.constant 0 : index
    %111 = vector.load %arg21[%c0_66, %c0_67] : memref<128x128xf32, #tpu.memory_space<vmem>>, vector<59x128xf32>
    tpu.vector_store %arg21[%c0_66, %c0_67], %110 {strides = array<i32>} : memref<128x128xf32, #tpu.memory_space<vmem>>, vector<59x128xf32>,
    %c0_68 = arith.constant 0 : index
    %c0_69 = arith.constant 0 : index
    %112 = vector.load %arg21[%c0_68, %c0_69] : memref<128x128xf32, #tpu.memory_space<vmem>>, vector<49x128xf32>
    %c0_70 = arith.constant 0 : index
    %c0_71 = arith.constant 0 : index
    %113 = vector.load %arg22[%c0_70, %c0_71] : memref<112x1408xf32, #tpu.memory_space<vmem>>, vector<49x128xf32>
    tpu.vector_store %arg22[%c0_70, %c0_71], %112 {strides = array<i32>} : memref<112x1408xf32, #tpu.memory_space<vmem>>, vector<49x128xf32>,
    %c1_72 = arith.constant 1 : index
    %c0_73 = arith.constant 0 : index
    %114 = vector.load %arg21[%c1_72, %c0_73] : memref<128x128xf32, #tpu.memory_space<vmem>>, vector<49x128xf32>
    %c0_74 = arith.constant 0 : index
    %c128 = arith.constant 128 : index
    %115 = vector.load %arg22[%c0_74, %c128] : memref<112x1408xf32, #tpu.memory_space<vmem>>, vector<49x128xf32>
    tpu.vector_store %arg22[%c0_74, %c128], %114 {strides = array<i32>} : memref<112x1408xf32, #tpu.memory_space<vmem>>, vector<49x128xf32>,
    %c2_75 = arith.constant 2 : index
    %c0_76 = arith.constant 0 : index
    %116 = vector.load %arg21[%c2_75, %c0_76] : memref<128x128xf32, #tpu.memory_space<vmem>>, vector<49x128xf32>
    %c0_77 = arith.constant 0 : index
    %c256 = arith.constant 256 : index
    %117 = vector.load %arg22[%c0_77, %c256] : memref<112x1408xf32, #tpu.memory_space<vmem>>, vector<49x128xf32>
    tpu.vector_store %arg22[%c0_77, %c256], %116 {strides = array<i32>} : memref<112x1408xf32, #tpu.memory_space<vmem>>, vector<49x128xf32>,
    %c3_78 = arith.constant 3 : index
    %c0_79 = arith.constant 0 : index
    %118 = vector.load %arg21[%c3_78, %c0_79] : memref<128x128xf32, #tpu.memory_space<vmem>>, vector<49x128xf32>
    %c0_80 = arith.constant 0 : index
    %c384 = arith.constant 384 : index
    %119 = vector.load %arg22[%c0_80, %c384] : memref<112x1408xf32, #tpu.memory_space<vmem>>, vector<49x128xf32>
    tpu.vector_store %arg22[%c0_80, %c384], %118 {strides = array<i32>} : memref<112x1408xf32, #tpu.memory_space<vmem>>, vector<49x128xf32>,
    %c4_81 = arith.constant 4 : index
    %c0_82 = arith.constant 0 : index
    %120 = vector.load %arg21[%c4_81, %c0_82] : memref<128x128xf32, #tpu.memory_space<vmem>>, vector<49x128xf32>
    %c0_83 = arith.constant 0 : index
    %c512 = arith.constant 512 : index
    %121 = vector.load %arg22[%c0_83, %c512] : memref<112x1408xf32, #tpu.memory_space<vmem>>, vector<49x128xf32>
    tpu.vector_store %arg22[%c0_83, %c512], %120 {strides = array<i32>} : memref<112x1408xf32, #tpu.memory_space<vmem>>, vector<49x128xf32>,
    %c5_84 = arith.constant 5 : index
    %c0_85 = arith.constant 0 : index
    %122 = vector.load %arg21[%c5_84, %c0_85] : memref<128x128xf32, #tpu.memory_space<vmem>>, vector<49x128xf32>
    %c0_86 = arith.constant 0 : index
    %c640 = arith.constant 640 : index
    %123 = vector.load %arg22[%c0_86, %c640] : memref<112x1408xf32, #tpu.memory_space<vmem>>, vector<49x128xf32>
    tpu.vector_store %arg22[%c0_86, %c640], %122 {strides = array<i32>} : memref<112x1408xf32, #tpu.memory_space<vmem>>, vector<49x128xf32>,
    %c6_87 = arith.constant 6 : index
    %c0_88 = arith.constant 0 : index
    %124 = vector.load %arg21[%c6_87, %c0_88] : memref<128x128xf32, #tpu.memory_space<vmem>>, vector<49x128xf32>
    %c0_89 = arith.constant 0 : index
    %c768 = arith.constant 768 : index
    %125 = vector.load %arg22[%c0_89, %c768] : memref<112x1408xf32, #tpu.memory_space<vmem>>, vector<49x128xf32>
    tpu.vector_store %arg22[%c0_89, %c768], %124 {strides = array<i32>} : memref<112x1408xf32, #tpu.memory_space<vmem>>, vector<49x128xf32>,
    %c7_90 = arith.constant 7 : index
    %c0_91 = arith.constant 0 : index
    %126 = vector.load %arg21[%c7_90, %c0_91] : memref<128x128xf32, #tpu.memory_space<vmem>>, vector<49x128xf32>
    %c0_92 = arith.constant 0 : index
    %c896 = arith.constant 896 : index
    %127 = vector.load %arg22[%c0_92, %c896] : memref<112x1408xf32, #tpu.memory_space<vmem>>, vector<49x128xf32>
    tpu.vector_store %arg22[%c0_92, %c896], %126 {strides = array<i32>} : memref<112x1408xf32, #tpu.memory_space<vmem>>, vector<49x128xf32>,
    %c8_93 = arith.constant 8 : index
    %c0_94 = arith.constant 0 : index
    %128 = vector.load %arg21[%c8_93, %c0_94] : memref<128x128xf32, #tpu.memory_space<vmem>>, vector<49x128xf32>
    %c0_95 = arith.constant 0 : index
    %c1024 = arith.constant 1024 : index
    %129 = vector.load %arg22[%c0_95, %c1024] : memref<112x1408xf32, #tpu.memory_space<vmem>>, vector<49x128xf32>
    tpu.vector_store %arg22[%c0_95, %c1024], %128 {strides = array<i32>} : memref<112x1408xf32, #tpu.memory_space<vmem>>, vector<49x128xf32>,
    %c9_96 = arith.constant 9 : index
    %c0_97 = arith.constant 0 : index
    %130 = vector.load %arg21[%c9_96, %c0_97] : memref<128x128xf32, #tpu.memory_space<vmem>>, vector<49x128xf32>
    %c0_98 = arith.constant 0 : index
    %c1152 = arith.constant 1152 : index
    %131 = vector.load %arg22[%c0_98, %c1152] : memref<112x1408xf32, #tpu.memory_space<vmem>>, vector<49x128xf32>
    tpu.vector_store %arg22[%c0_98, %c1152], %130 {strides = array<i32>} : memref<112x1408xf32, #tpu.memory_space<vmem>>, vector<49x128xf32>,
    %c10_99 = arith.constant 10 : index
    %c0_100 = arith.constant 0 : index
    %132 = vector.load %arg21[%c10_99, %c0_100] : memref<128x128xf32, #tpu.memory_space<vmem>>, vector<49x128xf32>
    %c0_101 = arith.constant 0 : index
    %c1280 = arith.constant 1280 : index
    %133 = vector.load %arg22[%c0_101, %c1280] : memref<112x1408xf32, #tpu.memory_space<vmem>>, vector<49x128xf32>
    tpu.vector_store %arg22[%c0_101, %c1280], %132 {strides = array<i32>} : memref<112x1408xf32, #tpu.memory_space<vmem>>, vector<49x128xf32>,
    %cst_102 = arith.constant 0.000000e+00 : f32
    %134 = vector.broadcast %cst_102 : f32 to vector<118x128xf32>
    %c1_103 = arith.constant 1 : index
    %c0_104 = arith.constant 0 : index
    %c0_105 = arith.constant 0 : index
    %135 = vector.load %arg0[%c1_103, %c0_104, %c0_105] : memref<2x128x1xf32, #tpu.memory_space<vmem>>, vector<1x118x1xf32>
    %136 = vector.shape_cast %135 : vector<1x118x1xf32> to vector<118x1xf32>
    %c0_106 = arith.constant 0 : index
    %c0_107 = arith.constant 0 : index
    %c0_108 = arith.constant 0 : index
    %137 = vector.load %arg1[%c0_106, %c0_107, %c0_108] : memref<11x1x128xf32, #tpu.memory_space<vmem>>, vector<1x1x128xf32>
    %138 = vector.shape_cast %137 : vector<1x1x128xf32> to vector<1x128xf32>
    %139 = vector.broadcast %136 : vector<118x1xf32> to vector<118x128xf32>
    %140 = vector.broadcast %138 : vector<1x128xf32> to vector<118x128xf32>
    %141 = arith.mulf %139, %140 : vector<118x128xf32>
    %142 = arith.addf %134, %141 : vector<118x128xf32>
    %c1_109 = arith.constant 1 : index
    %c1_110 = arith.constant 1 : index
    %c0_111 = arith.constant 0 : index
    %143 = vector.load %arg0[%c1_109, %c1_110, %c0_111] : memref<2x128x1xf32, #tpu.memory_space<vmem>>, vector<1x118x1xf32>
    %144 = vector.shape_cast %143 : vector<1x118x1xf32> to vector<118x1xf32>
    %c1_112 = arith.constant 1 : index
    %c0_113 = arith.constant 0 : index
    %c0_114 = arith.constant 0 : index
    %145 = vector.load %arg1[%c1_112, %c0_113, %c0_114] : memref<11x1x128xf32, #tpu.memory_space<vmem>>, vector<1x1x128xf32>
    %146 = vector.shape_cast %145 : vector<1x1x128xf32> to vector<1x128xf32>
    %147 = vector.broadcast %144 : vector<118x1xf32> to vector<118x128xf32>
    %148 = vector.broadcast %146 : vector<1x128xf32> to vector<118x128xf32>
    %149 = arith.mulf %147, %148 : vector<118x128xf32>
    %150 = arith.addf %142, %149 : vector<118x128xf32>
    %c1_115 = arith.constant 1 : index
    %c2_116 = arith.constant 2 : index
    %c0_117 = arith.constant 0 : index
    %151 = vector.load %arg0[%c1_115, %c2_116, %c0_117] : memref<2x128x1xf32, #tpu.memory_space<vmem>>, vector<1x118x1xf32>
    %152 = vector.shape_cast %151 : vector<1x118x1xf32> to vector<118x1xf32>
    %c2_118 = arith.constant 2 : index
    %c0_119 = arith.constant 0 : index
    %c0_120 = arith.constant 0 : index
    %153 = vector.load %arg1[%c2_118, %c0_119, %c0_120] : memref<11x1x128xf32, #tpu.memory_space<vmem>>, vector<1x1x128xf32>
    %154 = vector.shape_cast %153 : vector<1x1x128xf32> to vector<1x128xf32>
    %155 = vector.broadcast %152 : vector<118x1xf32> to vector<118x128xf32>
    %156 = vector.broadcast %154 : vector<1x128xf32> to vector<118x128xf32>
    %157 = arith.mulf %155, %156 : vector<118x128xf32>
    %158 = arith.addf %150, %157 : vector<118x128xf32>
    %c1_121 = arith.constant 1 : index
    %c3_122 = arith.constant 3 : index
    %c0_123 = arith.constant 0 : index
    %159 = vector.load %arg0[%c1_121, %c3_122, %c0_123] : memref<2x128x1xf32, #tpu.memory_space<vmem>>, vector<1x118x1xf32>
    %160 = vector.shape_cast %159 : vector<1x118x1xf32> to vector<118x1xf32>
    %c3_124 = arith.constant 3 : index
    %c0_125 = arith.constant 0 : index
    %c0_126 = arith.constant 0 : index
    %161 = vector.load %arg1[%c3_124, %c0_125, %c0_126] : memref<11x1x128xf32, #tpu.memory_space<vmem>>, vector<1x1x128xf32>
    %162 = vector.shape_cast %161 : vector<1x1x128xf32> to vector<1x128xf32>
    %163 = vector.broadcast %160 : vector<118x1xf32> to vector<118x128xf32>
    %164 = vector.broadcast %162 : vector<1x128xf32> to vector<118x128xf32>
    %165 = arith.mulf %163, %164 : vector<118x128xf32>
    %166 = arith.addf %158, %165 : vector<118x128xf32>
    %c1_127 = arith.constant 1 : index
    %c4_128 = arith.constant 4 : index
    %c0_129 = arith.constant 0 : index
    %167 = vector.load %arg0[%c1_127, %c4_128, %c0_129] : memref<2x128x1xf32, #tpu.memory_space<vmem>>, vector<1x118x1xf32>
    %168 = vector.shape_cast %167 : vector<1x118x1xf32> to vector<118x1xf32>
    %c4_130 = arith.constant 4 : index
    %c0_131 = arith.constant 0 : index
    %c0_132 = arith.constant 0 : index
    %169 = vector.load %arg1[%c4_130, %c0_131, %c0_132] : memref<11x1x128xf32, #tpu.memory_space<vmem>>, vector<1x1x128xf32>
    %170 = vector.shape_cast %169 : vector<1x1x128xf32> to vector<1x128xf32>
    %171 = vector.broadcast %168 : vector<118x1xf32> to vector<118x128xf32>
    %172 = vector.broadcast %170 : vector<1x128xf32> to vector<118x128xf32>
    %173 = arith.mulf %171, %172 : vector<118x128xf32>
    %174 = arith.addf %166, %173 : vector<118x128xf32>
    %c1_133 = arith.constant 1 : index
    %c5_134 = arith.constant 5 : index
    %c0_135 = arith.constant 0 : index
    %175 = vector.load %arg0[%c1_133, %c5_134, %c0_135] : memref<2x128x1xf32, #tpu.memory_space<vmem>>, vector<1x118x1xf32>
    %176 = vector.shape_cast %175 : vector<1x118x1xf32> to vector<118x1xf32>
    %c5_136 = arith.constant 5 : index
    %c0_137 = arith.constant 0 : index
    %c0_138 = arith.constant 0 : index
    %177 = vector.load %arg1[%c5_136, %c0_137, %c0_138] : memref<11x1x128xf32, #tpu.memory_space<vmem>>, vector<1x1x128xf32>
    %178 = vector.shape_cast %177 : vector<1x1x128xf32> to vector<1x128xf32>
    %179 = vector.broadcast %176 : vector<118x1xf32> to vector<118x128xf32>
    %180 = vector.broadcast %178 : vector<1x128xf32> to vector<118x128xf32>
    %181 = arith.mulf %179, %180 : vector<118x128xf32>
    %182 = arith.addf %174, %181 : vector<118x128xf32>
    %c1_139 = arith.constant 1 : index
    %c6_140 = arith.constant 6 : index
    %c0_141 = arith.constant 0 : index
    %183 = vector.load %arg0[%c1_139, %c6_140, %c0_141] : memref<2x128x1xf32, #tpu.memory_space<vmem>>, vector<1x118x1xf32>
    %184 = vector.shape_cast %183 : vector<1x118x1xf32> to vector<118x1xf32>
    %c6_142 = arith.constant 6 : index
    %c0_143 = arith.constant 0 : index
    %c0_144 = arith.constant 0 : index
    %185 = vector.load %arg1[%c6_142, %c0_143, %c0_144] : memref<11x1x128xf32, #tpu.memory_space<vmem>>, vector<1x1x128xf32>
    %186 = vector.shape_cast %185 : vector<1x1x128xf32> to vector<1x128xf32>
    %187 = vector.broadcast %184 : vector<118x1xf32> to vector<118x128xf32>
    %188 = vector.broadcast %186 : vector<1x128xf32> to vector<118x128xf32>
    %189 = arith.mulf %187, %188 : vector<118x128xf32>
    %190 = arith.addf %182, %189 : vector<118x128xf32>
    %c1_145 = arith.constant 1 : index
    %c7_146 = arith.constant 7 : index
    %c0_147 = arith.constant 0 : index
    %191 = vector.load %arg0[%c1_145, %c7_146, %c0_147] : memref<2x128x1xf32, #tpu.memory_space<vmem>>, vector<1x118x1xf32>
    %192 = vector.shape_cast %191 : vector<1x118x1xf32> to vector<118x1xf32>
    %c7_148 = arith.constant 7 : index
    %c0_149 = arith.constant 0 : index
    %c0_150 = arith.constant 0 : index
    %193 = vector.load %arg1[%c7_148, %c0_149, %c0_150] : memref<11x1x128xf32, #tpu.memory_space<vmem>>, vector<1x1x128xf32>
    %194 = vector.shape_cast %193 : vector<1x1x128xf32> to vector<1x128xf32>
    %195 = vector.broadcast %192 : vector<118x1xf32> to vector<118x128xf32>
    %196 = vector.broadcast %194 : vector<1x128xf32> to vector<118x128xf32>
    %197 = arith.mulf %195, %196 : vector<118x128xf32>
    %198 = arith.addf %190, %197 : vector<118x128xf32>
    %c1_151 = arith.constant 1 : index
    %c8_152 = arith.constant 8 : index
    %c0_153 = arith.constant 0 : index
    %199 = vector.load %arg0[%c1_151, %c8_152, %c0_153] : memref<2x128x1xf32, #tpu.memory_space<vmem>>, vector<1x118x1xf32>
    %200 = vector.shape_cast %199 : vector<1x118x1xf32> to vector<118x1xf32>
    %c8_154 = arith.constant 8 : index
    %c0_155 = arith.constant 0 : index
    %c0_156 = arith.constant 0 : index
    %201 = vector.load %arg1[%c8_154, %c0_155, %c0_156] : memref<11x1x128xf32, #tpu.memory_space<vmem>>, vector<1x1x128xf32>
    %202 = vector.shape_cast %201 : vector<1x1x128xf32> to vector<1x128xf32>
    %203 = vector.broadcast %200 : vector<118x1xf32> to vector<118x128xf32>
    %204 = vector.broadcast %202 : vector<1x128xf32> to vector<118x128xf32>
    %205 = arith.mulf %203, %204 : vector<118x128xf32>
    %206 = arith.addf %198, %205 : vector<118x128xf32>
    %c1_157 = arith.constant 1 : index
    %c9_158 = arith.constant 9 : index
    %c0_159 = arith.constant 0 : index
    %207 = vector.load %arg0[%c1_157, %c9_158, %c0_159] : memref<2x128x1xf32, #tpu.memory_space<vmem>>, vector<1x118x1xf32>
    %208 = vector.shape_cast %207 : vector<1x118x1xf32> to vector<118x1xf32>
    %c9_160 = arith.constant 9 : index
    %c0_161 = arith.constant 0 : index
    %c0_162 = arith.constant 0 : index
    %209 = vector.load %arg1[%c9_160, %c0_161, %c0_162] : memref<11x1x128xf32, #tpu.memory_space<vmem>>, vector<1x1x128xf32>
    %210 = vector.shape_cast %209 : vector<1x1x128xf32> to vector<1x128xf32>
    %211 = vector.broadcast %208 : vector<118x1xf32> to vector<118x128xf32>
    %212 = vector.broadcast %210 : vector<1x128xf32> to vector<118x128xf32>
    %213 = arith.mulf %211, %212 : vector<118x128xf32>
    %214 = arith.addf %206, %213 : vector<118x128xf32>
    %c1_163 = arith.constant 1 : index
    %c10_164 = arith.constant 10 : index
    %c0_165 = arith.constant 0 : index
    %215 = vector.load %arg0[%c1_163, %c10_164, %c0_165] : memref<2x128x1xf32, #tpu.memory_space<vmem>>, vector<1x118x1xf32>
    %216 = vector.shape_cast %215 : vector<1x118x1xf32> to vector<118x1xf32>
    %c10_166 = arith.constant 10 : index
    %c0_167 = arith.constant 0 : index
    %c0_168 = arith.constant 0 : index
    %217 = vector.load %arg1[%c10_166, %c0_167, %c0_168] : memref<11x1x128xf32, #tpu.memory_space<vmem>>, vector<1x1x128xf32>
    %218 = vector.shape_cast %217 : vector<1x1x128xf32> to vector<1x128xf32>
    %219 = vector.broadcast %216 : vector<118x1xf32> to vector<118x128xf32>
    %220 = vector.broadcast %218 : vector<1x128xf32> to vector<118x128xf32>
    %221 = arith.mulf %219, %220 : vector<118x128xf32>
    %222 = arith.addf %214, %221 : vector<118x128xf32>
    %223 = vector.broadcast %10 : vector<1x128xf32> to vector<118x128xf32>
    %224 = arith.mulf %222, %223 : vector<118x128xf32>
    %225 = vector.broadcast %11 : vector<1x128xf32> to vector<118x128xf32>
    %226 = arith.addf %224, %225 : vector<118x128xf32>
    %cst_169 = arith.constant 0.000000e+00 : f32
    %227 = vector.broadcast %cst_169 : f32 to vector<118x128xf32>
    %228 = arith.maximumf %226, %227 : vector<118x128xf32>
    %c120 = arith.constant 120 : index
    %c0_170 = arith.constant 0 : index
    %229 = vector.load %arg20[%c120, %c0_170] : memref<240x128xf32, #tpu.memory_space<vmem>>, vector<118x128xf32>
    tpu.vector_store %arg20[%c120, %c0_170], %228 {strides = array<i32>} : memref<240x128xf32, #tpu.memory_space<vmem>>, vector<118x128xf32>,
    %c120_171 = arith.constant 120 : index
    %c0_172 = arith.constant 0 : index
    %230 = tpu.strided_load %arg20[%c120_171, %c0_172] {strides = array<i32: 2, 1>} : memref<240x128xf32, #tpu.memory_space<vmem>>, vector<59x128xf32>
    %c121 = arith.constant 121 : index
    %c0_173 = arith.constant 0 : index
    %231 = tpu.strided_load %arg20[%c121, %c0_173] {strides = array<i32: 2, 1>} : memref<240x128xf32, #tpu.memory_space<vmem>>, vector<59x128xf32>
    %232 = arith.maximumf %230, %231 : vector<59x128xf32>
    %c64 = arith.constant 64 : index
    %c0_174 = arith.constant 0 : index
    %233 = vector.load %arg21[%c64, %c0_174] : memref<128x128xf32, #tpu.memory_space<vmem>>, vector<59x128xf32>
    tpu.vector_store %arg21[%c64, %c0_174], %232 {strides = array<i32>} : memref<128x128xf32, #tpu.memory_space<vmem>>, vector<59x128xf32>,
    %c64_175 = arith.constant 64 : index
    %c0_176 = arith.constant 0 : index
    %234 = vector.load %arg21[%c64_175, %c0_176] : memref<128x128xf32, #tpu.memory_space<vmem>>, vector<49x128xf32>
    %c56 = arith.constant 56 : index
    %c0_177 = arith.constant 0 : index
    %235 = vector.load %arg22[%c56, %c0_177] : memref<112x1408xf32, #tpu.memory_space<vmem>>, vector<49x128xf32>
    tpu.vector_store %arg22[%c56, %c0_177], %234 {strides = array<i32>} : memref<112x1408xf32, #tpu.memory_space<vmem>>, vector<49x128xf32>,
    %c65 = arith.constant 65 : index
    %c0_178 = arith.constant 0 : index
    %236 = vector.load %arg21[%c65, %c0_178] : memref<128x128xf32, #tpu.memory_space<vmem>>, vector<49x128xf32>
    %c56_179 = arith.constant 56 : index
    %c128_180 = arith.constant 128 : index
    %237 = vector.load %arg22[%c56_179, %c128_180] : memref<112x1408xf32, #tpu.memory_space<vmem>>, vector<49x128xf32>
    tpu.vector_store %arg22[%c56_179, %c128_180], %236 {strides = array<i32>} : memref<112x1408xf32, #tpu.memory_space<vmem>>, vector<49x128xf32>,
    %c66 = arith.constant 66 : index
    %c0_181 = arith.constant 0 : index
    %238 = vector.load %arg21[%c66, %c0_181] : memref<128x128xf32, #tpu.memory_space<vmem>>, vector<49x128xf32>
    %c56_182 = arith.constant 56 : index
    %c256_183 = arith.constant 256 : index
    %239 = vector.load %arg22[%c56_182, %c256_183] : memref<112x1408xf32, #tpu.memory_space<vmem>>, vector<49x128xf32>
    tpu.vector_store %arg22[%c56_182, %c256_183], %238 {strides = array<i32>} : memref<112x1408xf32, #tpu.memory_space<vmem>>, vector<49x128xf32>,
    %c67 = arith.constant 67 : index
    %c0_184 = arith.constant 0 : index
    %240 = vector.load %arg21[%c67, %c0_184] : memref<128x128xf32, #tpu.memory_space<vmem>>, vector<49x128xf32>
    %c56_185 = arith.constant 56 : index
    %c384_186 = arith.constant 384 : index
    %241 = vector.load %arg22[%c56_185, %c384_186] : memref<112x1408xf32, #tpu.memory_space<vmem>>, vector<49x128xf32>
    tpu.vector_store %arg22[%c56_185, %c384_186], %240 {strides = array<i32>} : memref<112x1408xf32, #tpu.memory_space<vmem>>, vector<49x128xf32>,
    %c68 = arith.constant 68 : index
    %c0_187 = arith.constant 0 : index
    %242 = vector.load %arg21[%c68, %c0_187] : memref<128x128xf32, #tpu.memory_space<vmem>>, vector<49x128xf32>
    %c56_188 = arith.constant 56 : index
    %c512_189 = arith.constant 512 : index
    %243 = vector.load %arg22[%c56_188, %c512_189] : memref<112x1408xf32, #tpu.memory_space<vmem>>, vector<49x128xf32>
    tpu.vector_store %arg22[%c56_188, %c512_189], %242 {strides = array<i32>} : memref<112x1408xf32, #tpu.memory_space<vmem>>, vector<49x128xf32>,
    %c69 = arith.constant 69 : index
    %c0_190 = arith.constant 0 : index
    %244 = vector.load %arg21[%c69, %c0_190] : memref<128x128xf32, #tpu.memory_space<vmem>>, vector<49x128xf32>
    %c56_191 = arith.constant 56 : index
    %c640_192 = arith.constant 640 : index
    %245 = vector.load %arg22[%c56_191, %c640_192] : memref<112x1408xf32, #tpu.memory_space<vmem>>, vector<49x128xf32>
    tpu.vector_store %arg22[%c56_191, %c640_192], %244 {strides = array<i32>} : memref<112x1408xf32, #tpu.memory_space<vmem>>, vector<49x128xf32>,
    %c70 = arith.constant 70 : index
    %c0_193 = arith.constant 0 : index
    %246 = vector.load %arg21[%c70, %c0_193] : memref<128x128xf32, #tpu.memory_space<vmem>>, vector<49x128xf32>
    %c56_194 = arith.constant 56 : index
    %c768_195 = arith.constant 768 : index
    %247 = vector.load %arg22[%c56_194, %c768_195] : memref<112x1408xf32, #tpu.memory_space<vmem>>, vector<49x128xf32>
    tpu.vector_store %arg22[%c56_194, %c768_195], %246 {strides = array<i32>} : memref<112x1408xf32, #tpu.memory_space<vmem>>, vector<49x128xf32>,
    %c71 = arith.constant 71 : index
    %c0_196 = arith.constant 0 : index
    %248 = vector.load %arg21[%c71, %c0_196] : memref<128x128xf32, #tpu.memory_space<vmem>>, vector<49x128xf32>
    %c56_197 = arith.constant 56 : index
    %c896_198 = arith.constant 896 : index
    %249 = vector.load %arg22[%c56_197, %c896_198] : memref<112x1408xf32, #tpu.memory_space<vmem>>, vector<49x128xf32>
    tpu.vector_store %arg22[%c56_197, %c896_198], %248 {strides = array<i32>} : memref<112x1408xf32, #tpu.memory_space<vmem>>, vector<49x128xf32>,
    %c72 = arith.constant 72 : index
    %c0_199 = arith.constant 0 : index
    %250 = vector.load %arg21[%c72, %c0_199] : memref<128x128xf32, #tpu.memory_space<vmem>>, vector<49x128xf32>
    %c56_200 = arith.constant 56 : index
    %c1024_201 = arith.constant 1024 : index
    %251 = vector.load %arg22[%c56_200, %c1024_201] : memref<112x1408xf32, #tpu.memory_space<vmem>>, vector<49x128xf32>
    tpu.vector_store %arg22[%c56_200, %c1024_201], %250 {strides = array<i32>} : memref<112x1408xf32, #tpu.memory_space<vmem>>, vector<49x128xf32>,
    %c73 = arith.constant 73 : index
    %c0_202 = arith.constant 0 : index
    %252 = vector.load %arg21[%c73, %c0_202] : memref<128x128xf32, #tpu.memory_space<vmem>>, vector<49x128xf32>
    %c56_203 = arith.constant 56 : index
    %c1152_204 = arith.constant 1152 : index
    %253 = vector.load %arg22[%c56_203, %c1152_204] : memref<112x1408xf32, #tpu.memory_space<vmem>>, vector<49x128xf32>
    tpu.vector_store %arg22[%c56_203, %c1152_204], %252 {strides = array<i32>} : memref<112x1408xf32, #tpu.memory_space<vmem>>, vector<49x128xf32>,
    %c74 = arith.constant 74 : index
    %c0_205 = arith.constant 0 : index
    %254 = vector.load %arg21[%c74, %c0_205] : memref<128x128xf32, #tpu.memory_space<vmem>>, vector<49x128xf32>
    %c56_206 = arith.constant 56 : index
    %c1280_207 = arith.constant 1280 : index
    %255 = vector.load %arg22[%c56_206, %c1280_207] : memref<112x1408xf32, #tpu.memory_space<vmem>>, vector<49x128xf32>
    tpu.vector_store %arg22[%c56_206, %c1280_207], %254 {strides = array<i32>} : memref<112x1408xf32, #tpu.memory_space<vmem>>, vector<49x128xf32>,
    %c0_i32_208 = arith.constant 0 : i32
    %256 = tpu.memref_slice %arg19[%c0_i32_208] : memref<5x!tpu.dma_semaphore, #tpu.memory_space<semaphore_mem>> -> memref<1x!tpu.dma_semaphore, #tpu.memory_space<semaphore_mem>>
    %257 = tpu.memref_squeeze %256 : memref<1x!tpu.dma_semaphore, #tpu.memory_space<semaphore_mem>> -> memref<!tpu.dma_semaphore, #tpu.memory_space<semaphore_mem>>
    tpu.wait_dma2 semaphore(%257 : memref<!tpu.dma_semaphore, #tpu.memory_space<semaphore_mem>>) src(%arg8 : memref<1408x64xf32, #tpu.memory_space<any>>) dst(%arg14 : memref<1408x64xf32, #tpu.memory_space<vmem>>)
    %c0_209 = arith.constant 0 : index
    %c0_210 = arith.constant 0 : index
    %258 = vector.load %arg22[%c0_209, %c0_210] : memref<112x1408xf32, #tpu.memory_space<vmem>>, vector<112x1408xf32>
    %c0_211 = arith.constant 0 : index
    %c0_212 = arith.constant 0 : index
    %259 = vector.load %arg14[%c0_211, %c0_212] : memref<1408x64xf32, #tpu.memory_space<vmem>>, vector<1408x64xf32>
    %cst_213 = arith.constant dense<0.000000e+00> : vector<112x64xf32>
    %260 = tpu.matmul %258, %259, %cst_213 {dimension_numbers = #tpu.dot_dimension_numbers<[1], [0], [0], [1], [0, 0, 1, 1], [], []>} : vector<112x1408xf32>, vector<1408x64xf32>, vector<112x64xf32> -> vector<112x64xf32>
    %c0_214 = arith.constant 0 : index
    %c0_215 = arith.constant 0 : index
    %261 = vector.load %arg3[%c0_214, %c0_215] : memref<2x64xf32, #tpu.memory_space<vmem>>, vector<1x64xf32>
    %c1_216 = arith.constant 1 : index
    %c0_217 = arith.constant 0 : index
    %262 = vector.load %arg3[%c1_216, %c0_217] : memref<2x64xf32, #tpu.memory_space<vmem>>, vector<1x64xf32>
    %263 = vector.broadcast %261 : vector<1x64xf32> to vector<112x64xf32>
    %264 = arith.mulf %260, %263 : vector<112x64xf32>
    %265 = vector.broadcast %262 : vector<1x64xf32> to vector<112x64xf32>
    %266 = arith.addf %264, %265 : vector<112x64xf32>
    %cst_218 = arith.constant 0.000000e+00 : f32
    %267 = vector.broadcast %cst_218 : f32 to vector<112x64xf32>
    %268 = arith.maximumf %266, %267 : vector<112x64xf32>
    %c0_219 = arith.constant 0 : index
    %c0_220 = arith.constant 0 : index
    %269 = vector.load %arg23[%c0_219, %c0_220] : memref<112x64xf32, #tpu.memory_space<vmem>>, vector<112x64xf32>
    tpu.vector_store %arg23[%c0_219, %c0_220], %268 {strides = array<i32>} : memref<112x64xf32, #tpu.memory_space<vmem>>, vector<112x64xf32>,
    %c0_221 = arith.constant 0 : index
    %c0_222 = arith.constant 0 : index
    %270 = tpu.strided_load %arg23[%c0_221, %c0_222] {strides = array<i32: 2, 1>} : memref<112x64xf32, #tpu.memory_space<vmem>>, vector<24x64xf32>
    %c1_223 = arith.constant 1 : index
    %c0_224 = arith.constant 0 : index
    %271 = tpu.strided_load %arg23[%c1_223, %c0_224] {strides = array<i32: 2, 1>} : memref<112x64xf32, #tpu.memory_space<vmem>>, vector<24x64xf32>
    %272 = arith.maximumf %270, %271 : vector<24x64xf32>
    %c0_225 = arith.constant 0 : index
    %c0_226 = arith.constant 0 : index
    %273 = vector.load %arg24[%c0_225, %c0_226] : memref<48x64xf32, #tpu.memory_space<vmem>>, vector<24x64xf32>
    tpu.vector_store %arg24[%c0_225, %c0_226], %272 {strides = array<i32>} : memref<48x64xf32, #tpu.memory_space<vmem>>, vector<24x64xf32>,
    %c56_227 = arith.constant 56 : index
    %c0_228 = arith.constant 0 : index
    %274 = tpu.strided_load %arg23[%c56_227, %c0_228] {strides = array<i32: 2, 1>} : memref<112x64xf32, #tpu.memory_space<vmem>>, vector<24x64xf32>
    %c57 = arith.constant 57 : index
    %c0_229 = arith.constant 0 : index
    %275 = tpu.strided_load %arg23[%c57, %c0_229] {strides = array<i32: 2, 1>} : memref<112x64xf32, #tpu.memory_space<vmem>>, vector<24x64xf32>
    %276 = arith.maximumf %274, %275 : vector<24x64xf32>
    %c24 = arith.constant 24 : index
    %c0_230 = arith.constant 0 : index
    %277 = vector.load %arg24[%c24, %c0_230] : memref<48x64xf32, #tpu.memory_space<vmem>>, vector<24x64xf32>
    tpu.vector_store %arg24[%c24, %c0_230], %276 {strides = array<i32>} : memref<48x64xf32, #tpu.memory_space<vmem>>, vector<24x64xf32>,
    %c1_i32_231 = arith.constant 1 : i32
    %278 = tpu.memref_slice %arg19[%c1_i32_231] : memref<5x!tpu.dma_semaphore, #tpu.memory_space<semaphore_mem>> -> memref<1x!tpu.dma_semaphore, #tpu.memory_space<semaphore_mem>>
    %279 = tpu.memref_squeeze %278 : memref<1x!tpu.dma_semaphore, #tpu.memory_space<semaphore_mem>> -> memref<!tpu.dma_semaphore, #tpu.memory_space<semaphore_mem>>
    tpu.wait_dma2 semaphore(%279 : memref<!tpu.dma_semaphore, #tpu.memory_space<semaphore_mem>>) src(%arg9 : memref<1536x512xbf16, #tpu.memory_space<any>>) dst(%arg15 : memref<1536x512xbf16, #tpu.memory_space<vmem>>)
    %cst_232 = arith.constant 0.000000e+00 : f32
    %280 = vector.broadcast %cst_232 : f32 to vector<2x512xf32>
    %c0_233 = arith.constant 0 : index
    %c0_234 = arith.constant 0 : index
    %281 = vector.load %arg4[%c0_233, %c0_234] : memref<1x512xf32, #tpu.memory_space<vmem>>, vector<1x512xf32>
    %282 = vector.broadcast %281 : vector<1x512xf32> to vector<2x512xf32>
    %283 = arith.addf %280, %282 : vector<2x512xf32>
    %c0_235 = arith.constant 0 : index
    %c0_236 = arith.constant 0 : index
    %284 = tpu.strided_load %arg24[%c0_235, %c0_236] {strides = array<i32: 24, 1>} : memref<48x64xf32, #tpu.memory_space<vmem>>, vector<2x64xf32>
    %285 = arith.truncf %284 : vector<2x64xf32> to vector<2x64xbf16>
    %c0_237 = arith.constant 0 : index
    %c0_238 = arith.constant 0 : index
    %286 = vector.load %arg15[%c0_237, %c0_238] : memref<1536x512xbf16, #tpu.memory_space<vmem>>, vector<64x512xbf16>
    %cst_239 = arith.constant dense<0.000000e+00> : vector<2x512xf32>
    %287 = tpu.matmul %285, %286, %cst_239 {dimension_numbers = #tpu.dot_dimension_numbers<[1], [0], [0], [1], [0, 0, 1, 1], [], []>} : vector<2x64xbf16>, vector<64x512xbf16>, vector<2x512xf32> -> vector<2x512xf32>
    %288 = arith.addf %283, %287 : vector<2x512xf32>
    %c1_240 = arith.constant 1 : index
    %c0_241 = arith.constant 0 : index
    %289 = tpu.strided_load %arg24[%c1_240, %c0_241] {strides = array<i32: 24, 1>} : memref<48x64xf32, #tpu.memory_space<vmem>>, vector<2x64xf32>
    %290 = arith.truncf %289 : vector<2x64xf32> to vector<2x64xbf16>
    %c64_242 = arith.constant 64 : index
    %c0_243 = arith.constant 0 : index
    %291 = vector.load %arg15[%c64_242, %c0_243] : memref<1536x512xbf16, #tpu.memory_space<vmem>>, vector<64x512xbf16>
    %cst_244 = arith.constant dense<0.000000e+00> : vector<2x512xf32>
    %292 = tpu.matmul %290, %291, %cst_244 {dimension_numbers = #tpu.dot_dimension_numbers<[1], [0], [0], [1], [0, 0, 1, 1], [], []>} : vector<2x64xbf16>, vector<64x512xbf16>, vector<2x512xf32> -> vector<2x512xf32>
    %293 = arith.addf %288, %292 : vector<2x512xf32>
    %c2_245 = arith.constant 2 : index
    %c0_246 = arith.constant 0 : index
    %294 = tpu.strided_load %arg24[%c2_245, %c0_246] {strides = array<i32: 24, 1>} : memref<48x64xf32, #tpu.memory_space<vmem>>, vector<2x64xf32>
    %295 = arith.truncf %294 : vector<2x64xf32> to vector<2x64xbf16>
    %c128_247 = arith.constant 128 : index
    %c0_248 = arith.constant 0 : index
    %296 = vector.load %arg15[%c128_247, %c0_248] : memref<1536x512xbf16, #tpu.memory_space<vmem>>, vector<64x512xbf16>
    %cst_249 = arith.constant dense<0.000000e+00> : vector<2x512xf32>
    %297 = tpu.matmul %295, %296, %cst_249 {dimension_numbers = #tpu.dot_dimension_numbers<[1], [0], [0], [1], [0, 0, 1, 1], [], []>} : vector<2x64xbf16>, vector<64x512xbf16>, vector<2x512xf32> -> vector<2x512xf32>
    %298 = arith.addf %293, %297 : vector<2x512xf32>
    %c3_250 = arith.constant 3 : index
    %c0_251 = arith.constant 0 : index
    %299 = tpu.strided_load %arg24[%c3_250, %c0_251] {strides = array<i32: 24, 1>} : memref<48x64xf32, #tpu.memory_space<vmem>>, vector<2x64xf32>
    %300 = arith.truncf %299 : vector<2x64xf32> to vector<2x64xbf16>
    %c192 = arith.constant 192 : index
    %c0_252 = arith.constant 0 : index
    %301 = vector.load %arg15[%c192, %c0_252] : memref<1536x512xbf16, #tpu.memory_space<vmem>>, vector<64x512xbf16>
    %cst_253 = arith.constant dense<0.000000e+00> : vector<2x512xf32>
    %302 = tpu.matmul %300, %301, %cst_253 {dimension_numbers = #tpu.dot_dimension_numbers<[1], [0], [0], [1], [0, 0, 1, 1], [], []>} : vector<2x64xbf16>, vector<64x512xbf16>, vector<2x512xf32> -> vector<2x512xf32>
    %303 = arith.addf %298, %302 : vector<2x512xf32>
    %c4_254 = arith.constant 4 : index
    %c0_255 = arith.constant 0 : index
    %304 = tpu.strided_load %arg24[%c4_254, %c0_255] {strides = array<i32: 24, 1>} : memref<48x64xf32, #tpu.memory_space<vmem>>, vector<2x64xf32>
    %305 = arith.truncf %304 : vector<2x64xf32> to vector<2x64xbf16>
    %c256_256 = arith.constant 256 : index
    %c0_257 = arith.constant 0 : index
    %306 = vector.load %arg15[%c256_256, %c0_257] : memref<1536x512xbf16, #tpu.memory_space<vmem>>, vector<64x512xbf16>
    %cst_258 = arith.constant dense<0.000000e+00> : vector<2x512xf32>
    %307 = tpu.matmul %305, %306, %cst_258 {dimension_numbers = #tpu.dot_dimension_numbers<[1], [0], [0], [1], [0, 0, 1, 1], [], []>} : vector<2x64xbf16>, vector<64x512xbf16>, vector<2x512xf32> -> vector<2x512xf32>
    %308 = arith.addf %303, %307 : vector<2x512xf32>
    %c5_259 = arith.constant 5 : index
    %c0_260 = arith.constant 0 : index
    %309 = tpu.strided_load %arg24[%c5_259, %c0_260] {strides = array<i32: 24, 1>} : memref<48x64xf32, #tpu.memory_space<vmem>>, vector<2x64xf32>
    %310 = arith.truncf %309 : vector<2x64xf32> to vector<2x64xbf16>
    %c320 = arith.constant 320 : index
    %c0_261 = arith.constant 0 : index
    %311 = vector.load %arg15[%c320, %c0_261] : memref<1536x512xbf16, #tpu.memory_space<vmem>>, vector<64x512xbf16>
    %cst_262 = arith.constant dense<0.000000e+00> : vector<2x512xf32>
    %312 = tpu.matmul %310, %311, %cst_262 {dimension_numbers = #tpu.dot_dimension_numbers<[1], [0], [0], [1], [0, 0, 1, 1], [], []>} : vector<2x64xbf16>, vector<64x512xbf16>, vector<2x512xf32> -> vector<2x512xf32>
    %313 = arith.addf %308, %312 : vector<2x512xf32>
    %c6_263 = arith.constant 6 : index
    %c0_264 = arith.constant 0 : index
    %314 = tpu.strided_load %arg24[%c6_263, %c0_264] {strides = array<i32: 24, 1>} : memref<48x64xf32, #tpu.memory_space<vmem>>, vector<2x64xf32>
    %315 = arith.truncf %314 : vector<2x64xf32> to vector<2x64xbf16>
    %c384_265 = arith.constant 384 : index
    %c0_266 = arith.constant 0 : index
    %316 = vector.load %arg15[%c384_265, %c0_266] : memref<1536x512xbf16, #tpu.memory_space<vmem>>, vector<64x512xbf16>
    %cst_267 = arith.constant dense<0.000000e+00> : vector<2x512xf32>
    %317 = tpu.matmul %315, %316, %cst_267 {dimension_numbers = #tpu.dot_dimension_numbers<[1], [0], [0], [1], [0, 0, 1, 1], [], []>} : vector<2x64xbf16>, vector<64x512xbf16>, vector<2x512xf32> -> vector<2x512xf32>
    %318 = arith.addf %313, %317 : vector<2x512xf32>
    %c7_268 = arith.constant 7 : index
    %c0_269 = arith.constant 0 : index
    %319 = tpu.strided_load %arg24[%c7_268, %c0_269] {strides = array<i32: 24, 1>} : memref<48x64xf32, #tpu.memory_space<vmem>>, vector<2x64xf32>
    %320 = arith.truncf %319 : vector<2x64xf32> to vector<2x64xbf16>
    %c448 = arith.constant 448 : index
    %c0_270 = arith.constant 0 : index
    %321 = vector.load %arg15[%c448, %c0_270] : memref<1536x512xbf16, #tpu.memory_space<vmem>>, vector<64x512xbf16>
    %cst_271 = arith.constant dense<0.000000e+00> : vector<2x512xf32>
    %322 = tpu.matmul %320, %321, %cst_271 {dimension_numbers = #tpu.dot_dimension_numbers<[1], [0], [0], [1], [0, 0, 1, 1], [], []>} : vector<2x64xbf16>, vector<64x512xbf16>, vector<2x512xf32> -> vector<2x512xf32>
    %323 = arith.addf %318, %322 : vector<2x512xf32>
    %c8_272 = arith.constant 8 : index
    %c0_273 = arith.constant 0 : index
    %324 = tpu.strided_load %arg24[%c8_272, %c0_273] {strides = array<i32: 24, 1>} : memref<48x64xf32, #tpu.memory_space<vmem>>, vector<2x64xf32>
    %325 = arith.truncf %324 : vector<2x64xf32> to vector<2x64xbf16>
    %c512_274 = arith.constant 512 : index
    %c0_275 = arith.constant 0 : index
    %326 = vector.load %arg15[%c512_274, %c0_275] : memref<1536x512xbf16, #tpu.memory_space<vmem>>, vector<64x512xbf16>
    %cst_276 = arith.constant dense<0.000000e+00> : vector<2x512xf32>
    %327 = tpu.matmul %325, %326, %cst_276 {dimension_numbers = #tpu.dot_dimension_numbers<[1], [0], [0], [1], [0, 0, 1, 1], [], []>} : vector<2x64xbf16>, vector<64x512xbf16>, vector<2x512xf32> -> vector<2x512xf32>
    %328 = arith.addf %323, %327 : vector<2x512xf32>
    %c9_277 = arith.constant 9 : index
    %c0_278 = arith.constant 0 : index
    %329 = tpu.strided_load %arg24[%c9_277, %c0_278] {strides = array<i32: 24, 1>} : memref<48x64xf32, #tpu.memory_space<vmem>>, vector<2x64xf32>
    %330 = arith.truncf %329 : vector<2x64xf32> to vector<2x64xbf16>
    %c576 = arith.constant 576 : index
    %c0_279 = arith.constant 0 : index
    %331 = vector.load %arg15[%c576, %c0_279] : memref<1536x512xbf16, #tpu.memory_space<vmem>>, vector<64x512xbf16>
    %cst_280 = arith.constant dense<0.000000e+00> : vector<2x512xf32>
    %332 = tpu.matmul %330, %331, %cst_280 {dimension_numbers = #tpu.dot_dimension_numbers<[1], [0], [0], [1], [0, 0, 1, 1], [], []>} : vector<2x64xbf16>, vector<64x512xbf16>, vector<2x512xf32> -> vector<2x512xf32>
    %333 = arith.addf %328, %332 : vector<2x512xf32>
    %c10_281 = arith.constant 10 : index
    %c0_282 = arith.constant 0 : index
    %334 = tpu.strided_load %arg24[%c10_281, %c0_282] {strides = array<i32: 24, 1>} : memref<48x64xf32, #tpu.memory_space<vmem>>, vector<2x64xf32>
    %335 = arith.truncf %334 : vector<2x64xf32> to vector<2x64xbf16>
    %c640_283 = arith.constant 640 : index
    %c0_284 = arith.constant 0 : index
    %336 = vector.load %arg15[%c640_283, %c0_284] : memref<1536x512xbf16, #tpu.memory_space<vmem>>, vector<64x512xbf16>
    %cst_285 = arith.constant dense<0.000000e+00> : vector<2x512xf32>
    %337 = tpu.matmul %335, %336, %cst_285 {dimension_numbers = #tpu.dot_dimension_numbers<[1], [0], [0], [1], [0, 0, 1, 1], [], []>} : vector<2x64xbf16>, vector<64x512xbf16>, vector<2x512xf32> -> vector<2x512xf32>
    %338 = arith.addf %333, %337 : vector<2x512xf32>
    %c11 = arith.constant 11 : index
    %c0_286 = arith.constant 0 : index
    %339 = tpu.strided_load %arg24[%c11, %c0_286] {strides = array<i32: 24, 1>} : memref<48x64xf32, #tpu.memory_space<vmem>>, vector<2x64xf32>
    %340 = arith.truncf %339 : vector<2x64xf32> to vector<2x64xbf16>
    %c704 = arith.constant 704 : index
    %c0_287 = arith.constant 0 : index
    %341 = vector.load %arg15[%c704, %c0_287] : memref<1536x512xbf16, #tpu.memory_space<vmem>>, vector<64x512xbf16>
    %cst_288 = arith.constant dense<0.000000e+00> : vector<2x512xf32>
    %342 = tpu.matmul %340, %341, %cst_288 {dimension_numbers = #tpu.dot_dimension_numbers<[1], [0], [0], [1], [0, 0, 1, 1], [], []>} : vector<2x64xbf16>, vector<64x512xbf16>, vector<2x512xf32> -> vector<2x512xf32>
    %343 = arith.addf %338, %342 : vector<2x512xf32>
    %c12 = arith.constant 12 : index
    %c0_289 = arith.constant 0 : index
    %344 = tpu.strided_load %arg24[%c12, %c0_289] {strides = array<i32: 24, 1>} : memref<48x64xf32, #tpu.memory_space<vmem>>, vector<2x64xf32>
    %345 = arith.truncf %344 : vector<2x64xf32> to vector<2x64xbf16>
    %c768_290 = arith.constant 768 : index
    %c0_291 = arith.constant 0 : index
    %346 = vector.load %arg15[%c768_290, %c0_291] : memref<1536x512xbf16, #tpu.memory_space<vmem>>, vector<64x512xbf16>
    %cst_292 = arith.constant dense<0.000000e+00> : vector<2x512xf32>
    %347 = tpu.matmul %345, %346, %cst_292 {dimension_numbers = #tpu.dot_dimension_numbers<[1], [0], [0], [1], [0, 0, 1, 1], [], []>} : vector<2x64xbf16>, vector<64x512xbf16>, vector<2x512xf32> -> vector<2x512xf32>
    %348 = arith.addf %343, %347 : vector<2x512xf32>
    %c13 = arith.constant 13 : index
    %c0_293 = arith.constant 0 : index
    %349 = tpu.strided_load %arg24[%c13, %c0_293] {strides = array<i32: 24, 1>} : memref<48x64xf32, #tpu.memory_space<vmem>>, vector<2x64xf32>
    %350 = arith.truncf %349 : vector<2x64xf32> to vector<2x64xbf16>
    %c832 = arith.constant 832 : index
    %c0_294 = arith.constant 0 : index
    %351 = vector.load %arg15[%c832, %c0_294] : memref<1536x512xbf16, #tpu.memory_space<vmem>>, vector<64x512xbf16>
    %cst_295 = arith.constant dense<0.000000e+00> : vector<2x512xf32>
    %352 = tpu.matmul %350, %351, %cst_295 {dimension_numbers = #tpu.dot_dimension_numbers<[1], [0], [0], [1], [0, 0, 1, 1], [], []>} : vector<2x64xbf16>, vector<64x512xbf16>, vector<2x512xf32> -> vector<2x512xf32>
    %353 = arith.addf %348, %352 : vector<2x512xf32>
    %c14 = arith.constant 14 : index
    %c0_296 = arith.constant 0 : index
    %354 = tpu.strided_load %arg24[%c14, %c0_296] {strides = array<i32: 24, 1>} : memref<48x64xf32, #tpu.memory_space<vmem>>, vector<2x64xf32>
    %355 = arith.truncf %354 : vector<2x64xf32> to vector<2x64xbf16>
    %c896_297 = arith.constant 896 : index
    %c0_298 = arith.constant 0 : index
    %356 = vector.load %arg15[%c896_297, %c0_298] : memref<1536x512xbf16, #tpu.memory_space<vmem>>, vector<64x512xbf16>
    %cst_299 = arith.constant dense<0.000000e+00> : vector<2x512xf32>
    %357 = tpu.matmul %355, %356, %cst_299 {dimension_numbers = #tpu.dot_dimension_numbers<[1], [0], [0], [1], [0, 0, 1, 1], [], []>} : vector<2x64xbf16>, vector<64x512xbf16>, vector<2x512xf32> -> vector<2x512xf32>
    %358 = arith.addf %353, %357 : vector<2x512xf32>
    %c15 = arith.constant 15 : index
    %c0_300 = arith.constant 0 : index
    %359 = tpu.strided_load %arg24[%c15, %c0_300] {strides = array<i32: 24, 1>} : memref<48x64xf32, #tpu.memory_space<vmem>>, vector<2x64xf32>
    %360 = arith.truncf %359 : vector<2x64xf32> to vector<2x64xbf16>
    %c960 = arith.constant 960 : index
    %c0_301 = arith.constant 0 : index
    %361 = vector.load %arg15[%c960, %c0_301] : memref<1536x512xbf16, #tpu.memory_space<vmem>>, vector<64x512xbf16>
    %cst_302 = arith.constant dense<0.000000e+00> : vector<2x512xf32>
    %362 = tpu.matmul %360, %361, %cst_302 {dimension_numbers = #tpu.dot_dimension_numbers<[1], [0], [0], [1], [0, 0, 1, 1], [], []>} : vector<2x64xbf16>, vector<64x512xbf16>, vector<2x512xf32> -> vector<2x512xf32>
    %363 = arith.addf %358, %362 : vector<2x512xf32>
    %c16 = arith.constant 16 : index
    %c0_303 = arith.constant 0 : index
    %364 = tpu.strided_load %arg24[%c16, %c0_303] {strides = array<i32: 24, 1>} : memref<48x64xf32, #tpu.memory_space<vmem>>, vector<2x64xf32>
    %365 = arith.truncf %364 : vector<2x64xf32> to vector<2x64xbf16>
    %c1024_304 = arith.constant 1024 : index
    %c0_305 = arith.constant 0 : index
    %366 = vector.load %arg15[%c1024_304, %c0_305] : memref<1536x512xbf16, #tpu.memory_space<vmem>>, vector<64x512xbf16>
    %cst_306 = arith.constant dense<0.000000e+00> : vector<2x512xf32>
    %367 = tpu.matmul %365, %366, %cst_306 {dimension_numbers = #tpu.dot_dimension_numbers<[1], [0], [0], [1], [0, 0, 1, 1], [], []>} : vector<2x64xbf16>, vector<64x512xbf16>, vector<2x512xf32> -> vector<2x512xf32>
    %368 = arith.addf %363, %367 : vector<2x512xf32>
    %c17 = arith.constant 17 : index
    %c0_307 = arith.constant 0 : index
    %369 = tpu.strided_load %arg24[%c17, %c0_307] {strides = array<i32: 24, 1>} : memref<48x64xf32, #tpu.memory_space<vmem>>, vector<2x64xf32>
    %370 = arith.truncf %369 : vector<2x64xf32> to vector<2x64xbf16>
    %c1088 = arith.constant 1088 : index
    %c0_308 = arith.constant 0 : index
    %371 = vector.load %arg15[%c1088, %c0_308] : memref<1536x512xbf16, #tpu.memory_space<vmem>>, vector<64x512xbf16>
    %cst_309 = arith.constant dense<0.000000e+00> : vector<2x512xf32>
    %372 = tpu.matmul %370, %371, %cst_309 {dimension_numbers = #tpu.dot_dimension_numbers<[1], [0], [0], [1], [0, 0, 1, 1], [], []>} : vector<2x64xbf16>, vector<64x512xbf16>, vector<2x512xf32> -> vector<2x512xf32>
    %373 = arith.addf %368, %372 : vector<2x512xf32>
    %c18 = arith.constant 18 : index
    %c0_310 = arith.constant 0 : index
    %374 = tpu.strided_load %arg24[%c18, %c0_310] {strides = array<i32: 24, 1>} : memref<48x64xf32, #tpu.memory_space<vmem>>, vector<2x64xf32>
    %375 = arith.truncf %374 : vector<2x64xf32> to vector<2x64xbf16>
    %c1152_311 = arith.constant 1152 : index
    %c0_312 = arith.constant 0 : index
    %376 = vector.load %arg15[%c1152_311, %c0_312] : memref<1536x512xbf16, #tpu.memory_space<vmem>>, vector<64x512xbf16>
    %cst_313 = arith.constant dense<0.000000e+00> : vector<2x512xf32>
    %377 = tpu.matmul %375, %376, %cst_313 {dimension_numbers = #tpu.dot_dimension_numbers<[1], [0], [0], [1], [0, 0, 1, 1], [], []>} : vector<2x64xbf16>, vector<64x512xbf16>, vector<2x512xf32> -> vector<2x512xf32>
    %378 = arith.addf %373, %377 : vector<2x512xf32>
    %c19 = arith.constant 19 : index
    %c0_314 = arith.constant 0 : index
    %379 = tpu.strided_load %arg24[%c19, %c0_314] {strides = array<i32: 24, 1>} : memref<48x64xf32, #tpu.memory_space<vmem>>, vector<2x64xf32>
    %380 = arith.truncf %379 : vector<2x64xf32> to vector<2x64xbf16>
    %c1216 = arith.constant 1216 : index
    %c0_315 = arith.constant 0 : index
    %381 = vector.load %arg15[%c1216, %c0_315] : memref<1536x512xbf16, #tpu.memory_space<vmem>>, vector<64x512xbf16>
    %cst_316 = arith.constant dense<0.000000e+00> : vector<2x512xf32>
    %382 = tpu.matmul %380, %381, %cst_316 {dimension_numbers = #tpu.dot_dimension_numbers<[1], [0], [0], [1], [0, 0, 1, 1], [], []>} : vector<2x64xbf16>, vector<64x512xbf16>, vector<2x512xf32> -> vector<2x512xf32>
    %383 = arith.addf %378, %382 : vector<2x512xf32>
    %c20 = arith.constant 20 : index
    %c0_317 = arith.constant 0 : index
    %384 = tpu.strided_load %arg24[%c20, %c0_317] {strides = array<i32: 24, 1>} : memref<48x64xf32, #tpu.memory_space<vmem>>, vector<2x64xf32>
    %385 = arith.truncf %384 : vector<2x64xf32> to vector<2x64xbf16>
    %c1280_318 = arith.constant 1280 : index
    %c0_319 = arith.constant 0 : index
    %386 = vector.load %arg15[%c1280_318, %c0_319] : memref<1536x512xbf16, #tpu.memory_space<vmem>>, vector<64x512xbf16>
    %cst_320 = arith.constant dense<0.000000e+00> : vector<2x512xf32>
    %387 = tpu.matmul %385, %386, %cst_320 {dimension_numbers = #tpu.dot_dimension_numbers<[1], [0], [0], [1], [0, 0, 1, 1], [], []>} : vector<2x64xbf16>, vector<64x512xbf16>, vector<2x512xf32> -> vector<2x512xf32>
    %388 = arith.addf %383, %387 : vector<2x512xf32>
    %c21 = arith.constant 21 : index
    %c0_321 = arith.constant 0 : index
    %389 = tpu.strided_load %arg24[%c21, %c0_321] {strides = array<i32: 24, 1>} : memref<48x64xf32, #tpu.memory_space<vmem>>, vector<2x64xf32>
    %390 = arith.truncf %389 : vector<2x64xf32> to vector<2x64xbf16>
    %c1344 = arith.constant 1344 : index
    %c0_322 = arith.constant 0 : index
    %391 = vector.load %arg15[%c1344, %c0_322] : memref<1536x512xbf16, #tpu.memory_space<vmem>>, vector<64x512xbf16>
    %cst_323 = arith.constant dense<0.000000e+00> : vector<2x512xf32>
    %392 = tpu.matmul %390, %391, %cst_323 {dimension_numbers = #tpu.dot_dimension_numbers<[1], [0], [0], [1], [0, 0, 1, 1], [], []>} : vector<2x64xbf16>, vector<64x512xbf16>, vector<2x512xf32> -> vector<2x512xf32>
    %393 = arith.addf %388, %392 : vector<2x512xf32>
    %c22 = arith.constant 22 : index
    %c0_324 = arith.constant 0 : index
    %394 = tpu.strided_load %arg24[%c22, %c0_324] {strides = array<i32: 24, 1>} : memref<48x64xf32, #tpu.memory_space<vmem>>, vector<2x64xf32>
    %395 = arith.truncf %394 : vector<2x64xf32> to vector<2x64xbf16>
    %c1408 = arith.constant 1408 : index
    %c0_325 = arith.constant 0 : index
    %396 = vector.load %arg15[%c1408, %c0_325] : memref<1536x512xbf16, #tpu.memory_space<vmem>>, vector<64x512xbf16>
    %cst_326 = arith.constant dense<0.000000e+00> : vector<2x512xf32>
    %397 = tpu.matmul %395, %396, %cst_326 {dimension_numbers = #tpu.dot_dimension_numbers<[1], [0], [0], [1], [0, 0, 1, 1], [], []>} : vector<2x64xbf16>, vector<64x512xbf16>, vector<2x512xf32> -> vector<2x512xf32>
    %398 = arith.addf %393, %397 : vector<2x512xf32>
    %c23 = arith.constant 23 : index
    %c0_327 = arith.constant 0 : index
    %399 = tpu.strided_load %arg24[%c23, %c0_327] {strides = array<i32: 24, 1>} : memref<48x64xf32, #tpu.memory_space<vmem>>, vector<2x64xf32>
    %400 = arith.truncf %399 : vector<2x64xf32> to vector<2x64xbf16>
    %c1472 = arith.constant 1472 : index
    %c0_328 = arith.constant 0 : index
    %401 = vector.load %arg15[%c1472, %c0_328] : memref<1536x512xbf16, #tpu.memory_space<vmem>>, vector<64x512xbf16>
    %cst_329 = arith.constant dense<0.000000e+00> : vector<2x512xf32>
    %402 = tpu.matmul %400, %401, %cst_329 {dimension_numbers = #tpu.dot_dimension_numbers<[1], [0], [0], [1], [0, 0, 1, 1], [], []>} : vector<2x64xbf16>, vector<64x512xbf16>, vector<2x512xf32> -> vector<2x512xf32>
    %403 = arith.addf %398, %402 : vector<2x512xf32>
    %cst_330 = arith.constant 0.000000e+00 : f32
    %404 = vector.broadcast %cst_330 : f32 to vector<2x512xf32>
    %405 = arith.maximumf %403, %404 : vector<2x512xf32>
    %c2_i32_331 = arith.constant 2 : i32
    %406 = tpu.memref_slice %arg19[%c2_i32_331] : memref<5x!tpu.dma_semaphore, #tpu.memory_space<semaphore_mem>> -> memref<1x!tpu.dma_semaphore, #tpu.memory_space<semaphore_mem>>
    %407 = tpu.memref_squeeze %406 : memref<1x!tpu.dma_semaphore, #tpu.memory_space<semaphore_mem>> -> memref<!tpu.dma_semaphore, #tpu.memory_space<semaphore_mem>>
    tpu.wait_dma2 semaphore(%407 : memref<!tpu.dma_semaphore, #tpu.memory_space<semaphore_mem>>) src(%arg10 : memref<512x256xbf16, #tpu.memory_space<any>>) dst(%arg16 : memref<512x256xbf16, #tpu.memory_space<vmem>>)
    %408 = arith.truncf %405 : vector<2x512xf32> to vector<2x512xbf16>
    %c0_332 = arith.constant 0 : index
    %c0_333 = arith.constant 0 : index
    %409 = vector.load %arg16[%c0_332, %c0_333] : memref<512x256xbf16, #tpu.memory_space<vmem>>, vector<512x256xbf16>
    %cst_334 = arith.constant dense<0.000000e+00> : vector<2x256xf32>
    %410 = tpu.matmul %408, %409, %cst_334 {dimension_numbers = #tpu.dot_dimension_numbers<[1], [0], [0], [1], [0, 0, 1, 1], [], []>} : vector<2x512xbf16>, vector<512x256xbf16>, vector<2x256xf32> -> vector<2x256xf32>
    %c0_335 = arith.constant 0 : index
    %c0_336 = arith.constant 0 : index
    %411 = vector.load %arg5[%c0_335, %c0_336] : memref<1x256xf32, #tpu.memory_space<vmem>>, vector<1x256xf32>
    %412 = vector.broadcast %411 : vector<1x256xf32> to vector<2x256xf32>
    %413 = arith.addf %410, %412 : vector<2x256xf32>
    %cst_337 = arith.constant 0.000000e+00 : f32
    %414 = vector.broadcast %cst_337 : f32 to vector<2x256xf32>
    %415 = arith.maximumf %413, %414 : vector<2x256xf32>
    %c3_i32_338 = arith.constant 3 : i32
    %416 = tpu.memref_slice %arg19[%c3_i32_338] : memref<5x!tpu.dma_semaphore, #tpu.memory_space<semaphore_mem>> -> memref<1x!tpu.dma_semaphore, #tpu.memory_space<semaphore_mem>>
    %417 = tpu.memref_squeeze %416 : memref<1x!tpu.dma_semaphore, #tpu.memory_space<semaphore_mem>> -> memref<!tpu.dma_semaphore, #tpu.memory_space<semaphore_mem>>
    tpu.wait_dma2 semaphore(%417 : memref<!tpu.dma_semaphore, #tpu.memory_space<semaphore_mem>>) src(%arg11 : memref<256x256xbf16, #tpu.memory_space<any>>) dst(%arg17 : memref<256x256xbf16, #tpu.memory_space<vmem>>)
    %418 = arith.truncf %415 : vector<2x256xf32> to vector<2x256xbf16>
    %c0_339 = arith.constant 0 : index
    %c0_340 = arith.constant 0 : index
    %419 = vector.load %arg17[%c0_339, %c0_340] : memref<256x256xbf16, #tpu.memory_space<vmem>>, vector<256x256xbf16>
    %cst_341 = arith.constant dense<0.000000e+00> : vector<2x256xf32>
    %420 = tpu.matmul %418, %419, %cst_341 {dimension_numbers = #tpu.dot_dimension_numbers<[1], [0], [0], [1], [0, 0, 1, 1], [], []>} : vector<2x256xbf16>, vector<256x256xbf16>, vector<2x256xf32> -> vector<2x256xf32>
    %c0_342 = arith.constant 0 : index
    %c0_343 = arith.constant 0 : index
    %421 = vector.load %arg6[%c0_342, %c0_343] : memref<1x256xf32, #tpu.memory_space<vmem>>, vector<1x256xf32>
    %422 = vector.broadcast %421 : vector<1x256xf32> to vector<2x256xf32>
    %423 = arith.addf %420, %422 : vector<2x256xf32>
    %cst_344 = arith.constant 0.000000e+00 : f32
    %424 = vector.broadcast %cst_344 : f32 to vector<2x256xf32>
    %425 = arith.maximumf %423, %424 : vector<2x256xf32>
    %c4_i32_345 = arith.constant 4 : i32
    %426 = tpu.memref_slice %arg19[%c4_i32_345] : memref<5x!tpu.dma_semaphore, #tpu.memory_space<semaphore_mem>> -> memref<1x!tpu.dma_semaphore, #tpu.memory_space<semaphore_mem>>
    %427 = tpu.memref_squeeze %426 : memref<1x!tpu.dma_semaphore, #tpu.memory_space<semaphore_mem>> -> memref<!tpu.dma_semaphore, #tpu.memory_space<semaphore_mem>>
    tpu.wait_dma2 semaphore(%427 : memref<!tpu.dma_semaphore, #tpu.memory_space<semaphore_mem>>) src(%arg12 : memref<256x128xbf16, #tpu.memory_space<any>>) dst(%arg18 : memref<256x128xbf16, #tpu.memory_space<vmem>>)
    %428 = arith.truncf %425 : vector<2x256xf32> to vector<2x256xbf16>
    %c0_346 = arith.constant 0 : index
    %c0_347 = arith.constant 0 : index
    %429 = vector.load %arg18[%c0_346, %c0_347] : memref<256x128xbf16, #tpu.memory_space<vmem>>, vector<256x128xbf16>
    %cst_348 = arith.constant dense<0.000000e+00> : vector<2x128xf32>
    %430 = tpu.matmul %428, %429, %cst_348 {dimension_numbers = #tpu.dot_dimension_numbers<[1], [0], [0], [1], [0, 0, 1, 1], [], []>} : vector<2x256xbf16>, vector<256x128xbf16>, vector<2x128xf32> -> vector<2x128xf32>
    %c0_349 = arith.constant 0 : index
    %c0_350 = arith.constant 0 : index
    %431 = vector.load %arg7[%c0_349, %c0_350] : memref<1x128xf32, #tpu.memory_space<vmem>>, vector<1x128xf32>
    %432 = vector.broadcast %431 : vector<1x128xf32> to vector<2x128xf32>
    %433 = arith.addf %430, %432 : vector<2x128xf32>
    %c0_351 = arith.constant 0 : index
    %c0_352 = arith.constant 0 : index
    %434 = vector.load %arg13[%c0_351, %c0_352] : memref<2x128xf32, #tpu.memory_space<vmem>>, vector<2x128xf32>
    tpu.vector_store %arg13[%c0_351, %c0_352], %433 {strides = array<i32>} : memref<2x128xf32, #tpu.memory_space<vmem>>, vector<2x128xf32>,
    return
  }
}

</mosaic_0001>

<llo_original>
// kernel: mol_filter_forward.1
$region0: #{mol_filter_forward.1}
  #allocation0 [shape = 'u32[]', space=smem, size = 0x4, offset = 0x4, fixed_abs, tag = 'smem constant byte address 0x4 - core index']
  #allocation1 [shape = 'u32[144,128]{1,0:T(1,128)}', space=vmem, size = 0x12000, scoped, tag = 'internal scratch']
  #allocation2 [shape = 'f32[1408,64]{1,0:T(8,128)}', space=vmem, size = 0xb0000, scoped, tag = 'scratch operand']
  #allocation3 [shape = 'bf16[1536,512]{1,0:T(8,128)(2,1)}', space=vmem, size = 0x180000, scoped, tag = 'scratch operand']
  #allocation4 [shape = 'bf16[512,256]{1,0:T(8,128)(2,1)}', space=vmem, size = 0x40000, scoped, tag = 'scratch operand']
  #allocation5 [shape = 'bf16[256,256]{1,0:T(8,128)(2,1)}', space=vmem, size = 0x20000, scoped, tag = 'scratch operand']
  #allocation6 [shape = 'bf16[256,128]{1,0:T(8,128)(2,1)}', space=vmem, size = 0x10000, scoped, tag = 'scratch operand']
  #allocation7 [shape = 's32[5]{0}', space=sflag, size = 0x14, scoped, tag = 'scratch operand']
  #allocation8 [shape = 'f32[240,128]{1,0:T(8,128)}', space=vmem, size = 0x1e000, scoped, tag = 'scratch operand']
  #allocation9 [shape = 'f32[128,128]{1,0:T(8,128)}', space=vmem, size = 0x10000, scoped, tag = 'scratch operand']
  #allocation10 [shape = 'f32[112,1408]{1,0:T(8,128)}', space=vmem, size = 0x9a000, scoped, tag = 'scratch operand']
  #allocation11 [shape = 'f32[112,64]{1,0:T(8,128)}', space=vmem, size = 0xe000, scoped, tag = 'scratch operand']
  #allocation12 [shape = 'f32[48,64]{1,0:T(8,128)}', space=vmem, size = 0x6000, scoped, tag = 'scratch operand']
  #allocation24 [shape = 's32[]', space=sflag, size = 0x4, offset = 0, fixed_abs, tag = 'sflag constant byte address 0x0 - dummy sync flag']
  #allocation25 [shape = 's32[]', space=sflag, size = 0x4, offset = 0, fixed_abs, tag = 'sflag constant byte address 0x0 - dummy sync flag']
  #allocation26 [shape = 's32[]', space=sflag, size = 0x4, offset = 0, fixed_abs, tag = 'sflag constant byte address 0x0 - dummy sync flag']
  #allocation27 [shape = 'u32[]', space=smem, size = 0x4, offset = 0x44, fixed_abs, tag = 'smem constant byte address 0x44 - assertion arg 0']
  #allocation28 [shape = 'u32[]', space=smem, size = 0x4, offset = 0x48, fixed_abs, tag = 'smem constant byte address 0x48 - assertion arg 1']
  #allocation29 [shape = 's32[]', space=sflag, size = 0x4, offset = 0, fixed_abs, tag = 'sflag constant byte address 0x0 - dummy sync flag']
  #allocation30 [shape = 's32[]', space=sflag, size = 0x4, offset = 0, fixed_abs, tag = 'sflag constant byte address 0x0 - dummy sync flag']
  #allocation31 [shape = 's32[]', space=sflag, size = 0x4, offset = 0, fixed_abs, tag = 'sflag constant byte address 0x0 - dummy sync flag']
  #allocation32 [shape = 's32[]', space=sflag, size = 0x4, offset = 0, fixed_abs, tag = 'sflag constant byte address 0x0 - dummy sync flag']
  #allocation33 [shape = 's32[]', space=sflag, size = 0x4, offset = 0, fixed_abs, tag = 'sflag constant byte address 0x0 - dummy sync flag']
  #allocation34 [shape = 's32[]', space=sflag, size = 0x4, offset = 0, fixed_abs, tag = 'sflag constant byte address 0x0 - dummy sync flag']
  %s0 = inlined_call_operand.vmem [shape: f32[2,128,1], index: 0, kind: input, shape index: {}]
  %s1 = inlined_call_operand.hbm [shape: f32[11,1,128], index: 1, kind: input, shape index: {}]
  %s2 = inlined_call_operand.hbm [shape: f32[2,128], index: 2, kind: input, shape index: {}]
  %s3 = inlined_call_operand.hbm [shape: f32[2,64], index: 3, kind: input, shape index: {}]
  %s4 = inlined_call_operand.hbm [shape: f32[1,512], index: 4, kind: input, shape index: {}]
  %s5 = inlined_call_operand.hbm [shape: f32[1,256], index: 5, kind: input, shape index: {}]
  %s6 = inlined_call_operand.hbm [shape: f32[1,256], index: 6, kind: input, shape index: {}]
  %s7 = inlined_call_operand.hbm [shape: f32[1,128], index: 7, kind: input, shape index: {}]
  %s8 = inlined_call_operand.vmem [shape: f32[1408,64], index: 8, kind: input, shape index: {}]
  %s9 = inlined_call_operand.hbm [shape: bf16[1536,512], index: 9, kind: input, shape index: {}]
  %s10 = inlined_call_operand.hbm [shape: bf16[512,256], index: 10, kind: input, shape index: {}]
  %s11 = inlined_call_operand.hbm [shape: bf16[256,256], index: 11, kind: input, shape index: {}]
  %s12 = inlined_call_operand.hbm [shape: bf16[256,128], index: 12, kind: input, shape index: {}]
  %s13 = inlined_call_operand.vmem [shape: f32[2,128], index: 13, kind: output, shape index: {}]
  %s14 = sld [smem:[#allocation0]]
  $region120: #{mol_filter_forward.1} parent=0
    _
  %s16 = ssub.s32 1, %s14
  %s17 = scalar_select 0, %s16, %s14
  $region1: #{mol_filter_forward.1} parent=0
    #allocation13 [shape = 'u8[5632]{0}', space=vmem, size = 0x1800, scoped, tag = 'input window, operand 1, single buffered']
    #allocation14 [shape = 's32[1]{0}', space=sflag, size = 0x4, scoped, tag = 'scoped memory for mol_filter_forward.1']
    #allocation15 [shape = 'u8[1024]{0}', space=vmem, size = 0x400, scoped, tag = 'input window, operand 2, single buffered']
    #allocation16 [shape = 's32[1]{0}', space=sflag, size = 0x4, scoped, tag = 'scoped memory for mol_filter_forward.1']
    #allocation17 [shape = 'u8[1024]{0}', space=vmem, size = 0x400, scoped, tag = 'input window, operand 3, single buffered']
    #allocation18 [shape = 'u8[2048]{0}', space=vmem, size = 0x800, scoped, tag = 'input window, operand 4, single buffered']
    #allocation19 [shape = 's32[1]{0}', space=sflag, size = 0x4, scoped, tag = 'scoped memory for mol_filter_forward.1']
    #allocation20 [shape = 'u8[1024]{0}', space=vmem, size = 0x400, scoped, tag = 'input window, operand 5, single buffered']
    #allocation21 [shape = 'u8[1024]{0}', space=vmem, size = 0x400, scoped, tag = 'input window, operand 6, single buffered']
    #allocation22 [shape = 's32[1]{0}', space=sflag, size = 0x4, scoped, tag = 'scoped memory for mol_filter_forward.1']
    #allocation23 [shape = 'u8[512]{0}', space=vmem, size = 0x400, scoped, tag = 'input window, operand 7, single buffered']
    %18 = vsyncpa [#allocation14], 0
    %19 = vsyncpa [#allocation16], 0
    %20 = vsyncpa [#allocation19], 0
    %21 = vsyncpa [#allocation22], 0
    // Predicated region
    $region2: #{mol_filter_forward.1} parent=1 // pred_check
      _
    $region3: #{mol_filter_forward.1} parent=1 // pred_check_branch
      %23 = sbr.rel (0) target = $region5
    $region4: #{mol_filter_forward.1} parent=1 // pred_region
      _
    $region5: #{mol_filter_forward.1} parent=1 // pred_fallthru
      _
    // Predicated region
    $region6: #{mol_filter_forward.1} parent=1 // pred_check
      _
    $region7: #{mol_filter_forward.1} parent=1 // pred_check_branch
      %25 = sbr.rel (0) target = $region9
    $region8: #{mol_filter_forward.1} parent=1 // pred_region
      %s27 = ssub.s32 176, 176
      %28 = vsyncadd [#allocation14], %s27
      %s29 = sshll.u32 [#allocation13], 4
      %s30 = int_to_ptr.vmem [resolvable:$true] %s29
      %35 = dma.hbm_to_vmem [thread:$0]  %s1, 176, %s30, [#allocation14], 16, 16, 1
    $region9: #{mol_filter_forward.1} parent=1 // pred_fallthru
      _
    // Predicated region
    $region10: #{mol_filter_forward.1} parent=1 // pred_check
      _
    $region11: #{mol_filter_forward.1} parent=1 // pred_check_branch
      %37 = sbr.rel (0) target = $region13
    $region12: #{mol_filter_forward.1} parent=1 // pred_region
      %s39 = ssub.s32 32, 32
      %40 = vsyncadd [#allocation16], %s39
      %s42 = sshll.u32 [#allocation15], 4
      %s43 = int_to_ptr.vmem [resolvable:$true] %s42
      %45 = dma.hbm_to_vmem [thread:$0]  %s2, 32, %s43, [#allocation16]
    $region13: #{mol_filter_forward.1} parent=1 // pred_fallthru
      _
    // Predicated region
    $region14: #{mol_filter_forward.1} parent=1 // pred_check
      _
    $region15: #{mol_filter_forward.1} parent=1 // pred_check_branch
      %47 = sbr.rel (0) target = $region17
    $region16: #{mol_filter_forward.1} parent=1 // pred_region
      %s49 = ssub.s32 32, 32
      %50 = vsyncadd [#allocation16], %s49
      %s52 = sshll.u32 [#allocation17], 4
      %s53 = int_to_ptr.vmem [resolvable:$true] %s52
      %55 = dma.hbm_to_vmem [thread:$0]  %s3, 32, %s53, [#allocation16]
    $region17: #{mol_filter_forward.1} parent=1 // pred_fallthru
      _
    // Predicated region
    $region18: #{mol_filter_forward.1} parent=1 // pred_check
      _
    $region19: #{mol_filter_forward.1} parent=1 // pred_check_branch
      %57 = sbr.rel (0) target = $region21
    $region20: #{mol_filter_forward.1} parent=1 // pred_region
      %s59 = ssub.s32 64, 64
      %60 = vsyncadd [#allocation19], %s59
      %s62 = sshll.u32 [#allocation18], 4
      %s63 = int_to_ptr.vmem [resolvable:$true] %s62
      %65 = dma.hbm_to_vmem [thread:$0]  %s4, 64, %s63, [#allocation19]
    $region21: #{mol_filter_forward.1} parent=1 // pred_fallthru
      _
    // Predicated region
    $region22: #{mol_filter_forward.1} parent=1 // pred_check
      _
    $region23: #{mol_filter_forward.1} parent=1 // pred_check_branch
      %67 = sbr.rel (0) target = $region25
    $region24: #{mol_filter_forward.1} parent=1 // pred_region
      %s69 = ssub.s32 32, 32
      %70 = vsyncadd [#allocation19], %s69
      %s72 = sshll.u32 [#allocation20], 4
      %s73 = int_to_ptr.vmem [resolvable:$true] %s72
      %75 = dma.hbm_to_vmem [thread:$0]  %s5, 32, %s73, [#allocation19]
    $region25: #{mol_filter_forward.1} parent=1 // pred_fallthru
      _
    // Predicated region
    $region26: #{mol_filter_forward.1} parent=1 // pred_check
      _
    $region27: #{mol_filter_forward.1} parent=1 // pred_check_branch
      %77 = sbr.rel (0) target = $region29
    $region28: #{mol_filter_forward.1} parent=1 // pred_region
      %s79 = ssub.s32 32, 32
      %80 = vsyncadd [#allocation22], %s79
      %s82 = sshll.u32 [#allocation21], 4
      %s83 = int_to_ptr.vmem [resolvable:$true] %s82
      %85 = dma.hbm_to_vmem [thread:$0]  %s6, 32, %s83, [#allocation22]
    $region29: #{mol_filter_forward.1} parent=1 // pred_fallthru
      _
    // Predicated region
    $region30: #{mol_filter_forward.1} parent=1 // pred_check
      _
    $region31: #{mol_filter_forward.1} parent=1 // pred_check_branch
      %87 = sbr.rel (0) target = $region33
    $region32: #{mol_filter_forward.1} parent=1 // pred_region
      %s89 = ssub.s32 16, 16
      %90 = vsyncadd [#allocation22], %s89
      %s92 = sshll.u32 [#allocation23], 4
      %s93 = int_to_ptr.vmem [resolvable:$true] %s92
      %95 = dma.hbm_to_vmem [thread:$0]  %s7, 16, %s93, [#allocation22]
    $region33: #{mol_filter_forward.1} parent=1 // pred_fallthru
      _
    // Predicated region
    $region34: #{mol_filter_forward.1} parent=1 // pred_check
      _
    $region35: #{mol_filter_forward.1} parent=1 // pred_check_branch
      %97 = sbr.rel (0) target = $region37
    $region36: #{mol_filter_forward.1} parent=1 // pred_region
      %98 = dma.done [#allocation14], 176
    $region37: #{mol_filter_forward.1} parent=1 // pred_fallthru
      _
    // Predicated region
    $region38: #{mol_filter_forward.1} parent=1 // pred_check
      _
    $region39: #{mol_filter_forward.1} parent=1 // pred_check_branch
      %100 = sbr.rel (0) target = $region41
    $region40: #{mol_filter_forward.1} parent=1 // pred_region
      %101 = dma.done [#allocation16], 32
    $region41: #{mol_filter_forward.1} parent=1 // pred_fallthru
      _
    // Predicated region
    $region42: #{mol_filter_forward.1} parent=1 // pred_check
      _
    $region43: #{mol_filter_forward.1} parent=1 // pred_check_branch
      %103 = sbr.rel (0) target = $region45
    $region44: #{mol_filter_forward.1} parent=1 // pred_region
      %104 = dma.done [#allocation16], 32
    $region45: #{mol_filter_forward.1} parent=1 // pred_fallthru
      _
    // Predicated region
    $region46: #{mol_filter_forward.1} parent=1 // pred_check
      _
    $region47: #{mol_filter_forward.1} parent=1 // pred_check_branch
      %106 = sbr.rel (0) target = $region49
    $region48: #{mol_filter_forward.1} parent=1 // pred_region
      %107 = dma.done [#allocation19], 64
    $region49: #{mol_filter_forward.1} parent=1 // pred_fallthru
      _
    // Predicated region
    $region50: #{mol_filter_forward.1} parent=1 // pred_check
      _
    $region51: #{mol_filter_forward.1} parent=1 // pred_check_branch
      %109 = sbr.rel (0) target = $region53
    $region52: #{mol_filter_forward.1} parent=1 // pred_region
      %110 = dma.done [#allocation19], 32
    $region53: #{mol_filter_forward.1} parent=1 // pred_fallthru
      _
    // Predicated region
    $region54: #{mol_filter_forward.1} parent=1 // pred_check
      _
    $region55: #{mol_filter_forward.1} parent=1 // pred_check_branch
      %112 = sbr.rel (0) target = $region57
    $region56: #{mol_filter_forward.1} parent=1 // pred_region
      %113 = dma.done [#allocation22], 32
    $region57: #{mol_filter_forward.1} parent=1 // pred_fallthru
      _
    // Predicated region
    $region58: #{mol_filter_forward.1} parent=1 // pred_check
      _
    $region59: #{mol_filter_forward.1} parent=1 // pred_check_branch
      %115 = sbr.rel (0) target = $region61
    $region60: #{mol_filter_forward.1} parent=1 // pred_region
      %116 = dma.done [#allocation22], 16
    $region61: #{mol_filter_forward.1} parent=1 // pred_fallthru
      _
    %p119 = scmp.lt.u32.totalorder 1408, 8
    %p120 = pneg %p119
    // Predicated region
    $region62: #{mol_filter_forward.1} parent=1 // pred_check
      _
    $region63: #{mol_filter_forward.1} parent=1 // pred_check_branch
      %122 = sbr.rel (%p119) target = $region65
    $region64: #{mol_filter_forward.1} parent=1 // pred_region
      %s138 = sand.u32 1408, 7
      %p139 = scmp.eq.s32.totalorder %s138, 0
      // Predicated region
      $region77: #{mol_filter_forward.1} parent=64 // pred_check
        %p140 = pneg %p139
      $region78: #{mol_filter_forward.1} parent=64 // pred_check_branch
        %142 = sbr.rel (%p140) target = $region80
      $region79: #{mol_filter_forward.1} parent=64 // pred_region
        loop: start=0, step=1, limit=1
        $region81: #{mol_filter_forward.1} parent=79 // loop_pre_header
          _
        $region82: #{mol_filter_forward.1} parent=79 // loop_header
          %s144 = sphi 0, %s148
          %p145 = scmp.ge.s32.totalorder %s144, 1
          %s149 = sphi %s8, %s8
          %s150 = sphi [#allocation2], [#allocation2]
        $region83: #{mol_filter_forward.1} parent=79 // loop_header_branch
          %147 = sbr.rel (%p145) target = $region87
        $region84: #{mol_filter_forward.1} parent=79 // loop_body
          %v151 = vld [vmem:[%s149] sm:$0xff]
          %152 = vst [vmem:[%s150] sm:$0xff] %v151
          %v153 = vld [vmem:[%s149 + $0x8] sm:$0xff]
          %154 = vst [vmem:[%s150 + $0x8] sm:$0xff] %v153
          %v155 = vld [vmem:[%s149 + $0x10] sm:$0xff]
          %156 = vst [vmem:[%s150 + $0x10] sm:$0xff] %v155
          %v157 = vld [vmem:[%s149 + $0x18] sm:$0xff]
          %158 = vst [vmem:[%s150 + $0x18] sm:$0xff] %v157
          %v159 = vld [vmem:[%s149 + $0x20] sm:$0xff]
          %160 = vst [vmem:[%s150 + $0x20] sm:$0xff] %v159
          %v161 = vld [vmem:[%s149 + $0x28] sm:$0xff]
          %162 = vst [vmem:[%s150 + $0x28] sm:$0xff] %v161
          %v163 = vld [vmem:[%s149 + $0x30] sm:$0xff]
          %164 = vst [vmem:[%s150 + $0x30] sm:$0xff] %v163
          %v165 = vld [vmem:[%s149 + $0x38] sm:$0xff]
          %166 = vst [vmem:[%s150 + $0x38] sm:$0xff] %v165
          %v167 = vld [vmem:[%s149 + $0x40] sm:$0xff]
          %168 = vst [vmem:[%s150 + $0x40] sm:$0xff] %v167
          %v169 = vld [vmem:[%s149 + $0x48] sm:$0xff]
          %170 = vst [vmem:[%s150 + $0x48] sm:$0xff] %v169
          %v171 = vld [vmem:[%s149 + $0x50] sm:$0xff]
          %172 = vst [vmem:[%s150 + $0x50] sm:$0xff] %v171
          %v173 = vld [vmem:[%s149 + $0x58] sm:$0xff]
          %174 = vst [vmem:[%s150 + $0x58] sm:$0xff] %v173
          %v175 = vld [vmem:[%s149 + $0x60] sm:$0xff]
          %176 = vst [vmem:[%s150 + $0x60] sm:$0xff] %v175
          %v177 = vld [vmem:[%s149 + $0x68] sm:$0xff]
          %178 = vst [vmem:[%s150 + $0x68] sm:$0xff] %v177
          %v179 = vld [vmem:[%s149 + $0x70] sm:$0xff]
          %180 = vst [vmem:[%s150 + $0x70] sm:$0xff] %v179
          %v181 = vld [vmem:[%s149 + $0x78] sm:$0xff]
          %182 = vst [vmem:[%s150 + $0x78] sm:$0xff] %v181
          %v183 = vld [vmem:[%s149 + $0x80] sm:$0xff]
          %184 = vst [vmem:[%s150 + $0x80] sm:$0xff] %v183
          %v185 = vld [vmem:[%s149 + $0x88] sm:$0xff]
          %186 = vst [vmem:[%s150 + $0x88] sm:$0xff] %v185
          %v187 = vld [vmem:[%s149 + $0x90] sm:$0xff]
          %188 = vst [vmem:[%s150 + $0x90] sm:$0xff] %v187
          %v189 = vld [vmem:[%s149 + $0x98] sm:$0xff]
          %190 = vst [vmem:[%s150 + $0x98] sm:$0xff] %v189
          %v191 = vld [vmem:[%s149 + $0xa0] sm:$0xff]
          %192 = vst [vmem:[%s150 + $0xa0] sm:$0xff] %v191
          %v193 = vld [vmem:[%s149 + $0xa8] sm:$0xff]
          %194 = vst [vmem:[%s150 + $0xa8] sm:$0xff] %v193
          %v195 = vld [vmem:[%s149 + $0xb0] sm:$0xff]
          %196 = vst [vmem:[%s150 + $0xb0] sm:$0xff] %v195
          %v197 = vld [vmem:[%s149 + $0xb8] sm:$0xff]
          %198 = vst [vmem:[%s150 + $0xb8] sm:$0xff] %v197
          %v199 = vld [vmem:[%s149 + $0xc0] sm:$0xff]
          %200 = vst [vmem:[%s150 + $0xc0] sm:$0xff] %v199
          %v201 = vld [vmem:[%s149 + $0xc8] sm:$0xff]
          %202 = vst [vmem:[%s150 + $0xc8] sm:$0xff] %v201
          %v203 = vld [vmem:[%s149 + $0xd0] sm:$0xff]
          %204 = vst [vmem:[%s150 + $0xd0] sm:$0xff] %v203
          %v205 = vld [vmem:[%s149 + $0xd8] sm:$0xff]
          %206 = vst [vmem:[%s150 + $0xd8] sm:$0xff] %v205
          %v207 = vld [vmem:[%s149 + $0xe0] sm:$0xff]
          %208 = vst [vmem:[%s150 + $0xe0] sm:$0xff] %v207
          %v209 = vld [vmem:[%s149 + $0xe8] sm:$0xff]
          %210 = vst [vmem:[%s150 + $0xe8] sm:$0xff] %v209
          %v211 = vld [vmem:[%s149 + $0xf0] sm:$0xff]
          %212 = vst [vmem:[%s150 + $0xf0] sm:$0xff] %v211
          %v213 = vld [vmem:[%s149 + $0xf8] sm:$0xff]
          %214 = vst [vmem:[%s150 + $0xf8] sm:$0xff] %v213
          %v215 = vld [vmem:[%s149 + $0x100] sm:$0xff]
          %216 = vst [vmem:[%s150 + $0x100] sm:$0xff] %v215
          %v217 = vld [vmem:[%s149 + $0x108] sm:$0xff]
          %218 = vst [vmem:[%s150 + $0x108] sm:$0xff] %v217
          %v219 = vld [vmem:[%s149 + $0x110] sm:$0xff]
          %220 = vst [vmem:[%s150 + $0x110] sm:$0xff] %v219
          %v221 = vld [vmem:[%s149 + $0x118] sm:$0xff]
          %222 = vst [vmem:[%s150 + $0x118] sm:$0xff] %v221
          %v223 = vld [vmem:[%s149 + $0x120] sm:$0xff]
          %224 = vst [vmem:[%s150 + $0x120] sm:$0xff] %v223
          %v225 = vld [vmem:[%s149 + $0x128] sm:$0xff]
          %226 = vst [vmem:[%s150 + $0x128] sm:$0xff] %v225
          %v227 = vld [vmem:[%s149 + $0x130] sm:$0xff]
          %228 = vst [vmem:[%s150 + $0x130] sm:$0xff] %v227
          %v229 = vld [vmem:[%s149 + $0x138] sm:$0xff]
          %230 = vst [vmem:[%s150 + $0x138] sm:$0xff] %v229
          %v231 = vld [vmem:[%s149 + $0x140] sm:$0xff]
          %232 = vst [vmem:[%s150 + $0x140] sm:$0xff] %v231
          %v233 = vld [vmem:[%s149 + $0x148] sm:$0xff]
          %234 = vst [vmem:[%s150 + $0x148] sm:$0xff] %v233
          %v235 = vld [vmem:[%s149 + $0x150] sm:$0xff]
          %236 = vst [vmem:[%s150 + $0x150] sm:$0xff] %v235
          %v237 = vld [vmem:[%s149 + $0x158] sm:$0xff]
          %238 = vst [vmem:[%s150 + $0x158] sm:$0xff] %v237
          %v239 = vld [vmem:[%s149 + $0x160] sm:$0xff]
          %240 = vst [vmem:[%s150 + $0x160] sm:$0xff] %v239
          %v241 = vld [vmem:[%s149 + $0x168] sm:$0xff]
          %242 = vst [vmem:[%s150 + $0x168] sm:$0xff] %v241
          %v243 = vld [vmem:[%s149 + $0x170] sm:$0xff]
          %244 = vst [vmem:[%s150 + $0x170] sm:$0xff] %v243
          %v245 = vld [vmem:[%s149 + $0x178] sm:$0xff]
          %246 = vst [vmem:[%s150 + $0x178] sm:$0xff] %v245
          %v247 = vld [vmem:[%s149 + $0x180] sm:$0xff]
          %248 = vst [vmem:[%s150 + $0x180] sm:$0xff] %v247
          %v249 = vld [vmem:[%s149 + $0x188] sm:$0xff]
          %250 = vst [vmem:[%s150 + $0x188] sm:$0xff] %v249
          %v251 = vld [vmem:[%s149 + $0x190] sm:$0xff]
          %252 = vst [vmem:[%s150 + $0x190] sm:$0xff] %v251
          %v253 = vld [vmem:[%s149 + $0x198] sm:$0xff]
          %254 = vst [vmem:[%s150 + $0x198] sm:$0xff] %v253
          %v255 = vld [vmem:[%s149 + $0x1a0] sm:$0xff]
          %256 = vst [vmem:[%s150 + $0x1a0] sm:$0xff] %v255
          %v257 = vld [vmem:[%s149 + $0x1a8] sm:$0xff]
          %258 = vst [vmem:[%s150 + $0x1a8] sm:$0xff] %v257
          %v259 = vld [vmem:[%s149 + $0x1b0] sm:$0xff]
          %260 = vst [vmem:[%s150 + $0x1b0] sm:$0xff] %v259
          %v261 = vld [vmem:[%s149 + $0x1b8] sm:$0xff]
          %262 = vst [vmem:[%s150 + $0x1b8] sm:$0xff] %v261
          %v263 = vld [vmem:[%s149 + $0x1c0] sm:$0xff]
          %264 = vst [vmem:[%s150 + $0x1c0] sm:$0xff] %v263
          %v265 = vld [vmem:[%s149 + $0x1c8] sm:$0xff]
          %266 = vst [vmem:[%s150 + $0x1c8] sm:$0xff] %v265
          %v267 = vld [vmem:[%s149 + $0x1d0] sm:$0xff]
          %268 = vst [vmem:[%s150 + $0x1d0] sm:$0xff] %v267
          %v269 = vld [vmem:[%s149 + $0x1d8] sm:$0xff]
          %270 = vst [vmem:[%s150 + $0x1d8] sm:$0xff] %v269
          %v271 = vld [vmem:[%s149 + $0x1e0] sm:$0xff]
          %272 = vst [vmem:[%s150 + $0x1e0] sm:$0xff] %v271
          %v273 = vld [vmem:[%s149 + $0x1e8] sm:$0xff]
          %274 = vst [vmem:[%s150 + $0x1e8] sm:$0xff] %v273
          %v275 = vld [vmem:[%s149 + $0x1f0] sm:$0xff]
          %276 = vst [vmem:[%s150 + $0x1f0] sm:$0xff] %v275
          %v277 = vld [vmem:[%s149 + $0x1f8] sm:$0xff]
          %278 = vst [vmem:[%s150 + $0x1f8] sm:$0xff] %v277
          %v279 = vld [vmem:[%s149 + $0x200] sm:$0xff]
          %280 = vst [vmem:[%s150 + $0x200] sm:$0xff] %v279
          %v281 = vld [vmem:[%s149 + $0x208] sm:$0xff]
          %282 = vst [vmem:[%s150 + $0x208] sm:$0xff] %v281
          %v283 = vld [vmem:[%s149 + $0x210] sm:$0xff]
          %284 = vst [vmem:[%s150 + $0x210] sm:$0xff] %v283
          %v285 = vld [vmem:[%s149 + $0x218] sm:$0xff]
          %286 = vst [vmem:[%s150 + $0x218] sm:$0xff] %v285
          %v287 = vld [vmem:[%s149 + $0x220] sm:$0xff]
          %288 = vst [vmem:[%s150 + $0x220] sm:$0xff] %v287
          %v289 = vld [vmem:[%s149 + $0x228] sm:$0xff]
          %290 = vst [vmem:[%s150 + $0x228] sm:$0xff] %v289
          %v291 = vld [vmem:[%s149 + $0x230] sm:$0xff]
          %292 = vst [vmem:[%s150 + $0x230] sm:$0xff] %v291
          %v293 = vld [vmem:[%s149 + $0x238] sm:$0xff]
          %294 = vst [vmem:[%s150 + $0x238] sm:$0xff] %v293
          %v295 = vld [vmem:[%s149 + $0x240] sm:$0xff]
          %296 = vst [vmem:[%s150 + $0x240] sm:$0xff] %v295
          %v297 = vld [vmem:[%s149 + $0x248] sm:$0xff]
          %298 = vst [vmem:[%s150 + $0x248] sm:$0xff] %v297
          %v299 = vld [vmem:[%s149 + $0x250] sm:$0xff]
          %300 = vst [vmem:[%s150 + $0x250] sm:$0xff] %v299
          %v301 = vld [vmem:[%s149 + $0x258] sm:$0xff]
          %302 = vst [vmem:[%s150 + $0x258] sm:$0xff] %v301
          %v303 = vld [vmem:[%s149 + $0x260] sm:$0xff]
          %304 = vst [vmem:[%s150 + $0x260] sm:$0xff] %v303
          %v305 = vld [vmem:[%s149 + $0x268] sm:$0xff]
          %306 = vst [vmem:[%s150 + $0x268] sm:$0xff] %v305
          %v307 = vld [vmem:[%s149 + $0x270] sm:$0xff]
          %308 = vst [vmem:[%s150 + $0x270] sm:$0xff] %v307
          %v309 = vld [vmem:[%s149 + $0x278] sm:$0xff]
          %310 = vst [vmem:[%s150 + $0x278] sm:$0xff] %v309
          %v311 = vld [vmem:[%s149 + $0x280] sm:$0xff]
          %312 = vst [vmem:[%s150 + $0x280] sm:$0xff] %v311
          %v313 = vld [vmem:[%s149 + $0x288] sm:$0xff]
          %314 = vst [vmem:[%s150 + $0x288] sm:$0xff] %v313
          %v315 = vld [vmem:[%s149 + $0x290] sm:$0xff]
          %316 = vst [vmem:[%s150 + $0x290] sm:$0xff] %v315
          %v317 = vld [vmem:[%s149 + $0x298] sm:$0xff]
          %318 = vst [vmem:[%s150 + $0x298] sm:$0xff] %v317
          %v319 = vld [vmem:[%s149 + $0x2a0] sm:$0xff]
          %320 = vst [vmem:[%s150 + $0x2a0] sm:$0xff] %v319
          %v321 = vld [vmem:[%s149 + $0x2a8] sm:$0xff]
          %322 = vst [vmem:[%s150 + $0x2a8] sm:$0xff] %v321
          %v323 = vld [vmem:[%s149 + $0x2b0] sm:$0xff]
          %324 = vst [vmem:[%s150 + $0x2b0] sm:$0xff] %v323
          %v325 = vld [vmem:[%s149 + $0x2b8] sm:$0xff]
          %326 = vst [vmem:[%s150 + $0x2b8] sm:$0xff] %v325
          %v327 = vld [vmem:[%s149 + $0x2c0] sm:$0xff]
          %328 = vst [vmem:[%s150 + $0x2c0] sm:$0xff] %v327
          %v329 = vld [vmem:[%s149 + $0x2c8] sm:$0xff]
          %330 = vst [vmem:[%s150 + $0x2c8] sm:$0xff] %v329
          %v331 = vld [vmem:[%s149 + $0x2d0] sm:$0xff]
          %332 = vst [vmem:[%s150 + $0x2d0] sm:$0xff] %v331
          %v333 = vld [vmem:[%s149 + $0x2d8] sm:$0xff]
          %334 = vst [vmem:[%s150 + $0x2d8] sm:$0xff] %v333
          %v335 = vld [vmem:[%s149 + $0x2e0] sm:$0xff]
          %336 = vst [vmem:[%s150 + $0x2e0] sm:$0xff] %v335
          %v337 = vld [vmem:[%s149 + $0x2e8] sm:$0xff]
          %338 = vst [vmem:[%s150 + $0x2e8] sm:$0xff] %v337
          %v339 = vld [vmem:[%s149 + $0x2f0] sm:$0xff]
          %340 = vst [vmem:[%s150 + $0x2f0] sm:$0xff] %v339
          %v341 = vld [vmem:[%s149 + $0x2f8] sm:$0xff]
          %342 = vst [vmem:[%s150 + $0x2f8] sm:$0xff] %v341
          %v343 = vld [vmem:[%s149 + $0x300] sm:$0xff]
          %344 = vst [vmem:[%s150 + $0x300] sm:$0xff] %v343
          %v345 = vld [vmem:[%s149 + $0x308] sm:$0xff]
          %346 = vst [vmem:[%s150 + $0x308] sm:$0xff] %v345
          %v347 = vld [vmem:[%s149 + $0x310] sm:$0xff]
          %348 = vst [vmem:[%s150 + $0x310] sm:$0xff] %v347
          %v349 = vld [vmem:[%s149 + $0x318] sm:$0xff]
          %350 = vst [vmem:[%s150 + $0x318] sm:$0xff] %v349
          %v351 = vld [vmem:[%s149 + $0x320] sm:$0xff]
          %352 = vst [vmem:[%s150 + $0x320] sm:$0xff] %v351
          %v353 = vld [vmem:[%s149 + $0x328] sm:$0xff]
          %354 = vst [vmem:[%s150 + $0x328] sm:$0xff] %v353
          %v355 = vld [vmem:[%s149 + $0x330] sm:$0xff]
          %356 = vst [vmem:[%s150 + $0x330] sm:$0xff] %v355
          %v357 = vld [vmem:[%s149 + $0x338] sm:$0xff]
          %358 = vst [vmem:[%s150 + $0x338] sm:$0xff] %v357
          %v359 = vld [vmem:[%s149 + $0x340] sm:$0xff]
          %360 = vst [vmem:[%s150 + $0x340] sm:$0xff] %v359
          %v361 = vld [vmem:[%s149 + $0x348] sm:$0xff]
          %362 = vst [vmem:[%s150 + $0x348] sm:$0xff] %v361
          %v363 = vld [vmem:[%s149 + $0x350] sm:$0xff]
          %364 = vst [vmem:[%s150 + $0x350] sm:$0xff] %v363
          %v365 = vld [vmem:[%s149 + $0x358] sm:$0xff]
          %366 = vst [vmem:[%s150 + $0x358] sm:$0xff] %v365
          %v367 = vld [vmem:[%s149 + $0x360] sm:$0xff]
          %368 = vst [vmem:[%s150 + $0x360] sm:$0xff] %v367
          %v369 = vld [vmem:[%s149 + $0x368] sm:$0xff]
          %370 = vst [vmem:[%s150 + $0x368] sm:$0xff] %v369
          %v371 = vld [vmem:[%s149 + $0x370] sm:$0xff]
          %372 = vst [vmem:[%s150 + $0x370] sm:$0xff] %v371
          %v373 = vld [vmem:[%s149 + $0x378] sm:$0xff]
          %374 = vst [vmem:[%s150 + $0x378] sm:$0xff] %v373
          %v375 = vld [vmem:[%s149 + $0x380] sm:$0xff]
          %376 = vst [vmem:[%s150 + $0x380] sm:$0xff] %v375
          %v377 = vld [vmem:[%s149 + $0x388] sm:$0xff]
          %378 = vst [vmem:[%s150 + $0x388] sm:$0xff] %v377
          %v379 = vld [vmem:[%s149 + $0x390] sm:$0xff]
          %380 = vst [vmem:[%s150 + $0x390] sm:$0xff] %v379
          %v381 = vld [vmem:[%s149 + $0x398] sm:$0xff]
          %382 = vst [vmem:[%s150 + $0x398] sm:$0xff] %v381
          %v383 = vld [vmem:[%s149 + $0x3a0] sm:$0xff]
          %384 = vst [vmem:[%s150 + $0x3a0] sm:$0xff] %v383
          %v385 = vld [vmem:[%s149 + $0x3a8] sm:$0xff]
          %386 = vst [vmem:[%s150 + $0x3a8] sm:$0xff] %v385
          %v387 = vld [vmem:[%s149 + $0x3b0] sm:$0xff]
          %388 = vst [vmem:[%s150 + $0x3b0] sm:$0xff] %v387
          %v389 = vld [vmem:[%s149 + $0x3b8] sm:$0xff]
          %390 = vst [vmem:[%s150 + $0x3b8] sm:$0xff] %v389
          %v391 = vld [vmem:[%s149 + $0x3c0] sm:$0xff]
          %392 = vst [vmem:[%s150 + $0x3c0] sm:$0xff] %v391
          %v393 = vld [vmem:[%s149 + $0x3c8] sm:$0xff]
          %394 = vst [vmem:[%s150 + $0x3c8] sm:$0xff] %v393
          %v395 = vld [vmem:[%s149 + $0x3d0] sm:$0xff]
          %396 = vst [vmem:[%s150 + $0x3d0] sm:$0xff] %v395
          %v397 = vld [vmem:[%s149 + $0x3d8] sm:$0xff]
          %398 = vst [vmem:[%s150 + $0x3d8] sm:$0xff] %v397
          %v399 = vld [vmem:[%s149 + $0x3e0] sm:$0xff]
          %400 = vst [vmem:[%s150 + $0x3e0] sm:$0xff] %v399
          %v401 = vld [vmem:[%s149 + $0x3e8] sm:$0xff]
          %402 = vst [vmem:[%s150 + $0x3e8] sm:$0xff] %v401
          %v403 = vld [vmem:[%s149 + $0x3f0] sm:$0xff]
          %404 = vst [vmem:[%s150 + $0x3f0] sm:$0xff] %v403
          %v405 = vld [vmem:[%s149 + $0x3f8] sm:$0xff]
          %406 = vst [vmem:[%s150 + $0x3f8] sm:$0xff] %v405
          %v407 = vld [vmem:[%s149 + $0x400] sm:$0xff]
          %408 = vst [vmem:[%s150 + $0x400] sm:$0xff] %v407
          %v409 = vld [vmem:[%s149 + $0x408] sm:$0xff]
          %410 = vst [vmem:[%s150 + $0x408] sm:$0xff] %v409
          %v411 = vld [vmem:[%s149 + $0x410] sm:$0xff]
          %412 = vst [vmem:[%s150 + $0x410] sm:$0xff] %v411
          %v413 = vld [vmem:[%s149 + $0x418] sm:$0xff]
          %414 = vst [vmem:[%s150 + $0x418] sm:$0xff] %v413
          %v415 = vld [vmem:[%s149 + $0x420] sm:$0xff]
          %416 = vst [vmem:[%s150 + $0x420] sm:$0xff] %v415
          %v417 = vld [vmem:[%s149 + $0x428] sm:$0xff]
          %418 = vst [vmem:[%s150 + $0x428] sm:$0xff] %v417
          %v419 = vld [vmem:[%s149 + $0x430] sm:$0xff]
          %420 = vst [vmem:[%s150 + $0x430] sm:$0xff] %v419
          %v421 = vld [vmem:[%s149 + $0x438] sm:$0xff]
          %422 = vst [vmem:[%s150 + $0x438] sm:$0xff] %v421
          %v423 = vld [vmem:[%s149 + $0x440] sm:$0xff]
          %424 = vst [vmem:[%s150 + $0x440] sm:$0xff] %v423
          %v425 = vld [vmem:[%s149 + $0x448] sm:$0xff]
          %426 = vst [vmem:[%s150 + $0x448] sm:$0xff] %v425
          %v427 = vld [vmem:[%s149 + $0x450] sm:$0xff]
          %428 = vst [vmem:[%s150 + $0x450] sm:$0xff] %v427
          %v429 = vld [vmem:[%s149 + $0x458] sm:$0xff]
          %430 = vst [vmem:[%s150 + $0x458] sm:$0xff] %v429
          %v431 = vld [vmem:[%s149 + $0x460] sm:$0xff]
          %432 = vst [vmem:[%s150 + $0x460] sm:$0xff] %v431
          %v433 = vld [vmem:[%s149 + $0x468] sm:$0xff]
          %434 = vst [vmem:[%s150 + $0x468] sm:$0xff] %v433
          %v435 = vld [vmem:[%s149 + $0x470] sm:$0xff]
          %436 = vst [vmem:[%s150 + $0x470] sm:$0xff] %v435
          %v437 = vld [vmem:[%s149 + $0x478] sm:$0xff]
          %438 = vst [vmem:[%s150 + $0x478] sm:$0xff] %v437
          %v439 = vld [vmem:[%s149 + $0x480] sm:$0xff]
          %440 = vst [vmem:[%s150 + $0x480] sm:$0xff] %v439
          %v441 = vld [vmem:[%s149 + $0x488] sm:$0xff]
          %442 = vst [vmem:[%s150 + $0x488] sm:$0xff] %v441
          %v443 = vld [vmem:[%s149 + $0x490] sm:$0xff]
          %444 = vst [vmem:[%s150 + $0x490] sm:$0xff] %v443
          %v445 = vld [vmem:[%s149 + $0x498] sm:$0xff]
          %446 = vst [vmem:[%s150 + $0x498] sm:$0xff] %v445
          %v447 = vld [vmem:[%s149 + $0x4a0] sm:$0xff]
          %448 = vst [vmem:[%s150 + $0x4a0] sm:$0xff] %v447
          %v449 = vld [vmem:[%s149 + $0x4a8] sm:$0xff]
          %450 = vst [vmem:[%s150 + $0x4a8] sm:$0xff] %v449
          %v451 = vld [vmem:[%s149 + $0x4b0] sm:$0xff]
          %452 = vst [vmem:[%s150 + $0x4b0] sm:$0xff] %v451
          %v453 = vld [vmem:[%s149 + $0x4b8] sm:$0xff]
          %454 = vst [vmem:[%s150 + $0x4b8] sm:$0xff] %v453
          %v455 = vld [vmem:[%s149 + $0x4c0] sm:$0xff]
          %456 = vst [vmem:[%s150 + $0x4c0] sm:$0xff] %v455
          %v457 = vld [vmem:[%s149 + $0x4c8] sm:$0xff]
          %458 = vst [vmem:[%s150 + $0x4c8] sm:$0xff] %v457
          %v459 = vld [vmem:[%s149 + $0x4d0] sm:$0xff]
          %460 = vst [vmem:[%s150 + $0x4d0] sm:$0xff] %v459
          %v461 = vld [vmem:[%s149 + $0x4d8] sm:$0xff]
          %462 = vst [vmem:[%s150 + $0x4d8] sm:$0xff] %v461
          %v463 = vld [vmem:[%s149 + $0x4e0] sm:$0xff]
          %464 = vst [vmem:[%s150 + $0x4e0] sm:$0xff] %v463
          %v465 = vld [vmem:[%s149 + $0x4e8] sm:$0xff]
          %466 = vst [vmem:[%s150 + $0x4e8] sm:$0xff] %v465
          %v467 = vld [vmem:[%s149 + $0x4f0] sm:$0xff]
          %468 = vst [vmem:[%s150 + $0x4f0] sm:$0xff] %v467
          %v469 = vld [vmem:[%s149 + $0x4f8] sm:$0xff]
          %470 = vst [vmem:[%s150 + $0x4f8] sm:$0xff] %v469
          %v471 = vld [vmem:[%s149 + $0x500] sm:$0xff]
          %472 = vst [vmem:[%s150 + $0x500] sm:$0xff] %v471
          %v473 = vld [vmem:[%s149 + $0x508] sm:$0xff]
          %474 = vst [vmem:[%s150 + $0x508] sm:$0xff] %v473
          %v475 = vld [vmem:[%s149 + $0x510] sm:$0xff]
          %476 = vst [vmem:[%s150 + $0x510] sm:$0xff] %v475
          %v477 = vld [vmem:[%s149 + $0x518] sm:$0xff]
          %478 = vst [vmem:[%s150 + $0x518] sm:$0xff] %v477
          %v479 = vld [vmem:[%s149 + $0x520] sm:$0xff]
          %480 = vst [vmem:[%s150 + $0x520] sm:$0xff] %v479
          %v481 = vld [vmem:[%s149 + $0x528] sm:$0xff]
          %482 = vst [vmem:[%s150 + $0x528] sm:$0xff] %v481
          %v483 = vld [vmem:[%s149 + $0x530] sm:$0xff]
          %484 = vst [vmem:[%s150 + $0x530] sm:$0xff] %v483
          %v485 = vld [vmem:[%s149 + $0x538] sm:$0xff]
          %486 = vst [vmem:[%s150 + $0x538] sm:$0xff] %v485
          %v487 = vld [vmem:[%s149 + $0x540] sm:$0xff]
          %488 = vst [vmem:[%s150 + $0x540] sm:$0xff] %v487
          %v489 = vld [vmem:[%s149 + $0x548] sm:$0xff]
          %490 = vst [vmem:[%s150 + $0x548] sm:$0xff] %v489
          %v491 = vld [vmem:[%s149 + $0x550] sm:$0xff]
          %492 = vst [vmem:[%s150 + $0x550] sm:$0xff] %v491
          %v493 = vld [vmem:[%s149 + $0x558] sm:$0xff]
          %494 = vst [vmem:[%s150 + $0x558] sm:$0xff] %v493
          %v495 = vld [vmem:[%s149 + $0x560] sm:$0xff]
          %496 = vst [vmem:[%s150 + $0x560] sm:$0xff] %v495
          %v497 = vld [vmem:[%s149 + $0x568] sm:$0xff]
          %498 = vst [vmem:[%s150 + $0x568] sm:$0xff] %v497
          %v499 = vld [vmem:[%s149 + $0x570] sm:$0xff]
          %500 = vst [vmem:[%s150 + $0x570] sm:$0xff] %v499
          %v501 = vld [vmem:[%s149 + $0x578] sm:$0xff]
          %502 = vst [vmem:[%s150 + $0x578] sm:$0xff] %v501
        $region85: #{mol_filter_forward.1} parent=79 // loop_footer
          %s148 = sadd.s32 1, %s144
        $region86: #{mol_filter_forward.1} parent=79 // loop_footer_branch
          %143 = sbr.rel target = $region82
        $region87: #{mol_filter_forward.1} parent=79 // loop_exit
          _
      $region80: #{mol_filter_forward.1} parent=64 // pred_fallthru
        _
      %p503 = pneg %p139
      // Predicated region
      $region88: #{mol_filter_forward.1} parent=64 // pred_check
        _
      $region89: #{mol_filter_forward.1} parent=64 // pred_check_branch
        %505 = sbr.rel (%p139) target = $region91
      $region90: #{mol_filter_forward.1} parent=64 // pred_region
        %s506 = sand.u32 1408, 7
      $region91: #{mol_filter_forward.1} parent=64 // pred_fallthru
        _
    $region65: #{mol_filter_forward.1} parent=1 // pred_fallthru
      _
    // Predicated region
    $region66: #{mol_filter_forward.1} parent=1 // pred_check
      %p123 = pneg %p119
    $region67: #{mol_filter_forward.1} parent=1 // pred_check_branch
      %125 = sbr.rel (%p123) target = $region69
    $region68: #{mol_filter_forward.1} parent=1 // pred_region
      %s126 = sshll.u32 1, 1408
      %s127 = ssub.s32 %s126, 1
      loop: start=0, step=1, limit=1
      $region70: #{mol_filter_forward.1} parent=68 // loop_pre_header
        _
      $region71: #{mol_filter_forward.1} parent=68 // loop_header
        %s129 = sphi 0, %s133
        %p130 = scmp.ge.s32.totalorder %s129, 1
        %s134 = sphi %s8, %s8
        %s135 = sphi [#allocation2], [#allocation2]
      $region72: #{mol_filter_forward.1} parent=68 // loop_header_branch
        %132 = sbr.rel (%p130) target = $region76
      $region73: #{mol_filter_forward.1} parent=68 // loop_body
        %v136 = vld [vmem:[%s134] sm:%s127]
        %137 = vst [vmem:[%s135] sm:%s127] %v136
      $region74: #{mol_filter_forward.1} parent=68 // loop_footer
        %s133 = sadd.s32 1, %s129
      $region75: #{mol_filter_forward.1} parent=68 // loop_footer_branch
        %128 = sbr.rel target = $region71
      $region76: #{mol_filter_forward.1} parent=68 // loop_exit
        _
    $region69: #{mol_filter_forward.1} parent=1 // pred_fallthru
      _
    // Predicated region
    $region92: #{mol_filter_forward.1} parent=1 // pred_check
      _
    $region93: #{mol_filter_forward.1} parent=1 // pred_check_branch
      %509 = sbr.rel (0) target = $region95
    $region94: #{mol_filter_forward.1} parent=1 // pred_region
      %510 = vsyncadd [#allocation7], 22528
    $region95: #{mol_filter_forward.1} parent=1 // pred_fallthru
      _
    %s511 = scalar_lea.sflag [#allocation7], 1
    // Predicated region
    $region96: #{mol_filter_forward.1} parent=1 // pred_check
      _
    $region97: #{mol_filter_forward.1} parent=1 // pred_check_branch
      %513 = sbr.rel target = $region99
    $region98: #{mol_filter_forward.1} parent=1 // pred_region
      %514 = sst [smem:[#allocation27]] [#allocation26]
      %515 = sst [smem:[#allocation28]] [#allocation25]
    $region99: #{mol_filter_forward.1} parent=1 // pred_fallthru
      _
    %517 = shalt.err (0)
    %s519 = sshll.u32 [#allocation3], 4
    %s520 = int_to_ptr.vmem [resolvable:$true] %s519
    %522 = dma.hbm_to_vmem [thread:$0]  %s9, 49152, %s520, %s511
    %s523 = scalar_lea.sflag [#allocation7], 2
    // Predicated region
    $region100: #{mol_filter_forward.1} parent=1 // pred_check
      _
    $region101: #{mol_filter_forward.1} parent=1 // pred_check_branch
      %525 = sbr.rel target = $region103
    $region102: #{mol_filter_forward.1} parent=1 // pred_region
      %526 = sst [smem:[#allocation27]] [#allocation30]
      %527 = sst [smem:[#allocation28]] [#allocation29]
    $region103: #{mol_filter_forward.1} parent=1 // pred_fallthru
      _
    %529 = shalt.err (0)
    %s531 = sshll.u32 [#allocation4], 4
    %s532 = int_to_ptr.vmem [resolvable:$true] %s531
    %534 = dma.hbm_to_vmem [thread:$0]  %s10, 8192, %s532, %s523
    %s535 = scalar_lea.sflag [#allocation7], 3
    // Predicated region
    $region104: #{mol_filter_forward.1} parent=1 // pred_check
      _
    $region105: #{mol_filter_forward.1} parent=1 // pred_check_branch
      %537 = sbr.rel target = $region107
    $region106: #{mol_filter_forward.1} parent=1 // pred_region
      %538 = sst [smem:[#allocation27]] [#allocation32]
      %539 = sst [smem:[#allocation28]] [#allocation31]
    $region107: #{mol_filter_forward.1} parent=1 // pred_fallthru
      _
    %541 = shalt.err (0)
    %s543 = sshll.u32 [#allocation5], 4
    %s544 = int_to_ptr.vmem [resolvable:$true] %s543
    %546 = dma.hbm_to_vmem [thread:$0]  %s11, 4096, %s544, %s535
    %s547 = scalar_lea.sflag [#allocation7], 4
    // Predicated region
    $region108: #{mol_filter_forward.1} parent=1 // pred_check
      _
    $region109: #{mol_filter_forward.1} parent=1 // pred_check_branch
      %549 = sbr.rel target = $region111
    $region110: #{mol_filter_forward.1} parent=1 // pred_region
      %550 = sst [smem:[#allocation27]] [#allocation34]
      %551 = sst [smem:[#allocation28]] [#allocation33]
    $region111: #{mol_filter_forward.1} parent=1 // pred_fallthru
      _
    %553 = shalt.err (0)
    %s555 = sshll.u32 [#allocation6], 4
    %s556 = int_to_ptr.vmem [resolvable:$true] %s555
    %558 = dma.hbm_to_vmem [thread:$0]  %s12, 2048, %s556, %s547
    %v559 = vld [vmem:[#allocation15] sm:$0x1]
    %v560 = vld [vmem:[#allocation15 + $0x1] sm:$0x1]
    %v561 = vld [vmem:[%s0] sm:$0xff]
    %v562 = vld [vmem:[%s0 + $0x8] sm:$0xff]
    %v563 = vld [vmem:[%s0 + $0x10] sm:$0xff]
    %v564 = vld [vmem:[%s0 + $0x18] sm:$0xff]
    %v565 = vld [vmem:[%s0 + $0x20] sm:$0xff]
    %v566 = vld [vmem:[%s0 + $0x28] sm:$0xff]
    %v567 = vld [vmem:[%s0 + $0x30] sm:$0xff]
    %v568 = vld [vmem:[%s0 + $0x38] sm:$0xff]
    %v569 = vld [vmem:[%s0 + $0x40] sm:$0xff]
    %v570 = vld [vmem:[%s0 + $0x48] sm:$0xff]
    %v571 = vld [vmem:[%s0 + $0x50] sm:$0xff]
    %v572 = vld [vmem:[%s0 + $0x58] sm:$0xff]
    %v573 = vld [vmem:[%s0 + $0x60] sm:$0xff]
    %v574 = vld [vmem:[%s0 + $0x68] sm:$0xff]
    %v575 = vld [vmem:[%s0 + $0x70] sm:$0x3f]
    %v576 = vld [vmem:[#allocation13] sm:$0x1]
    %578 = vset.pattern.permute.xlu0 0
    %579 = vperm.xlu0 %578, %v561
    %v580 = vpop.permute.xlu0 %579
    %583 = vset.pattern.permute.xlu0 0
    %584 = vperm.xlu0 %583, %v562
    %v585 = vpop.permute.xlu0 %584
    %588 = vset.pattern.permute.xlu0 0
    %589 = vperm.xlu0 %588, %v563
    %v590 = vpop.permute.xlu0 %589
    %593 = vset.pattern.permute.xlu0 0
    %594 = vperm.xlu0 %593, %v564
    %v595 = vpop.permute.xlu0 %594
    %598 = vset.pattern.permute.xlu0 0
    %599 = vperm.xlu0 %598, %v565
    %v600 = vpop.permute.xlu0 %599
    %603 = vset.pattern.permute.xlu0 0
    %604 = vperm.xlu0 %603, %v566
    %v605 = vpop.permute.xlu0 %604
    %608 = vset.pattern.permute.xlu0 0
    %609 = vperm.xlu0 %608, %v567
    %v610 = vpop.permute.xlu0 %609
    %613 = vset.pattern.permute.xlu0 0
    %614 = vperm.xlu0 %613, %v568
    %v615 = vpop.permute.xlu0 %614
    %618 = vset.pattern.permute.xlu0 0
    %619 = vperm.xlu0 %618, %v569
    %v620 = vpop.permute.xlu0 %619
    %623 = vset.pattern.permute.xlu0 0
    %624 = vperm.xlu0 %623, %v570
    %v625 = vpop.permute.xlu0 %624
    %628 = vset.pattern.permute.xlu0 0
    %629 = vperm.xlu0 %628, %v571
    %v630 = vpop.permute.xlu0 %629
    %633 = vset.pattern.permute.xlu0 0
    %634 = vperm.xlu0 %633, %v572
    %v635 = vpop.permute.xlu0 %634
    %638 = vset.pattern.permute.xlu0 0
    %639 = vperm.xlu0 %638, %v573
    %v640 = vpop.permute.xlu0 %639
    %643 = vset.pattern.permute.xlu0 0
    %644 = vperm.xlu0 %643, %v574
    %v645 = vpop.permute.xlu0 %644
    %648 = vset.pattern.permute.xlu0 0
    %649 = vperm.xlu0 %648, %v575
    %v650 = vpop.permute.xlu0 %649
    %v653 = vlaneseq
    %v654 = vshrl.u32 %v653, 7
    %v655 = vsub.s32 0, %v654
    %v656 = vrot.slane %v576, %v655
    %v658 = vmul.f32 %v580, %v656
    %v659 = vmul.f32 %v585, %v656
    %v660 = vmul.f32 %v590, %v656
    %v661 = vmul.f32 %v595, %v656
    %v662 = vmul.f32 %v600, %v656
    %v663 = vmul.f32 %v605, %v656
    %v664 = vmul.f32 %v610, %v656
    %v665 = vmul.f32 %v615, %v656
    %v666 = vmul.f32 %v620, %v656
    %v667 = vmul.f32 %v625, %v656
    %v668 = vmul.f32 %v630, %v656
    %v669 = vmul.f32 %v635, %v656
    %v670 = vmul.f32 %v640, %v656
    %v671 = vmul.f32 %v645, %v656
    %v672 = vmul.f32 %v650, %v656
    %v673 = vadd.f32 %v658, 0.0
    %v674 = vadd.f32 %v659, 0.0
    %v675 = vadd.f32 %v660, 0.0
    %v676 = vadd.f32 %v661, 0.0
    %v677 = vadd.f32 %v662, 0.0
    %v678 = vadd.f32 %v663, 0.0
    %v679 = vadd.f32 %v664, 0.0
    %v680 = vadd.f32 %v665, 0.0
    %v681 = vadd.f32 %v666, 0.0
    %v682 = vadd.f32 %v667, 0.0
    %v683 = vadd.f32 %v668, 0.0
    %v684 = vadd.f32 %v669, 0.0
    %v685 = vadd.f32 %v670, 0.0
    %v686 = vadd.f32 %v671, 0.0
    %v687 = vadd.f32 %v672, 0.0
    %v688 = vld [vmem:[%s0 + $0x1] sm:$0xff]
    %v689 = vld [vmem:[%s0 + $0x9] sm:$0xff]
    %v690 = vld [vmem:[%s0 + $0x11] sm:$0xff]
    %v691 = vld [vmem:[%s0 + $0x19] sm:$0xff]
    %v692 = vld [vmem:[%s0 + $0x21] sm:$0xff]
    %v693 = vld [vmem:[%s0 + $0x29] sm:$0xff]
    %v694 = vld [vmem:[%s0 + $0x31] sm:$0xff]
    %v695 = vld [vmem:[%s0 + $0x39] sm:$0xff]
    %v696 = vld [vmem:[%s0 + $0x41] sm:$0xff]
    %v697 = vld [vmem:[%s0 + $0x49] sm:$0xff]
    %v698 = vld [vmem:[%s0 + $0x51] sm:$0xff]
    %v699 = vld [vmem:[%s0 + $0x59] sm:$0xff]
    %v700 = vld [vmem:[%s0 + $0x61] sm:$0xff]
    %v701 = vld [vmem:[%s0 + $0x69] sm:$0xff]
    %v702 = vld [vmem:[%s0 + $0x71] sm:$0x3f]
    %s703 = scalar_lea.vmem [#allocation13], 1
    %v704 = vld [vmem:[%s703] sm:$0x1]
    %706 = vset.pattern.permute.xlu0 0
    %707 = vperm.xlu0 %706, %v688
    %v708 = vpop.permute.xlu0 %707
    %711 = vset.pattern.permute.xlu0 0
    %712 = vperm.xlu0 %711, %v689
    %v713 = vpop.permute.xlu0 %712
    %716 = vset.pattern.permute.xlu0 0
    %717 = vperm.xlu0 %716, %v690
    %v718 = vpop.permute.xlu0 %717
    %721 = vset.pattern.permute.xlu0 0
    %722 = vperm.xlu0 %721, %v691
    %v723 = vpop.permute.xlu0 %722
    %726 = vset.pattern.permute.xlu0 0
    %727 = vperm.xlu0 %726, %v692
    %v728 = vpop.permute.xlu0 %727
    %731 = vset.pattern.permute.xlu0 0
    %732 = vperm.xlu0 %731, %v693
    %v733 = vpop.permute.xlu0 %732
    %736 = vset.pattern.permute.xlu0 0
    %737 = vperm.xlu0 %736, %v694
    %v738 = vpop.permute.xlu0 %737
    %741 = vset.pattern.permute.xlu0 0
    %742 = vperm.xlu0 %741, %v695
    %v743 = vpop.permute.xlu0 %742
    %746 = vset.pattern.permute.xlu0 0
    %747 = vperm.xlu0 %746, %v696
    %v748 = vpop.permute.xlu0 %747
    %751 = vset.pattern.permute.xlu0 0
    %752 = vperm.xlu0 %751, %v697
    %v753 = vpop.permute.xlu0 %752
    %756 = vset.pattern.permute.xlu0 0
    %757 = vperm.xlu0 %756, %v698
    %v758 = vpop.permute.xlu0 %757
    %761 = vset.pattern.permute.xlu0 0
    %762 = vperm.xlu0 %761, %v699
    %v763 = vpop.permute.xlu0 %762
    %766 = vset.pattern.permute.xlu0 0
    %767 = vperm.xlu0 %766, %v700
    %v768 = vpop.permute.xlu0 %767
    %771 = vset.pattern.permute.xlu0 0
    %772 = vperm.xlu0 %771, %v701
    %v773 = vpop.permute.xlu0 %772
    %776 = vset.pattern.permute.xlu0 0
    %777 = vperm.xlu0 %776, %v702
    %v778 = vpop.permute.xlu0 %777
    %v781 = vlaneseq
    %v782 = vshrl.u32 %v781, 7
    %v783 = vsub.s32 0, %v782
    %v784 = vrot.slane %v704, %v783
    %v786 = vmul.f32 %v708, %v784
    %v787 = vmul.f32 %v713, %v784
    %v788 = vmul.f32 %v718, %v784
    %v789 = vmul.f32 %v723, %v784
    %v790 = vmul.f32 %v728, %v784
    %v791 = vmul.f32 %v733, %v784
    %v792 = vmul.f32 %v738, %v784
    %v793 = vmul.f32 %v743, %v784
    %v794 = vmul.f32 %v748, %v784
    %v795 = vmul.f32 %v753, %v784
    %v796 = vmul.f32 %v758, %v784
    %v797 = vmul.f32 %v763, %v784
    %v798 = vmul.f32 %v768, %v784
    %v799 = vmul.f32 %v773, %v784
    %v800 = vmul.f32 %v778, %v784
    %v801 = vadd.f32 %v673, %v786
    %v802 = vadd.f32 %v674, %v787
    %v803 = vadd.f32 %v675, %v788
    %v804 = vadd.f32 %v676, %v789
    %v805 = vadd.f32 %v677, %v790
    %v806 = vadd.f32 %v678, %v791
    %v807 = vadd.f32 %v679, %v792
    %v808 = vadd.f32 %v680, %v793
    %v809 = vadd.f32 %v681, %v794
    %v810 = vadd.f32 %v682, %v795
    %v811 = vadd.f32 %v683, %v796
    %v812 = vadd.f32 %v684, %v797
    %v813 = vadd.f32 %v685, %v798
    %v814 = vadd.f32 %v686, %v799
    %v815 = vadd.f32 %v687, %v800
    %v816 = vld [vmem:[%s0 + $0x2] sm:$0xff]
    %v817 = vld [vmem:[%s0 + $0xa] sm:$0xff]
    %v818 = vld [vmem:[%s0 + $0x12] sm:$0xff]
    %v819 = vld [vmem:[%s0 + $0x1a] sm:$0xff]
    %v820 = vld [vmem:[%s0 + $0x22] sm:$0xff]
    %v821 = vld [vmem:[%s0 + $0x2a] sm:$0xff]
    %v822 = vld [vmem:[%s0 + $0x32] sm:$0xff]
    %v823 = vld [vmem:[%s0 + $0x3a] sm:$0xff]
    %v824 = vld [vmem:[%s0 + $0x42] sm:$0xff]
    %v825 = vld [vmem:[%s0 + $0x4a] sm:$0xff]
    %v826 = vld [vmem:[%s0 + $0x52] sm:$0xff]
    %v827 = vld [vmem:[%s0 + $0x5a] sm:$0xff]
    %v828 = vld [vmem:[%s0 + $0x62] sm:$0xff]
    %v829 = vld [vmem:[%s0 + $0x6a] sm:$0xff]
    %v830 = vld [vmem:[%s0 + $0x72] sm:$0x3f]
    %s831 = scalar_lea.vmem [#allocation13], 2
    %v832 = vld [vmem:[%s831] sm:$0x1]
    %834 = vset.pattern.permute.xlu0 0
    %835 = vperm.xlu0 %834, %v816
    %v836 = vpop.permute.xlu0 %835
    %839 = vset.pattern.permute.xlu0 0
    %840 = vperm.xlu0 %839, %v817
    %v841 = vpop.permute.xlu0 %840
    %844 = vset.pattern.permute.xlu0 0
    %845 = vperm.xlu0 %844, %v818
    %v846 = vpop.permute.xlu0 %845
    %849 = vset.pattern.permute.xlu0 0
    %850 = vperm.xlu0 %849, %v819
    %v851 = vpop.permute.xlu0 %850
    %854 = vset.pattern.permute.xlu0 0
    %855 = vperm.xlu0 %854, %v820
    %v856 = vpop.permute.xlu0 %855
    %859 = vset.pattern.permute.xlu0 0
    %860 = vperm.xlu0 %859, %v821
    %v861 = vpop.permute.xlu0 %860
    %864 = vset.pattern.permute.xlu0 0
    %865 = vperm.xlu0 %864, %v822
    %v866 = vpop.permute.xlu0 %865
    %869 = vset.pattern.permute.xlu0 0
    %870 = vperm.xlu0 %869, %v823
    %v871 = vpop.permute.xlu0 %870
    %874 = vset.pattern.permute.xlu0 0
    %875 = vperm.xlu0 %874, %v824
    %v876 = vpop.permute.xlu0 %875
    %879 = vset.pattern.permute.xlu0 0
    %880 = vperm.xlu0 %879, %v825
    %v881 = vpop.permute.xlu0 %880
    %884 = vset.pattern.permute.xlu0 0
    %885 = vperm.xlu0 %884, %v826
    %v886 = vpop.permute.xlu0 %885
    %889 = vset.pattern.permute.xlu0 0
    %890 = vperm.xlu0 %889, %v827
    %v891 = vpop.permute.xlu0 %890
    %894 = vset.pattern.permute.xlu0 0
    %895 = vperm.xlu0 %894, %v828
    %v896 = vpop.permute.xlu0 %895
    %899 = vset.pattern.permute.xlu0 0
    %900 = vperm.xlu0 %899, %v829
    %v901 = vpop.permute.xlu0 %900
    %904 = vset.pattern.permute.xlu0 0
    %905 = vperm.xlu0 %904, %v830
    %v906 = vpop.permute.xlu0 %905
    %v909 = vlaneseq
    %v910 = vshrl.u32 %v909, 7
    %v911 = vsub.s32 0, %v910
    %v912 = vrot.slane %v832, %v911
    %v914 = vmul.f32 %v836, %v912
    %v915 = vmul.f32 %v841, %v912
    %v916 = vmul.f32 %v846, %v912
    %v917 = vmul.f32 %v851, %v912
    %v918 = vmul.f32 %v856, %v912
    %v919 = vmul.f32 %v861, %v912
    %v920 = vmul.f32 %v866, %v912
    %v921 = vmul.f32 %v871, %v912
    %v922 = vmul.f32 %v876, %v912
    %v923 = vmul.f32 %v881, %v912
    %v924 = vmul.f32 %v886, %v912
    %v925 = vmul.f32 %v891, %v912
    %v926 = vmul.f32 %v896, %v912
    %v927 = vmul.f32 %v901, %v912
    %v928 = vmul.f32 %v906, %v912
    %v929 = vadd.f32 %v801, %v914
    %v930 = vadd.f32 %v802, %v915
    %v931 = vadd.f32 %v803, %v916
    %v932 = vadd.f32 %v804, %v917
    %v933 = vadd.f32 %v805, %v918
    %v934 = vadd.f32 %v806, %v919
    %v935 = vadd.f32 %v807, %v920
    %v936 = vadd.f32 %v808, %v921
    %v937 = vadd.f32 %v809, %v922
    %v938 = vadd.f32 %v810, %v923
    %v939 = vadd.f32 %v811, %v924
    %v940 = vadd.f32 %v812, %v925
    %v941 = vadd.f32 %v813, %v926
    %v942 = vadd.f32 %v814, %v927
    %v943 = vadd.f32 %v815, %v928
    %v944 = vld [vmem:[%s0 + $0x3] sm:$0xff]
    %v945 = vld [vmem:[%s0 + $0xb] sm:$0xff]
    %v946 = vld [vmem:[%s0 + $0x13] sm:$0xff]
    %v947 = vld [vmem:[%s0 + $0x1b] sm:$0xff]
    %v948 = vld [vmem:[%s0 + $0x23] sm:$0xff]
    %v949 = vld [vmem:[%s0 + $0x2b] sm:$0xff]
    %v950 = vld [vmem:[%s0 + $0x33] sm:$0xff]
    %v951 = vld [vmem:[%s0 + $0x3b] sm:$0xff]
    %v952 = vld [vmem:[%s0 + $0x43] sm:$0xff]
    %v953 = vld [vmem:[%s0 + $0x4b] sm:$0xff]
    %v954 = vld [vmem:[%s0 + $0x53] sm:$0xff]
    %v955 = vld [vmem:[%s0 + $0x5b] sm:$0xff]
    %v956 = vld [vmem:[%s0 + $0x63] sm:$0xff]
    %v957 = vld [vmem:[%s0 + $0x6b] sm:$0xff]
    %v958 = vld [vmem:[%s0 + $0x73] sm:$0x3f]
    %s959 = scalar_lea.vmem [#allocation13], 3
    %v960 = vld [vmem:[%s959] sm:$0x1]
    %962 = vset.pattern.permute.xlu0 0
    %963 = vperm.xlu0 %962, %v944
    %v964 = vpop.permute.xlu0 %963
    %967 = vset.pattern.permute.xlu0 0
    %968 = vperm.xlu0 %967, %v945
    %v969 = vpop.permute.xlu0 %968
    %972 = vset.pattern.permute.xlu0 0
    %973 = vperm.xlu0 %972, %v946
    %v974 = vpop.permute.xlu0 %973
    %977 = vset.pattern.permute.xlu0 0
    %978 = vperm.xlu0 %977, %v947
    %v979 = vpop.permute.xlu0 %978
    %982 = vset.pattern.permute.xlu0 0
    %983 = vperm.xlu0 %982, %v948
    %v984 = vpop.permute.xlu0 %983
    %987 = vset.pattern.permute.xlu0 0
    %988 = vperm.xlu0 %987, %v949
    %v989 = vpop.permute.xlu0 %988
    %992 = vset.pattern.permute.xlu0 0
    %993 = vperm.xlu0 %992, %v950
    %v994 = vpop.permute.xlu0 %993
    %997 = vset.pattern.permute.xlu0 0
    %998 = vperm.xlu0 %997, %v951
    %v999 = vpop.permute.xlu0 %998
    %1002 = vset.pattern.permute.xlu0 0
    %1003 = vperm.xlu0 %1002, %v952
    %v1004 = vpop.permute.xlu0 %1003
    %1007 = vset.pattern.permute.xlu0 0
    %1008 = vperm.xlu0 %1007, %v953
    %v1009 = vpop.permute.xlu0 %1008
    %1012 = vset.pattern.permute.xlu0 0
    %1013 = vperm.xlu0 %1012, %v954
    %v1014 = vpop.permute.xlu0 %1013
    %1017 = vset.pattern.permute.xlu0 0
    %1018 = vperm.xlu0 %1017, %v955
    %v1019 = vpop.permute.xlu0 %1018
    %1022 = vset.pattern.permute.xlu0 0
    %1023 = vperm.xlu0 %1022, %v956
    %v1024 = vpop.permute.xlu0 %1023
    %1027 = vset.pattern.permute.xlu0 0
    %1028 = vperm.xlu0 %1027, %v957
    %v1029 = vpop.permute.xlu0 %1028
    %1032 = vset.pattern.permute.xlu0 0
    %1033 = vperm.xlu0 %1032, %v958
    %v1034 = vpop.permute.xlu0 %1033
    %v1037 = vlaneseq
    %v1038 = vshrl.u32 %v1037, 7
    %v1039 = vsub.s32 0, %v1038
    %v1040 = vrot.slane %v960, %v1039
    %v1042 = vmul.f32 %v964, %v1040
    %v1043 = vmul.f32 %v969, %v1040
    %v1044 = vmul.f32 %v974, %v1040
    %v1045 = vmul.f32 %v979, %v1040
    %v1046 = vmul.f32 %v984, %v1040
    %v1047 = vmul.f32 %v989, %v1040
    %v1048 = vmul.f32 %v994, %v1040
    %v1049 = vmul.f32 %v999, %v1040
    %v1050 = vmul.f32 %v1004, %v1040
    %v1051 = vmul.f32 %v1009, %v1040
    %v1052 = vmul.f32 %v1014, %v1040
    %v1053 = vmul.f32 %v1019, %v1040
    %v1054 = vmul.f32 %v1024, %v1040
    %v1055 = vmul.f32 %v1029, %v1040
    %v1056 = vmul.f32 %v1034, %v1040
    %v1057 = vadd.f32 %v929, %v1042
    %v1058 = vadd.f32 %v930, %v1043
    %v1059 = vadd.f32 %v931, %v1044
    %v1060 = vadd.f32 %v932, %v1045
    %v1061 = vadd.f32 %v933, %v1046
    %v1062 = vadd.f32 %v934, %v1047
    %v1063 = vadd.f32 %v935, %v1048
    %v1064 = vadd.f32 %v936, %v1049
    %v1065 = vadd.f32 %v937, %v1050
    %v1066 = vadd.f32 %v938, %v1051
    %v1067 = vadd.f32 %v939, %v1052
    %v1068 = vadd.f32 %v940, %v1053
    %v1069 = vadd.f32 %v941, %v1054
    %v1070 = vadd.f32 %v942, %v1055
    %v1071 = vadd.f32 %v943, %v1056
    %v1072 = vld [vmem:[%s0 + $0x4] sm:$0xff]
    %v1073 = vld [vmem:[%s0 + $0xc] sm:$0xff]
    %v1074 = vld [vmem:[%s0 + $0x14] sm:$0xff]
    %v1075 = vld [vmem:[%s0 + $0x1c] sm:$0xff]
    %v1076 = vld [vmem:[%s0 + $0x24] sm:$0xff]
    %v1077 = vld [vmem:[%s0 + $0x2c] sm:$0xff]
    %v1078 = vld [vmem:[%s0 + $0x34] sm:$0xff]
    %v1079 = vld [vmem:[%s0 + $0x3c] sm:$0xff]
    %v1080 = vld [vmem:[%s0 + $0x44] sm:$0xff]
    %v1081 = vld [vmem:[%s0 + $0x4c] sm:$0xff]
    %v1082 = vld [vmem:[%s0 + $0x54] sm:$0xff]
    %v1083 = vld [vmem:[%s0 + $0x5c] sm:$0xff]
    %v1084 = vld [vmem:[%s0 + $0x64] sm:$0xff]
    %v1085 = vld [vmem:[%s0 + $0x6c] sm:$0xff]
    %v1086 = vld [vmem:[%s0 + $0x74] sm:$0x3f]
    %s1087 = scalar_lea.vmem [#allocation13], 4
    %v1088 = vld [vmem:[%s1087] sm:$0x1]
    %1090 = vset.pattern.permute.xlu0 0
    %1091 = vperm.xlu0 %1090, %v1072
    %v1092 = vpop.permute.xlu0 %1091
    %1095 = vset.pattern.permute.xlu0 0
    %1096 = vperm.xlu0 %1095, %v1073
    %v1097 = vpop.permute.xlu0 %1096
    %1100 = vset.pattern.permute.xlu0 0
    %1101 = vperm.xlu0 %1100, %v1074
    %v1102 = vpop.permute.xlu0 %1101
    %1105 = vset.pattern.permute.xlu0 0
    %1106 = vperm.xlu0 %1105, %v1075
    %v1107 = vpop.permute.xlu0 %1106
    %1110 = vset.pattern.permute.xlu0 0
    %1111 = vperm.xlu0 %1110, %v1076
    %v1112 = vpop.permute.xlu0 %1111
    %1115 = vset.pattern.permute.xlu0 0
    %1116 = vperm.xlu0 %1115, %v1077
    %v1117 = vpop.permute.xlu0 %1116
    %1120 = vset.pattern.permute.xlu0 0
    %1121 = vperm.xlu0 %1120, %v1078
    %v1122 = vpop.permute.xlu0 %1121
    %1125 = vset.pattern.permute.xlu0 0
    %1126 = vperm.xlu0 %1125, %v1079
    %v1127 = vpop.permute.xlu0 %1126
    %1130 = vset.pattern.permute.xlu0 0
    %1131 = vperm.xlu0 %1130, %v1080
    %v1132 = vpop.permute.xlu0 %1131
    %1135 = vset.pattern.permute.xlu0 0
    %1136 = vperm.xlu0 %1135, %v1081
    %v1137 = vpop.permute.xlu0 %1136
    %1140 = vset.pattern.permute.xlu0 0
    %1141 = vperm.xlu0 %1140, %v1082
    %v1142 = vpop.permute.xlu0 %1141
    %1145 = vset.pattern.permute.xlu0 0
    %1146 = vperm.xlu0 %1145, %v1083
    %v1147 = vpop.permute.xlu0 %1146
    %1150 = vset.pattern.permute.xlu0 0
    %1151 = vperm.xlu0 %1150, %v1084
    %v1152 = vpop.permute.xlu0 %1151
    %1155 = vset.pattern.permute.xlu0 0
    %1156 = vperm.xlu0 %1155, %v1085
    %v1157 = vpop.permute.xlu0 %1156
    %1160 = vset.pattern.permute.xlu0 0
    %1161 = vperm.xlu0 %1160, %v1086
    %v1162 = vpop.permute.xlu0 %1161
    %v1165 = vlaneseq
    %v1166 = vshrl.u32 %v1165, 7
    %v1167 = vsub.s32 0, %v1166
    %v1168 = vrot.slane %v1088, %v1167
    %v1170 = vmul.f32 %v1092, %v1168
    %v1171 = vmul.f32 %v1097, %v1168
    %v1172 = vmul.f32 %v1102, %v1168
    %v1173 = vmul.f32 %v1107, %v1168
    %v1174 = vmul.f32 %v1112, %v1168
    %v1175 = vmul.f32 %v1117, %v1168
    %v1176 = vmul.f32 %v1122, %v1168
    %v1177 = vmul.f32 %v1127, %v1168
    %v1178 = vmul.f32 %v1132, %v1168
    %v1179 = vmul.f32 %v1137, %v1168
    %v1180 = vmul.f32 %v1142, %v1168
    %v1181 = vmul.f32 %v1147, %v1168
    %v1182 = vmul.f32 %v1152, %v1168
    %v1183 = vmul.f32 %v1157, %v1168
    %v1184 = vmul.f32 %v1162, %v1168
    %v1185 = vadd.f32 %v1057, %v1170
    %v1186 = vadd.f32 %v1058, %v1171
    %v1187 = vadd.f32 %v1059, %v1172
    %v1188 = vadd.f32 %v1060, %v1173
    %v1189 = vadd.f32 %v1061, %v1174
    %v1190 = vadd.f32 %v1062, %v1175
    %v1191 = vadd.f32 %v1063, %v1176
    %v1192 = vadd.f32 %v1064, %v1177
    %v1193 = vadd.f32 %v1065, %v1178
    %v1194 = vadd.f32 %v1066, %v1179
    %v1195 = vadd.f32 %v1067, %v1180
    %v1196 = vadd.f32 %v1068, %v1181
    %v1197 = vadd.f32 %v1069, %v1182
    %v1198 = vadd.f32 %v1070, %v1183
    %v1199 = vadd.f32 %v1071, %v1184
    %v1200 = vld [vmem:[%s0 + $0x5] sm:$0xff]
    %v1201 = vld [vmem:[%s0 + $0xd] sm:$0xff]
    %v1202 = vld [vmem:[%s0 + $0x15] sm:$0xff]
    %v1203 = vld [vmem:[%s0 + $0x1d] sm:$0xff]
    %v1204 = vld [vmem:[%s0 + $0x25] sm:$0xff]
    %v1205 = vld [vmem:[%s0 + $0x2d] sm:$0xff]
    %v1206 = vld [vmem:[%s0 + $0x35] sm:$0xff]
    %v1207 = vld [vmem:[%s0 + $0x3d] sm:$0xff]
    %v1208 = vld [vmem:[%s0 + $0x45] sm:$0xff]
    %v1209 = vld [vmem:[%s0 + $0x4d] sm:$0xff]
    %v1210 = vld [vmem:[%s0 + $0x55] sm:$0xff]
    %v1211 = vld [vmem:[%s0 + $0x5d] sm:$0xff]
    %v1212 = vld [vmem:[%s0 + $0x65] sm:$0xff]
    %v1213 = vld [vmem:[%s0 + $0x6d] sm:$0xff]
    %v1214 = vld [vmem:[%s0 + $0x75] sm:$0x3f]
    %s1215 = scalar_lea.vmem [#allocation13], 5
    %v1216 = vld [vmem:[%s1215] sm:$0x1]
    %1218 = vset.pattern.permute.xlu0 0
    %1219 = vperm.xlu0 %1218, %v1200
    %v1220 = vpop.permute.xlu0 %1219
    %1223 = vset.pattern.permute.xlu0 0
    %1224 = vperm.xlu0 %1223, %v1201
    %v1225 = vpop.permute.xlu0 %1224
    %1228 = vset.pattern.permute.xlu0 0
    %1229 = vperm.xlu0 %1228, %v1202
    %v1230 = vpop.permute.xlu0 %1229
    %1233 = vset.pattern.permute.xlu0 0
    %1234 = vperm.xlu0 %1233, %v1203
    %v1235 = vpop.permute.xlu0 %1234
    %1238 = vset.pattern.permute.xlu0 0
    %1239 = vperm.xlu0 %1238, %v1204
    %v1240 = vpop.permute.xlu0 %1239
    %1243 = vset.pattern.permute.xlu0 0
    %1244 = vperm.xlu0 %1243, %v1205
    %v1245 = vpop.permute.xlu0 %1244
    %1248 = vset.pattern.permute.xlu0 0
    %1249 = vperm.xlu0 %1248, %v1206
    %v1250 = vpop.permute.xlu0 %1249
    %1253 = vset.pattern.permute.xlu0 0
    %1254 = vperm.xlu0 %1253, %v1207
    %v1255 = vpop.permute.xlu0 %1254
    %1258 = vset.pattern.permute.xlu0 0
    %1259 = vperm.xlu0 %1258, %v1208
    %v1260 = vpop.permute.xlu0 %1259
    %1263 = vset.pattern.permute.xlu0 0
    %1264 = vperm.xlu0 %1263, %v1209
    %v1265 = vpop.permute.xlu0 %1264
    %1268 = vset.pattern.permute.xlu0 0
    %1269 = vperm.xlu0 %1268, %v1210
    %v1270 = vpop.permute.xlu0 %1269
    %1273 = vset.pattern.permute.xlu0 0
    %1274 = vperm.xlu0 %1273, %v1211
    %v1275 = vpop.permute.xlu0 %1274
    %1278 = vset.pattern.permute.xlu0 0
    %1279 = vperm.xlu0 %1278, %v1212
    %v1280 = vpop.permute.xlu0 %1279
    %1283 = vset.pattern.permute.xlu0 0
    %1284 = vperm.xlu0 %1283, %v1213
    %v1285 = vpop.permute.xlu0 %1284
    %1288 = vset.pattern.permute.xlu0 0
    %1289 = vperm.xlu0 %1288, %v1214
    %v1290 = vpop.permute.xlu0 %1289
    %v1293 = vlaneseq
    %v1294 = vshrl.u32 %v1293, 7
    %v1295 = vsub.s32 0, %v1294
    %v1296 = vrot.slane %v1216, %v1295
    %v1298 = vmul.f32 %v1220, %v1296
    %v1299 = vmul.f32 %v1225, %v1296
    %v1300 = vmul.f32 %v1230, %v1296
    %v1301 = vmul.f32 %v1235, %v1296
    %v1302 = vmul.f32 %v1240, %v1296
    %v1303 = vmul.f32 %v1245, %v1296
    %v1304 = vmul.f32 %v1250, %v1296
    %v1305 = vmul.f32 %v1255, %v1296
    %v1306 = vmul.f32 %v1260, %v1296
    %v1307 = vmul.f32 %v1265, %v1296
    %v1308 = vmul.f32 %v1270, %v1296
    %v1309 = vmul.f32 %v1275, %v1296
    %v1310 = vmul.f32 %v1280, %v1296
    %v1311 = vmul.f32 %v1285, %v1296
    %v1312 = vmul.f32 %v1290, %v1296
    %v1313 = vadd.f32 %v1185, %v1298
    %v1314 = vadd.f32 %v1186, %v1299
    %v1315 = vadd.f32 %v1187, %v1300
    %v1316 = vadd.f32 %v1188, %v1301
    %v1317 = vadd.f32 %v1189, %v1302
    %v1318 = vadd.f32 %v1190, %v1303
    %v1319 = vadd.f32 %v1191, %v1304
    %v1320 = vadd.f32 %v1192, %v1305
    %v1321 = vadd.f32 %v1193, %v1306
    %v1322 = vadd.f32 %v1194, %v1307
    %v1323 = vadd.f32 %v1195, %v1308
    %v1324 = vadd.f32 %v1196, %v1309
    %v1325 = vadd.f32 %v1197, %v1310
    %v1326 = vadd.f32 %v1198, %v1311
    %v1327 = vadd.f32 %v1199, %v1312
    %v1328 = vld [vmem:[%s0 + $0x6] sm:$0xff]
    %v1329 = vld [vmem:[%s0 + $0xe] sm:$0xff]
    %v1330 = vld [vmem:[%s0 + $0x16] sm:$0xff]
    %v1331 = vld [vmem:[%s0 + $0x1e] sm:$0xff]
    %v1332 = vld [vmem:[%s0 + $0x26] sm:$0xff]
    %v1333 = vld [vmem:[%s0 + $0x2e] sm:$0xff]
    %v1334 = vld [vmem:[%s0 + $0x36] sm:$0xff]
    %v1335 = vld [vmem:[%s0 + $0x3e] sm:$0xff]
    %v1336 = vld [vmem:[%s0 + $0x46] sm:$0xff]
    %v1337 = vld [vmem:[%s0 + $0x4e] sm:$0xff]
    %v1338 = vld [vmem:[%s0 + $0x56] sm:$0xff]
    %v1339 = vld [vmem:[%s0 + $0x5e] sm:$0xff]
    %v1340 = vld [vmem:[%s0 + $0x66] sm:$0xff]
    %v1341 = vld [vmem:[%s0 + $0x6e] sm:$0xff]
    %v1342 = vld [vmem:[%s0 + $0x76] sm:$0x3f]
    %s1343 = scalar_lea.vmem [#allocation13], 6
    %v1344 = vld [vmem:[%s1343] sm:$0x1]
    %1346 = vset.pattern.permute.xlu0 0
    %1347 = vperm.xlu0 %1346, %v1328
    %v1348 = vpop.permute.xlu0 %1347
    %1351 = vset.pattern.permute.xlu0 0
    %1352 = vperm.xlu0 %1351, %v1329
    %v1353 = vpop.permute.xlu0 %1352
    %1356 = vset.pattern.permute.xlu0 0
    %1357 = vperm.xlu0 %1356, %v1330
    %v1358 = vpop.permute.xlu0 %1357
    %1361 = vset.pattern.permute.xlu0 0
    %1362 = vperm.xlu0 %1361, %v1331
    %v1363 = vpop.permute.xlu0 %1362
    %1366 = vset.pattern.permute.xlu0 0
    %1367 = vperm.xlu0 %1366, %v1332
    %v1368 = vpop.permute.xlu0 %1367
    %1371 = vset.pattern.permute.xlu0 0
    %1372 = vperm.xlu0 %1371, %v1333
    %v1373 = vpop.permute.xlu0 %1372
    %1376 = vset.pattern.permute.xlu0 0
    %1377 = vperm.xlu0 %1376, %v1334
    %v1378 = vpop.permute.xlu0 %1377
    %1381 = vset.pattern.permute.xlu0 0
    %1382 = vperm.xlu0 %1381, %v1335
    %v1383 = vpop.permute.xlu0 %1382
    %1386 = vset.pattern.permute.xlu0 0
    %1387 = vperm.xlu0 %1386, %v1336
    %v1388 = vpop.permute.xlu0 %1387
    %1391 = vset.pattern.permute.xlu0 0
    %1392 = vperm.xlu0 %1391, %v1337
    %v1393 = vpop.permute.xlu0 %1392
    %1396 = vset.pattern.permute.xlu0 0
    %1397 = vperm.xlu0 %1396, %v1338
    %v1398 = vpop.permute.xlu0 %1397
    %1401 = vset.pattern.permute.xlu0 0
    %1402 = vperm.xlu0 %1401, %v1339
    %v1403 = vpop.permute.xlu0 %1402
    %1406 = vset.pattern.permute.xlu0 0
    %1407 = vperm.xlu0 %1406, %v1340
    %v1408 = vpop.permute.xlu0 %1407
    %1411 = vset.pattern.permute.xlu0 0
    %1412 = vperm.xlu0 %1411, %v1341
    %v1413 = vpop.permute.xlu0 %1412
    %1416 = vset.pattern.permute.xlu0 0
    %1417 = vperm.xlu0 %1416, %v1342
    %v1418 = vpop.permute.xlu0 %1417
    %v1421 = vlaneseq
    %v1422 = vshrl.u32 %v1421, 7
    %v1423 = vsub.s32 0, %v1422
    %v1424 = vrot.slane %v1344, %v1423
    %v1426 = vmul.f32 %v1348, %v1424
    %v1427 = vmul.f32 %v1353, %v1424
    %v1428 = vmul.f32 %v1358, %v1424
    %v1429 = vmul.f32 %v1363, %v1424
    %v1430 = vmul.f32 %v1368, %v1424
    %v1431 = vmul.f32 %v1373, %v1424
    %v1432 = vmul.f32 %v1378, %v1424
    %v1433 = vmul.f32 %v1383, %v1424
    %v1434 = vmul.f32 %v1388, %v1424
    %v1435 = vmul.f32 %v1393, %v1424
    %v1436 = vmul.f32 %v1398, %v1424
    %v1437 = vmul.f32 %v1403, %v1424
    %v1438 = vmul.f32 %v1408, %v1424
    %v1439 = vmul.f32 %v1413, %v1424
    %v1440 = vmul.f32 %v1418, %v1424
    %v1441 = vadd.f32 %v1313, %v1426
    %v1442 = vadd.f32 %v1314, %v1427
    %v1443 = vadd.f32 %v1315, %v1428
    %v1444 = vadd.f32 %v1316, %v1429
    %v1445 = vadd.f32 %v1317, %v1430
    %v1446 = vadd.f32 %v1318, %v1431
    %v1447 = vadd.f32 %v1319, %v1432
    %v1448 = vadd.f32 %v1320, %v1433
    %v1449 = vadd.f32 %v1321, %v1434
    %v1450 = vadd.f32 %v1322, %v1435
    %v1451 = vadd.f32 %v1323, %v1436
    %v1452 = vadd.f32 %v1324, %v1437
    %v1453 = vadd.f32 %v1325, %v1438
    %v1454 = vadd.f32 %v1326, %v1439
    %v1455 = vadd.f32 %v1327, %v1440
    %v1456 = vld [vmem:[%s0 + $0x7] sm:$0xff]
    %v1457 = vld [vmem:[%s0 + $0xf] sm:$0xff]
    %v1458 = vld [vmem:[%s0 + $0x17] sm:$0xff]
    %v1459 = vld [vmem:[%s0 + $0x1f] sm:$0xff]
    %v1460 = vld [vmem:[%s0 + $0x27] sm:$0xff]
    %v1461 = vld [vmem:[%s0 + $0x2f] sm:$0xff]
    %v1462 = vld [vmem:[%s0 + $0x37] sm:$0xff]
    %v1463 = vld [vmem:[%s0 + $0x3f] sm:$0xff]
    %v1464 = vld [vmem:[%s0 + $0x47] sm:$0xff]
    %v1465 = vld [vmem:[%s0 + $0x4f] sm:$0xff]
    %v1466 = vld [vmem:[%s0 + $0x57] sm:$0xff]
    %v1467 = vld [vmem:[%s0 + $0x5f] sm:$0xff]
    %v1468 = vld [vmem:[%s0 + $0x67] sm:$0xff]
    %v1469 = vld [vmem:[%s0 + $0x6f] sm:$0xff]
    %v1470 = vld [vmem:[%s0 + $0x77] sm:$0x3f]
    %s1471 = scalar_lea.vmem [#allocation13], 7
    %v1472 = vld [vmem:[%s1471] sm:$0x1]
    %1474 = vset.pattern.permute.xlu0 0
    %1475 = vperm.xlu0 %1474, %v1456
    %v1476 = vpop.permute.xlu0 %1475
    %1479 = vset.pattern.permute.xlu0 0
    %1480 = vperm.xlu0 %1479, %v1457
    %v1481 = vpop.permute.xlu0 %1480
    %1484 = vset.pattern.permute.xlu0 0
    %1485 = vperm.xlu0 %1484, %v1458
    %v1486 = vpop.permute.xlu0 %1485
    %1489 = vset.pattern.permute.xlu0 0
    %1490 = vperm.xlu0 %1489, %v1459
    %v1491 = vpop.permute.xlu0 %1490
    %1494 = vset.pattern.permute.xlu0 0
    %1495 = vperm.xlu0 %1494, %v1460
    %v1496 = vpop.permute.xlu0 %1495
    %1499 = vset.pattern.permute.xlu0 0
    %1500 = vperm.xlu0 %1499, %v1461
    %v1501 = vpop.permute.xlu0 %1500
    %1504 = vset.pattern.permute.xlu0 0
    %1505 = vperm.xlu0 %1504, %v1462
    %v1506 = vpop.permute.xlu0 %1505
    %1509 = vset.pattern.permute.xlu0 0
    %1510 = vperm.xlu0 %1509, %v1463
    %v1511 = vpop.permute.xlu0 %1510
    %1514 = vset.pattern.permute.xlu0 0
    %1515 = vperm.xlu0 %1514, %v1464
    %v1516 = vpop.permute.xlu0 %1515
    %1519 = vset.pattern.permute.xlu0 0
    %1520 = vperm.xlu0 %1519, %v1465
    %v1521 = vpop.permute.xlu0 %1520
    %1524 = vset.pattern.permute.xlu0 0
    %1525 = vperm.xlu0 %1524, %v1466
    %v1526 = vpop.permute.xlu0 %1525
    %1529 = vset.pattern.permute.xlu0 0
    %1530 = vperm.xlu0 %1529, %v1467
    %v1531 = vpop.permute.xlu0 %1530
    %1534 = vset.pattern.permute.xlu0 0
    %1535 = vperm.xlu0 %1534, %v1468
    %v1536 = vpop.permute.xlu0 %1535
    %1539 = vset.pattern.permute.xlu0 0
    %1540 = vperm.xlu0 %1539, %v1469
    %v1541 = vpop.permute.xlu0 %1540
    %1544 = vset.pattern.permute.xlu0 0
    %1545 = vperm.xlu0 %1544, %v1470
    %v1546 = vpop.permute.xlu0 %1545
    %v1549 = vlaneseq
    %v1550 = vshrl.u32 %v1549, 7
    %v1551 = vsub.s32 0, %v1550
    %v1552 = vrot.slane %v1472, %v1551
    %v1554 = vmul.f32 %v1476, %v1552
    %v1555 = vmul.f32 %v1481, %v1552
    %v1556 = vmul.f32 %v1486, %v1552
    %v1557 = vmul.f32 %v1491, %v1552
    %v1558 = vmul.f32 %v1496, %v1552
    %v1559 = vmul.f32 %v1501, %v1552
    %v1560 = vmul.f32 %v1506, %v1552
    %v1561 = vmul.f32 %v1511, %v1552
    %v1562 = vmul.f32 %v1516, %v1552
    %v1563 = vmul.f32 %v1521, %v1552
    %v1564 = vmul.f32 %v1526, %v1552
    %v1565 = vmul.f32 %v1531, %v1552
    %v1566 = vmul.f32 %v1536, %v1552
    %v1567 = vmul.f32 %v1541, %v1552
    %v1568 = vmul.f32 %v1546, %v1552
    %v1569 = vadd.f32 %v1441, %v1554
    %v1570 = vadd.f32 %v1442, %v1555
    %v1571 = vadd.f32 %v1443, %v1556
    %v1572 = vadd.f32 %v1444, %v1557
    %v1573 = vadd.f32 %v1445, %v1558
    %v1574 = vadd.f32 %v1446, %v1559
    %v1575 = vadd.f32 %v1447, %v1560
    %v1576 = vadd.f32 %v1448, %v1561
    %v1577 = vadd.f32 %v1449, %v1562
    %v1578 = vadd.f32 %v1450, %v1563
    %v1579 = vadd.f32 %v1451, %v1564
    %v1580 = vadd.f32 %v1452, %v1565
    %v1581 = vadd.f32 %v1453, %v1566
    %v1582 = vadd.f32 %v1454, %v1567
    %v1583 = vadd.f32 %v1455, %v1568
    %v1584 = vld [vmem:[%s0 + $0x8] sm:$0xff]
    %v1585 = vld [vmem:[%s0 + $0x10] sm:$0xff]
    %v1586 = vld [vmem:[%s0 + $0x18] sm:$0xff]
    %v1587 = vld [vmem:[%s0 + $0x20] sm:$0xff]
    %v1588 = vld [vmem:[%s0 + $0x28] sm:$0xff]
    %v1589 = vld [vmem:[%s0 + $0x30] sm:$0xff]
    %v1590 = vld [vmem:[%s0 + $0x38] sm:$0xff]
    %v1591 = vld [vmem:[%s0 + $0x40] sm:$0xff]
    %v1592 = vld [vmem:[%s0 + $0x48] sm:$0xff]
    %v1593 = vld [vmem:[%s0 + $0x50] sm:$0xff]
    %v1594 = vld [vmem:[%s0 + $0x58] sm:$0xff]
    %v1595 = vld [vmem:[%s0 + $0x60] sm:$0xff]
    %v1596 = vld [vmem:[%s0 + $0x68] sm:$0xff]
    %v1597 = vld [vmem:[%s0 + $0x70] sm:$0xff]
    %v1598 = vld [vmem:[%s0 + $0x78] sm:$0x3f]
    %s1599 = scalar_lea.vmem [#allocation13], 8
    %v1600 = vld [vmem:[%s1599] sm:$0x1]
    %1602 = vset.pattern.permute.xlu0 0
    %1603 = vperm.xlu0 %1602, %v1584
    %v1604 = vpop.permute.xlu0 %1603
    %1607 = vset.pattern.permute.xlu0 0
    %1608 = vperm.xlu0 %1607, %v1585
    %v1609 = vpop.permute.xlu0 %1608
    %1612 = vset.pattern.permute.xlu0 0
    %1613 = vperm.xlu0 %1612, %v1586
    %v1614 = vpop.permute.xlu0 %1613
    %1617 = vset.pattern.permute.xlu0 0
    %1618 = vperm.xlu0 %1617, %v1587
    %v1619 = vpop.permute.xlu0 %1618
    %1622 = vset.pattern.permute.xlu0 0
    %1623 = vperm.xlu0 %1622, %v1588
    %v1624 = vpop.permute.xlu0 %1623
    %1627 = vset.pattern.permute.xlu0 0
    %1628 = vperm.xlu0 %1627, %v1589
    %v1629 = vpop.permute.xlu0 %1628
    %1632 = vset.pattern.permute.xlu0 0
    %1633 = vperm.xlu0 %1632, %v1590
    %v1634 = vpop.permute.xlu0 %1633
    %1637 = vset.pattern.permute.xlu0 0
    %1638 = vperm.xlu0 %1637, %v1591
    %v1639 = vpop.permute.xlu0 %1638
    %1642 = vset.pattern.permute.xlu0 0
    %1643 = vperm.xlu0 %1642, %v1592
    %v1644 = vpop.permute.xlu0 %1643
    %1647 = vset.pattern.permute.xlu0 0
    %1648 = vperm.xlu0 %1647, %v1593
    %v1649 = vpop.permute.xlu0 %1648
    %1652 = vset.pattern.permute.xlu0 0
    %1653 = vperm.xlu0 %1652, %v1594
    %v1654 = vpop.permute.xlu0 %1653
    %1657 = vset.pattern.permute.xlu0 0
    %1658 = vperm.xlu0 %1657, %v1595
    %v1659 = vpop.permute.xlu0 %1658
    %1662 = vset.pattern.permute.xlu0 0
    %1663 = vperm.xlu0 %1662, %v1596
    %v1664 = vpop.permute.xlu0 %1663
    %1667 = vset.pattern.permute.xlu0 0
    %1668 = vperm.xlu0 %1667, %v1597
    %v1669 = vpop.permute.xlu0 %1668
    %1672 = vset.pattern.permute.xlu0 0
    %1673 = vperm.xlu0 %1672, %v1598
    %v1674 = vpop.permute.xlu0 %1673
    %v1677 = vlaneseq
    %v1678 = vshrl.u32 %v1677, 7
    %v1679 = vsub.s32 0, %v1678
    %v1680 = vrot.slane %v1600, %v1679
    %v1682 = vmul.f32 %v1604, %v1680
    %v1683 = vmul.f32 %v1609, %v1680
    %v1684 = vmul.f32 %v1614, %v1680
    %v1685 = vmul.f32 %v1619, %v1680
    %v1686 = vmul.f32 %v1624, %v1680
    %v1687 = vmul.f32 %v1629, %v1680
    %v1688 = vmul.f32 %v1634, %v1680
    %v1689 = vmul.f32 %v1639, %v1680
    %v1690 = vmul.f32 %v1644, %v1680
    %v1691 = vmul.f32 %v1649, %v1680
    %v1692 = vmul.f32 %v1654, %v1680
    %v1693 = vmul.f32 %v1659, %v1680
    %v1694 = vmul.f32 %v1664, %v1680
    %v1695 = vmul.f32 %v1669, %v1680
    %v1696 = vmul.f32 %v1674, %v1680
    %v1697 = vadd.f32 %v1569, %v1682
    %v1698 = vadd.f32 %v1570, %v1683
    %v1699 = vadd.f32 %v1571, %v1684
    %v1700 = vadd.f32 %v1572, %v1685
    %v1701 = vadd.f32 %v1573, %v1686
    %v1702 = vadd.f32 %v1574, %v1687
    %v1703 = vadd.f32 %v1575, %v1688
    %v1704 = vadd.f32 %v1576, %v1689
    %v1705 = vadd.f32 %v1577, %v1690
    %v1706 = vadd.f32 %v1578, %v1691
    %v1707 = vadd.f32 %v1579, %v1692
    %v1708 = vadd.f32 %v1580, %v1693
    %v1709 = vadd.f32 %v1581, %v1694
    %v1710 = vadd.f32 %v1582, %v1695
    %v1711 = vadd.f32 %v1583, %v1696
    %v1712 = vld [vmem:[%s0 + $0x9] sm:$0xff]
    %v1713 = vld [vmem:[%s0 + $0x11] sm:$0xff]
    %v1714 = vld [vmem:[%s0 + $0x19] sm:$0xff]
    %v1715 = vld [vmem:[%s0 + $0x21] sm:$0xff]
    %v1716 = vld [vmem:[%s0 + $0x29] sm:$0xff]
    %v1717 = vld [vmem:[%s0 + $0x31] sm:$0xff]
    %v1718 = vld [vmem:[%s0 + $0x39] sm:$0xff]
    %v1719 = vld [vmem:[%s0 + $0x41] sm:$0xff]
    %v1720 = vld [vmem:[%s0 + $0x49] sm:$0xff]
    %v1721 = vld [vmem:[%s0 + $0x51] sm:$0xff]
    %v1722 = vld [vmem:[%s0 + $0x59] sm:$0xff]
    %v1723 = vld [vmem:[%s0 + $0x61] sm:$0xff]
    %v1724 = vld [vmem:[%s0 + $0x69] sm:$0xff]
    %v1725 = vld [vmem:[%s0 + $0x71] sm:$0xff]
    %v1726 = vld [vmem:[%s0 + $0x79] sm:$0x3f]
    %s1727 = scalar_lea.vmem [#allocation13], 9
    %v1728 = vld [vmem:[%s1727] sm:$0x1]
    %1730 = vset.pattern.permute.xlu0 0
    %1731 = vperm.xlu0 %1730, %v1712
    %v1732 = vpop.permute.xlu0 %1731
    %1735 = vset.pattern.permute.xlu0 0
    %1736 = vperm.xlu0 %1735, %v1713
    %v1737 = vpop.permute.xlu0 %1736
    %1740 = vset.pattern.permute.xlu0 0
    %1741 = vperm.xlu0 %1740, %v1714
    %v1742 = vpop.permute.xlu0 %1741
    %1745 = vset.pattern.permute.xlu0 0
    %1746 = vperm.xlu0 %1745, %v1715
    %v1747 = vpop.permute.xlu0 %1746
    %1750 = vset.pattern.permute.xlu0 0
    %1751 = vperm.xlu0 %1750, %v1716
    %v1752 = vpop.permute.xlu0 %1751
    %1755 = vset.pattern.permute.xlu0 0
    %1756 = vperm.xlu0 %1755, %v1717
    %v1757 = vpop.permute.xlu0 %1756
    %1760 = vset.pattern.permute.xlu0 0
    %1761 = vperm.xlu0 %1760, %v1718
    %v1762 = vpop.permute.xlu0 %1761
    %1765 = vset.pattern.permute.xlu0 0
    %1766 = vperm.xlu0 %1765, %v1719
    %v1767 = vpop.permute.xlu0 %1766
    %1770 = vset.pattern.permute.xlu0 0
    %1771 = vperm.xlu0 %1770, %v1720
    %v1772 = vpop.permute.xlu0 %1771
    %1775 = vset.pattern.permute.xlu0 0
    %1776 = vperm.xlu0 %1775, %v1721
    %v1777 = vpop.permute.xlu0 %1776
    %1780 = vset.pattern.permute.xlu0 0
    %1781 = vperm.xlu0 %1780, %v1722
    %v1782 = vpop.permute.xlu0 %1781
    %1785 = vset.pattern.permute.xlu0 0
    %1786 = vperm.xlu0 %1785, %v1723
    %v1787 = vpop.permute.xlu0 %1786
    %1790 = vset.pattern.permute.xlu0 0
    %1791 = vperm.xlu0 %1790, %v1724
    %v1792 = vpop.permute.xlu0 %1791
    %1795 = vset.pattern.permute.xlu0 0
    %1796 = vperm.xlu0 %1795, %v1725
    %v1797 = vpop.permute.xlu0 %1796
    %1800 = vset.pattern.permute.xlu0 0
    %1801 = vperm.xlu0 %1800, %v1726
    %v1802 = vpop.permute.xlu0 %1801
    %v1805 = vlaneseq
    %v1806 = vshrl.u32 %v1805, 7
    %v1807 = vsub.s32 0, %v1806
    %v1808 = vrot.slane %v1728, %v1807
    %v1810 = vmul.f32 %v1732, %v1808
    %v1811 = vmul.f32 %v1737, %v1808
    %v1812 = vmul.f32 %v1742, %v1808
    %v1813 = vmul.f32 %v1747, %v1808
    %v1814 = vmul.f32 %v1752, %v1808
    %v1815 = vmul.f32 %v1757, %v1808
    %v1816 = vmul.f32 %v1762, %v1808
    %v1817 = vmul.f32 %v1767, %v1808
    %v1818 = vmul.f32 %v1772, %v1808
    %v1819 = vmul.f32 %v1777, %v1808
    %v1820 = vmul.f32 %v1782, %v1808
    %v1821 = vmul.f32 %v1787, %v1808
    %v1822 = vmul.f32 %v1792, %v1808
    %v1823 = vmul.f32 %v1797, %v1808
    %v1824 = vmul.f32 %v1802, %v1808
    %v1825 = vadd.f32 %v1697, %v1810
    %v1826 = vadd.f32 %v1698, %v1811
    %v1827 = vadd.f32 %v1699, %v1812
    %v1828 = vadd.f32 %v1700, %v1813
    %v1829 = vadd.f32 %v1701, %v1814
    %v1830 = vadd.f32 %v1702, %v1815
    %v1831 = vadd.f32 %v1703, %v1816
    %v1832 = vadd.f32 %v1704, %v1817
    %v1833 = vadd.f32 %v1705, %v1818
    %v1834 = vadd.f32 %v1706, %v1819
    %v1835 = vadd.f32 %v1707, %v1820
    %v1836 = vadd.f32 %v1708, %v1821
    %v1837 = vadd.f32 %v1709, %v1822
    %v1838 = vadd.f32 %v1710, %v1823
    %v1839 = vadd.f32 %v1711, %v1824
    %v1840 = vld [vmem:[%s0 + $0xa] sm:$0xff]
    %v1841 = vld [vmem:[%s0 + $0x12] sm:$0xff]
    %v1842 = vld [vmem:[%s0 + $0x1a] sm:$0xff]
    %v1843 = vld [vmem:[%s0 + $0x22] sm:$0xff]
    %v1844 = vld [vmem:[%s0 + $0x2a] sm:$0xff]
    %v1845 = vld [vmem:[%s0 + $0x32] sm:$0xff]
    %v1846 = vld [vmem:[%s0 + $0x3a] sm:$0xff]
    %v1847 = vld [vmem:[%s0 + $0x42] sm:$0xff]
    %v1848 = vld [vmem:[%s0 + $0x4a] sm:$0xff]
    %v1849 = vld [vmem:[%s0 + $0x52] sm:$0xff]
    %v1850 = vld [vmem:[%s0 + $0x5a] sm:$0xff]
    %v1851 = vld [vmem:[%s0 + $0x62] sm:$0xff]
    %v1852 = vld [vmem:[%s0 + $0x6a] sm:$0xff]
    %v1853 = vld [vmem:[%s0 + $0x72] sm:$0xff]
    %v1854 = vld [vmem:[%s0 + $0x7a] sm:$0x3f]
    %s1855 = scalar_lea.vmem [#allocation13], 10
    %v1856 = vld [vmem:[%s1855] sm:$0x1]
    %1858 = vset.pattern.permute.xlu0 0
    %1859 = vperm.xlu0 %1858, %v1840
    %v1860 = vpop.permute.xlu0 %1859
    %1863 = vset.pattern.permute.xlu0 0
    %1864 = vperm.xlu0 %1863, %v1841
    %v1865 = vpop.permute.xlu0 %1864
    %1868 = vset.pattern.permute.xlu0 0
    %1869 = vperm.xlu0 %1868, %v1842
    %v1870 = vpop.permute.xlu0 %1869
    %1873 = vset.pattern.permute.xlu0 0
    %1874 = vperm.xlu0 %1873, %v1843
    %v1875 = vpop.permute.xlu0 %1874
    %1878 = vset.pattern.permute.xlu0 0
    %1879 = vperm.xlu0 %1878, %v1844
    %v1880 = vpop.permute.xlu0 %1879
    %1883 = vset.pattern.permute.xlu0 0
    %1884 = vperm.xlu0 %1883, %v1845
    %v1885 = vpop.permute.xlu0 %1884
    %1888 = vset.pattern.permute.xlu0 0
    %1889 = vperm.xlu0 %1888, %v1846
    %v1890 = vpop.permute.xlu0 %1889
    %1893 = vset.pattern.permute.xlu0 0
    %1894 = vperm.xlu0 %1893, %v1847
    %v1895 = vpop.permute.xlu0 %1894
    %1898 = vset.pattern.permute.xlu0 0
    %1899 = vperm.xlu0 %1898, %v1848
    %v1900 = vpop.permute.xlu0 %1899
    %1903 = vset.pattern.permute.xlu0 0
    %1904 = vperm.xlu0 %1903, %v1849
    %v1905 = vpop.permute.xlu0 %1904
    %1908 = vset.pattern.permute.xlu0 0
    %1909 = vperm.xlu0 %1908, %v1850
    %v1910 = vpop.permute.xlu0 %1909
    %1913 = vset.pattern.permute.xlu0 0
    %1914 = vperm.xlu0 %1913, %v1851
    %v1915 = vpop.permute.xlu0 %1914
    %1918 = vset.pattern.permute.xlu0 0
    %1919 = vperm.xlu0 %1918, %v1852
    %v1920 = vpop.permute.xlu0 %1919
    %1923 = vset.pattern.permute.xlu0 0
    %1924 = vperm.xlu0 %1923, %v1853
    %v1925 = vpop.permute.xlu0 %1924
    %1928 = vset.pattern.permute.xlu0 0
    %1929 = vperm.xlu0 %1928, %v1854
    %v1930 = vpop.permute.xlu0 %1929
    %v1933 = vlaneseq
    %v1934 = vshrl.u32 %v1933, 7
    %v1935 = vsub.s32 0, %v1934
    %v1936 = vrot.slane %v1856, %v1935
    %v1938 = vmul.f32 %v1860, %v1936
    %v1939 = vmul.f32 %v1865, %v1936
    %v1940 = vmul.f32 %v1870, %v1936
    %v1941 = vmul.f32 %v1875, %v1936
    %v1942 = vmul.f32 %v1880, %v1936
    %v1943 = vmul.f32 %v1885, %v1936
    %v1944 = vmul.f32 %v1890, %v1936
    %v1945 = vmul.f32 %v1895, %v1936
    %v1946 = vmul.f32 %v1900, %v1936
    %v1947 = vmul.f32 %v1905, %v1936
    %v1948 = vmul.f32 %v1910, %v1936
    %v1949 = vmul.f32 %v1915, %v1936
    %v1950 = vmul.f32 %v1920, %v1936
    %v1951 = vmul.f32 %v1925, %v1936
    %v1952 = vmul.f32 %v1930, %v1936
    %v1953 = vadd.f32 %v1825, %v1938
    %v1954 = vadd.f32 %v1826, %v1939
    %v1955 = vadd.f32 %v1827, %v1940
    %v1956 = vadd.f32 %v1828, %v1941
    %v1957 = vadd.f32 %v1829, %v1942
    %v1958 = vadd.f32 %v1830, %v1943
    %v1959 = vadd.f32 %v1831, %v1944
    %v1960 = vadd.f32 %v1832, %v1945
    %v1961 = vadd.f32 %v1833, %v1946
    %v1962 = vadd.f32 %v1834, %v1947
    %v1963 = vadd.f32 %v1835, %v1948
    %v1964 = vadd.f32 %v1836, %v1949
    %v1965 = vadd.f32 %v1837, %v1950
    %v1966 = vadd.f32 %v1838, %v1951
    %v1967 = vadd.f32 %v1839, %v1952
    %v1968 = vlaneseq
    %v1969 = vshrl.u32 %v1968, 7
    %v1970 = vsub.s32 0, %v1969
    %v1971 = vrot.slane %v559, %v1970
    %v1972 = vmul.f32 %v1953, %v1971
    %v1973 = vmul.f32 %v1954, %v1971
    %v1974 = vmul.f32 %v1955, %v1971
    %v1975 = vmul.f32 %v1956, %v1971
    %v1976 = vmul.f32 %v1957, %v1971
    %v1977 = vmul.f32 %v1958, %v1971
    %v1978 = vmul.f32 %v1959, %v1971
    %v1979 = vmul.f32 %v1960, %v1971
    %v1980 = vmul.f32 %v1961, %v1971
    %v1981 = vmul.f32 %v1962, %v1971
    %v1982 = vmul.f32 %v1963, %v1971
    %v1983 = vmul.f32 %v1964, %v1971
    %v1984 = vmul.f32 %v1965, %v1971
    %v1985 = vmul.f32 %v1966, %v1971
    %v1986 = vmul.f32 %v1967, %v1971
    %v1987 = vlaneseq
    %v1988 = vshrl.u32 %v1987, 7
    %v1989 = vsub.s32 0, %v1988
    %v1990 = vrot.slane %v560, %v1989
    %v1991 = vadd.f32 %v1972, %v1990
    %v1992 = vadd.f32 %v1973, %v1990
    %v1993 = vadd.f32 %v1974, %v1990
    %v1994 = vadd.f32 %v1975, %v1990
    %v1995 = vadd.f32 %v1976, %v1990
    %v1996 = vadd.f32 %v1977, %v1990
    %v1997 = vadd.f32 %v1978, %v1990
    %v1998 = vadd.f32 %v1979, %v1990
    %v1999 = vadd.f32 %v1980, %v1990
    %v2000 = vadd.f32 %v1981, %v1990
    %v2001 = vadd.f32 %v1982, %v1990
    %v2002 = vadd.f32 %v1983, %v1990
    %v2003 = vadd.f32 %v1984, %v1990
    %v2004 = vadd.f32 %v1985, %v1990
    %v2005 = vadd.f32 %v1986, %v1990
    %v2006 = vmax.f32 %v1991, 0.0
    %v2007 = vmax.f32 %v1992, 0.0
    %v2008 = vmax.f32 %v1993, 0.0
    %v2009 = vmax.f32 %v1994, 0.0
    %v2010 = vmax.f32 %v1995, 0.0
    %v2011 = vmax.f32 %v1996, 0.0
    %v2012 = vmax.f32 %v1997, 0.0
    %v2013 = vmax.f32 %v1998, 0.0
    %v2014 = vmax.f32 %v1999, 0.0
    %v2015 = vmax.f32 %v2000, 0.0
    %v2016 = vmax.f32 %v2001, 0.0
    %v2017 = vmax.f32 %v2002, 0.0
    %v2018 = vmax.f32 %v2003, 0.0
    %v2019 = vmax.f32 %v2004, 0.0
    %v2020 = vmax.f32 %v2005, 0.0
    %2021 = vst [vmem:[#allocation8] sm:$0xff] %v2006
    %2022 = vst [vmem:[#allocation8 + $0x8] sm:$0xff] %v2007
    %2023 = vst [vmem:[#allocation8 + $0x10] sm:$0xff] %v2008
    %2024 = vst [vmem:[#allocation8 + $0x18] sm:$0xff] %v2009
    %2025 = vst [vmem:[#allocation8 + $0x20] sm:$0xff] %v2010
    %2026 = vst [vmem:[#allocation8 + $0x28] sm:$0xff] %v2011
    %2027 = vst [vmem:[#allocation8 + $0x30] sm:$0xff] %v2012
    %2028 = vst [vmem:[#allocation8 + $0x38] sm:$0xff] %v2013
    %2029 = vst [vmem:[#allocation8 + $0x40] sm:$0xff] %v2014
    %2030 = vst [vmem:[#allocation8 + $0x48] sm:$0xff] %v2015
    %2031 = vst [vmem:[#allocation8 + $0x50] sm:$0xff] %v2016
    %2032 = vst [vmem:[#allocation8 + $0x58] sm:$0xff] %v2017
    %2033 = vst [vmem:[#allocation8 + $0x60] sm:$0xff] %v2018
    %2034 = vst [vmem:[#allocation8 + $0x68] sm:$0xff] %v2019
    %2035 = vst [vmem:[#allocation8 + $0x70] sm:$0x3f] %v2020
    %v2036 = vld [vmem:[#allocation8] ss:$2 sm:$0xff]
    %s2037 = scalar_lea.vmem [#allocation8], 16
    %v2038 = vld [vmem:[%s2037] ss:$2 sm:$0xff]
    %s2039 = scalar_lea.vmem [#allocation8], 32
    %v2040 = vld [vmem:[%s2039] ss:$2 sm:$0xff]
    %s2041 = scalar_lea.vmem [#allocation8], 48
    %v2042 = vld [vmem:[%s2041] ss:$2 sm:$0xff]
    %s2043 = scalar_lea.vmem [#allocation8], 64
    %v2044 = vld [vmem:[%s2043] ss:$2 sm:$0xff]
    %s2045 = scalar_lea.vmem [#allocation8], 80
    %v2046 = vld [vmem:[%s2045] ss:$2 sm:$0xff]
    %s2047 = scalar_lea.vmem [#allocation8], 96
    %v2048 = vld [vmem:[%s2047] ss:$2 sm:$0xff]
    %s2049 = scalar_lea.vmem [#allocation8], 112
    %v2050 = vld [vmem:[%s2049] ss:$2 sm:$0x7]
    %s2051 = scalar_lea.vmem [#allocation8], 1
    %v2052 = vld [vmem:[%s2051] ss:$2 sm:$0xff]
    %s2053 = scalar_lea.vmem [#allocation8], 17
    %v2054 = vld [vmem:[%s2053] ss:$2 sm:$0xff]
    %s2055 = scalar_lea.vmem [#allocation8], 33
    %v2056 = vld [vmem:[%s2055] ss:$2 sm:$0xff]
    %s2057 = scalar_lea.vmem [#allocation8], 49
    %v2058 = vld [vmem:[%s2057] ss:$2 sm:$0xff]
    %s2059 = scalar_lea.vmem [#allocation8], 65
    %v2060 = vld [vmem:[%s2059] ss:$2 sm:$0xff]
    %s2061 = scalar_lea.vmem [#allocation8], 81
    %v2062 = vld [vmem:[%s2061] ss:$2 sm:$0xff]
    %s2063 = scalar_lea.vmem [#allocation8], 97
    %v2064 = vld [vmem:[%s2063] ss:$2 sm:$0xff]
    %s2065 = scalar_lea.vmem [#allocation8], 113
    %v2066 = vld [vmem:[%s2065] ss:$2 sm:$0x7]
    %v2067 = vmax.f32 %v2036, %v2052
    %v2068 = vmax.f32 %v2038, %v2054
    %v2069 = vmax.f32 %v2040, %v2056
    %v2070 = vmax.f32 %v2042, %v2058
    %v2071 = vmax.f32 %v2044, %v2060
    %v2072 = vmax.f32 %v2046, %v2062
    %v2073 = vmax.f32 %v2048, %v2064
    %v2074 = vmax.f32 %v2050, %v2066
    %2075 = vst [vmem:[#allocation9] sm:$0xff] %v2067
    %2076 = vst [vmem:[#allocation9 + $0x8] sm:$0xff] %v2068
    %2077 = vst [vmem:[#allocation9 + $0x10] sm:$0xff] %v2069
    %2078 = vst [vmem:[#allocation9 + $0x18] sm:$0xff] %v2070
    %2079 = vst [vmem:[#allocation9 + $0x20] sm:$0xff] %v2071
    %2080 = vst [vmem:[#allocation9 + $0x28] sm:$0xff] %v2072
    %2081 = vst [vmem:[#allocation9 + $0x30] sm:$0xff] %v2073
    %2082 = vst [vmem:[#allocation9 + $0x38] sm:$0x7] %v2074
    %v2083 = vld [vmem:[#allocation9] sm:$0xff]
    %v2084 = vld [vmem:[#allocation9 + $0x8] sm:$0xff]
    %v2085 = vld [vmem:[#allocation9 + $0x10] sm:$0xff]
    %v2086 = vld [vmem:[#allocation9 + $0x18] sm:$0xff]
    %v2087 = vld [vmem:[#allocation9 + $0x20] sm:$0xff]
    %v2088 = vld [vmem:[#allocation9 + $0x28] sm:$0xff]
    %v2089 = vld [vmem:[#allocation9 + $0x30] sm:$0x1]
    %2090 = vst [vmem:[#allocation10] sm:$0xff] %v2083
    %2091 = vst [vmem:[#allocation10 + $0x58] sm:$0xff] %v2084
    %2092 = vst [vmem:[#allocation10 + $0xb0] sm:$0xff] %v2085
    %2093 = vst [vmem:[#allocation10 + $0x108] sm:$0xff] %v2086
    %2094 = vst [vmem:[#allocation10 + $0x160] sm:$0xff] %v2087
    %2095 = vst [vmem:[#allocation10 + $0x1b8] sm:$0xff] %v2088
    %2096 = vst [vmem:[#allocation10 + $0x210] sm:$0x1] %v2089
    %v2097 = vld [vmem:[#allocation9 + $0x1] sm:$0xff]
    %v2098 = vld [vmem:[#allocation9 + $0x9] sm:$0xff]
    %v2099 = vld [vmem:[#allocation9 + $0x11] sm:$0xff]
    %v2100 = vld [vmem:[#allocation9 + $0x19] sm:$0xff]
    %v2101 = vld [vmem:[#allocation9 + $0x21] sm:$0xff]
    %v2102 = vld [vmem:[#allocation9 + $0x29] sm:$0xff]
    %v2103 = vld [vmem:[#allocation9 + $0x31] sm:$0x1]
    %2104 = vst [vmem:[#allocation10 + $0x8] sm:$0xff] %v2097
    %2105 = vst [vmem:[#allocation10 + $0x60] sm:$0xff] %v2098
    %2106 = vst [vmem:[#allocation10 + $0xb8] sm:$0xff] %v2099
    %2107 = vst [vmem:[#allocation10 + $0x110] sm:$0xff] %v2100
    %2108 = vst [vmem:[#allocation10 + $0x168] sm:$0xff] %v2101
    %2109 = vst [vmem:[#allocation10 + $0x1c0] sm:$0xff] %v2102
    %2110 = vst [vmem:[#allocation10 + $0x218] sm:$0x1] %v2103
    %v2111 = vld [vmem:[#allocation9 + $0x2] sm:$0xff]
    %v2112 = vld [vmem:[#allocation9 + $0xa] sm:$0xff]
    %v2113 = vld [vmem:[#allocation9 + $0x12] sm:$0xff]
    %v2114 = vld [vmem:[#allocation9 + $0x1a] sm:$0xff]
    %v2115 = vld [vmem:[#allocation9 + $0x22] sm:$0xff]
    %v2116 = vld [vmem:[#allocation9 + $0x2a] sm:$0xff]
    %v2117 = vld [vmem:[#allocation9 + $0x32] sm:$0x1]
    %2118 = vst [vmem:[#allocation10 + $0x10] sm:$0xff] %v2111
    %2119 = vst [vmem:[#allocation10 + $0x68] sm:$0xff] %v2112
    %2120 = vst [vmem:[#allocation10 + $0xc0] sm:$0xff] %v2113
    %2121 = vst [vmem:[#allocation10 + $0x118] sm:$0xff] %v2114
    %2122 = vst [vmem:[#allocation10 + $0x170] sm:$0xff] %v2115
    %2123 = vst [vmem:[#allocation10 + $0x1c8] sm:$0xff] %v2116
    %2124 = vst [vmem:[#allocation10 + $0x220] sm:$0x1] %v2117
    %v2125 = vld [vmem:[#allocation9 + $0x3] sm:$0xff]
    %v2126 = vld [vmem:[#allocation9 + $0xb] sm:$0xff]
    %v2127 = vld [vmem:[#allocation9 + $0x13] sm:$0xff]
    %v2128 = vld [vmem:[#allocation9 + $0x1b] sm:$0xff]
    %v2129 = vld [vmem:[#allocation9 + $0x23] sm:$0xff]
    %v2130 = vld [vmem:[#allocation9 + $0x2b] sm:$0xff]
    %v2131 = vld [vmem:[#allocation9 + $0x33] sm:$0x1]
    %2132 = vst [vmem:[#allocation10 + $0x18] sm:$0xff] %v2125
    %2133 = vst [vmem:[#allocation10 + $0x70] sm:$0xff] %v2126
    %2134 = vst [vmem:[#allocation10 + $0xc8] sm:$0xff] %v2127
    %2135 = vst [vmem:[#allocation10 + $0x120] sm:$0xff] %v2128
    %2136 = vst [vmem:[#allocation10 + $0x178] sm:$0xff] %v2129
    %2137 = vst [vmem:[#allocation10 + $0x1d0] sm:$0xff] %v2130
    %2138 = vst [vmem:[#allocation10 + $0x228] sm:$0x1] %v2131
    %v2139 = vld [vmem:[#allocation9 + $0x4] sm:$0xff]
    %v2140 = vld [vmem:[#allocation9 + $0xc] sm:$0xff]
    %v2141 = vld [vmem:[#allocation9 + $0x14] sm:$0xff]
    %v2142 = vld [vmem:[#allocation9 + $0x1c] sm:$0xff]
    %v2143 = vld [vmem:[#allocation9 + $0x24] sm:$0xff]
    %v2144 = vld [vmem:[#allocation9 + $0x2c] sm:$0xff]
    %v2145 = vld [vmem:[#allocation9 + $0x34] sm:$0x1]
    %2146 = vst [vmem:[#allocation10 + $0x20] sm:$0xff] %v2139
    %2147 = vst [vmem:[#allocation10 + $0x78] sm:$0xff] %v2140
    %2148 = vst [vmem:[#allocation10 + $0xd0] sm:$0xff] %v2141
    %2149 = vst [vmem:[#allocation10 + $0x128] sm:$0xff] %v2142
    %2150 = vst [vmem:[#allocation10 + $0x180] sm:$0xff] %v2143
    %2151 = vst [vmem:[#allocation10 + $0x1d8] sm:$0xff] %v2144
    %2152 = vst [vmem:[#allocation10 + $0x230] sm:$0x1] %v2145
    %v2153 = vld [vmem:[#allocation9 + $0x5] sm:$0xff]
    %v2154 = vld [vmem:[#allocation9 + $0xd] sm:$0xff]
    %v2155 = vld [vmem:[#allocation9 + $0x15] sm:$0xff]
    %v2156 = vld [vmem:[#allocation9 + $0x1d] sm:$0xff]
    %v2157 = vld [vmem:[#allocation9 + $0x25] sm:$0xff]
    %v2158 = vld [vmem:[#allocation9 + $0x2d] sm:$0xff]
    %v2159 = vld [vmem:[#allocation9 + $0x35] sm:$0x1]
    %2160 = vst [vmem:[#allocation10 + $0x28] sm:$0xff] %v2153
    %2161 = vst [vmem:[#allocation10 + $0x80] sm:$0xff] %v2154
    %2162 = vst [vmem:[#allocation10 + $0xd8] sm:$0xff] %v2155
    %2163 = vst [vmem:[#allocation10 + $0x130] sm:$0xff] %v2156
    %2164 = vst [vmem:[#allocation10 + $0x188] sm:$0xff] %v2157
    %2165 = vst [vmem:[#allocation10 + $0x1e0] sm:$0xff] %v2158
    %2166 = vst [vmem:[#allocation10 + $0x238] sm:$0x1] %v2159
    %v2167 = vld [vmem:[#allocation9 + $0x6] sm:$0xff]
    %v2168 = vld [vmem:[#allocation9 + $0xe] sm:$0xff]
    %v2169 = vld [vmem:[#allocation9 + $0x16] sm:$0xff]
    %v2170 = vld [vmem:[#allocation9 + $0x1e] sm:$0xff]
    %v2171 = vld [vmem:[#allocation9 + $0x26] sm:$0xff]
    %v2172 = vld [vmem:[#allocation9 + $0x2e] sm:$0xff]
    %v2173 = vld [vmem:[#allocation9 + $0x36] sm:$0x1]
    %2174 = vst [vmem:[#allocation10 + $0x30] sm:$0xff] %v2167
    %2175 = vst [vmem:[#allocation10 + $0x88] sm:$0xff] %v2168
    %2176 = vst [vmem:[#allocation10 + $0xe0] sm:$0xff] %v2169
    %2177 = vst [vmem:[#allocation10 + $0x138] sm:$0xff] %v2170
    %2178 = vst [vmem:[#allocation10 + $0x190] sm:$0xff] %v2171
    %2179 = vst [vmem:[#allocation10 + $0x1e8] sm:$0xff] %v2172
    %2180 = vst [vmem:[#allocation10 + $0x240] sm:$0x1] %v2173
    %v2181 = vld [vmem:[#allocation9 + $0x7] sm:$0xff]
    %v2182 = vld [vmem:[#allocation9 + $0xf] sm:$0xff]
    %v2183 = vld [vmem:[#allocation9 + $0x17] sm:$0xff]
    %v2184 = vld [vmem:[#allocation9 + $0x1f] sm:$0xff]
    %v2185 = vld [vmem:[#allocation9 + $0x27] sm:$0xff]
    %v2186 = vld [vmem:[#allocation9 + $0x2f] sm:$0xff]
    %v2187 = vld [vmem:[#allocation9 + $0x37] sm:$0x1]
    %2188 = vst [vmem:[#allocation10 + $0x38] sm:$0xff] %v2181
    %2189 = vst [vmem:[#allocation10 + $0x90] sm:$0xff] %v2182
    %2190 = vst [vmem:[#allocation10 + $0xe8] sm:$0xff] %v2183
    %2191 = vst [vmem:[#allocation10 + $0x140] sm:$0xff] %v2184
    %2192 = vst [vmem:[#allocation10 + $0x198] sm:$0xff] %v2185
    %2193 = vst [vmem:[#allocation10 + $0x1f0] sm:$0xff] %v2186
    %2194 = vst [vmem:[#allocation10 + $0x248] sm:$0x1] %v2187
    %v2195 = vld [vmem:[#allocation9 + $0x8] sm:$0xff]
    %v2196 = vld [vmem:[#allocation9 + $0x10] sm:$0xff]
    %v2197 = vld [vmem:[#allocation9 + $0x18] sm:$0xff]
    %v2198 = vld [vmem:[#allocation9 + $0x20] sm:$0xff]
    %v2199 = vld [vmem:[#allocation9 + $0x28] sm:$0xff]
    %v2200 = vld [vmem:[#allocation9 + $0x30] sm:$0xff]
    %v2201 = vld [vmem:[#allocation9 + $0x38] sm:$0x1]
    %2202 = vst [vmem:[#allocation10 + $0x40] sm:$0xff] %v2195
    %2203 = vst [vmem:[#allocation10 + $0x98] sm:$0xff] %v2196
    %2204 = vst [vmem:[#allocation10 + $0xf0] sm:$0xff] %v2197
    %2205 = vst [vmem:[#allocation10 + $0x148] sm:$0xff] %v2198
    %2206 = vst [vmem:[#allocation10 + $0x1a0] sm:$0xff] %v2199
    %2207 = vst [vmem:[#allocation10 + $0x1f8] sm:$0xff] %v2200
    %2208 = vst [vmem:[#allocation10 + $0x250] sm:$0x1] %v2201
    %v2209 = vld [vmem:[#allocation9 + $0x9] sm:$0xff]
    %v2210 = vld [vmem:[#allocation9 + $0x11] sm:$0xff]
    %v2211 = vld [vmem:[#allocation9 + $0x19] sm:$0xff]
    %v2212 = vld [vmem:[#allocation9 + $0x21] sm:$0xff]
    %v2213 = vld [vmem:[#allocation9 + $0x29] sm:$0xff]
    %v2214 = vld [vmem:[#allocation9 + $0x31] sm:$0xff]
    %v2215 = vld [vmem:[#allocation9 + $0x39] sm:$0x1]
    %2216 = vst [vmem:[#allocation10 + $0x48] sm:$0xff] %v2209
    %2217 = vst [vmem:[#allocation10 + $0xa0] sm:$0xff] %v2210
    %2218 = vst [vmem:[#allocation10 + $0xf8] sm:$0xff] %v2211
    %2219 = vst [vmem:[#allocation10 + $0x150] sm:$0xff] %v2212
    %2220 = vst [vmem:[#allocation10 + $0x1a8] sm:$0xff] %v2213
    %2221 = vst [vmem:[#allocation10 + $0x200] sm:$0xff] %v2214
    %2222 = vst [vmem:[#allocation10 + $0x258] sm:$0x1] %v2215
    %v2223 = vld [vmem:[#allocation9 + $0xa] sm:$0xff]
    %v2224 = vld [vmem:[#allocation9 + $0x12] sm:$0xff]
    %v2225 = vld [vmem:[#allocation9 + $0x1a] sm:$0xff]
    %v2226 = vld [vmem:[#allocation9 + $0x22] sm:$0xff]
    %v2227 = vld [vmem:[#allocation9 + $0x2a] sm:$0xff]
    %v2228 = vld [vmem:[#allocation9 + $0x32] sm:$0xff]
    %v2229 = vld [vmem:[#allocation9 + $0x3a] sm:$0x1]
    %2230 = vst [vmem:[#allocation10 + $0x50] sm:$0xff] %v2223
    %2231 = vst [vmem:[#allocation10 + $0xa8] sm:$0xff] %v2224
    %2232 = vst [vmem:[#allocation10 + $0x100] sm:$0xff] %v2225
    %2233 = vst [vmem:[#allocation10 + $0x158] sm:$0xff] %v2226
    %2234 = vst [vmem:[#allocation10 + $0x1b0] sm:$0xff] %v2227
    %2235 = vst [vmem:[#allocation10 + $0x208] sm:$0xff] %v2228
    %2236 = vst [vmem:[#allocation10 + $0x260] sm:$0x1] %v2229
    %s2237 = scalar_lea.vmem %s0, 128
    %v2238 = vld [vmem:[%s2237] sm:$0xff]
    %v2239 = vld [vmem:[%s2237 + $0x8] sm:$0xff]
    %v2240 = vld [vmem:[%s2237 + $0x10] sm:$0xff]
    %v2241 = vld [vmem:[%s2237 + $0x18] sm:$0xff]
    %v2242 = vld [vmem:[%s2237 + $0x20] sm:$0xff]
    %v2243 = vld [vmem:[%s2237 + $0x28] sm:$0xff]
    %v2244 = vld [vmem:[%s2237 + $0x30] sm:$0xff]
    %v2245 = vld [vmem:[%s2237 + $0x38] sm:$0xff]
    %v2246 = vld [vmem:[%s2237 + $0x40] sm:$0xff]
    %v2247 = vld [vmem:[%s2237 + $0x48] sm:$0xff]
    %v2248 = vld [vmem:[%s2237 + $0x50] sm:$0xff]
    %v2249 = vld [vmem:[%s2237 + $0x58] sm:$0xff]
    %v2250 = vld [vmem:[%s2237 + $0x60] sm:$0xff]
    %v2251 = vld [vmem:[%s2237 + $0x68] sm:$0xff]
    %v2252 = vld [vmem:[%s2237 + $0x70] sm:$0x3f]
    %v2253 = vld [vmem:[#allocation13] sm:$0x1]
    %2255 = vset.pattern.permute.xlu0 0
    %2256 = vperm.xlu0 %2255, %v2238
    %v2257 = vpop.permute.xlu0 %2256
    %2260 = vset.pattern.permute.xlu0 0
    %2261 = vperm.xlu0 %2260, %v2239
    %v2262 = vpop.permute.xlu0 %2261
    %2265 = vset.pattern.permute.xlu0 0
    %2266 = vperm.xlu0 %2265, %v2240
    %v2267 = vpop.permute.xlu0 %2266
    %2270 = vset.pattern.permute.xlu0 0
    %2271 = vperm.xlu0 %2270, %v2241
    %v2272 = vpop.permute.xlu0 %2271
    %2275 = vset.pattern.permute.xlu0 0
    %2276 = vperm.xlu0 %2275, %v2242
    %v2277 = vpop.permute.xlu0 %2276
    %2280 = vset.pattern.permute.xlu0 0
    %2281 = vperm.xlu0 %2280, %v2243
    %v2282 = vpop.permute.xlu0 %2281
    %2285 = vset.pattern.permute.xlu0 0
    %2286 = vperm.xlu0 %2285, %v2244
    %v2287 = vpop.permute.xlu0 %2286
    %2290 = vset.pattern.permute.xlu0 0
    %2291 = vperm.xlu0 %2290, %v2245
    %v2292 = vpop.permute.xlu0 %2291
    %2295 = vset.pattern.permute.xlu0 0
    %2296 = vperm.xlu0 %2295, %v2246
    %v2297 = vpop.permute.xlu0 %2296
    %2300 = vset.pattern.permute.xlu0 0
    %2301 = vperm.xlu0 %2300, %v2247
    %v2302 = vpop.permute.xlu0 %2301
    %2305 = vset.pattern.permute.xlu0 0
    %2306 = vperm.xlu0 %2305, %v2248
    %v2307 = vpop.permute.xlu0 %2306
    %2310 = vset.pattern.permute.xlu0 0
    %2311 = vperm.xlu0 %2310, %v2249
    %v2312 = vpop.permute.xlu0 %2311
    %2315 = vset.pattern.permute.xlu0 0
    %2316 = vperm.xlu0 %2315, %v2250
    %v2317 = vpop.permute.xlu0 %2316
    %2320 = vset.pattern.permute.xlu0 0
    %2321 = vperm.xlu0 %2320, %v2251
    %v2322 = vpop.permute.xlu0 %2321
    %2325 = vset.pattern.permute.xlu0 0
    %2326 = vperm.xlu0 %2325, %v2252
    %v2327 = vpop.permute.xlu0 %2326
    %v2330 = vlaneseq
    %v2331 = vshrl.u32 %v2330, 7
    %v2332 = vsub.s32 0, %v2331
    %v2333 = vrot.slane %v2253, %v2332
    %v2335 = vmul.f32 %v2257, %v2333
    %v2336 = vmul.f32 %v2262, %v2333
    %v2337 = vmul.f32 %v2267, %v2333
    %v2338 = vmul.f32 %v2272, %v2333
    %v2339 = vmul.f32 %v2277, %v2333
    %v2340 = vmul.f32 %v2282, %v2333
    %v2341 = vmul.f32 %v2287, %v2333
    %v2342 = vmul.f32 %v2292, %v2333
    %v2343 = vmul.f32 %v2297, %v2333
    %v2344 = vmul.f32 %v2302, %v2333
    %v2345 = vmul.f32 %v2307, %v2333
    %v2346 = vmul.f32 %v2312, %v2333
    %v2347 = vmul.f32 %v2317, %v2333
    %v2348 = vmul.f32 %v2322, %v2333
    %v2349 = vmul.f32 %v2327, %v2333
    %v2350 = vadd.f32 %v2335, 0.0
    %v2351 = vadd.f32 %v2336, 0.0
    %v2352 = vadd.f32 %v2337, 0.0
    %v2353 = vadd.f32 %v2338, 0.0
    %v2354 = vadd.f32 %v2339, 0.0
    %v2355 = vadd.f32 %v2340, 0.0
    %v2356 = vadd.f32 %v2341, 0.0
    %v2357 = vadd.f32 %v2342, 0.0
    %v2358 = vadd.f32 %v2343, 0.0
    %v2359 = vadd.f32 %v2344, 0.0
    %v2360 = vadd.f32 %v2345, 0.0
    %v2361 = vadd.f32 %v2346, 0.0
    %v2362 = vadd.f32 %v2347, 0.0
    %v2363 = vadd.f32 %v2348, 0.0
    %v2364 = vadd.f32 %v2349, 0.0
    %v2365 = vld [vmem:[%s2237 + $0x1] sm:$0xff]
    %v2366 = vld [vmem:[%s2237 + $0x9] sm:$0xff]
    %v2367 = vld [vmem:[%s2237 + $0x11] sm:$0xff]
    %v2368 = vld [vmem:[%s2237 + $0x19] sm:$0xff]
    %v2369 = vld [vmem:[%s2237 + $0x21] sm:$0xff]
    %v2370 = vld [vmem:[%s2237 + $0x29] sm:$0xff]
    %v2371 = vld [vmem:[%s2237 + $0x31] sm:$0xff]
    %v2372 = vld [vmem:[%s2237 + $0x39] sm:$0xff]
    %v2373 = vld [vmem:[%s2237 + $0x41] sm:$0xff]
    %v2374 = vld [vmem:[%s2237 + $0x49] sm:$0xff]
    %v2375 = vld [vmem:[%s2237 + $0x51] sm:$0xff]
    %v2376 = vld [vmem:[%s2237 + $0x59] sm:$0xff]
    %v2377 = vld [vmem:[%s2237 + $0x61] sm:$0xff]
    %v2378 = vld [vmem:[%s2237 + $0x69] sm:$0xff]
    %v2379 = vld [vmem:[%s2237 + $0x71] sm:$0x3f]
    %v2380 = vld [vmem:[%s703] sm:$0x1]
    %2382 = vset.pattern.permute.xlu0 0
    %2383 = vperm.xlu0 %2382, %v2365
    %v2384 = vpop.permute.xlu0 %2383
    %2387 = vset.pattern.permute.xlu0 0
    %2388 = vperm.xlu0 %2387, %v2366
    %v2389 = vpop.permute.xlu0 %2388
    %2392 = vset.pattern.permute.xlu0 0
    %2393 = vperm.xlu0 %2392, %v2367
    %v2394 = vpop.permute.xlu0 %2393
    %2397 = vset.pattern.permute.xlu0 0
    %2398 = vperm.xlu0 %2397, %v2368
    %v2399 = vpop.permute.xlu0 %2398
    %2402 = vset.pattern.permute.xlu0 0
    %2403 = vperm.xlu0 %2402, %v2369
    %v2404 = vpop.permute.xlu0 %2403
    %2407 = vset.pattern.permute.xlu0 0
    %2408 = vperm.xlu0 %2407, %v2370
    %v2409 = vpop.permute.xlu0 %2408
    %2412 = vset.pattern.permute.xlu0 0
    %2413 = vperm.xlu0 %2412, %v2371
    %v2414 = vpop.permute.xlu0 %2413
    %2417 = vset.pattern.permute.xlu0 0
    %2418 = vperm.xlu0 %2417, %v2372
    %v2419 = vpop.permute.xlu0 %2418
    %2422 = vset.pattern.permute.xlu0 0
    %2423 = vperm.xlu0 %2422, %v2373
    %v2424 = vpop.permute.xlu0 %2423
    %2427 = vset.pattern.permute.xlu0 0
    %2428 = vperm.xlu0 %2427, %v2374
    %v2429 = vpop.permute.xlu0 %2428
    %2432 = vset.pattern.permute.xlu0 0
    %2433 = vperm.xlu0 %2432, %v2375
    %v2434 = vpop.permute.xlu0 %2433
    %2437 = vset.pattern.permute.xlu0 0
    %2438 = vperm.xlu0 %2437, %v2376
    %v2439 = vpop.permute.xlu0 %2438
    %2442 = vset.pattern.permute.xlu0 0
    %2443 = vperm.xlu0 %2442, %v2377
    %v2444 = vpop.permute.xlu0 %2443
    %2447 = vset.pattern.permute.xlu0 0
    %2448 = vperm.xlu0 %2447, %v2378
    %v2449 = vpop.permute.xlu0 %2448
    %2452 = vset.pattern.permute.xlu0 0
    %2453 = vperm.xlu0 %2452, %v2379
    %v2454 = vpop.permute.xlu0 %2453
    %v2457 = vlaneseq
    %v2458 = vshrl.u32 %v2457, 7
    %v2459 = vsub.s32 0, %v2458
    %v2460 = vrot.slane %v2380, %v2459
    %v2462 = vmul.f32 %v2384, %v2460
    %v2463 = vmul.f32 %v2389, %v2460
    %v2464 = vmul.f32 %v2394, %v2460
    %v2465 = vmul.f32 %v2399, %v2460
    %v2466 = vmul.f32 %v2404, %v2460
    %v2467 = vmul.f32 %v2409, %v2460
    %v2468 = vmul.f32 %v2414, %v2460
    %v2469 = vmul.f32 %v2419, %v2460
    %v2470 = vmul.f32 %v2424, %v2460
    %v2471 = vmul.f32 %v2429, %v2460
    %v2472 = vmul.f32 %v2434, %v2460
    %v2473 = vmul.f32 %v2439, %v2460
    %v2474 = vmul.f32 %v2444, %v2460
    %v2475 = vmul.f32 %v2449, %v2460
    %v2476 = vmul.f32 %v2454, %v2460
    %v2477 = vadd.f32 %v2350, %v2462
    %v2478 = vadd.f32 %v2351, %v2463
    %v2479 = vadd.f32 %v2352, %v2464
    %v2480 = vadd.f32 %v2353, %v2465
    %v2481 = vadd.f32 %v2354, %v2466
    %v2482 = vadd.f32 %v2355, %v2467
    %v2483 = vadd.f32 %v2356, %v2468
    %v2484 = vadd.f32 %v2357, %v2469
    %v2485 = vadd.f32 %v2358, %v2470
    %v2486 = vadd.f32 %v2359, %v2471
    %v2487 = vadd.f32 %v2360, %v2472
    %v2488 = vadd.f32 %v2361, %v2473
    %v2489 = vadd.f32 %v2362, %v2474
    %v2490 = vadd.f32 %v2363, %v2475
    %v2491 = vadd.f32 %v2364, %v2476
    %v2492 = vld [vmem:[%s2237 + $0x2] sm:$0xff]
    %v2493 = vld [vmem:[%s2237 + $0xa] sm:$0xff]
    %v2494 = vld [vmem:[%s2237 + $0x12] sm:$0xff]
    %v2495 = vld [vmem:[%s2237 + $0x1a] sm:$0xff]
    %v2496 = vld [vmem:[%s2237 + $0x22] sm:$0xff]
    %v2497 = vld [vmem:[%s2237 + $0x2a] sm:$0xff]
    %v2498 = vld [vmem:[%s2237 + $0x32] sm:$0xff]
    %v2499 = vld [vmem:[%s2237 + $0x3a] sm:$0xff]
    %v2500 = vld [vmem:[%s2237 + $0x42] sm:$0xff]
    %v2501 = vld [vmem:[%s2237 + $0x4a] sm:$0xff]
    %v2502 = vld [vmem:[%s2237 + $0x52] sm:$0xff]
    %v2503 = vld [vmem:[%s2237 + $0x5a] sm:$0xff]
    %v2504 = vld [vmem:[%s2237 + $0x62] sm:$0xff]
    %v2505 = vld [vmem:[%s2237 + $0x6a] sm:$0xff]
    %v2506 = vld [vmem:[%s2237 + $0x72] sm:$0x3f]
    %v2507 = vld [vmem:[%s831] sm:$0x1]
    %2509 = vset.pattern.permute.xlu0 0
    %2510 = vperm.xlu0 %2509, %v2492
    %v2511 = vpop.permute.xlu0 %2510
    %2514 = vset.pattern.permute.xlu0 0
    %2515 = vperm.xlu0 %2514, %v2493
    %v2516 = vpop.permute.xlu0 %2515
    %2519 = vset.pattern.permute.xlu0 0
    %2520 = vperm.xlu0 %2519, %v2494
    %v2521 = vpop.permute.xlu0 %2520
    %2524 = vset.pattern.permute.xlu0 0
    %2525 = vperm.xlu0 %2524, %v2495
    %v2526 = vpop.permute.xlu0 %2525
    %2529 = vset.pattern.permute.xlu0 0
    %2530 = vperm.xlu0 %2529, %v2496
    %v2531 = vpop.permute.xlu0 %2530
    %2534 = vset.pattern.permute.xlu0 0
    %2535 = vperm.xlu0 %2534, %v2497
    %v2536 = vpop.permute.xlu0 %2535
    %2539 = vset.pattern.permute.xlu0 0
    %2540 = vperm.xlu0 %2539, %v2498
    %v2541 = vpop.permute.xlu0 %2540
    %2544 = vset.pattern.permute.xlu0 0
    %2545 = vperm.xlu0 %2544, %v2499
    %v2546 = vpop.permute.xlu0 %2545
    %2549 = vset.pattern.permute.xlu0 0
    %2550 = vperm.xlu0 %2549, %v2500
    %v2551 = vpop.permute.xlu0 %2550
    %2554 = vset.pattern.permute.xlu0 0
    %2555 = vperm.xlu0 %2554, %v2501
    %v2556 = vpop.permute.xlu0 %2555
    %2559 = vset.pattern.permute.xlu0 0
    %2560 = vperm.xlu0 %2559, %v2502
    %v2561 = vpop.permute.xlu0 %2560
    %2564 = vset.pattern.permute.xlu0 0
    %2565 = vperm.xlu0 %2564, %v2503
    %v2566 = vpop.permute.xlu0 %2565
    %2569 = vset.pattern.permute.xlu0 0
    %2570 = vperm.xlu0 %2569, %v2504
    %v2571 = vpop.permute.xlu0 %2570
    %2574 = vset.pattern.permute.xlu0 0
    %2575 = vperm.xlu0 %2574, %v2505
    %v2576 = vpop.permute.xlu0 %2575
    %2579 = vset.pattern.permute.xlu0 0
    %2580 = vperm.xlu0 %2579, %v2506
    %v2581 = vpop.permute.xlu0 %2580
    %v2584 = vlaneseq
    %v2585 = vshrl.u32 %v2584, 7
    %v2586 = vsub.s32 0, %v2585
    %v2587 = vrot.slane %v2507, %v2586
    %v2589 = vmul.f32 %v2511, %v2587
    %v2590 = vmul.f32 %v2516, %v2587
    %v2591 = vmul.f32 %v2521, %v2587
    %v2592 = vmul.f32 %v2526, %v2587
    %v2593 = vmul.f32 %v2531, %v2587
    %v2594 = vmul.f32 %v2536, %v2587
    %v2595 = vmul.f32 %v2541, %v2587
    %v2596 = vmul.f32 %v2546, %v2587
    %v2597 = vmul.f32 %v2551, %v2587
    %v2598 = vmul.f32 %v2556, %v2587
    %v2599 = vmul.f32 %v2561, %v2587
    %v2600 = vmul.f32 %v2566, %v2587
    %v2601 = vmul.f32 %v2571, %v2587
    %v2602 = vmul.f32 %v2576, %v2587
    %v2603 = vmul.f32 %v2581, %v2587
    %v2604 = vadd.f32 %v2477, %v2589
    %v2605 = vadd.f32 %v2478, %v2590
    %v2606 = vadd.f32 %v2479, %v2591
    %v2607 = vadd.f32 %v2480, %v2592
    %v2608 = vadd.f32 %v2481, %v2593
    %v2609 = vadd.f32 %v2482, %v2594
    %v2610 = vadd.f32 %v2483, %v2595
    %v2611 = vadd.f32 %v2484, %v2596
    %v2612 = vadd.f32 %v2485, %v2597
    %v2613 = vadd.f32 %v2486, %v2598
    %v2614 = vadd.f32 %v2487, %v2599
    %v2615 = vadd.f32 %v2488, %v2600
    %v2616 = vadd.f32 %v2489, %v2601
    %v2617 = vadd.f32 %v2490, %v2602
    %v2618 = vadd.f32 %v2491, %v2603
    %v2619 = vld [vmem:[%s2237 + $0x3] sm:$0xff]
    %v2620 = vld [vmem:[%s2237 + $0xb] sm:$0xff]
    %v2621 = vld [vmem:[%s2237 + $0x13] sm:$0xff]
    %v2622 = vld [vmem:[%s2237 + $0x1b] sm:$0xff]
    %v2623 = vld [vmem:[%s2237 + $0x23] sm:$0xff]
    %v2624 = vld [vmem:[%s2237 + $0x2b] sm:$0xff]
    %v2625 = vld [vmem:[%s2237 + $0x33] sm:$0xff]
    %v2626 = vld [vmem:[%s2237 + $0x3b] sm:$0xff]
    %v2627 = vld [vmem:[%s2237 + $0x43] sm:$0xff]
    %v2628 = vld [vmem:[%s2237 + $0x4b] sm:$0xff]
    %v2629 = vld [vmem:[%s2237 + $0x53] sm:$0xff]
    %v2630 = vld [vmem:[%s2237 + $0x5b] sm:$0xff]
    %v2631 = vld [vmem:[%s2237 + $0x63] sm:$0xff]
    %v2632 = vld [vmem:[%s2237 + $0x6b] sm:$0xff]
    %v2633 = vld [vmem:[%s2237 + $0x73] sm:$0x3f]
    %v2634 = vld [vmem:[%s959] sm:$0x1]
    %2636 = vset.pattern.permute.xlu0 0
    %2637 = vperm.xlu0 %2636, %v2619
    %v2638 = vpop.permute.xlu0 %2637
    %2641 = vset.pattern.permute.xlu0 0
    %2642 = vperm.xlu0 %2641, %v2620
    %v2643 = vpop.permute.xlu0 %2642
    %2646 = vset.pattern.permute.xlu0 0
    %2647 = vperm.xlu0 %2646, %v2621
    %v2648 = vpop.permute.xlu0 %2647
    %2651 = vset.pattern.permute.xlu0 0
    %2652 = vperm.xlu0 %2651, %v2622
    %v2653 = vpop.permute.xlu0 %2652
    %2656 = vset.pattern.permute.xlu0 0
    %2657 = vperm.xlu0 %2656, %v2623
    %v2658 = vpop.permute.xlu0 %2657
    %2661 = vset.pattern.permute.xlu0 0
    %2662 = vperm.xlu0 %2661, %v2624
    %v2663 = vpop.permute.xlu0 %2662
    %2666 = vset.pattern.permute.xlu0 0
    %2667 = vperm.xlu0 %2666, %v2625
    %v2668 = vpop.permute.xlu0 %2667
    %2671 = vset.pattern.permute.xlu0 0
    %2672 = vperm.xlu0 %2671, %v2626
    %v2673 = vpop.permute.xlu0 %2672
    %2676 = vset.pattern.permute.xlu0 0
    %2677 = vperm.xlu0 %2676, %v2627
    %v2678 = vpop.permute.xlu0 %2677
    %2681 = vset.pattern.permute.xlu0 0
    %2682 = vperm.xlu0 %2681, %v2628
    %v2683 = vpop.permute.xlu0 %2682
    %2686 = vset.pattern.permute.xlu0 0
    %2687 = vperm.xlu0 %2686, %v2629
    %v2688 = vpop.permute.xlu0 %2687
    %2691 = vset.pattern.permute.xlu0 0
    %2692 = vperm.xlu0 %2691, %v2630
    %v2693 = vpop.permute.xlu0 %2692
    %2696 = vset.pattern.permute.xlu0 0
    %2697 = vperm.xlu0 %2696, %v2631
    %v2698 = vpop.permute.xlu0 %2697
    %2701 = vset.pattern.permute.xlu0 0
    %2702 = vperm.xlu0 %2701, %v2632
    %v2703 = vpop.permute.xlu0 %2702
    %2706 = vset.pattern.permute.xlu0 0
    %2707 = vperm.xlu0 %2706, %v2633
    %v2708 = vpop.permute.xlu0 %2707
    %v2711 = vlaneseq
    %v2712 = vshrl.u32 %v2711, 7
    %v2713 = vsub.s32 0, %v2712
    %v2714 = vrot.slane %v2634, %v2713
    %v2716 = vmul.f32 %v2638, %v2714
    %v2717 = vmul.f32 %v2643, %v2714
    %v2718 = vmul.f32 %v2648, %v2714
    %v2719 = vmul.f32 %v2653, %v2714
    %v2720 = vmul.f32 %v2658, %v2714
    %v2721 = vmul.f32 %v2663, %v2714
    %v2722 = vmul.f32 %v2668, %v2714
    %v2723 = vmul.f32 %v2673, %v2714
    %v2724 = vmul.f32 %v2678, %v2714
    %v2725 = vmul.f32 %v2683, %v2714
    %v2726 = vmul.f32 %v2688, %v2714
    %v2727 = vmul.f32 %v2693, %v2714
    %v2728 = vmul.f32 %v2698, %v2714
    %v2729 = vmul.f32 %v2703, %v2714
    %v2730 = vmul.f32 %v2708, %v2714
    %v2731 = vadd.f32 %v2604, %v2716
    %v2732 = vadd.f32 %v2605, %v2717
    %v2733 = vadd.f32 %v2606, %v2718
    %v2734 = vadd.f32 %v2607, %v2719
    %v2735 = vadd.f32 %v2608, %v2720
    %v2736 = vadd.f32 %v2609, %v2721
    %v2737 = vadd.f32 %v2610, %v2722
    %v2738 = vadd.f32 %v2611, %v2723
    %v2739 = vadd.f32 %v2612, %v2724
    %v2740 = vadd.f32 %v2613, %v2725
    %v2741 = vadd.f32 %v2614, %v2726
    %v2742 = vadd.f32 %v2615, %v2727
    %v2743 = vadd.f32 %v2616, %v2728
    %v2744 = vadd.f32 %v2617, %v2729
    %v2745 = vadd.f32 %v2618, %v2730
    %v2746 = vld [vmem:[%s2237 + $0x4] sm:$0xff]
    %v2747 = vld [vmem:[%s2237 + $0xc] sm:$0xff]
    %v2748 = vld [vmem:[%s2237 + $0x14] sm:$0xff]
    %v2749 = vld [vmem:[%s2237 + $0x1c] sm:$0xff]
    %v2750 = vld [vmem:[%s2237 + $0x24] sm:$0xff]
    %v2751 = vld [vmem:[%s2237 + $0x2c] sm:$0xff]
    %v2752 = vld [vmem:[%s2237 + $0x34] sm:$0xff]
    %v2753 = vld [vmem:[%s2237 + $0x3c] sm:$0xff]
    %v2754 = vld [vmem:[%s2237 + $0x44] sm:$0xff]
    %v2755 = vld [vmem:[%s2237 + $0x4c] sm:$0xff]
    %v2756 = vld [vmem:[%s2237 + $0x54] sm:$0xff]
    %v2757 = vld [vmem:[%s2237 + $0x5c] sm:$0xff]
    %v2758 = vld [vmem:[%s2237 + $0x64] sm:$0xff]
    %v2759 = vld [vmem:[%s2237 + $0x6c] sm:$0xff]
    %v2760 = vld [vmem:[%s2237 + $0x74] sm:$0x3f]
    %v2761 = vld [vmem:[%s1087] sm:$0x1]
    %2763 = vset.pattern.permute.xlu0 0
    %2764 = vperm.xlu0 %2763, %v2746
    %v2765 = vpop.permute.xlu0 %2764
    %2768 = vset.pattern.permute.xlu0 0
    %2769 = vperm.xlu0 %2768, %v2747
    %v2770 = vpop.permute.xlu0 %2769
    %2773 = vset.pattern.permute.xlu0 0
    %2774 = vperm.xlu0 %2773, %v2748
    %v2775 = vpop.permute.xlu0 %2774
    %2778 = vset.pattern.permute.xlu0 0
    %2779 = vperm.xlu0 %2778, %v2749
    %v2780 = vpop.permute.xlu0 %2779
    %2783 = vset.pattern.permute.xlu0 0
    %2784 = vperm.xlu0 %2783, %v2750
    %v2785 = vpop.permute.xlu0 %2784
    %2788 = vset.pattern.permute.xlu0 0
    %2789 = vperm.xlu0 %2788, %v2751
    %v2790 = vpop.permute.xlu0 %2789
    %2793 = vset.pattern.permute.xlu0 0
    %2794 = vperm.xlu0 %2793, %v2752
    %v2795 = vpop.permute.xlu0 %2794
    %2798 = vset.pattern.permute.xlu0 0
    %2799 = vperm.xlu0 %2798, %v2753
    %v2800 = vpop.permute.xlu0 %2799
    %2803 = vset.pattern.permute.xlu0 0
    %2804 = vperm.xlu0 %2803, %v2754
    %v2805 = vpop.permute.xlu0 %2804
    %2808 = vset.pattern.permute.xlu0 0
    %2809 = vperm.xlu0 %2808, %v2755
    %v2810 = vpop.permute.xlu0 %2809
    %2813 = vset.pattern.permute.xlu0 0
    %2814 = vperm.xlu0 %2813, %v2756
    %v2815 = vpop.permute.xlu0 %2814
    %2818 = vset.pattern.permute.xlu0 0
    %2819 = vperm.xlu0 %2818, %v2757
    %v2820 = vpop.permute.xlu0 %2819
    %2823 = vset.pattern.permute.xlu0 0
    %2824 = vperm.xlu0 %2823, %v2758
    %v2825 = vpop.permute.xlu0 %2824
    %2828 = vset.pattern.permute.xlu0 0
    %2829 = vperm.xlu0 %2828, %v2759
    %v2830 = vpop.permute.xlu0 %2829
    %2833 = vset.pattern.permute.xlu0 0
    %2834 = vperm.xlu0 %2833, %v2760
    %v2835 = vpop.permute.xlu0 %2834
    %v2838 = vlaneseq
    %v2839 = vshrl.u32 %v2838, 7
    %v2840 = vsub.s32 0, %v2839
    %v2841 = vrot.slane %v2761, %v2840
    %v2843 = vmul.f32 %v2765, %v2841
    %v2844 = vmul.f32 %v2770, %v2841
    %v2845 = vmul.f32 %v2775, %v2841
    %v2846 = vmul.f32 %v2780, %v2841
    %v2847 = vmul.f32 %v2785, %v2841
    %v2848 = vmul.f32 %v2790, %v2841
    %v2849 = vmul.f32 %v2795, %v2841
    %v2850 = vmul.f32 %v2800, %v2841
    %v2851 = vmul.f32 %v2805, %v2841
    %v2852 = vmul.f32 %v2810, %v2841
    %v2853 = vmul.f32 %v2815, %v2841
    %v2854 = vmul.f32 %v2820, %v2841
    %v2855 = vmul.f32 %v2825, %v2841
    %v2856 = vmul.f32 %v2830, %v2841
    %v2857 = vmul.f32 %v2835, %v2841
    %v2858 = vadd.f32 %v2731, %v2843
    %v2859 = vadd.f32 %v2732, %v2844
    %v2860 = vadd.f32 %v2733, %v2845
    %v2861 = vadd.f32 %v2734, %v2846
    %v2862 = vadd.f32 %v2735, %v2847
    %v2863 = vadd.f32 %v2736, %v2848
    %v2864 = vadd.f32 %v2737, %v2849
    %v2865 = vadd.f32 %v2738, %v2850
    %v2866 = vadd.f32 %v2739, %v2851
    %v2867 = vadd.f32 %v2740, %v2852
    %v2868 = vadd.f32 %v2741, %v2853
    %v2869 = vadd.f32 %v2742, %v2854
    %v2870 = vadd.f32 %v2743, %v2855
    %v2871 = vadd.f32 %v2744, %v2856
    %v2872 = vadd.f32 %v2745, %v2857
    %v2873 = vld [vmem:[%s2237 + $0x5] sm:$0xff]
    %v2874 = vld [vmem:[%s2237 + $0xd] sm:$0xff]
    %v2875 = vld [vmem:[%s2237 + $0x15] sm:$0xff]
    %v2876 = vld [vmem:[%s2237 + $0x1d] sm:$0xff]
    %v2877 = vld [vmem:[%s2237 + $0x25] sm:$0xff]
    %v2878 = vld [vmem:[%s2237 + $0x2d] sm:$0xff]
    %v2879 = vld [vmem:[%s2237 + $0x35] sm:$0xff]
    %v2880 = vld [vmem:[%s2237 + $0x3d] sm:$0xff]
    %v2881 = vld [vmem:[%s2237 + $0x45] sm:$0xff]
    %v2882 = vld [vmem:[%s2237 + $0x4d] sm:$0xff]
    %v2883 = vld [vmem:[%s2237 + $0x55] sm:$0xff]
    %v2884 = vld [vmem:[%s2237 + $0x5d] sm:$0xff]
    %v2885 = vld [vmem:[%s2237 + $0x65] sm:$0xff]
    %v2886 = vld [vmem:[%s2237 + $0x6d] sm:$0xff]
    %v2887 = vld [vmem:[%s2237 + $0x75] sm:$0x3f]
    %v2888 = vld [vmem:[%s1215] sm:$0x1]
    %2890 = vset.pattern.permute.xlu0 0
    %2891 = vperm.xlu0 %2890, %v2873
    %v2892 = vpop.permute.xlu0 %2891
    %2895 = vset.pattern.permute.xlu0 0
    %2896 = vperm.xlu0 %2895, %v2874
    %v2897 = vpop.permute.xlu0 %2896
    %2900 = vset.pattern.permute.xlu0 0
    %2901 = vperm.xlu0 %2900, %v2875
    %v2902 = vpop.permute.xlu0 %2901
    %2905 = vset.pattern.permute.xlu0 0
    %2906 = vperm.xlu0 %2905, %v2876
    %v2907 = vpop.permute.xlu0 %2906
    %2910 = vset.pattern.permute.xlu0 0
    %2911 = vperm.xlu0 %2910, %v2877
    %v2912 = vpop.permute.xlu0 %2911
    %2915 = vset.pattern.permute.xlu0 0
    %2916 = vperm.xlu0 %2915, %v2878
    %v2917 = vpop.permute.xlu0 %2916
    %2920 = vset.pattern.permute.xlu0 0
    %2921 = vperm.xlu0 %2920, %v2879
    %v2922 = vpop.permute.xlu0 %2921
    %2925 = vset.pattern.permute.xlu0 0
    %2926 = vperm.xlu0 %2925, %v2880
    %v2927 = vpop.permute.xlu0 %2926
    %2930 = vset.pattern.permute.xlu0 0
    %2931 = vperm.xlu0 %2930, %v2881
    %v2932 = vpop.permute.xlu0 %2931
    %2935 = vset.pattern.permute.xlu0 0
    %2936 = vperm.xlu0 %2935, %v2882
    %v2937 = vpop.permute.xlu0 %2936
    %2940 = vset.pattern.permute.xlu0 0
    %2941 = vperm.xlu0 %2940, %v2883
    %v2942 = vpop.permute.xlu0 %2941
    %2945 = vset.pattern.permute.xlu0 0
    %2946 = vperm.xlu0 %2945, %v2884
    %v2947 = vpop.permute.xlu0 %2946
    %2950 = vset.pattern.permute.xlu0 0
    %2951 = vperm.xlu0 %2950, %v2885
    %v2952 = vpop.permute.xlu0 %2951
    %2955 = vset.pattern.permute.xlu0 0
    %2956 = vperm.xlu0 %2955, %v2886
    %v2957 = vpop.permute.xlu0 %2956
    %2960 = vset.pattern.permute.xlu0 0
    %2961 = vperm.xlu0 %2960, %v2887
    %v2962 = vpop.permute.xlu0 %2961
    %v2965 = vlaneseq
    %v2966 = vshrl.u32 %v2965, 7
    %v2967 = vsub.s32 0, %v2966
    %v2968 = vrot.slane %v2888, %v2967
    %v2970 = vmul.f32 %v2892, %v2968
    %v2971 = vmul.f32 %v2897, %v2968
    %v2972 = vmul.f32 %v2902, %v2968
    %v2973 = vmul.f32 %v2907, %v2968
    %v2974 = vmul.f32 %v2912, %v2968
    %v2975 = vmul.f32 %v2917, %v2968
    %v2976 = vmul.f32 %v2922, %v2968
    %v2977 = vmul.f32 %v2927, %v2968
    %v2978 = vmul.f32 %v2932, %v2968
    %v2979 = vmul.f32 %v2937, %v2968
    %v2980 = vmul.f32 %v2942, %v2968
    %v2981 = vmul.f32 %v2947, %v2968
    %v2982 = vmul.f32 %v2952, %v2968
    %v2983 = vmul.f32 %v2957, %v2968
    %v2984 = vmul.f32 %v2962, %v2968
    %v2985 = vadd.f32 %v2858, %v2970
    %v2986 = vadd.f32 %v2859, %v2971
    %v2987 = vadd.f32 %v2860, %v2972
    %v2988 = vadd.f32 %v2861, %v2973
    %v2989 = vadd.f32 %v2862, %v2974
    %v2990 = vadd.f32 %v2863, %v2975
    %v2991 = vadd.f32 %v2864, %v2976
    %v2992 = vadd.f32 %v2865, %v2977
    %v2993 = vadd.f32 %v2866, %v2978
    %v2994 = vadd.f32 %v2867, %v2979
    %v2995 = vadd.f32 %v2868, %v2980
    %v2996 = vadd.f32 %v2869, %v2981
    %v2997 = vadd.f32 %v2870, %v2982
    %v2998 = vadd.f32 %v2871, %v2983
    %v2999 = vadd.f32 %v2872, %v2984
    %v3000 = vld [vmem:[%s2237 + $0x6] sm:$0xff]
    %v3001 = vld [vmem:[%s2237 + $0xe] sm:$0xff]
    %v3002 = vld [vmem:[%s2237 + $0x16] sm:$0xff]
    %v3003 = vld [vmem:[%s2237 + $0x1e] sm:$0xff]
    %v3004 = vld [vmem:[%s2237 + $0x26] sm:$0xff]
    %v3005 = vld [vmem:[%s2237 + $0x2e] sm:$0xff]
    %v3006 = vld [vmem:[%s2237 + $0x36] sm:$0xff]
    %v3007 = vld [vmem:[%s2237 + $0x3e] sm:$0xff]
    %v3008 = vld [vmem:[%s2237 + $0x46] sm:$0xff]
    %v3009 = vld [vmem:[%s2237 + $0x4e] sm:$0xff]
    %v3010 = vld [vmem:[%s2237 + $0x56] sm:$0xff]
    %v3011 = vld [vmem:[%s2237 + $0x5e] sm:$0xff]
    %v3012 = vld [vmem:[%s2237 + $0x66] sm:$0xff]
    %v3013 = vld [vmem:[%s2237 + $0x6e] sm:$0xff]
    %v3014 = vld [vmem:[%s2237 + $0x76] sm:$0x3f]
    %v3015 = vld [vmem:[%s1343] sm:$0x1]
    %3017 = vset.pattern.permute.xlu0 0
    %3018 = vperm.xlu0 %3017, %v3000
    %v3019 = vpop.permute.xlu0 %3018
    %3022 = vset.pattern.permute.xlu0 0
    %3023 = vperm.xlu0 %3022, %v3001
    %v3024 = vpop.permute.xlu0 %3023
    %3027 = vset.pattern.permute.xlu0 0
    %3028 = vperm.xlu0 %3027, %v3002
    %v3029 = vpop.permute.xlu0 %3028
    %3032 = vset.pattern.permute.xlu0 0
    %3033 = vperm.xlu0 %3032, %v3003
    %v3034 = vpop.permute.xlu0 %3033
    %3037 = vset.pattern.permute.xlu0 0
    %3038 = vperm.xlu0 %3037, %v3004
    %v3039 = vpop.permute.xlu0 %3038
    %3042 = vset.pattern.permute.xlu0 0
    %3043 = vperm.xlu0 %3042, %v3005
    %v3044 = vpop.permute.xlu0 %3043
    %3047 = vset.pattern.permute.xlu0 0
    %3048 = vperm.xlu0 %3047, %v3006
    %v3049 = vpop.permute.xlu0 %3048
    %3052 = vset.pattern.permute.xlu0 0
    %3053 = vperm.xlu0 %3052, %v3007
    %v3054 = vpop.permute.xlu0 %3053
    %3057 = vset.pattern.permute.xlu0 0
    %3058 = vperm.xlu0 %3057, %v3008
    %v3059 = vpop.permute.xlu0 %3058
    %3062 = vset.pattern.permute.xlu0 0
    %3063 = vperm.xlu0 %3062, %v3009
    %v3064 = vpop.permute.xlu0 %3063
    %3067 = vset.pattern.permute.xlu0 0
    %3068 = vperm.xlu0 %3067, %v3010
    %v3069 = vpop.permute.xlu0 %3068
    %3072 = vset.pattern.permute.xlu0 0
    %3073 = vperm.xlu0 %3072, %v3011
    %v3074 = vpop.permute.xlu0 %3073
    %3077 = vset.pattern.permute.xlu0 0
    %3078 = vperm.xlu0 %3077, %v3012
    %v3079 = vpop.permute.xlu0 %3078
    %3082 = vset.pattern.permute.xlu0 0
    %3083 = vperm.xlu0 %3082, %v3013
    %v3084 = vpop.permute.xlu0 %3083
    %3087 = vset.pattern.permute.xlu0 0
    %3088 = vperm.xlu0 %3087, %v3014
    %v3089 = vpop.permute.xlu0 %3088
    %v3092 = vlaneseq
    %v3093 = vshrl.u32 %v3092, 7
    %v3094 = vsub.s32 0, %v3093
    %v3095 = vrot.slane %v3015, %v3094
    %v3097 = vmul.f32 %v3019, %v3095
    %v3098 = vmul.f32 %v3024, %v3095
    %v3099 = vmul.f32 %v3029, %v3095
    %v3100 = vmul.f32 %v3034, %v3095
    %v3101 = vmul.f32 %v3039, %v3095
    %v3102 = vmul.f32 %v3044, %v3095
    %v3103 = vmul.f32 %v3049, %v3095
    %v3104 = vmul.f32 %v3054, %v3095
    %v3105 = vmul.f32 %v3059, %v3095
    %v3106 = vmul.f32 %v3064, %v3095
    %v3107 = vmul.f32 %v3069, %v3095
    %v3108 = vmul.f32 %v3074, %v3095
    %v3109 = vmul.f32 %v3079, %v3095
    %v3110 = vmul.f32 %v3084, %v3095
    %v3111 = vmul.f32 %v3089, %v3095
    %v3112 = vadd.f32 %v2985, %v3097
    %v3113 = vadd.f32 %v2986, %v3098
    %v3114 = vadd.f32 %v2987, %v3099
    %v3115 = vadd.f32 %v2988, %v3100
    %v3116 = vadd.f32 %v2989, %v3101
    %v3117 = vadd.f32 %v2990, %v3102
    %v3118 = vadd.f32 %v2991, %v3103
    %v3119 = vadd.f32 %v2992, %v3104
    %v3120 = vadd.f32 %v2993, %v3105
    %v3121 = vadd.f32 %v2994, %v3106
    %v3122 = vadd.f32 %v2995, %v3107
    %v3123 = vadd.f32 %v2996, %v3108
    %v3124 = vadd.f32 %v2997, %v3109
    %v3125 = vadd.f32 %v2998, %v3110
    %v3126 = vadd.f32 %v2999, %v3111
    %v3127 = vld [vmem:[%s2237 + $0x7] sm:$0xff]
    %v3128 = vld [vmem:[%s2237 + $0xf] sm:$0xff]
    %v3129 = vld [vmem:[%s2237 + $0x17] sm:$0xff]
    %v3130 = vld [vmem:[%s2237 + $0x1f] sm:$0xff]
    %v3131 = vld [vmem:[%s2237 + $0x27] sm:$0xff]
    %v3132 = vld [vmem:[%s2237 + $0x2f] sm:$0xff]
    %v3133 = vld [vmem:[%s2237 + $0x37] sm:$0xff]
    %v3134 = vld [vmem:[%s2237 + $0x3f] sm:$0xff]
    %v3135 = vld [vmem:[%s2237 + $0x47] sm:$0xff]
    %v3136 = vld [vmem:[%s2237 + $0x4f] sm:$0xff]
    %v3137 = vld [vmem:[%s2237 + $0x57] sm:$0xff]
    %v3138 = vld [vmem:[%s2237 + $0x5f] sm:$0xff]
    %v3139 = vld [vmem:[%s2237 + $0x67] sm:$0xff]
    %v3140 = vld [vmem:[%s2237 + $0x6f] sm:$0xff]
    %v3141 = vld [vmem:[%s2237 + $0x77] sm:$0x3f]
    %v3142 = vld [vmem:[%s1471] sm:$0x1]
    %3144 = vset.pattern.permute.xlu0 0
    %3145 = vperm.xlu0 %3144, %v3127
    %v3146 = vpop.permute.xlu0 %3145
    %3149 = vset.pattern.permute.xlu0 0
    %3150 = vperm.xlu0 %3149, %v3128
    %v3151 = vpop.permute.xlu0 %3150
    %3154 = vset.pattern.permute.xlu0 0
    %3155 = vperm.xlu0 %3154, %v3129
    %v3156 = vpop.permute.xlu0 %3155
    %3159 = vset.pattern.permute.xlu0 0
    %3160 = vperm.xlu0 %3159, %v3130
    %v3161 = vpop.permute.xlu0 %3160
    %3164 = vset.pattern.permute.xlu0 0
    %3165 = vperm.xlu0 %3164, %v3131
    %v3166 = vpop.permute.xlu0 %3165
    %3169 = vset.pattern.permute.xlu0 0
    %3170 = vperm.xlu0 %3169, %v3132
    %v3171 = vpop.permute.xlu0 %3170
    %3174 = vset.pattern.permute.xlu0 0
    %3175 = vperm.xlu0 %3174, %v3133
    %v3176 = vpop.permute.xlu0 %3175
    %3179 = vset.pattern.permute.xlu0 0
    %3180 = vperm.xlu0 %3179, %v3134
    %v3181 = vpop.permute.xlu0 %3180
    %3184 = vset.pattern.permute.xlu0 0
    %3185 = vperm.xlu0 %3184, %v3135
    %v3186 = vpop.permute.xlu0 %3185
    %3189 = vset.pattern.permute.xlu0 0
    %3190 = vperm.xlu0 %3189, %v3136
    %v3191 = vpop.permute.xlu0 %3190
    %3194 = vset.pattern.permute.xlu0 0
    %3195 = vperm.xlu0 %3194, %v3137
    %v3196 = vpop.permute.xlu0 %3195
    %3199 = vset.pattern.permute.xlu0 0
    %3200 = vperm.xlu0 %3199, %v3138
    %v3201 = vpop.permute.xlu0 %3200
    %3204 = vset.pattern.permute.xlu0 0
    %3205 = vperm.xlu0 %3204, %v3139
    %v3206 = vpop.permute.xlu0 %3205
    %3209 = vset.pattern.permute.xlu0 0
    %3210 = vperm.xlu0 %3209, %v3140
    %v3211 = vpop.permute.xlu0 %3210
    %3214 = vset.pattern.permute.xlu0 0
    %3215 = vperm.xlu0 %3214, %v3141
    %v3216 = vpop.permute.xlu0 %3215
    %v3219 = vlaneseq
    %v3220 = vshrl.u32 %v3219, 7
    %v3221 = vsub.s32 0, %v3220
    %v3222 = vrot.slane %v3142, %v3221
    %v3224 = vmul.f32 %v3146, %v3222
    %v3225 = vmul.f32 %v3151, %v3222
    %v3226 = vmul.f32 %v3156, %v3222
    %v3227 = vmul.f32 %v3161, %v3222
    %v3228 = vmul.f32 %v3166, %v3222
    %v3229 = vmul.f32 %v3171, %v3222
    %v3230 = vmul.f32 %v3176, %v3222
    %v3231 = vmul.f32 %v3181, %v3222
    %v3232 = vmul.f32 %v3186, %v3222
    %v3233 = vmul.f32 %v3191, %v3222
    %v3234 = vmul.f32 %v3196, %v3222
    %v3235 = vmul.f32 %v3201, %v3222
    %v3236 = vmul.f32 %v3206, %v3222
    %v3237 = vmul.f32 %v3211, %v3222
    %v3238 = vmul.f32 %v3216, %v3222
    %v3239 = vadd.f32 %v3112, %v3224
    %v3240 = vadd.f32 %v3113, %v3225
    %v3241 = vadd.f32 %v3114, %v3226
    %v3242 = vadd.f32 %v3115, %v3227
    %v3243 = vadd.f32 %v3116, %v3228
    %v3244 = vadd.f32 %v3117, %v3229
    %v3245 = vadd.f32 %v3118, %v3230
    %v3246 = vadd.f32 %v3119, %v3231
    %v3247 = vadd.f32 %v3120, %v3232
    %v3248 = vadd.f32 %v3121, %v3233
    %v3249 = vadd.f32 %v3122, %v3234
    %v3250 = vadd.f32 %v3123, %v3235
    %v3251 = vadd.f32 %v3124, %v3236
    %v3252 = vadd.f32 %v3125, %v3237
    %v3253 = vadd.f32 %v3126, %v3238
    %v3254 = vld [vmem:[%s2237 + $0x8] sm:$0xff]
    %v3255 = vld [vmem:[%s2237 + $0x10] sm:$0xff]
    %v3256 = vld [vmem:[%s2237 + $0x18] sm:$0xff]
    %v3257 = vld [vmem:[%s2237 + $0x20] sm:$0xff]
    %v3258 = vld [vmem:[%s2237 + $0x28] sm:$0xff]
    %v3259 = vld [vmem:[%s2237 + $0x30] sm:$0xff]
    %v3260 = vld [vmem:[%s2237 + $0x38] sm:$0xff]
    %v3261 = vld [vmem:[%s2237 + $0x40] sm:$0xff]
    %v3262 = vld [vmem:[%s2237 + $0x48] sm:$0xff]
    %v3263 = vld [vmem:[%s2237 + $0x50] sm:$0xff]
    %v3264 = vld [vmem:[%s2237 + $0x58] sm:$0xff]
    %v3265 = vld [vmem:[%s2237 + $0x60] sm:$0xff]
    %v3266 = vld [vmem:[%s2237 + $0x68] sm:$0xff]
    %v3267 = vld [vmem:[%s2237 + $0x70] sm:$0xff]
    %v3268 = vld [vmem:[%s2237 + $0x78] sm:$0x3f]
    %v3269 = vld [vmem:[%s1599] sm:$0x1]
    %3271 = vset.pattern.permute.xlu0 0
    %3272 = vperm.xlu0 %3271, %v3254
    %v3273 = vpop.permute.xlu0 %3272
    %3276 = vset.pattern.permute.xlu0 0
    %3277 = vperm.xlu0 %3276, %v3255
    %v3278 = vpop.permute.xlu0 %3277
    %3281 = vset.pattern.permute.xlu0 0
    %3282 = vperm.xlu0 %3281, %v3256
    %v3283 = vpop.permute.xlu0 %3282
    %3286 = vset.pattern.permute.xlu0 0
    %3287 = vperm.xlu0 %3286, %v3257
    %v3288 = vpop.permute.xlu0 %3287
    %3291 = vset.pattern.permute.xlu0 0
    %3292 = vperm.xlu0 %3291, %v3258
    %v3293 = vpop.permute.xlu0 %3292
    %3296 = vset.pattern.permute.xlu0 0
    %3297 = vperm.xlu0 %3296, %v3259
    %v3298 = vpop.permute.xlu0 %3297
    %3301 = vset.pattern.permute.xlu0 0
    %3302 = vperm.xlu0 %3301, %v3260
    %v3303 = vpop.permute.xlu0 %3302
    %3306 = vset.pattern.permute.xlu0 0
    %3307 = vperm.xlu0 %3306, %v3261
    %v3308 = vpop.permute.xlu0 %3307
    %3311 = vset.pattern.permute.xlu0 0
    %3312 = vperm.xlu0 %3311, %v3262
    %v3313 = vpop.permute.xlu0 %3312
    %3316 = vset.pattern.permute.xlu0 0
    %3317 = vperm.xlu0 %3316, %v3263
    %v3318 = vpop.permute.xlu0 %3317
    %3321 = vset.pattern.permute.xlu0 0
    %3322 = vperm.xlu0 %3321, %v3264
    %v3323 = vpop.permute.xlu0 %3322
    %3326 = vset.pattern.permute.xlu0 0
    %3327 = vperm.xlu0 %3326, %v3265
    %v3328 = vpop.permute.xlu0 %3327
    %3331 = vset.pattern.permute.xlu0 0
    %3332 = vperm.xlu0 %3331, %v3266
    %v3333 = vpop.permute.xlu0 %3332
    %3336 = vset.pattern.permute.xlu0 0
    %3337 = vperm.xlu0 %3336, %v3267
    %v3338 = vpop.permute.xlu0 %3337
    %3341 = vset.pattern.permute.xlu0 0
    %3342 = vperm.xlu0 %3341, %v3268
    %v3343 = vpop.permute.xlu0 %3342
    %v3346 = vlaneseq
    %v3347 = vshrl.u32 %v3346, 7
    %v3348 = vsub.s32 0, %v3347
    %v3349 = vrot.slane %v3269, %v3348
    %v3351 = vmul.f32 %v3273, %v3349
    %v3352 = vmul.f32 %v3278, %v3349
    %v3353 = vmul.f32 %v3283, %v3349
    %v3354 = vmul.f32 %v3288, %v3349
    %v3355 = vmul.f32 %v3293, %v3349
    %v3356 = vmul.f32 %v3298, %v3349
    %v3357 = vmul.f32 %v3303, %v3349
    %v3358 = vmul.f32 %v3308, %v3349
    %v3359 = vmul.f32 %v3313, %v3349
    %v3360 = vmul.f32 %v3318, %v3349
    %v3361 = vmul.f32 %v3323, %v3349
    %v3362 = vmul.f32 %v3328, %v3349
    %v3363 = vmul.f32 %v3333, %v3349
    %v3364 = vmul.f32 %v3338, %v3349
    %v3365 = vmul.f32 %v3343, %v3349
    %v3366 = vadd.f32 %v3239, %v3351
    %v3367 = vadd.f32 %v3240, %v3352
    %v3368 = vadd.f32 %v3241, %v3353
    %v3369 = vadd.f32 %v3242, %v3354
    %v3370 = vadd.f32 %v3243, %v3355
    %v3371 = vadd.f32 %v3244, %v3356
    %v3372 = vadd.f32 %v3245, %v3357
    %v3373 = vadd.f32 %v3246, %v3358
    %v3374 = vadd.f32 %v3247, %v3359
    %v3375 = vadd.f32 %v3248, %v3360
    %v3376 = vadd.f32 %v3249, %v3361
    %v3377 = vadd.f32 %v3250, %v3362
    %v3378 = vadd.f32 %v3251, %v3363
    %v3379 = vadd.f32 %v3252, %v3364
    %v3380 = vadd.f32 %v3253, %v3365
    %v3381 = vld [vmem:[%s2237 + $0x9] sm:$0xff]
    %v3382 = vld [vmem:[%s2237 + $0x11] sm:$0xff]
    %v3383 = vld [vmem:[%s2237 + $0x19] sm:$0xff]
    %v3384 = vld [vmem:[%s2237 + $0x21] sm:$0xff]
    %v3385 = vld [vmem:[%s2237 + $0x29] sm:$0xff]
    %v3386 = vld [vmem:[%s2237 + $0x31] sm:$0xff]
    %v3387 = vld [vmem:[%s2237 + $0x39] sm:$0xff]
    %v3388 = vld [vmem:[%s2237 + $0x41] sm:$0xff]
    %v3389 = vld [vmem:[%s2237 + $0x49] sm:$0xff]
    %v3390 = vld [vmem:[%s2237 + $0x51] sm:$0xff]
    %v3391 = vld [vmem:[%s2237 + $0x59] sm:$0xff]
    %v3392 = vld [vmem:[%s2237 + $0x61] sm:$0xff]
    %v3393 = vld [vmem:[%s2237 + $0x69] sm:$0xff]
    %v3394 = vld [vmem:[%s2237 + $0x71] sm:$0xff]
    %v3395 = vld [vmem:[%s2237 + $0x79] sm:$0x3f]
    %v3396 = vld [vmem:[%s1727] sm:$0x1]
    %3398 = vset.pattern.permute.xlu0 0
    %3399 = vperm.xlu0 %3398, %v3381
    %v3400 = vpop.permute.xlu0 %3399
    %3403 = vset.pattern.permute.xlu0 0
    %3404 = vperm.xlu0 %3403, %v3382
    %v3405 = vpop.permute.xlu0 %3404
    %3408 = vset.pattern.permute.xlu0 0
    %3409 = vperm.xlu0 %3408, %v3383
    %v3410 = vpop.permute.xlu0 %3409
    %3413 = vset.pattern.permute.xlu0 0
    %3414 = vperm.xlu0 %3413, %v3384
    %v3415 = vpop.permute.xlu0 %3414
    %3418 = vset.pattern.permute.xlu0 0
    %3419 = vperm.xlu0 %3418, %v3385
    %v3420 = vpop.permute.xlu0 %3419
    %3423 = vset.pattern.permute.xlu0 0
    %3424 = vperm.xlu0 %3423, %v3386
    %v3425 = vpop.permute.xlu0 %3424
    %3428 = vset.pattern.permute.xlu0 0
    %3429 = vperm.xlu0 %3428, %v3387
    %v3430 = vpop.permute.xlu0 %3429
    %3433 = vset.pattern.permute.xlu0 0
    %3434 = vperm.xlu0 %3433, %v3388
    %v3435 = vpop.permute.xlu0 %3434
    %3438 = vset.pattern.permute.xlu0 0
    %3439 = vperm.xlu0 %3438, %v3389
    %v3440 = vpop.permute.xlu0 %3439
    %3443 = vset.pattern.permute.xlu0 0
    %3444 = vperm.xlu0 %3443, %v3390
    %v3445 = vpop.permute.xlu0 %3444
    %3448 = vset.pattern.permute.xlu0 0
    %3449 = vperm.xlu0 %3448, %v3391
    %v3450 = vpop.permute.xlu0 %3449
    %3453 = vset.pattern.permute.xlu0 0
    %3454 = vperm.xlu0 %3453, %v3392
    %v3455 = vpop.permute.xlu0 %3454
    %3458 = vset.pattern.permute.xlu0 0
    %3459 = vperm.xlu0 %3458, %v3393
    %v3460 = vpop.permute.xlu0 %3459
    %3463 = vset.pattern.permute.xlu0 0
    %3464 = vperm.xlu0 %3463, %v3394
    %v3465 = vpop.permute.xlu0 %3464
    %3468 = vset.pattern.permute.xlu0 0
    %3469 = vperm.xlu0 %3468, %v3395
    %v3470 = vpop.permute.xlu0 %3469
    %v3473 = vlaneseq
    %v3474 = vshrl.u32 %v3473, 7
    %v3475 = vsub.s32 0, %v3474
    %v3476 = vrot.slane %v3396, %v3475
    %v3478 = vmul.f32 %v3400, %v3476
    %v3479 = vmul.f32 %v3405, %v3476
    %v3480 = vmul.f32 %v3410, %v3476
    %v3481 = vmul.f32 %v3415, %v3476
    %v3482 = vmul.f32 %v3420, %v3476
    %v3483 = vmul.f32 %v3425, %v3476
    %v3484 = vmul.f32 %v3430, %v3476
    %v3485 = vmul.f32 %v3435, %v3476
    %v3486 = vmul.f32 %v3440, %v3476
    %v3487 = vmul.f32 %v3445, %v3476
    %v3488 = vmul.f32 %v3450, %v3476
    %v3489 = vmul.f32 %v3455, %v3476
    %v3490 = vmul.f32 %v3460, %v3476
    %v3491 = vmul.f32 %v3465, %v3476
    %v3492 = vmul.f32 %v3470, %v3476
    %v3493 = vadd.f32 %v3366, %v3478
    %v3494 = vadd.f32 %v3367, %v3479
    %v3495 = vadd.f32 %v3368, %v3480
    %v3496 = vadd.f32 %v3369, %v3481
    %v3497 = vadd.f32 %v3370, %v3482
    %v3498 = vadd.f32 %v3371, %v3483
    %v3499 = vadd.f32 %v3372, %v3484
    %v3500 = vadd.f32 %v3373, %v3485
    %v3501 = vadd.f32 %v3374, %v3486
    %v3502 = vadd.f32 %v3375, %v3487
    %v3503 = vadd.f32 %v3376, %v3488
    %v3504 = vadd.f32 %v3377, %v3489
    %v3505 = vadd.f32 %v3378, %v3490
    %v3506 = vadd.f32 %v3379, %v3491
    %v3507 = vadd.f32 %v3380, %v3492
    %v3508 = vld [vmem:[%s2237 + $0xa] sm:$0xff]
    %v3509 = vld [vmem:[%s2237 + $0x12] sm:$0xff]
    %v3510 = vld [vmem:[%s2237 + $0x1a] sm:$0xff]
    %v3511 = vld [vmem:[%s2237 + $0x22] sm:$0xff]
    %v3512 = vld [vmem:[%s2237 + $0x2a] sm:$0xff]
    %v3513 = vld [vmem:[%s2237 + $0x32] sm:$0xff]
    %v3514 = vld [vmem:[%s2237 + $0x3a] sm:$0xff]
    %v3515 = vld [vmem:[%s2237 + $0x42] sm:$0xff]
    %v3516 = vld [vmem:[%s2237 + $0x4a] sm:$0xff]
    %v3517 = vld [vmem:[%s2237 + $0x52] sm:$0xff]
    %v3518 = vld [vmem:[%s2237 + $0x5a] sm:$0xff]
    %v3519 = vld [vmem:[%s2237 + $0x62] sm:$0xff]
    %v3520 = vld [vmem:[%s2237 + $0x6a] sm:$0xff]
    %v3521 = vld [vmem:[%s2237 + $0x72] sm:$0xff]
    %v3522 = vld [vmem:[%s2237 + $0x7a] sm:$0x3f]
    %v3523 = vld [vmem:[%s1855] sm:$0x1]
    %3525 = vset.pattern.permute.xlu0 0
    %3526 = vperm.xlu0 %3525, %v3508
    %v3527 = vpop.permute.xlu0 %3526
    %3530 = vset.pattern.permute.xlu0 0
    %3531 = vperm.xlu0 %3530, %v3509
    %v3532 = vpop.permute.xlu0 %3531
    %3535 = vset.pattern.permute.xlu0 0
    %3536 = vperm.xlu0 %3535, %v3510
    %v3537 = vpop.permute.xlu0 %3536
    %3540 = vset.pattern.permute.xlu0 0
    %3541 = vperm.xlu0 %3540, %v3511
    %v3542 = vpop.permute.xlu0 %3541
    %3545 = vset.pattern.permute.xlu0 0
    %3546 = vperm.xlu0 %3545, %v3512
    %v3547 = vpop.permute.xlu0 %3546
    %3550 = vset.pattern.permute.xlu0 0
    %3551 = vperm.xlu0 %3550, %v3513
    %v3552 = vpop.permute.xlu0 %3551
    %3555 = vset.pattern.permute.xlu0 0
    %3556 = vperm.xlu0 %3555, %v3514
    %v3557 = vpop.permute.xlu0 %3556
    %3560 = vset.pattern.permute.xlu0 0
    %3561 = vperm.xlu0 %3560, %v3515
    %v3562 = vpop.permute.xlu0 %3561
    %3565 = vset.pattern.permute.xlu0 0
    %3566 = vperm.xlu0 %3565, %v3516
    %v3567 = vpop.permute.xlu0 %3566
    %3570 = vset.pattern.permute.xlu0 0
    %3571 = vperm.xlu0 %3570, %v3517
    %v3572 = vpop.permute.xlu0 %3571
    %3575 = vset.pattern.permute.xlu0 0
    %3576 = vperm.xlu0 %3575, %v3518
    %v3577 = vpop.permute.xlu0 %3576
    %3580 = vset.pattern.permute.xlu0 0
    %3581 = vperm.xlu0 %3580, %v3519
    %v3582 = vpop.permute.xlu0 %3581
    %3585 = vset.pattern.permute.xlu0 0
    %3586 = vperm.xlu0 %3585, %v3520
    %v3587 = vpop.permute.xlu0 %3586
    %3590 = vset.pattern.permute.xlu0 0
    %3591 = vperm.xlu0 %3590, %v3521
    %v3592 = vpop.permute.xlu0 %3591
    %3595 = vset.pattern.permute.xlu0 0
    %3596 = vperm.xlu0 %3595, %v3522
    %v3597 = vpop.permute.xlu0 %3596
    %v3600 = vlaneseq
    %v3601 = vshrl.u32 %v3600, 7
    %v3602 = vsub.s32 0, %v3601
    %v3603 = vrot.slane %v3523, %v3602
    %v3605 = vmul.f32 %v3527, %v3603
    %v3606 = vmul.f32 %v3532, %v3603
    %v3607 = vmul.f32 %v3537, %v3603
    %v3608 = vmul.f32 %v3542, %v3603
    %v3609 = vmul.f32 %v3547, %v3603
    %v3610 = vmul.f32 %v3552, %v3603
    %v3611 = vmul.f32 %v3557, %v3603
    %v3612 = vmul.f32 %v3562, %v3603
    %v3613 = vmul.f32 %v3567, %v3603
    %v3614 = vmul.f32 %v3572, %v3603
    %v3615 = vmul.f32 %v3577, %v3603
    %v3616 = vmul.f32 %v3582, %v3603
    %v3617 = vmul.f32 %v3587, %v3603
    %v3618 = vmul.f32 %v3592, %v3603
    %v3619 = vmul.f32 %v3597, %v3603
    %v3620 = vadd.f32 %v3493, %v3605
    %v3621 = vadd.f32 %v3494, %v3606
    %v3622 = vadd.f32 %v3495, %v3607
    %v3623 = vadd.f32 %v3496, %v3608
    %v3624 = vadd.f32 %v3497, %v3609
    %v3625 = vadd.f32 %v3498, %v3610
    %v3626 = vadd.f32 %v3499, %v3611
    %v3627 = vadd.f32 %v3500, %v3612
    %v3628 = vadd.f32 %v3501, %v3613
    %v3629 = vadd.f32 %v3502, %v3614
    %v3630 = vadd.f32 %v3503, %v3615
    %v3631 = vadd.f32 %v3504, %v3616
    %v3632 = vadd.f32 %v3505, %v3617
    %v3633 = vadd.f32 %v3506, %v3618
    %v3634 = vadd.f32 %v3507, %v3619
    %v3635 = vmul.f32 %v3620, %v1971
    %v3636 = vmul.f32 %v3621, %v1971
    %v3637 = vmul.f32 %v3622, %v1971
    %v3638 = vmul.f32 %v3623, %v1971
    %v3639 = vmul.f32 %v3624, %v1971
    %v3640 = vmul.f32 %v3625, %v1971
    %v3641 = vmul.f32 %v3626, %v1971
    %v3642 = vmul.f32 %v3627, %v1971
    %v3643 = vmul.f32 %v3628, %v1971
    %v3644 = vmul.f32 %v3629, %v1971
    %v3645 = vmul.f32 %v3630, %v1971
    %v3646 = vmul.f32 %v3631, %v1971
    %v3647 = vmul.f32 %v3632, %v1971
    %v3648 = vmul.f32 %v3633, %v1971
    %v3649 = vmul.f32 %v3634, %v1971
    %v3650 = vadd.f32 %v3635, %v1990
    %v3651 = vadd.f32 %v3636, %v1990
    %v3652 = vadd.f32 %v3637, %v1990
    %v3653 = vadd.f32 %v3638, %v1990
    %v3654 = vadd.f32 %v3639, %v1990
    %v3655 = vadd.f32 %v3640, %v1990
    %v3656 = vadd.f32 %v3641, %v1990
    %v3657 = vadd.f32 %v3642, %v1990
    %v3658 = vadd.f32 %v3643, %v1990
    %v3659 = vadd.f32 %v3644, %v1990
    %v3660 = vadd.f32 %v3645, %v1990
    %v3661 = vadd.f32 %v3646, %v1990
    %v3662 = vadd.f32 %v3647, %v1990
    %v3663 = vadd.f32 %v3648, %v1990
    %v3664 = vadd.f32 %v3649, %v1990
    %v3665 = vmax.f32 %v3650, 0.0
    %v3666 = vmax.f32 %v3651, 0.0
    %v3667 = vmax.f32 %v3652, 0.0
    %v3668 = vmax.f32 %v3653, 0.0
    %v3669 = vmax.f32 %v3654, 0.0
    %v3670 = vmax.f32 %v3655, 0.0
    %v3671 = vmax.f32 %v3656, 0.0
    %v3672 = vmax.f32 %v3657, 0.0
    %v3673 = vmax.f32 %v3658, 0.0
    %v3674 = vmax.f32 %v3659, 0.0
    %v3675 = vmax.f32 %v3660, 0.0
    %v3676 = vmax.f32 %v3661, 0.0
    %v3677 = vmax.f32 %v3662, 0.0
    %v3678 = vmax.f32 %v3663, 0.0
    %v3679 = vmax.f32 %v3664, 0.0
    %3680 = vst [vmem:[#allocation8 + $0x78] sm:$0xff] %v3665
    %3681 = vst [vmem:[#allocation8 + $0x80] sm:$0xff] %v3666
    %3682 = vst [vmem:[#allocation8 + $0x88] sm:$0xff] %v3667
    %3683 = vst [vmem:[#allocation8 + $0x90] sm:$0xff] %v3668
    %3684 = vst [vmem:[#allocation8 + $0x98] sm:$0xff] %v3669
    %3685 = vst [vmem:[#allocation8 + $0xa0] sm:$0xff] %v3670
    %3686 = vst [vmem:[#allocation8 + $0xa8] sm:$0xff] %v3671
    %3687 = vst [vmem:[#allocation8 + $0xb0] sm:$0xff] %v3672
    %3688 = vst [vmem:[#allocation8 + $0xb8] sm:$0xff] %v3673
    %3689 = vst [vmem:[#allocation8 + $0xc0] sm:$0xff] %v3674
    %3690 = vst [vmem:[#allocation8 + $0xc8] sm:$0xff] %v3675
    %3691 = vst [vmem:[#allocation8 + $0xd0] sm:$0xff] %v3676
    %3692 = vst [vmem:[#allocation8 + $0xd8] sm:$0xff] %v3677
    %3693 = vst [vmem:[#allocation8 + $0xe0] sm:$0xff] %v3678
    %3694 = vst [vmem:[#allocation8 + $0xe8] sm:$0x3f] %v3679
    %s3695 = scalar_lea.vmem [#allocation8], 120
    %v3696 = vld [vmem:[%s3695] ss:$2 sm:$0xff]
    %s3697 = scalar_lea.vmem [#allocation8], 136
    %v3698 = vld [vmem:[%s3697] ss:$2 sm:$0xff]
    %s3699 = scalar_lea.vmem [#allocation8], 152
    %v3700 = vld [vmem:[%s3699] ss:$2 sm:$0xff]
    %s3701 = scalar_lea.vmem [#allocation8], 168
    %v3702 = vld [vmem:[%s3701] ss:$2 sm:$0xff]
    %s3703 = scalar_lea.vmem [#allocation8], 184
    %v3704 = vld [vmem:[%s3703] ss:$2 sm:$0xff]
    %s3705 = scalar_lea.vmem [#allocation8], 200
    %v3706 = vld [vmem:[%s3705] ss:$2 sm:$0xff]
    %s3707 = scalar_lea.vmem [#allocation8], 216
    %v3708 = vld [vmem:[%s3707] ss:$2 sm:$0xff]
    %s3709 = scalar_lea.vmem [#allocation8], 232
    %v3710 = vld [vmem:[%s3709] ss:$2 sm:$0x7]
    %s3711 = scalar_lea.vmem [#allocation8], 121
    %v3712 = vld [vmem:[%s3711] ss:$2 sm:$0xff]
    %s3713 = scalar_lea.vmem [#allocation8], 137
    %v3714 = vld [vmem:[%s3713] ss:$2 sm:$0xff]
    %s3715 = scalar_lea.vmem [#allocation8], 153
    %v3716 = vld [vmem:[%s3715] ss:$2 sm:$0xff]
    %s3717 = scalar_lea.vmem [#allocation8], 169
    %v3718 = vld [vmem:[%s3717] ss:$2 sm:$0xff]
    %s3719 = scalar_lea.vmem [#allocation8], 185
    %v3720 = vld [vmem:[%s3719] ss:$2 sm:$0xff]
    %s3721 = scalar_lea.vmem [#allocation8], 201
    %v3722 = vld [vmem:[%s3721] ss:$2 sm:$0xff]
    %s3723 = scalar_lea.vmem [#allocation8], 217
    %v3724 = vld [vmem:[%s3723] ss:$2 sm:$0xff]
    %s3725 = scalar_lea.vmem [#allocation8], 233
    %v3726 = vld [vmem:[%s3725] ss:$2 sm:$0x7]
    %v3727 = vmax.f32 %v3696, %v3712
    %v3728 = vmax.f32 %v3698, %v3714
    %v3729 = vmax.f32 %v3700, %v3716
    %v3730 = vmax.f32 %v3702, %v3718
    %v3731 = vmax.f32 %v3704, %v3720
    %v3732 = vmax.f32 %v3706, %v3722
    %v3733 = vmax.f32 %v3708, %v3724
    %v3734 = vmax.f32 %v3710, %v3726
    %3735 = vst [vmem:[#allocation9 + $0x40] sm:$0xff] %v3727
    %3736 = vst [vmem:[#allocation9 + $0x48] sm:$0xff] %v3728
    %3737 = vst [vmem:[#allocation9 + $0x50] sm:$0xff] %v3729
    %3738 = vst [vmem:[#allocation9 + $0x58] sm:$0xff] %v3730
    %3739 = vst [vmem:[#allocation9 + $0x60] sm:$0xff] %v3731
    %3740 = vst [vmem:[#allocation9 + $0x68] sm:$0xff] %v3732
    %3741 = vst [vmem:[#allocation9 + $0x70] sm:$0xff] %v3733
    %3742 = vst [vmem:[#allocation9 + $0x78] sm:$0x7] %v3734
    %v3743 = vld [vmem:[#allocation9 + $0x40] sm:$0xff]
    %v3744 = vld [vmem:[#allocation9 + $0x48] sm:$0xff]
    %v3745 = vld [vmem:[#allocation9 + $0x50] sm:$0xff]
    %v3746 = vld [vmem:[#allocation9 + $0x58] sm:$0xff]
    %v3747 = vld [vmem:[#allocation9 + $0x60] sm:$0xff]
    %v3748 = vld [vmem:[#allocation9 + $0x68] sm:$0xff]
    %v3749 = vld [vmem:[#allocation9 + $0x70] sm:$0x1]
    %3750 = vst [vmem:[#allocation10 + $0x268] sm:$0xff] %v3743
    %3751 = vst [vmem:[#allocation10 + $0x2c0] sm:$0xff] %v3744
    %3752 = vst [vmem:[#allocation10 + $0x318] sm:$0xff] %v3745
    %3753 = vst [vmem:[#allocation10 + $0x370] sm:$0xff] %v3746
    %3754 = vst [vmem:[#allocation10 + $0x3c8] sm:$0xff] %v3747
    %3755 = vst [vmem:[#allocation10 + $0x420] sm:$0xff] %v3748
    %3756 = vst [vmem:[#allocation10 + $0x478] sm:$0x1] %v3749
    %v3757 = vld [vmem:[#allocation9 + $0x41] sm:$0xff]
    %v3758 = vld [vmem:[#allocation9 + $0x49] sm:$0xff]
    %v3759 = vld [vmem:[#allocation9 + $0x51] sm:$0xff]
    %v3760 = vld [vmem:[#allocation9 + $0x59] sm:$0xff]
    %v3761 = vld [vmem:[#allocation9 + $0x61] sm:$0xff]
    %v3762 = vld [vmem:[#allocation9 + $0x69] sm:$0xff]
    %v3763 = vld [vmem:[#allocation9 + $0x71] sm:$0x1]
    %3764 = vst [vmem:[#allocation10 + $0x270] sm:$0xff] %v3757
    %3765 = vst [vmem:[#allocation10 + $0x2c8] sm:$0xff] %v3758
    %3766 = vst [vmem:[#allocation10 + $0x320] sm:$0xff] %v3759
    %3767 = vst [vmem:[#allocation10 + $0x378] sm:$0xff] %v3760
    %3768 = vst [vmem:[#allocation10 + $0x3d0] sm:$0xff] %v3761
    %3769 = vst [vmem:[#allocation10 + $0x428] sm:$0xff] %v3762
    %3770 = vst [vmem:[#allocation10 + $0x480] sm:$0x1] %v3763
    %v3771 = vld [vmem:[#allocation9 + $0x42] sm:$0xff]
    %v3772 = vld [vmem:[#allocation9 + $0x4a] sm:$0xff]
    %v3773 = vld [vmem:[#allocation9 + $0x52] sm:$0xff]
    %v3774 = vld [vmem:[#allocation9 + $0x5a] sm:$0xff]
    %v3775 = vld [vmem:[#allocation9 + $0x62] sm:$0xff]
    %v3776 = vld [vmem:[#allocation9 + $0x6a] sm:$0xff]
    %v3777 = vld [vmem:[#allocation9 + $0x72] sm:$0x1]
    %3778 = vst [vmem:[#allocation10 + $0x278] sm:$0xff] %v3771
    %3779 = vst [vmem:[#allocation10 + $0x2d0] sm:$0xff] %v3772
    %3780 = vst [vmem:[#allocation10 + $0x328] sm:$0xff] %v3773
    %3781 = vst [vmem:[#allocation10 + $0x380] sm:$0xff] %v3774
    %3782 = vst [vmem:[#allocation10 + $0x3d8] sm:$0xff] %v3775
    %3783 = vst [vmem:[#allocation10 + $0x430] sm:$0xff] %v3776
    %3784 = vst [vmem:[#allocation10 + $0x488] sm:$0x1] %v3777
    %v3785 = vld [vmem:[#allocation9 + $0x43] sm:$0xff]
    %v3786 = vld [vmem:[#allocation9 + $0x4b] sm:$0xff]
    %v3787 = vld [vmem:[#allocation9 + $0x53] sm:$0xff]
    %v3788 = vld [vmem:[#allocation9 + $0x5b] sm:$0xff]
    %v3789 = vld [vmem:[#allocation9 + $0x63] sm:$0xff]
    %v3790 = vld [vmem:[#allocation9 + $0x6b] sm:$0xff]
    %v3791 = vld [vmem:[#allocation9 + $0x73] sm:$0x1]
    %3792 = vst [vmem:[#allocation10 + $0x280] sm:$0xff] %v3785
    %3793 = vst [vmem:[#allocation10 + $0x2d8] sm:$0xff] %v3786
    %3794 = vst [vmem:[#allocation10 + $0x330] sm:$0xff] %v3787
    %3795 = vst [vmem:[#allocation10 + $0x388] sm:$0xff] %v3788
    %3796 = vst [vmem:[#allocation10 + $0x3e0] sm:$0xff] %v3789
    %3797 = vst [vmem:[#allocation10 + $0x438] sm:$0xff] %v3790
    %3798 = vst [vmem:[#allocation10 + $0x490] sm:$0x1] %v3791
    %v3799 = vld [vmem:[#allocation9 + $0x44] sm:$0xff]
    %v3800 = vld [vmem:[#allocation9 + $0x4c] sm:$0xff]
    %v3801 = vld [vmem:[#allocation9 + $0x54] sm:$0xff]
    %v3802 = vld [vmem:[#allocation9 + $0x5c] sm:$0xff]
    %v3803 = vld [vmem:[#allocation9 + $0x64] sm:$0xff]
    %v3804 = vld [vmem:[#allocation9 + $0x6c] sm:$0xff]
    %v3805 = vld [vmem:[#allocation9 + $0x74] sm:$0x1]
    %3806 = vst [vmem:[#allocation10 + $0x288] sm:$0xff] %v3799
    %3807 = vst [vmem:[#allocation10 + $0x2e0] sm:$0xff] %v3800
    %3808 = vst [vmem:[#allocation10 + $0x338] sm:$0xff] %v3801
    %3809 = vst [vmem:[#allocation10 + $0x390] sm:$0xff] %v3802
    %3810 = vst [vmem:[#allocation10 + $0x3e8] sm:$0xff] %v3803
    %3811 = vst [vmem:[#allocation10 + $0x440] sm:$0xff] %v3804
    %3812 = vst [vmem:[#allocation10 + $0x498] sm:$0x1] %v3805
    %v3813 = vld [vmem:[#allocation9 + $0x45] sm:$0xff]
    %v3814 = vld [vmem:[#allocation9 + $0x4d] sm:$0xff]
    %v3815 = vld [vmem:[#allocation9 + $0x55] sm:$0xff]
    %v3816 = vld [vmem:[#allocation9 + $0x5d] sm:$0xff]
    %v3817 = vld [vmem:[#allocation9 + $0x65] sm:$0xff]
    %v3818 = vld [vmem:[#allocation9 + $0x6d] sm:$0xff]
    %v3819 = vld [vmem:[#allocation9 + $0x75] sm:$0x1]
    %3820 = vst [vmem:[#allocation10 + $0x290] sm:$0xff] %v3813
    %3821 = vst [vmem:[#allocation10 + $0x2e8] sm:$0xff] %v3814
    %3822 = vst [vmem:[#allocation10 + $0x340] sm:$0xff] %v3815
    %3823 = vst [vmem:[#allocation10 + $0x398] sm:$0xff] %v3816
    %3824 = vst [vmem:[#allocation10 + $0x3f0] sm:$0xff] %v3817
    %3825 = vst [vmem:[#allocation10 + $0x448] sm:$0xff] %v3818
    %3826 = vst [vmem:[#allocation10 + $0x4a0] sm:$0x1] %v3819
    %v3827 = vld [vmem:[#allocation9 + $0x46] sm:$0xff]
    %v3828 = vld [vmem:[#allocation9 + $0x4e] sm:$0xff]
    %v3829 = vld [vmem:[#allocation9 + $0x56] sm:$0xff]
    %v3830 = vld [vmem:[#allocation9 + $0x5e] sm:$0xff]
    %v3831 = vld [vmem:[#allocation9 + $0x66] sm:$0xff]
    %v3832 = vld [vmem:[#allocation9 + $0x6e] sm:$0xff]
    %v3833 = vld [vmem:[#allocation9 + $0x76] sm:$0x1]
    %3834 = vst [vmem:[#allocation10 + $0x298] sm:$0xff] %v3827
    %3835 = vst [vmem:[#allocation10 + $0x2f0] sm:$0xff] %v3828
    %3836 = vst [vmem:[#allocation10 + $0x348] sm:$0xff] %v3829
    %3837 = vst [vmem:[#allocation10 + $0x3a0] sm:$0xff] %v3830
    %3838 = vst [vmem:[#allocation10 + $0x3f8] sm:$0xff] %v3831
    %3839 = vst [vmem:[#allocation10 + $0x450] sm:$0xff] %v3832
    %3840 = vst [vmem:[#allocation10 + $0x4a8] sm:$0x1] %v3833
    %v3841 = vld [vmem:[#allocation9 + $0x47] sm:$0xff]
    %v3842 = vld [vmem:[#allocation9 + $0x4f] sm:$0xff]
    %v3843 = vld [vmem:[#allocation9 + $0x57] sm:$0xff]
    %v3844 = vld [vmem:[#allocation9 + $0x5f] sm:$0xff]
    %v3845 = vld [vmem:[#allocation9 + $0x67] sm:$0xff]
    %v3846 = vld [vmem:[#allocation9 + $0x6f] sm:$0xff]
    %v3847 = vld [vmem:[#allocation9 + $0x77] sm:$0x1]
    %3848 = vst [vmem:[#allocation10 + $0x2a0] sm:$0xff] %v3841
    %3849 = vst [vmem:[#allocation10 + $0x2f8] sm:$0xff] %v3842
    %3850 = vst [vmem:[#allocation10 + $0x350] sm:$0xff] %v3843
    %3851 = vst [vmem:[#allocation10 + $0x3a8] sm:$0xff] %v3844
    %3852 = vst [vmem:[#allocation10 + $0x400] sm:$0xff] %v3845
    %3853 = vst [vmem:[#allocation10 + $0x458] sm:$0xff] %v3846
    %3854 = vst [vmem:[#allocation10 + $0x4b0] sm:$0x1] %v3847
    %v3855 = vld [vmem:[#allocation9 + $0x48] sm:$0xff]
    %v3856 = vld [vmem:[#allocation9 + $0x50] sm:$0xff]
    %v3857 = vld [vmem:[#allocation9 + $0x58] sm:$0xff]
    %v3858 = vld [vmem:[#allocation9 + $0x60] sm:$0xff]
    %v3859 = vld [vmem:[#allocation9 + $0x68] sm:$0xff]
    %v3860 = vld [vmem:[#allocation9 + $0x70] sm:$0xff]
    %v3861 = vld [vmem:[#allocation9 + $0x78] sm:$0x1]
    %3862 = vst [vmem:[#allocation10 + $0x2a8] sm:$0xff] %v3855
    %3863 = vst [vmem:[#allocation10 + $0x300] sm:$0xff] %v3856
    %3864 = vst [vmem:[#allocation10 + $0x358] sm:$0xff] %v3857
    %3865 = vst [vmem:[#allocation10 + $0x3b0] sm:$0xff] %v3858
    %3866 = vst [vmem:[#allocation10 + $0x408] sm:$0xff] %v3859
    %3867 = vst [vmem:[#allocation10 + $0x460] sm:$0xff] %v3860
    %3868 = vst [vmem:[#allocation10 + $0x4b8] sm:$0x1] %v3861
    %v3869 = vld [vmem:[#allocation9 + $0x49] sm:$0xff]
    %v3870 = vld [vmem:[#allocation9 + $0x51] sm:$0xff]
    %v3871 = vld [vmem:[#allocation9 + $0x59] sm:$0xff]
    %v3872 = vld [vmem:[#allocation9 + $0x61] sm:$0xff]
    %v3873 = vld [vmem:[#allocation9 + $0x69] sm:$0xff]
    %v3874 = vld [vmem:[#allocation9 + $0x71] sm:$0xff]
    %v3875 = vld [vmem:[#allocation9 + $0x79] sm:$0x1]
    %3876 = vst [vmem:[#allocation10 + $0x2b0] sm:$0xff] %v3869
    %3877 = vst [vmem:[#allocation10 + $0x308] sm:$0xff] %v3870
    %3878 = vst [vmem:[#allocation10 + $0x360] sm:$0xff] %v3871
    %3879 = vst [vmem:[#allocation10 + $0x3b8] sm:$0xff] %v3872
    %3880 = vst [vmem:[#allocation10 + $0x410] sm:$0xff] %v3873
    %3881 = vst [vmem:[#allocation10 + $0x468] sm:$0xff] %v3874
    %3882 = vst [vmem:[#allocation10 + $0x4c0] sm:$0x1] %v3875
    %v3883 = vld [vmem:[#allocation9 + $0x4a] sm:$0xff]
    %v3884 = vld [vmem:[#allocation9 + $0x52] sm:$0xff]
    %v3885 = vld [vmem:[#allocation9 + $0x5a] sm:$0xff]
    %v3886 = vld [vmem:[#allocation9 + $0x62] sm:$0xff]
    %v3887 = vld [vmem:[#allocation9 + $0x6a] sm:$0xff]
    %v3888 = vld [vmem:[#allocation9 + $0x72] sm:$0xff]
    %v3889 = vld [vmem:[#allocation9 + $0x7a] sm:$0x1]
    %3890 = vst [vmem:[#allocation10 + $0x2b8] sm:$0xff] %v3883
    %3891 = vst [vmem:[#allocation10 + $0x310] sm:$0xff] %v3884
    %3892 = vst [vmem:[#allocation10 + $0x368] sm:$0xff] %v3885
    %3893 = vst [vmem:[#allocation10 + $0x3c0] sm:$0xff] %v3886
    %3894 = vst [vmem:[#allocation10 + $0x418] sm:$0xff] %v3887
    %3895 = vst [vmem:[#allocation10 + $0x470] sm:$0xff] %v3888
    %3896 = vst [vmem:[#allocation10 + $0x4c8] sm:$0x1] %v3889
    %s3897 = smul.u32 1408, 1
    %s3898 = sshll.u32 %s3897, 4
    %3899 = dma.done [#allocation7], %s3898
    %v3900 = vld [vmem:[#allocation10] sm:$0xff]
    %v3901 = vld [vmem:[#allocation10 + $0x8] sm:$0xff]
    %v3902 = vld [vmem:[#allocation10 + $0x10] sm:$0xff]
    %v3903 = vld [vmem:[#allocation10 + $0x18] sm:$0xff]
    %v3904 = vld [vmem:[#allocation10 + $0x20] sm:$0xff]
    %v3905 = vld [vmem:[#allocation10 + $0x28] sm:$0xff]
    %v3906 = vld [vmem:[#allocation10 + $0x30] sm:$0xff]
    %v3907 = vld [vmem:[#allocation10 + $0x38] sm:$0xff]
    %v3908 = vld [vmem:[#allocation10 + $0x40] sm:$0xff]
    %v3909 = vld [vmem:[#allocation10 + $0x48] sm:$0xff]
    %v3910 = vld [vmem:[#allocation10 + $0x50] sm:$0xff]
    %v3911 = vld [vmem:[#allocation10 + $0x58] sm:$0xff]
    %v3912 = vld [vmem:[#allocation10 + $0x60] sm:$0xff]
    %v3913 = vld [vmem:[#allocation10 + $0x68] sm:$0xff]
    %v3914 = vld [vmem:[#allocation10 + $0x70] sm:$0xff]
    %v3915 = vld [vmem:[#allocation10 + $0x78] sm:$0xff]
    %v3916 = vld [vmem:[#allocation10 + $0x80] sm:$0xff]
    %v3917 = vld [vmem:[#allocation10 + $0x88] sm:$0xff]
    %v3918 = vld [vmem:[#allocation10 + $0x90] sm:$0xff]
    %v3919 = vld [vmem:[#allocation10 + $0x98] sm:$0xff]
    %v3920 = vld [vmem:[#allocation10 + $0xa0] sm:$0xff]
    %v3921 = vld [vmem:[#allocation10 + $0xa8] sm:$0xff]
    %v3922 = vld [vmem:[#allocation10 + $0xb0] sm:$0xff]
    %v3923 = vld [vmem:[#allocation10 + $0xb8] sm:$0xff]
    %v3924 = vld [vmem:[#allocation10 + $0xc0] sm:$0xff]
    %v3925 = vld [vmem:[#allocation10 + $0xc8] sm:$0xff]
    %v3926 = vld [vmem:[#allocation10 + $0xd0] sm:$0xff]
    %v3927 = vld [vmem:[#allocation10 + $0xd8] sm:$0xff]
    %v3928 = vld [vmem:[#allocation10 + $0xe0] sm:$0xff]
    %v3929 = vld [vmem:[#allocation10 + $0xe8] sm:$0xff]
    %v3930 = vld [vmem:[#allocation10 + $0xf0] sm:$0xff]
    %v3931 = vld [vmem:[#allocation10 + $0xf8] sm:$0xff]
    %v3932 = vld [vmem:[#allocation10 + $0x100] sm:$0xff]
    %v3933 = vld [vmem:[#allocation10 + $0x108] sm:$0xff]
    %v3934 = vld [vmem:[#allocation10 + $0x110] sm:$0xff]
    %v3935 = vld [vmem:[#allocation10 + $0x118] sm:$0xff]
    %v3936 = vld [vmem:[#allocation10 + $0x120] sm:$0xff]
    %v3937 = vld [vmem:[#allocation10 + $0x128] sm:$0xff]
    %v3938 = vld [vmem:[#allocation10 + $0x130] sm:$0xff]
    %v3939 = vld [vmem:[#allocation10 + $0x138] sm:$0xff]
    %v3940 = vld [vmem:[#allocation10 + $0x140] sm:$0xff]
    %v3941 = vld [vmem:[#allocation10 + $0x148] sm:$0xff]
    %v3942 = vld [vmem:[#allocation10 + $0x150] sm:$0xff]
    %v3943 = vld [vmem:[#allocation10 + $0x158] sm:$0xff]
    %v3944 = vld [vmem:[#allocation10 + $0x160] sm:$0xff]
    %v3945 = vld [vmem:[#allocation10 + $0x168] sm:$0xff]
    %v3946 = vld [vmem:[#allocation10 + $0x170] sm:$0xff]
    %v3947 = vld [vmem:[#allocation10 + $0x178] sm:$0xff]
    %v3948 = vld [vmem:[#allocation10 + $0x180] sm:$0xff]
    %v3949 = vld [vmem:[#allocation10 + $0x188] sm:$0xff]
    %v3950 = vld [vmem:[#allocation10 + $0x190] sm:$0xff]
    %v3951 = vld [vmem:[#allocation10 + $0x198] sm:$0xff]
    %v3952 = vld [vmem:[#allocation10 + $0x1a0] sm:$0xff]
    %v3953 = vld [vmem:[#allocation10 + $0x1a8] sm:$0xff]
    %v3954 = vld [vmem:[#allocation10 + $0x1b0] sm:$0xff]
    %v3955 = vld [vmem:[#allocation10 + $0x1b8] sm:$0xff]
    %v3956 = vld [vmem:[#allocation10 + $0x1c0] sm:$0xff]
    %v3957 = vld [vmem:[#allocation10 + $0x1c8] sm:$0xff]
    %v3958 = vld [vmem:[#allocation10 + $0x1d0] sm:$0xff]
    %v3959 = vld [vmem:[#allocation10 + $0x1d8] sm:$0xff]
    %v3960 = vld [vmem:[#allocation10 + $0x1e0] sm:$0xff]
    %v3961 = vld [vmem:[#allocation10 + $0x1e8] sm:$0xff]
    %v3962 = vld [vmem:[#allocation10 + $0x1f0] sm:$0xff]
    %v3963 = vld [vmem:[#allocation10 + $0x1f8] sm:$0xff]
    %v3964 = vld [vmem:[#allocation10 + $0x200] sm:$0xff]
    %v3965 = vld [vmem:[#allocation10 + $0x208] sm:$0xff]
    %v3966 = vld [vmem:[#allocation10 + $0x210] sm:$0xff]
    %v3967 = vld [vmem:[#allocation10 + $0x218] sm:$0xff]
    %v3968 = vld [vmem:[#allocation10 + $0x220] sm:$0xff]
    %v3969 = vld [vmem:[#allocation10 + $0x228] sm:$0xff]
    %v3970 = vld [vmem:[#allocation10 + $0x230] sm:$0xff]
    %v3971 = vld [vmem:[#allocation10 + $0x238] sm:$0xff]
    %v3972 = vld [vmem:[#allocation10 + $0x240] sm:$0xff]
    %v3973 = vld [vmem:[#allocation10 + $0x248] sm:$0xff]
    %v3974 = vld [vmem:[#allocation10 + $0x250] sm:$0xff]
    %v3975 = vld [vmem:[#allocation10 + $0x258] sm:$0xff]
    %v3976 = vld [vmem:[#allocation10 + $0x260] sm:$0xff]
    %v3977 = vld [vmem:[#allocation10 + $0x268] sm:$0xff]
    %v3978 = vld [vmem:[#allocation10 + $0x270] sm:$0xff]
    %v3979 = vld [vmem:[#allocation10 + $0x278] sm:$0xff]
    %v3980 = vld [vmem:[#allocation10 + $0x280] sm:$0xff]
    %v3981 = vld [vmem:[#allocation10 + $0x288] sm:$0xff]
    %v3982 = vld [vmem:[#allocation10 + $0x290] sm:$0xff]
    %v3983 = vld [vmem:[#allocation10 + $0x298] sm:$0xff]
    %v3984 = vld [vmem:[#allocation10 + $0x2a0] sm:$0xff]
    %v3985 = vld [vmem:[#allocation10 + $0x2a8] sm:$0xff]
    %v3986 = vld [vmem:[#allocation10 + $0x2b0] sm:$0xff]
    %v3987 = vld [vmem:[#allocation10 + $0x2b8] sm:$0xff]
    %v3988 = vld [vmem:[#allocation10 + $0x2c0] sm:$0xff]
    %v3989 = vld [vmem:[#allocation10 + $0x2c8] sm:$0xff]
    %v3990 = vld [vmem:[#allocation10 + $0x2d0] sm:$0xff]
    %v3991 = vld [vmem:[#allocation10 + $0x2d8] sm:$0xff]
    %v3992 = vld [vmem:[#allocation10 + $0x2e0] sm:$0xff]
    %v3993 = vld [vmem:[#allocation10 + $0x2e8] sm:$0xff]
    %v3994 = vld [vmem:[#allocation10 + $0x2f0] sm:$0xff]
    %v3995 = vld [vmem:[#allocation10 + $0x2f8] sm:$0xff]
    %v3996 = vld [vmem:[#allocation10 + $0x300] sm:$0xff]
    %v3997 = vld [vmem:[#allocation10 + $0x308] sm:$0xff]
    %v3998 = vld [vmem:[#allocation10 + $0x310] sm:$0xff]
    %v3999 = vld [vmem:[#allocation10 + $0x318] sm:$0xff]
    %v4000 = vld [vmem:[#allocation10 + $0x320] sm:$0xff]
    %v4001 = vld [vmem:[#allocation10 + $0x328] sm:$0xff]
    %v4002 = vld [vmem:[#allocation10 + $0x330] sm:$0xff]
    %v4003 = vld [vmem:[#allocation10 + $0x338] sm:$0xff]
    %v4004 = vld [vmem:[#allocation10 + $0x340] sm:$0xff]
    %v4005 = vld [vmem:[#allocation10 + $0x348] sm:$0xff]
    %v4006 = vld [vmem:[#allocation10 + $0x350] sm:$0xff]
    %v4007 = vld [vmem:[#allocation10 + $0x358] sm:$0xff]
    %v4008 = vld [vmem:[#allocation10 + $0x360] sm:$0xff]
    %v4009 = vld [vmem:[#allocation10 + $0x368] sm:$0xff]
    %v4010 = vld [vmem:[#allocation10 + $0x370] sm:$0xff]
    %v4011 = vld [vmem:[#allocation10 + $0x378] sm:$0xff]
    %v4012 = vld [vmem:[#allocation10 + $0x380] sm:$0xff]
    %v4013 = vld [vmem:[#allocation10 + $0x388] sm:$0xff]
    %v4014 = vld [vmem:[#allocation10 + $0x390] sm:$0xff]
    %v4015 = vld [vmem:[#allocation10 + $0x398] sm:$0xff]
    %v4016 = vld [vmem:[#allocation10 + $0x3a0] sm:$0xff]
    %v4017 = vld [vmem:[#allocation10 + $0x3a8] sm:$0xff]
    %v4018 = vld [vmem:[#allocation10 + $0x3b0] sm:$0xff]
    %v4019 = vld [vmem:[#allocation10 + $0x3b8] sm:$0xff]
    %v4020 = vld [vmem:[#allocation10 + $0x3c0] sm:$0xff]
    %v4021 = vld [vmem:[#allocation10 + $0x3c8] sm:$0xff]
    %v4022 = vld [vmem:[#allocation10 + $0x3d0] sm:$0xff]
    %v4023 = vld [vmem:[#allocation10 + $0x3d8] sm:$0xff]
    %v4024 = vld [vmem:[#allocation10 + $0x3e0] sm:$0xff]
    %v4025 = vld [vmem:[#allocation10 + $0x3e8] sm:$0xff]
    %v4026 = vld [vmem:[#allocation10 + $0x3f0] sm:$0xff]
    %v4027 = vld [vmem:[#allocation10 + $0x3f8] sm:$0xff]
    %v4028 = vld [vmem:[#allocation10 + $0x400] sm:$0xff]
    %v4029 = vld [vmem:[#allocation10 + $0x408] sm:$0xff]
    %v4030 = vld [vmem:[#allocation10 + $0x410] sm:$0xff]
    %v4031 = vld [vmem:[#allocation10 + $0x418] sm:$0xff]
    %v4032 = vld [vmem:[#allocation10 + $0x420] sm:$0xff]
    %v4033 = vld [vmem:[#allocation10 + $0x428] sm:$0xff]
    %v4034 = vld [vmem:[#allocation10 + $0x430] sm:$0xff]
    %v4035 = vld [vmem:[#allocation10 + $0x438] sm:$0xff]
    %v4036 = vld [vmem:[#allocation10 + $0x440] sm:$0xff]
    %v4037 = vld [vmem:[#allocation10 + $0x448] sm:$0xff]
    %v4038 = vld [vmem:[#allocation10 + $0x450] sm:$0xff]
    %v4039 = vld [vmem:[#allocation10 + $0x458] sm:$0xff]
    %v4040 = vld [vmem:[#allocation10 + $0x460] sm:$0xff]
    %v4041 = vld [vmem:[#allocation10 + $0x468] sm:$0xff]
    %v4042 = vld [vmem:[#allocation10 + $0x470] sm:$0xff]
    %v4043 = vld [vmem:[#allocation10 + $0x478] sm:$0xff]
    %v4044 = vld [vmem:[#allocation10 + $0x480] sm:$0xff]
    %v4045 = vld [vmem:[#allocation10 + $0x488] sm:$0xff]
    %v4046 = vld [vmem:[#allocation10 + $0x490] sm:$0xff]
    %v4047 = vld [vmem:[#allocation10 + $0x498] sm:$0xff]
    %v4048 = vld [vmem:[#allocation10 + $0x4a0] sm:$0xff]
    %v4049 = vld [vmem:[#allocation10 + $0x4a8] sm:$0xff]
    %v4050 = vld [vmem:[#allocation10 + $0x4b0] sm:$0xff]
    %v4051 = vld [vmem:[#allocation10 + $0x4b8] sm:$0xff]
    %v4052 = vld [vmem:[#allocation10 + $0x4c0] sm:$0xff]
    %v4053 = vld [vmem:[#allocation10 + $0x4c8] sm:$0xff]
    %v4054 = vld [vmem:[#allocation2] sm:$0xff]
    %v4055 = vld [vmem:[#allocation2 + $0x8] sm:$0xff]
    %v4056 = vld [vmem:[#allocation2 + $0x10] sm:$0xff]
    %v4057 = vld [vmem:[#allocation2 + $0x18] sm:$0xff]
    %v4058 = vld [vmem:[#allocation2 + $0x20] sm:$0xff]
    %v4059 = vld [vmem:[#allocation2 + $0x28] sm:$0xff]
    %v4060 = vld [vmem:[#allocation2 + $0x30] sm:$0xff]
    %v4061 = vld [vmem:[#allocation2 + $0x38] sm:$0xff]
    %v4062 = vld [vmem:[#allocation2 + $0x40] sm:$0xff]
    %v4063 = vld [vmem:[#allocation2 + $0x48] sm:$0xff]
    %v4064 = vld [vmem:[#allocation2 + $0x50] sm:$0xff]
    %v4065 = vld [vmem:[#allocation2 + $0x58] sm:$0xff]
    %v4066 = vld [vmem:[#allocation2 + $0x60] sm:$0xff]
    %v4067 = vld [vmem:[#allocation2 + $0x68] sm:$0xff]
    %v4068 = vld [vmem:[#allocation2 + $0x70] sm:$0xff]
    %v4069 = vld [vmem:[#allocation2 + $0x78] sm:$0xff]
    %v4070 = vld [vmem:[#allocation2 + $0x80] sm:$0xff]
    %v4071 = vld [vmem:[#allocation2 + $0x88] sm:$0xff]
    %v4072 = vld [vmem:[#allocation2 + $0x90] sm:$0xff]
    %v4073 = vld [vmem:[#allocation2 + $0x98] sm:$0xff]
    %v4074 = vld [vmem:[#allocation2 + $0xa0] sm:$0xff]
    %v4075 = vld [vmem:[#allocation2 + $0xa8] sm:$0xff]
    %v4076 = vld [vmem:[#allocation2 + $0xb0] sm:$0xff]
    %v4077 = vld [vmem:[#allocation2 + $0xb8] sm:$0xff]
    %v4078 = vld [vmem:[#allocation2 + $0xc0] sm:$0xff]
    %v4079 = vld [vmem:[#allocation2 + $0xc8] sm:$0xff]
    %v4080 = vld [vmem:[#allocation2 + $0xd0] sm:$0xff]
    %v4081 = vld [vmem:[#allocation2 + $0xd8] sm:$0xff]
    %v4082 = vld [vmem:[#allocation2 + $0xe0] sm:$0xff]
    %v4083 = vld [vmem:[#allocation2 + $0xe8] sm:$0xff]
    %v4084 = vld [vmem:[#allocation2 + $0xf0] sm:$0xff]
    %v4085 = vld [vmem:[#allocation2 + $0xf8] sm:$0xff]
    %v4086 = vld [vmem:[#allocation2 + $0x100] sm:$0xff]
    %v4087 = vld [vmem:[#allocation2 + $0x108] sm:$0xff]
    %v4088 = vld [vmem:[#allocation2 + $0x110] sm:$0xff]
    %v4089 = vld [vmem:[#allocation2 + $0x118] sm:$0xff]
    %v4090 = vld [vmem:[#allocation2 + $0x120] sm:$0xff]
    %v4091 = vld [vmem:[#allocation2 + $0x128] sm:$0xff]
    %v4092 = vld [vmem:[#allocation2 + $0x130] sm:$0xff]
    %v4093 = vld [vmem:[#allocation2 + $0x138] sm:$0xff]
    %v4094 = vld [vmem:[#allocation2 + $0x140] sm:$0xff]
    %v4095 = vld [vmem:[#allocation2 + $0x148] sm:$0xff]
    %v4096 = vld [vmem:[#allocation2 + $0x150] sm:$0xff]
    %v4097 = vld [vmem:[#allocation2 + $0x158] sm:$0xff]
    %v4098 = vld [vmem:[#allocation2 + $0x160] sm:$0xff]
    %v4099 = vld [vmem:[#allocation2 + $0x168] sm:$0xff]
    %v4100 = vld [vmem:[#allocation2 + $0x170] sm:$0xff]
    %v4101 = vld [vmem:[#allocation2 + $0x178] sm:$0xff]
    %v4102 = vld [vmem:[#allocation2 + $0x180] sm:$0xff]
    %v4103 = vld [vmem:[#allocation2 + $0x188] sm:$0xff]
    %v4104 = vld [vmem:[#allocation2 + $0x190] sm:$0xff]
    %v4105 = vld [vmem:[#allocation2 + $0x198] sm:$0xff]
    %v4106 = vld [vmem:[#allocation2 + $0x1a0] sm:$0xff]
    %v4107 = vld [vmem:[#allocation2 + $0x1a8] sm:$0xff]
    %v4108 = vld [vmem:[#allocation2 + $0x1b0] sm:$0xff]
    %v4109 = vld [vmem:[#allocation2 + $0x1b8] sm:$0xff]
    %v4110 = vld [vmem:[#allocation2 + $0x1c0] sm:$0xff]
    %v4111 = vld [vmem:[#allocation2 + $0x1c8] sm:$0xff]
    %v4112 = vld [vmem:[#allocation2 + $0x1d0] sm:$0xff]
    %v4113 = vld [vmem:[#allocation2 + $0x1d8] sm:$0xff]
    %v4114 = vld [vmem:[#allocation2 + $0x1e0] sm:$0xff]
    %v4115 = vld [vmem:[#allocation2 + $0x1e8] sm:$0xff]
    %v4116 = vld [vmem:[#allocation2 + $0x1f0] sm:$0xff]
    %v4117 = vld [vmem:[#allocation2 + $0x1f8] sm:$0xff]
    %v4118 = vld [vmem:[#allocation2 + $0x200] sm:$0xff]
    %v4119 = vld [vmem:[#allocation2 + $0x208] sm:$0xff]
    %v4120 = vld [vmem:[#allocation2 + $0x210] sm:$0xff]
    %v4121 = vld [vmem:[#allocation2 + $0x218] sm:$0xff]
    %v4122 = vld [vmem:[#allocation2 + $0x220] sm:$0xff]
    %v4123 = vld [vmem:[#allocation2 + $0x228] sm:$0xff]
    %v4124 = vld [vmem:[#allocation2 + $0x230] sm:$0xff]
    %v4125 = vld [vmem:[#allocation2 + $0x238] sm:$0xff]
    %v4126 = vld [vmem:[#allocation2 + $0x240] sm:$0xff]
    %v4127 = vld [vmem:[#allocation2 + $0x248] sm:$0xff]
    %v4128 = vld [vmem:[#allocation2 + $0x250] sm:$0xff]
    %v4129 = vld [vmem:[#allocation2 + $0x258] sm:$0xff]
    %v4130 = vld [vmem:[#allocation2 + $0x260] sm:$0xff]
    %v4131 = vld [vmem:[#allocation2 + $0x268] sm:$0xff]
    %v4132 = vld [vmem:[#allocation2 + $0x270] sm:$0xff]
    %v4133 = vld [vmem:[#allocation2 + $0x278] sm:$0xff]
    %v4134 = vld [vmem:[#allocation2 + $0x280] sm:$0xff]
    %v4135 = vld [vmem:[#allocation2 + $0x288] sm:$0xff]
    %v4136 = vld [vmem:[#allocation2 + $0x290] sm:$0xff]
    %v4137 = vld [vmem:[#allocation2 + $0x298] sm:$0xff]
    %v4138 = vld [vmem:[#allocation2 + $0x2a0] sm:$0xff]
    %v4139 = vld [vmem:[#allocation2 + $0x2a8] sm:$0xff]
    %v4140 = vld [vmem:[#allocation2 + $0x2b0] sm:$0xff]
    %v4141 = vld [vmem:[#allocation2 + $0x2b8] sm:$0xff]
    %v4142 = vld [vmem:[#allocation2 + $0x2c0] sm:$0xff]
    %v4143 = vld [vmem:[#allocation2 + $0x2c8] sm:$0xff]
    %v4144 = vld [vmem:[#allocation2 + $0x2d0] sm:$0xff]
    %v4145 = vld [vmem:[#allocation2 + $0x2d8] sm:$0xff]
    %v4146 = vld [vmem:[#allocation2 + $0x2e0] sm:$0xff]
    %v4147 = vld [vmem:[#allocation2 + $0x2e8] sm:$0xff]
    %v4148 = vld [vmem:[#allocation2 + $0x2f0] sm:$0xff]
    %v4149 = vld [vmem:[#allocation2 + $0x2f8] sm:$0xff]
    %v4150 = vld [vmem:[#allocation2 + $0x300] sm:$0xff]
    %v4151 = vld [vmem:[#allocation2 + $0x308] sm:$0xff]
    %v4152 = vld [vmem:[#allocation2 + $0x310] sm:$0xff]
    %v4153 = vld [vmem:[#allocation2 + $0x318] sm:$0xff]
    %v4154 = vld [vmem:[#allocation2 + $0x320] sm:$0xff]
    %v4155 = vld [vmem:[#allocation2 + $0x328] sm:$0xff]
    %v4156 = vld [vmem:[#allocation2 + $0x330] sm:$0xff]
    %v4157 = vld [vmem:[#allocation2 + $0x338] sm:$0xff]
    %v4158 = vld [vmem:[#allocation2 + $0x340] sm:$0xff]
    %v4159 = vld [vmem:[#allocation2 + $0x348] sm:$0xff]
    %v4160 = vld [vmem:[#allocation2 + $0x350] sm:$0xff]
    %v4161 = vld [vmem:[#allocation2 + $0x358] sm:$0xff]
    %v4162 = vld [vmem:[#allocation2 + $0x360] sm:$0xff]
    %v4163 = vld [vmem:[#allocation2 + $0x368] sm:$0xff]
    %v4164 = vld [vmem:[#allocation2 + $0x370] sm:$0xff]
    %v4165 = vld [vmem:[#allocation2 + $0x378] sm:$0xff]
    %v4166 = vld [vmem:[#allocation2 + $0x380] sm:$0xff]
    %v4167 = vld [vmem:[#allocation2 + $0x388] sm:$0xff]
    %v4168 = vld [vmem:[#allocation2 + $0x390] sm:$0xff]
    %v4169 = vld [vmem:[#allocation2 + $0x398] sm:$0xff]
    %v4170 = vld [vmem:[#allocation2 + $0x3a0] sm:$0xff]
    %v4171 = vld [vmem:[#allocation2 + $0x3a8] sm:$0xff]
    %v4172 = vld [vmem:[#allocation2 + $0x3b0] sm:$0xff]
    %v4173 = vld [vmem:[#allocation2 + $0x3b8] sm:$0xff]
    %v4174 = vld [vmem:[#allocation2 + $0x3c0] sm:$0xff]
    %v4175 = vld [vmem:[#allocation2 + $0x3c8] sm:$0xff]
    %v4176 = vld [vmem:[#allocation2 + $0x3d0] sm:$0xff]
    %v4177 = vld [vmem:[#allocation2 + $0x3d8] sm:$0xff]
    %v4178 = vld [vmem:[#allocation2 + $0x3e0] sm:$0xff]
    %v4179 = vld [vmem:[#allocation2 + $0x3e8] sm:$0xff]
    %v4180 = vld [vmem:[#allocation2 + $0x3f0] sm:$0xff]
    %v4181 = vld [vmem:[#allocation2 + $0x3f8] sm:$0xff]
    %v4182 = vld [vmem:[#allocation2 + $0x400] sm:$0xff]
    %v4183 = vld [vmem:[#allocation2 + $0x408] sm:$0xff]
    %v4184 = vld [vmem:[#allocation2 + $0x410] sm:$0xff]
    %v4185 = vld [vmem:[#allocation2 + $0x418] sm:$0xff]
    %v4186 = vld [vmem:[#allocation2 + $0x420] sm:$0xff]
    %v4187 = vld [vmem:[#allocation2 + $0x428] sm:$0xff]
    %v4188 = vld [vmem:[#allocation2 + $0x430] sm:$0xff]
    %v4189 = vld [vmem:[#allocation2 + $0x438] sm:$0xff]
    %v4190 = vld [vmem:[#allocation2 + $0x440] sm:$0xff]
    %v4191 = vld [vmem:[#allocation2 + $0x448] sm:$0xff]
    %v4192 = vld [vmem:[#allocation2 + $0x450] sm:$0xff]
    %v4193 = vld [vmem:[#allocation2 + $0x458] sm:$0xff]
    %v4194 = vld [vmem:[#allocation2 + $0x460] sm:$0xff]
    %v4195 = vld [vmem:[#allocation2 + $0x468] sm:$0xff]
    %v4196 = vld [vmem:[#allocation2 + $0x470] sm:$0xff]
    %v4197 = vld [vmem:[#allocation2 + $0x478] sm:$0xff]
    %v4198 = vld [vmem:[#allocation2 + $0x480] sm:$0xff]
    %v4199 = vld [vmem:[#allocation2 + $0x488] sm:$0xff]
    %v4200 = vld [vmem:[#allocation2 + $0x490] sm:$0xff]
    %v4201 = vld [vmem:[#allocation2 + $0x498] sm:$0xff]
    %v4202 = vld [vmem:[#allocation2 + $0x4a0] sm:$0xff]
    %v4203 = vld [vmem:[#allocation2 + $0x4a8] sm:$0xff]
    %v4204 = vld [vmem:[#allocation2 + $0x4b0] sm:$0xff]
    %v4205 = vld [vmem:[#allocation2 + $0x4b8] sm:$0xff]
    %v4206 = vld [vmem:[#allocation2 + $0x4c0] sm:$0xff]
    %v4207 = vld [vmem:[#allocation2 + $0x4c8] sm:$0xff]
    %v4208 = vld [vmem:[#allocation2 + $0x4d0] sm:$0xff]
    %v4209 = vld [vmem:[#allocation2 + $0x4d8] sm:$0xff]
    %v4210 = vld [vmem:[#allocation2 + $0x4e0] sm:$0xff]
    %v4211 = vld [vmem:[#allocation2 + $0x4e8] sm:$0xff]
    %v4212 = vld [vmem:[#allocation2 + $0x4f0] sm:$0xff]
    %v4213 = vld [vmem:[#allocation2 + $0x4f8] sm:$0xff]
    %v4214 = vld [vmem:[#allocation2 + $0x500] sm:$0xff]
    %v4215 = vld [vmem:[#allocation2 + $0x508] sm:$0xff]
    %v4216 = vld [vmem:[#allocation2 + $0x510] sm:$0xff]
    %v4217 = vld [vmem:[#allocation2 + $0x518] sm:$0xff]
    %v4218 = vld [vmem:[#allocation2 + $0x520] sm:$0xff]
    %v4219 = vld [vmem:[#allocation2 + $0x528] sm:$0xff]
    %v4220 = vld [vmem:[#allocation2 + $0x530] sm:$0xff]
    %v4221 = vld [vmem:[#allocation2 + $0x538] sm:$0xff]
    %v4222 = vld [vmem:[#allocation2 + $0x540] sm:$0xff]
    %v4223 = vld [vmem:[#allocation2 + $0x548] sm:$0xff]
    %v4224 = vld [vmem:[#allocation2 + $0x550] sm:$0xff]
    %v4225 = vld [vmem:[#allocation2 + $0x558] sm:$0xff]
    %v4226 = vld [vmem:[#allocation2 + $0x560] sm:$0xff]
    %v4227 = vld [vmem:[#allocation2 + $0x568] sm:$0xff]
    %v4228 = vld [vmem:[#allocation2 + $0x570] sm:$0xff]
    %v4229 = vld [vmem:[#allocation2 + $0x578] sm:$0xff]
    %4230 = vmatprep.subr.mxu0 0.0
    %4231 = vmatpush1.msra.mxu0 %v4069
    %4232 = vmatprep.subr.mxu0 0.0
    %4233 = vmatpush1.msra.mxu0 %v4068
    %4234 = vmatprep.subr.mxu0 0.0
    %4235 = vmatpush1.msra.mxu0 %v4067
    %4236 = vmatprep.subr.mxu0 0.0
    %4237 = vmatpush1.msra.mxu0 %v4066
    %4238 = vmatprep.subr.mxu0 0.0
    %4239 = vmatpush1.msra.mxu0 %v4065
    %4240 = vmatprep.subr.mxu0 0.0
    %4241 = vmatpush1.msra.mxu0 %v4064
    %4242 = vmatprep.subr.mxu0 0.0
    %4243 = vmatpush1.msra.mxu0 %v4063
    %4244 = vmatprep.subr.mxu0 0.0
    %4245 = vmatpush1.msra.mxu0 %v4062
    %4246 = vmatprep.subr.mxu0 0.0
    %4247 = vmatpush1.msra.mxu0 %v4061
    %4248 = vmatprep.subr.mxu0 0.0
    %4249 = vmatpush1.msra.mxu0 %v4060
    %4250 = vmatprep.subr.mxu0 0.0
    %4251 = vmatpush1.msra.mxu0 %v4059
    %4252 = vmatprep.subr.mxu0 0.0
    %4253 = vmatpush1.msra.mxu0 %v4058
    %4254 = vmatprep.subr.mxu0 0.0
    %4255 = vmatpush1.msra.mxu0 %v4057
    %4256 = vmatprep.subr.mxu0 0.0
    %4257 = vmatpush1.msra.mxu0 %v4056
    %4258 = vmatprep.subr.mxu0 0.0
    %4259 = vmatpush1.msra.mxu0 %v4055
    %4260 = vmatprep.subr.mxu0 0.0
    %4261 = vmatpush1.msra.mxu0 %v4054
    %4262 = vmatprep.subr.mxu0 0.0
    %4263 = vmatpush2.msra.mxu0 %v4085
    %4264 = vmatprep.subr.mxu0 0.0
    %4265 = vmatpush2.msra.mxu0 %v4084
    %4266 = vmatprep.subr.mxu0 0.0
    %4267 = vmatpush2.msra.mxu0 %v4083
    %4268 = vmatprep.subr.mxu0 0.0
    %4269 = vmatpush2.msra.mxu0 %v4082
    %4270 = vmatprep.subr.mxu0 0.0
    %4271 = vmatpush2.msra.mxu0 %v4081
    %4272 = vmatprep.subr.mxu0 0.0
    %4273 = vmatpush2.msra.mxu0 %v4080
    %4274 = vmatprep.subr.mxu0 0.0
    %4275 = vmatpush2.msra.mxu0 %v4079
    %4276 = vmatprep.subr.mxu0 0.0
    %4277 = vmatpush2.msra.mxu0 %v4078
    %4278 = vmatprep.subr.mxu0 0.0
    %4279 = vmatpush2.msra.mxu0 %v4077
    %4280 = vmatprep.subr.mxu0 0.0
    %4281 = vmatpush2.msra.mxu0 %v4076
    %4282 = vmatprep.subr.mxu0 0.0
    %4283 = vmatpush2.msra.mxu0 %v4075
    %4284 = vmatprep.subr.mxu0 0.0
    %4285 = vmatpush2.msra.mxu0 %v4074
    %4286 = vmatprep.subr.mxu0 0.0
    %4287 = vmatpush2.msra.mxu0 %v4073
    %4288 = vmatprep.subr.mxu0 0.0
    %4289 = vmatpush2.msra.mxu0 %v4072
    %4290 = vmatprep.subr.mxu0 0.0
    %4291 = vmatpush2.msra.mxu0 %v4071
    %4292 = vmatprep.subr.mxu0 0.0
    %4293 = vmatpush2.msra.mxu0 %v4070
    %4294 = vmatprep.mubr.f32.mxu0 %v3901
    %4295 = vmatmul.mubr.f32.gmra.mxu0 %v3900
    %v4296 = vpop.f32.mrf.mxu0
    %v4297 = vadd.f32 0.0, %v4296
    %v4298 = vpop.f32.mrf.mxu0
    %4299 = vmatprep.mubr.f32.mxu0 %v3912
    %4300 = vmatmul.mubr.f32.gmra.mxu0 %v3911
    %v4301 = vpop.f32.mrf.mxu0
    %v4302 = vadd.f32 0.0, %v4301
    %v4303 = vpop.f32.mrf.mxu0
    %4304 = vmatprep.mubr.f32.mxu0 %v3923
    %4305 = vmatmul.mubr.f32.gmra.mxu0 %v3922
    %v4306 = vpop.f32.mrf.mxu0
    %v4307 = vadd.f32 0.0, %v4306
    %v4308 = vpop.f32.mrf.mxu0
    %4309 = vmatprep.mubr.f32.mxu0 %v3934
    %4310 = vmatmul.mubr.f32.gmra.mxu0 %v3933
    %v4311 = vpop.f32.mrf.mxu0
    %v4312 = vadd.f32 0.0, %v4311
    %v4313 = vpop.f32.mrf.mxu0
    %4314 = vmatprep.mubr.f32.mxu0 %v3945
    %4315 = vmatmul.mubr.f32.gmra.mxu0 %v3944
    %v4316 = vpop.f32.mrf.mxu0
    %v4317 = vadd.f32 0.0, %v4316
    %v4318 = vpop.f32.mrf.mxu0
    %4319 = vmatprep.mubr.f32.mxu0 %v3956
    %4320 = vmatmul.mubr.f32.gmra.mxu0 %v3955
    %v4321 = vpop.f32.mrf.mxu0
    %v4322 = vadd.f32 0.0, %v4321
    %v4323 = vpop.f32.mrf.mxu0
    %4324 = vmatprep.mubr.f32.mxu0 %v3967
    %4325 = vmatmul.mubr.f32.gmra.mxu0 %v3966
    %v4326 = vpop.f32.mrf.mxu0
    %v4327 = vadd.f32 0.0, %v4326
    %v4328 = vpop.f32.mrf.mxu0
    %4329 = vmatprep.mubr.f32.mxu0 %v3978
    %4330 = vmatmul.mubr.f32.gmra.mxu0 %v3977
    %v4331 = vpop.f32.mrf.mxu0
    %v4332 = vadd.f32 0.0, %v4331
    %v4333 = vpop.f32.mrf.mxu0
    %4334 = vmatprep.mubr.f32.mxu0 %v3989
    %4335 = vmatmul.mubr.f32.gmra.mxu0 %v3988
    %v4336 = vpop.f32.mrf.mxu0
    %v4337 = vadd.f32 0.0, %v4336
    %v4338 = vpop.f32.mrf.mxu0
    %4339 = vmatprep.mubr.f32.mxu0 %v4000
    %4340 = vmatmul.mubr.f32.gmra.mxu0 %v3999
    %v4341 = vpop.f32.mrf.mxu0
    %v4342 = vadd.f32 0.0, %v4341
    %v4343 = vpop.f32.mrf.mxu0
    %4344 = vmatprep.mubr.f32.mxu0 %v4011
    %4345 = vmatmul.mubr.f32.gmra.mxu0 %v4010
    %v4346 = vpop.f32.mrf.mxu0
    %v4347 = vadd.f32 0.0, %v4346
    %v4348 = vpop.f32.mrf.mxu0
    %4349 = vmatprep.mubr.f32.mxu0 %v4022
    %4350 = vmatmul.mubr.f32.gmra.mxu0 %v4021
    %v4351 = vpop.f32.mrf.mxu0
    %v4352 = vadd.f32 0.0, %v4351
    %v4353 = vpop.f32.mrf.mxu0
    %4354 = vmatprep.mubr.f32.mxu0 %v4033
    %4355 = vmatmul.mubr.f32.gmra.mxu0 %v4032
    %v4356 = vpop.f32.mrf.mxu0
    %v4357 = vadd.f32 0.0, %v4356
    %v4358 = vpop.f32.mrf.mxu0
    %4359 = vmatprep.mubr.f32.mxu0 %v4044
    %4360 = vmatmul.mubr.f32.gmra.mxu0 %v4043
    %v4361 = vpop.f32.mrf.mxu0
    %v4362 = vadd.f32 0.0, %v4361
    %v4363 = vpop.f32.mrf.mxu0
    %4364 = vdwg.mxu0
    %4365 = vmatprep.subr.mxu0 0.0
    %4366 = vmatpush1.msra.mxu0 %v4101
    %4367 = vmatprep.subr.mxu0 0.0
    %4368 = vmatpush1.msra.mxu0 %v4100
    %4369 = vmatprep.subr.mxu0 0.0
    %4370 = vmatpush1.msra.mxu0 %v4099
    %4371 = vmatprep.subr.mxu0 0.0
    %4372 = vmatpush1.msra.mxu0 %v4098
    %4373 = vmatprep.subr.mxu0 0.0
    %4374 = vmatpush1.msra.mxu0 %v4097
    %4375 = vmatprep.subr.mxu0 0.0
    %4376 = vmatpush1.msra.mxu0 %v4096
    %4377 = vmatprep.subr.mxu0 0.0
    %4378 = vmatpush1.msra.mxu0 %v4095
    %4379 = vmatprep.subr.mxu0 0.0
    %4380 = vmatpush1.msra.mxu0 %v4094
    %4381 = vmatprep.subr.mxu0 0.0
    %4382 = vmatpush1.msra.mxu0 %v4093
    %4383 = vmatprep.subr.mxu0 0.0
    %4384 = vmatpush1.msra.mxu0 %v4092
    %4385 = vmatprep.subr.mxu0 0.0
    %4386 = vmatpush1.msra.mxu0 %v4091
    %4387 = vmatprep.subr.mxu0 0.0
    %4388 = vmatpush1.msra.mxu0 %v4090
    %4389 = vmatprep.subr.mxu0 0.0
    %4390 = vmatpush1.msra.mxu0 %v4089
    %4391 = vmatprep.subr.mxu0 0.0
    %4392 = vmatpush1.msra.mxu0 %v4088
    %4393 = vmatprep.subr.mxu0 0.0
    %4394 = vmatpush1.msra.mxu0 %v4087
    %4395 = vmatprep.subr.mxu0 0.0
    %4396 = vmatpush1.msra.mxu0 %v4086
    %4397 = vmatprep.subr.mxu0 0.0
    %4398 = vmatpush2.msra.mxu0 %v4117
    %4399 = vmatprep.subr.mxu0 0.0
    %4400 = vmatpush2.msra.mxu0 %v4116
    %4401 = vmatprep.subr.mxu0 0.0
    %4402 = vmatpush2.msra.mxu0 %v4115
    %4403 = vmatprep.subr.mxu0 0.0
    %4404 = vmatpush2.msra.mxu0 %v4114
    %4405 = vmatprep.subr.mxu0 0.0
    %4406 = vmatpush2.msra.mxu0 %v4113
    %4407 = vmatprep.subr.mxu0 0.0
    %4408 = vmatpush2.msra.mxu0 %v4112
    %4409 = vmatprep.subr.mxu0 0.0
    %4410 = vmatpush2.msra.mxu0 %v4111
    %4411 = vmatprep.subr.mxu0 0.0
    %4412 = vmatpush2.msra.mxu0 %v4110
    %4413 = vmatprep.subr.mxu0 0.0
    %4414 = vmatpush2.msra.mxu0 %v4109
    %4415 = vmatprep.subr.mxu0 0.0
    %4416 = vmatpush2.msra.mxu0 %v4108
    %4417 = vmatprep.subr.mxu0 0.0
    %4418 = vmatpush2.msra.mxu0 %v4107
    %4419 = vmatprep.subr.mxu0 0.0
    %4420 = vmatpush2.msra.mxu0 %v4106
    %4421 = vmatprep.subr.mxu0 0.0
    %4422 = vmatpush2.msra.mxu0 %v4105
    %4423 = vmatprep.subr.mxu0 0.0
    %4424 = vmatpush2.msra.mxu0 %v4104
    %4425 = vmatprep.subr.mxu0 0.0
    %4426 = vmatpush2.msra.mxu0 %v4103
    %4427 = vmatprep.subr.mxu0 0.0
    %4428 = vmatpush2.msra.mxu0 %v4102
    %4429 = vmatprep.mubr.f32.mxu0 %v3903
    %4430 = vmatmul.mubr.f32.gmra.mxu0 %v3902
    %v4431 = vpop.f32.mrf.mxu0
    %v4432 = vadd.f32 %v4297, %v4431
    %v4433 = vpop.f32.mrf.mxu0
    %4434 = vmatprep.mubr.f32.mxu0 %v3914
    %4435 = vmatmul.mubr.f32.gmra.mxu0 %v3913
    %v4436 = vpop.f32.mrf.mxu0
    %v4437 = vadd.f32 %v4302, %v4436
    %v4438 = vpop.f32.mrf.mxu0
    %4439 = vmatprep.mubr.f32.mxu0 %v3925
    %4440 = vmatmul.mubr.f32.gmra.mxu0 %v3924
    %v4441 = vpop.f32.mrf.mxu0
    %v4442 = vadd.f32 %v4307, %v4441
    %v4443 = vpop.f32.mrf.mxu0
    %4444 = vmatprep.mubr.f32.mxu0 %v3936
    %4445 = vmatmul.mubr.f32.gmra.mxu0 %v3935
    %v4446 = vpop.f32.mrf.mxu0
    %v4447 = vadd.f32 %v4312, %v4446
    %v4448 = vpop.f32.mrf.mxu0
    %4449 = vmatprep.mubr.f32.mxu0 %v3947
    %4450 = vmatmul.mubr.f32.gmra.mxu0 %v3946
    %v4451 = vpop.f32.mrf.mxu0
    %v4452 = vadd.f32 %v4317, %v4451
    %v4453 = vpop.f32.mrf.mxu0
    %4454 = vmatprep.mubr.f32.mxu0 %v3958
    %4455 = vmatmul.mubr.f32.gmra.mxu0 %v3957
    %v4456 = vpop.f32.mrf.mxu0
    %v4457 = vadd.f32 %v4322, %v4456
    %v4458 = vpop.f32.mrf.mxu0
    %4459 = vmatprep.mubr.f32.mxu0 %v3969
    %4460 = vmatmul.mubr.f32.gmra.mxu0 %v3968
    %v4461 = vpop.f32.mrf.mxu0
    %v4462 = vadd.f32 %v4327, %v4461
    %v4463 = vpop.f32.mrf.mxu0
    %4464 = vmatprep.mubr.f32.mxu0 %v3980
    %4465 = vmatmul.mubr.f32.gmra.mxu0 %v3979
    %v4466 = vpop.f32.mrf.mxu0
    %v4467 = vadd.f32 %v4332, %v4466
    %v4468 = vpop.f32.mrf.mxu0
    %4469 = vmatprep.mubr.f32.mxu0 %v3991
    %4470 = vmatmul.mubr.f32.gmra.mxu0 %v3990
    %v4471 = vpop.f32.mrf.mxu0
    %v4472 = vadd.f32 %v4337, %v4471
    %v4473 = vpop.f32.mrf.mxu0
    %4474 = vmatprep.mubr.f32.mxu0 %v4002
    %4475 = vmatmul.mubr.f32.gmra.mxu0 %v4001
    %v4476 = vpop.f32.mrf.mxu0
    %v4477 = vadd.f32 %v4342, %v4476
    %v4478 = vpop.f32.mrf.mxu0
    %4479 = vmatprep.mubr.f32.mxu0 %v4013
    %4480 = vmatmul.mubr.f32.gmra.mxu0 %v4012
    %v4481 = vpop.f32.mrf.mxu0
    %v4482 = vadd.f32 %v4347, %v4481
    %v4483 = vpop.f32.mrf.mxu0
    %4484 = vmatprep.mubr.f32.mxu0 %v4024
    %4485 = vmatmul.mubr.f32.gmra.mxu0 %v4023
    %v4486 = vpop.f32.mrf.mxu0
    %v4487 = vadd.f32 %v4352, %v4486
    %v4488 = vpop.f32.mrf.mxu0
    %4489 = vmatprep.mubr.f32.mxu0 %v4035
    %4490 = vmatmul.mubr.f32.gmra.mxu0 %v4034
    %v4491 = vpop.f32.mrf.mxu0
    %v4492 = vadd.f32 %v4357, %v4491
    %v4493 = vpop.f32.mrf.mxu0
    %4494 = vmatprep.mubr.f32.mxu0 %v4046
    %4495 = vmatmul.mubr.f32.gmra.mxu0 %v4045
    %v4496 = vpop.f32.mrf.mxu0
    %v4497 = vadd.f32 %v4362, %v4496
    %v4498 = vpop.f32.mrf.mxu0
    %4499 = vdwg.mxu0
    %4500 = vmatprep.subr.mxu0 0.0
    %4501 = vmatpush1.msra.mxu0 %v4133
    %4502 = vmatprep.subr.mxu0 0.0
    %4503 = vmatpush1.msra.mxu0 %v4132
    %4504 = vmatprep.subr.mxu0 0.0
    %4505 = vmatpush1.msra.mxu0 %v4131
    %4506 = vmatprep.subr.mxu0 0.0
    %4507 = vmatpush1.msra.mxu0 %v4130
    %4508 = vmatprep.subr.mxu0 0.0
    %4509 = vmatpush1.msra.mxu0 %v4129
    %4510 = vmatprep.subr.mxu0 0.0
    %4511 = vmatpush1.msra.mxu0 %v4128
    %4512 = vmatprep.subr.mxu0 0.0
    %4513 = vmatpush1.msra.mxu0 %v4127
    %4514 = vmatprep.subr.mxu0 0.0
    %4515 = vmatpush1.msra.mxu0 %v4126
    %4516 = vmatprep.subr.mxu0 0.0
    %4517 = vmatpush1.msra.mxu0 %v4125
    %4518 = vmatprep.subr.mxu0 0.0
    %4519 = vmatpush1.msra.mxu0 %v4124
    %4520 = vmatprep.subr.mxu0 0.0
    %4521 = vmatpush1.msra.mxu0 %v4123
    %4522 = vmatprep.subr.mxu0 0.0
    %4523 = vmatpush1.msra.mxu0 %v4122
    %4524 = vmatprep.subr.mxu0 0.0
    %4525 = vmatpush1.msra.mxu0 %v4121
    %4526 = vmatprep.subr.mxu0 0.0
    %4527 = vmatpush1.msra.mxu0 %v4120
    %4528 = vmatprep.subr.mxu0 0.0
    %4529 = vmatpush1.msra.mxu0 %v4119
    %4530 = vmatprep.subr.mxu0 0.0
    %4531 = vmatpush1.msra.mxu0 %v4118
    %4532 = vmatprep.subr.mxu0 0.0
    %4533 = vmatpush2.msra.mxu0 %v4149
    %4534 = vmatprep.subr.mxu0 0.0
    %4535 = vmatpush2.msra.mxu0 %v4148
    %4536 = vmatprep.subr.mxu0 0.0
    %4537 = vmatpush2.msra.mxu0 %v4147
    %4538 = vmatprep.subr.mxu0 0.0
    %4539 = vmatpush2.msra.mxu0 %v4146
    %4540 = vmatprep.subr.mxu0 0.0
    %4541 = vmatpush2.msra.mxu0 %v4145
    %4542 = vmatprep.subr.mxu0 0.0
    %4543 = vmatpush2.msra.mxu0 %v4144
    %4544 = vmatprep.subr.mxu0 0.0
    %4545 = vmatpush2.msra.mxu0 %v4143
    %4546 = vmatprep.subr.mxu0 0.0
    %4547 = vmatpush2.msra.mxu0 %v4142
    %4548 = vmatprep.subr.mxu0 0.0
    %4549 = vmatpush2.msra.mxu0 %v4141
    %4550 = vmatprep.subr.mxu0 0.0
    %4551 = vmatpush2.msra.mxu0 %v4140
    %4552 = vmatprep.subr.mxu0 0.0
    %4553 = vmatpush2.msra.mxu0 %v4139
    %4554 = vmatprep.subr.mxu0 0.0
    %4555 = vmatpush2.msra.mxu0 %v4138
    %4556 = vmatprep.subr.mxu0 0.0
    %4557 = vmatpush2.msra.mxu0 %v4137
    %4558 = vmatprep.subr.mxu0 0.0
    %4559 = vmatpush2.msra.mxu0 %v4136
    %4560 = vmatprep.subr.mxu0 0.0
    %4561 = vmatpush2.msra.mxu0 %v4135
    %4562 = vmatprep.subr.mxu0 0.0
    %4563 = vmatpush2.msra.mxu0 %v4134
    %4564 = vmatprep.mubr.f32.mxu0 %v3905
    %4565 = vmatmul.mubr.f32.gmra.mxu0 %v3904
    %v4566 = vpop.f32.mrf.mxu0
    %v4567 = vadd.f32 %v4432, %v4566
    %v4568 = vpop.f32.mrf.mxu0
    %4569 = vmatprep.mubr.f32.mxu0 %v3916
    %4570 = vmatmul.mubr.f32.gmra.mxu0 %v3915
    %v4571 = vpop.f32.mrf.mxu0
    %v4572 = vadd.f32 %v4437, %v4571
    %v4573 = vpop.f32.mrf.mxu0
    %4574 = vmatprep.mubr.f32.mxu0 %v3927
    %4575 = vmatmul.mubr.f32.gmra.mxu0 %v3926
    %v4576 = vpop.f32.mrf.mxu0
    %v4577 = vadd.f32 %v4442, %v4576
    %v4578 = vpop.f32.mrf.mxu0
    %4579 = vmatprep.mubr.f32.mxu0 %v3938
    %4580 = vmatmul.mubr.f32.gmra.mxu0 %v3937
    %v4581 = vpop.f32.mrf.mxu0
    %v4582 = vadd.f32 %v4447, %v4581
    %v4583 = vpop.f32.mrf.mxu0
    %4584 = vmatprep.mubr.f32.mxu0 %v3949
    %4585 = vmatmul.mubr.f32.gmra.mxu0 %v3948
    %v4586 = vpop.f32.mrf.mxu0
    %v4587 = vadd.f32 %v4452, %v4586
    %v4588 = vpop.f32.mrf.mxu0
    %4589 = vmatprep.mubr.f32.mxu0 %v3960
    %4590 = vmatmul.mubr.f32.gmra.mxu0 %v3959
    %v4591 = vpop.f32.mrf.mxu0
    %v4592 = vadd.f32 %v4457, %v4591
    %v4593 = vpop.f32.mrf.mxu0
    %4594 = vmatprep.mubr.f32.mxu0 %v3971
    %4595 = vmatmul.mubr.f32.gmra.mxu0 %v3970
    %v4596 = vpop.f32.mrf.mxu0
    %v4597 = vadd.f32 %v4462, %v4596
    %v4598 = vpop.f32.mrf.mxu0
    %4599 = vmatprep.mubr.f32.mxu0 %v3982
    %4600 = vmatmul.mubr.f32.gmra.mxu0 %v3981
    %v4601 = vpop.f32.mrf.mxu0
    %v4602 = vadd.f32 %v4467, %v4601
    %v4603 = vpop.f32.mrf.mxu0
    %4604 = vmatprep.mubr.f32.mxu0 %v3993
    %4605 = vmatmul.mubr.f32.gmra.mxu0 %v3992
    %v4606 = vpop.f32.mrf.mxu0
    %v4607 = vadd.f32 %v4472, %v4606
    %v4608 = vpop.f32.mrf.mxu0
    %4609 = vmatprep.mubr.f32.mxu0 %v4004
    %4610 = vmatmul.mubr.f32.gmra.mxu0 %v4003
    %v4611 = vpop.f32.mrf.mxu0
    %v4612 = vadd.f32 %v4477, %v4611
    %v4613 = vpop.f32.mrf.mxu0
    %4614 = vmatprep.mubr.f32.mxu0 %v4015
    %4615 = vmatmul.mubr.f32.gmra.mxu0 %v4014
    %v4616 = vpop.f32.mrf.mxu0
    %v4617 = vadd.f32 %v4482, %v4616
    %v4618 = vpop.f32.mrf.mxu0
    %4619 = vmatprep.mubr.f32.mxu0 %v4026
    %4620 = vmatmul.mubr.f32.gmra.mxu0 %v4025
    %v4621 = vpop.f32.mrf.mxu0
    %v4622 = vadd.f32 %v4487, %v4621
    %v4623 = vpop.f32.mrf.mxu0
    %4624 = vmatprep.mubr.f32.mxu0 %v4037
    %4625 = vmatmul.mubr.f32.gmra.mxu0 %v4036
    %v4626 = vpop.f32.mrf.mxu0
    %v4627 = vadd.f32 %v4492, %v4626
    %v4628 = vpop.f32.mrf.mxu0
    %4629 = vmatprep.mubr.f32.mxu0 %v4048
    %4630 = vmatmul.mubr.f32.gmra.mxu0 %v4047
    %v4631 = vpop.f32.mrf.mxu0
    %v4632 = vadd.f32 %v4497, %v4631
    %v4633 = vpop.f32.mrf.mxu0
    %4634 = vdwg.mxu0
    %4635 = vmatprep.subr.mxu0 0.0
    %4636 = vmatpush1.msra.mxu0 %v4165
    %4637 = vmatprep.subr.mxu0 0.0
    %4638 = vmatpush1.msra.mxu0 %v4164
    %4639 = vmatprep.subr.mxu0 0.0
    %4640 = vmatpush1.msra.mxu0 %v4163
    %4641 = vmatprep.subr.mxu0 0.0
    %4642 = vmatpush1.msra.mxu0 %v4162
    %4643 = vmatprep.subr.mxu0 0.0
    %4644 = vmatpush1.msra.mxu0 %v4161
    %4645 = vmatprep.subr.mxu0 0.0
    %4646 = vmatpush1.msra.mxu0 %v4160
    %4647 = vmatprep.subr.mxu0 0.0
    %4648 = vmatpush1.msra.mxu0 %v4159
    %4649 = vmatprep.subr.mxu0 0.0
    %4650 = vmatpush1.msra.mxu0 %v4158
    %4651 = vmatprep.subr.mxu0 0.0
    %4652 = vmatpush1.msra.mxu0 %v4157
    %4653 = vmatprep.subr.mxu0 0.0
    %4654 = vmatpush1.msra.mxu0 %v4156
    %4655 = vmatprep.subr.mxu0 0.0
    %4656 = vmatpush1.msra.mxu0 %v4155
    %4657 = vmatprep.subr.mxu0 0.0
    %4658 = vmatpush1.msra.mxu0 %v4154
    %4659 = vmatprep.subr.mxu0 0.0
    %4660 = vmatpush1.msra.mxu0 %v4153
    %4661 = vmatprep.subr.mxu0 0.0
    %4662 = vmatpush1.msra.mxu0 %v4152
    %4663 = vmatprep.subr.mxu0 0.0
    %4664 = vmatpush1.msra.mxu0 %v4151
    %4665 = vmatprep.subr.mxu0 0.0
    %4666 = vmatpush1.msra.mxu0 %v4150
    %4667 = vmatprep.subr.mxu0 0.0
    %4668 = vmatpush2.msra.mxu0 %v4181
    %4669 = vmatprep.subr.mxu0 0.0
    %4670 = vmatpush2.msra.mxu0 %v4180
    %4671 = vmatprep.subr.mxu0 0.0
    %4672 = vmatpush2.msra.mxu0 %v4179
    %4673 = vmatprep.subr.mxu0 0.0
    %4674 = vmatpush2.msra.mxu0 %v4178
    %4675 = vmatprep.subr.mxu0 0.0
    %4676 = vmatpush2.msra.mxu0 %v4177
    %4677 = vmatprep.subr.mxu0 0.0
    %4678 = vmatpush2.msra.mxu0 %v4176
    %4679 = vmatprep.subr.mxu0 0.0
    %4680 = vmatpush2.msra.mxu0 %v4175
    %4681 = vmatprep.subr.mxu0 0.0
    %4682 = vmatpush2.msra.mxu0 %v4174
    %4683 = vmatprep.subr.mxu0 0.0
    %4684 = vmatpush2.msra.mxu0 %v4173
    %4685 = vmatprep.subr.mxu0 0.0
    %4686 = vmatpush2.msra.mxu0 %v4172
    %4687 = vmatprep.subr.mxu0 0.0
    %4688 = vmatpush2.msra.mxu0 %v4171
    %4689 = vmatprep.subr.mxu0 0.0
    %4690 = vmatpush2.msra.mxu0 %v4170
    %4691 = vmatprep.subr.mxu0 0.0
    %4692 = vmatpush2.msra.mxu0 %v4169
    %4693 = vmatprep.subr.mxu0 0.0
    %4694 = vmatpush2.msra.mxu0 %v4168
    %4695 = vmatprep.subr.mxu0 0.0
    %4696 = vmatpush2.msra.mxu0 %v4167
    %4697 = vmatprep.subr.mxu0 0.0
    %4698 = vmatpush2.msra.mxu0 %v4166
    %4699 = vmatprep.mubr.f32.mxu0 %v3907
    %4700 = vmatmul.mubr.f32.gmra.mxu0 %v3906
    %v4701 = vpop.f32.mrf.mxu0
    %v4702 = vadd.f32 %v4567, %v4701
    %v4703 = vpop.f32.mrf.mxu0
    %4704 = vmatprep.mubr.f32.mxu0 %v3918
    %4705 = vmatmul.mubr.f32.gmra.mxu0 %v3917
    %v4706 = vpop.f32.mrf.mxu0
    %v4707 = vadd.f32 %v4572, %v4706
    %v4708 = vpop.f32.mrf.mxu0
    %4709 = vmatprep.mubr.f32.mxu0 %v3929
    %4710 = vmatmul.mubr.f32.gmra.mxu0 %v3928
    %v4711 = vpop.f32.mrf.mxu0
    %v4712 = vadd.f32 %v4577, %v4711
    %v4713 = vpop.f32.mrf.mxu0
    %4714 = vmatprep.mubr.f32.mxu0 %v3940
    %4715 = vmatmul.mubr.f32.gmra.mxu0 %v3939
    %v4716 = vpop.f32.mrf.mxu0
    %v4717 = vadd.f32 %v4582, %v4716
    %v4718 = vpop.f32.mrf.mxu0
    %4719 = vmatprep.mubr.f32.mxu0 %v3951
    %4720 = vmatmul.mubr.f32.gmra.mxu0 %v3950
    %v4721 = vpop.f32.mrf.mxu0
    %v4722 = vadd.f32 %v4587, %v4721
    %v4723 = vpop.f32.mrf.mxu0
    %4724 = vmatprep.mubr.f32.mxu0 %v3962
    %4725 = vmatmul.mubr.f32.gmra.mxu0 %v3961
    %v4726 = vpop.f32.mrf.mxu0
    %v4727 = vadd.f32 %v4592, %v4726
    %v4728 = vpop.f32.mrf.mxu0
    %4729 = vmatprep.mubr.f32.mxu0 %v3973
    %4730 = vmatmul.mubr.f32.gmra.mxu0 %v3972
    %v4731 = vpop.f32.mrf.mxu0
    %v4732 = vadd.f32 %v4597, %v4731
    %v4733 = vpop.f32.mrf.mxu0
    %4734 = vmatprep.mubr.f32.mxu0 %v3984
    %4735 = vmatmul.mubr.f32.gmra.mxu0 %v3983
    %v4736 = vpop.f32.mrf.mxu0
    %v4737 = vadd.f32 %v4602, %v4736
    %v4738 = vpop.f32.mrf.mxu0
    %4739 = vmatprep.mubr.f32.mxu0 %v3995
    %4740 = vmatmul.mubr.f32.gmra.mxu0 %v3994
    %v4741 = vpop.f32.mrf.mxu0
    %v4742 = vadd.f32 %v4607, %v4741
    %v4743 = vpop.f32.mrf.mxu0
    %4744 = vmatprep.mubr.f32.mxu0 %v4006
    %4745 = vmatmul.mubr.f32.gmra.mxu0 %v4005
    %v4746 = vpop.f32.mrf.mxu0
    %v4747 = vadd.f32 %v4612, %v4746
    %v4748 = vpop.f32.mrf.mxu0
    %4749 = vmatprep.mubr.f32.mxu0 %v4017
    %4750 = vmatmul.mubr.f32.gmra.mxu0 %v4016
    %v4751 = vpop.f32.mrf.mxu0
    %v4752 = vadd.f32 %v4617, %v4751
    %v4753 = vpop.f32.mrf.mxu0
    %4754 = vmatprep.mubr.f32.mxu0 %v4028
    %4755 = vmatmul.mubr.f32.gmra.mxu0 %v4027
    %v4756 = vpop.f32.mrf.mxu0
    %v4757 = vadd.f32 %v4622, %v4756
    %v4758 = vpop.f32.mrf.mxu0
    %4759 = vmatprep.mubr.f32.mxu0 %v4039
    %4760 = vmatmul.mubr.f32.gmra.mxu0 %v4038
    %v4761 = vpop.f32.mrf.mxu0
    %v4762 = vadd.f32 %v4627, %v4761
    %v4763 = vpop.f32.mrf.mxu0
    %4764 = vmatprep.mubr.f32.mxu0 %v4050
    %4765 = vmatmul.mubr.f32.gmra.mxu0 %v4049
    %v4766 = vpop.f32.mrf.mxu0
    %v4767 = vadd.f32 %v4632, %v4766
    %v4768 = vpop.f32.mrf.mxu0
    %4769 = vdwg.mxu0
    %4770 = vmatprep.subr.mxu0 0.0
    %4771 = vmatpush1.msra.mxu0 %v4197
    %4772 = vmatprep.subr.mxu0 0.0
    %4773 = vmatpush1.msra.mxu0 %v4196
    %4774 = vmatprep.subr.mxu0 0.0
    %4775 = vmatpush1.msra.mxu0 %v4195
    %4776 = vmatprep.subr.mxu0 0.0
    %4777 = vmatpush1.msra.mxu0 %v4194
    %4778 = vmatprep.subr.mxu0 0.0
    %4779 = vmatpush1.msra.mxu0 %v4193
    %4780 = vmatprep.subr.mxu0 0.0
    %4781 = vmatpush1.msra.mxu0 %v4192
    %4782 = vmatprep.subr.mxu0 0.0
    %4783 = vmatpush1.msra.mxu0 %v4191
    %4784 = vmatprep.subr.mxu0 0.0
    %4785 = vmatpush1.msra.mxu0 %v4190
    %4786 = vmatprep.subr.mxu0 0.0
    %4787 = vmatpush1.msra.mxu0 %v4189
    %4788 = vmatprep.subr.mxu0 0.0
    %4789 = vmatpush1.msra.mxu0 %v4188
    %4790 = vmatprep.subr.mxu0 0.0
    %4791 = vmatpush1.msra.mxu0 %v4187
    %4792 = vmatprep.subr.mxu0 0.0
    %4793 = vmatpush1.msra.mxu0 %v4186
    %4794 = vmatprep.subr.mxu0 0.0
    %4795 = vmatpush1.msra.mxu0 %v4185
    %4796 = vmatprep.subr.mxu0 0.0
    %4797 = vmatpush1.msra.mxu0 %v4184
    %4798 = vmatprep.subr.mxu0 0.0
    %4799 = vmatpush1.msra.mxu0 %v4183
    %4800 = vmatprep.subr.mxu0 0.0
    %4801 = vmatpush1.msra.mxu0 %v4182
    %4802 = vmatprep.subr.mxu0 0.0
    %4803 = vmatpush2.msra.mxu0 %v4213
    %4804 = vmatprep.subr.mxu0 0.0
    %4805 = vmatpush2.msra.mxu0 %v4212
    %4806 = vmatprep.subr.mxu0 0.0
    %4807 = vmatpush2.msra.mxu0 %v4211
    %4808 = vmatprep.subr.mxu0 0.0
    %4809 = vmatpush2.msra.mxu0 %v4210
    %4810 = vmatprep.subr.mxu0 0.0
    %4811 = vmatpush2.msra.mxu0 %v4209
    %4812 = vmatprep.subr.mxu0 0.0
    %4813 = vmatpush2.msra.mxu0 %v4208
    %4814 = vmatprep.subr.mxu0 0.0
    %4815 = vmatpush2.msra.mxu0 %v4207
    %4816 = vmatprep.subr.mxu0 0.0
    %4817 = vmatpush2.msra.mxu0 %v4206
    %4818 = vmatprep.subr.mxu0 0.0
    %4819 = vmatpush2.msra.mxu0 %v4205
    %4820 = vmatprep.subr.mxu0 0.0
    %4821 = vmatpush2.msra.mxu0 %v4204
    %4822 = vmatprep.subr.mxu0 0.0
    %4823 = vmatpush2.msra.mxu0 %v4203
    %4824 = vmatprep.subr.mxu0 0.0
    %4825 = vmatpush2.msra.mxu0 %v4202
    %4826 = vmatprep.subr.mxu0 0.0
    %4827 = vmatpush2.msra.mxu0 %v4201
    %4828 = vmatprep.subr.mxu0 0.0
    %4829 = vmatpush2.msra.mxu0 %v4200
    %4830 = vmatprep.subr.mxu0 0.0
    %4831 = vmatpush2.msra.mxu0 %v4199
    %4832 = vmatprep.subr.mxu0 0.0
    %4833 = vmatpush2.msra.mxu0 %v4198
    %4834 = vmatprep.mubr.f32.mxu0 %v3909
    %4835 = vmatmul.mubr.f32.gmra.mxu0 %v3908
    %v4836 = vpop.f32.mrf.mxu0
    %v4837 = vadd.f32 %v4702, %v4836
    %v4838 = vpop.f32.mrf.mxu0
    %4839 = vmatprep.mubr.f32.mxu0 %v3920
    %4840 = vmatmul.mubr.f32.gmra.mxu0 %v3919
    %v4841 = vpop.f32.mrf.mxu0
    %v4842 = vadd.f32 %v4707, %v4841
    %v4843 = vpop.f32.mrf.mxu0
    %4844 = vmatprep.mubr.f32.mxu0 %v3931
    %4845 = vmatmul.mubr.f32.gmra.mxu0 %v3930
    %v4846 = vpop.f32.mrf.mxu0
    %v4847 = vadd.f32 %v4712, %v4846
    %v4848 = vpop.f32.mrf.mxu0
    %4849 = vmatprep.mubr.f32.mxu0 %v3942
    %4850 = vmatmul.mubr.f32.gmra.mxu0 %v3941
    %v4851 = vpop.f32.mrf.mxu0
    %v4852 = vadd.f32 %v4717, %v4851
    %v4853 = vpop.f32.mrf.mxu0
    %4854 = vmatprep.mubr.f32.mxu0 %v3953
    %4855 = vmatmul.mubr.f32.gmra.mxu0 %v3952
    %v4856 = vpop.f32.mrf.mxu0
    %v4857 = vadd.f32 %v4722, %v4856
    %v4858 = vpop.f32.mrf.mxu0
    %4859 = vmatprep.mubr.f32.mxu0 %v3964
    %4860 = vmatmul.mubr.f32.gmra.mxu0 %v3963
    %v4861 = vpop.f32.mrf.mxu0
    %v4862 = vadd.f32 %v4727, %v4861
    %v4863 = vpop.f32.mrf.mxu0
    %4864 = vmatprep.mubr.f32.mxu0 %v3975
    %4865 = vmatmul.mubr.f32.gmra.mxu0 %v3974
    %v4866 = vpop.f32.mrf.mxu0
    %v4867 = vadd.f32 %v4732, %v4866
    %v4868 = vpop.f32.mrf.mxu0
    %4869 = vmatprep.mubr.f32.mxu0 %v3986
    %4870 = vmatmul.mubr.f32.gmra.mxu0 %v3985
    %v4871 = vpop.f32.mrf.mxu0
    %v4872 = vadd.f32 %v4737, %v4871
    %v4873 = vpop.f32.mrf.mxu0
    %4874 = vmatprep.mubr.f32.mxu0 %v3997
    %4875 = vmatmul.mubr.f32.gmra.mxu0 %v3996
    %v4876 = vpop.f32.mrf.mxu0
    %v4877 = vadd.f32 %v4742, %v4876
    %v4878 = vpop.f32.mrf.mxu0
    %4879 = vmatprep.mubr.f32.mxu0 %v4008
    %4880 = vmatmul.mubr.f32.gmra.mxu0 %v4007
    %v4881 = vpop.f32.mrf.mxu0
    %v4882 = vadd.f32 %v4747, %v4881
    %v4883 = vpop.f32.mrf.mxu0
    %4884 = vmatprep.mubr.f32.mxu0 %v4019
    %4885 = vmatmul.mubr.f32.gmra.mxu0 %v4018
    %v4886 = vpop.f32.mrf.mxu0
    %v4887 = vadd.f32 %v4752, %v4886
    %v4888 = vpop.f32.mrf.mxu0
    %4889 = vmatprep.mubr.f32.mxu0 %v4030
    %4890 = vmatmul.mubr.f32.gmra.mxu0 %v4029
    %v4891 = vpop.f32.mrf.mxu0
    %v4892 = vadd.f32 %v4757, %v4891
    %v4893 = vpop.f32.mrf.mxu0
    %4894 = vmatprep.mubr.f32.mxu0 %v4041
    %4895 = vmatmul.mubr.f32.gmra.mxu0 %v4040
    %v4896 = vpop.f32.mrf.mxu0
    %v4897 = vadd.f32 %v4762, %v4896
    %v4898 = vpop.f32.mrf.mxu0
    %4899 = vmatprep.mubr.f32.mxu0 %v4052
    %4900 = vmatmul.mubr.f32.gmra.mxu0 %v4051
    %v4901 = vpop.f32.mrf.mxu0
    %v4902 = vadd.f32 %v4767, %v4901
    %v4903 = vpop.f32.mrf.mxu0
    %4904 = vdwg.mxu0
    %4905 = vmatprep.subr.mxu0 0.0
    %4906 = vmatpush1.msra.mxu0 %v4229
    %4907 = vmatprep.subr.mxu0 0.0
    %4908 = vmatpush1.msra.mxu0 %v4228
    %4909 = vmatprep.subr.mxu0 0.0
    %4910 = vmatpush1.msra.mxu0 %v4227
    %4911 = vmatprep.subr.mxu0 0.0
    %4912 = vmatpush1.msra.mxu0 %v4226
    %4913 = vmatprep.subr.mxu0 0.0
    %4914 = vmatpush1.msra.mxu0 %v4225
    %4915 = vmatprep.subr.mxu0 0.0
    %4916 = vmatpush1.msra.mxu0 %v4224
    %4917 = vmatprep.subr.mxu0 0.0
    %4918 = vmatpush1.msra.mxu0 %v4223
    %4919 = vmatprep.subr.mxu0 0.0
    %4920 = vmatpush1.msra.mxu0 %v4222
    %4921 = vmatprep.subr.mxu0 0.0
    %4922 = vmatpush1.msra.mxu0 %v4221
    %4923 = vmatprep.subr.mxu0 0.0
    %4924 = vmatpush1.msra.mxu0 %v4220
    %4925 = vmatprep.subr.mxu0 0.0
    %4926 = vmatpush1.msra.mxu0 %v4219
    %4927 = vmatprep.subr.mxu0 0.0
    %4928 = vmatpush1.msra.mxu0 %v4218
    %4929 = vmatprep.subr.mxu0 0.0
    %4930 = vmatpush1.msra.mxu0 %v4217
    %4931 = vmatprep.subr.mxu0 0.0
    %4932 = vmatpush1.msra.mxu0 %v4216
    %4933 = vmatprep.subr.mxu0 0.0
    %4934 = vmatpush1.msra.mxu0 %v4215
    %4935 = vmatprep.subr.mxu0 0.0
    %4936 = vmatpush1.msra.mxu0 %v4214
    %4937 = vmatprep.subr.mxu0 0.0
    %4938 = vmatpush2.msra.mxu0 0.0
    %4939 = vmatprep.subr.mxu0 0.0
    %4940 = vmatpush2.msra.mxu0 0.0
    %4941 = vmatprep.subr.mxu0 0.0
    %4942 = vmatpush2.msra.mxu0 0.0
    %4943 = vmatprep.subr.mxu0 0.0
    %4944 = vmatpush2.msra.mxu0 0.0
    %4945 = vmatprep.subr.mxu0 0.0
    %4946 = vmatpush2.msra.mxu0 0.0
    %4947 = vmatprep.subr.mxu0 0.0
    %4948 = vmatpush2.msra.mxu0 0.0
    %4949 = vmatprep.subr.mxu0 0.0
    %4950 = vmatpush2.msra.mxu0 0.0
    %4951 = vmatprep.subr.mxu0 0.0
    %4952 = vmatpush2.msra.mxu0 0.0
    %4953 = vmatprep.subr.mxu0 0.0
    %4954 = vmatpush2.msra.mxu0 0.0
    %4955 = vmatprep.subr.mxu0 0.0
    %4956 = vmatpush2.msra.mxu0 0.0
    %4957 = vmatprep.subr.mxu0 0.0
    %4958 = vmatpush2.msra.mxu0 0.0
    %4959 = vmatprep.subr.mxu0 0.0
    %4960 = vmatpush2.msra.mxu0 0.0
    %4961 = vmatprep.subr.mxu0 0.0
    %4962 = vmatpush2.msra.mxu0 0.0
    %4963 = vmatprep.subr.mxu0 0.0
    %4964 = vmatpush2.msra.mxu0 0.0
    %4965 = vmatprep.subr.mxu0 0.0
    %4966 = vmatpush2.msra.mxu0 0.0
    %4967 = vmatprep.subr.mxu0 0.0
    %4968 = vmatpush2.msra.mxu0 0.0
    %4969 = vmatprep.mubr.f32.mxu0 0.0
    %4970 = vmatmul.mubr.f32.gmra.mxu0 %v3910
    %v4971 = vpop.f32.mrf.mxu0
    %v4972 = vadd.f32 %v4837, %v4971
    %v4973 = vpop.f32.mrf.mxu0
    %4974 = vmatprep.mubr.f32.mxu0 0.0
    %4975 = vmatmul.mubr.f32.gmra.mxu0 %v3921
    %v4976 = vpop.f32.mrf.mxu0
    %v4977 = vadd.f32 %v4842, %v4976
    %v4978 = vpop.f32.mrf.mxu0
    %4979 = vmatprep.mubr.f32.mxu0 0.0
    %4980 = vmatmul.mubr.f32.gmra.mxu0 %v3932
    %v4981 = vpop.f32.mrf.mxu0
    %v4982 = vadd.f32 %v4847, %v4981
    %v4983 = vpop.f32.mrf.mxu0
    %4984 = vmatprep.mubr.f32.mxu0 0.0
    %4985 = vmatmul.mubr.f32.gmra.mxu0 %v3943
    %v4986 = vpop.f32.mrf.mxu0
    %v4987 = vadd.f32 %v4852, %v4986
    %v4988 = vpop.f32.mrf.mxu0
    %4989 = vmatprep.mubr.f32.mxu0 0.0
    %4990 = vmatmul.mubr.f32.gmra.mxu0 %v3954
    %v4991 = vpop.f32.mrf.mxu0
    %v4992 = vadd.f32 %v4857, %v4991
    %v4993 = vpop.f32.mrf.mxu0
    %4994 = vmatprep.mubr.f32.mxu0 0.0
    %4995 = vmatmul.mubr.f32.gmra.mxu0 %v3965
    %v4996 = vpop.f32.mrf.mxu0
    %v4997 = vadd.f32 %v4862, %v4996
    %v4998 = vpop.f32.mrf.mxu0
    %4999 = vmatprep.mubr.f32.mxu0 0.0
    %5000 = vmatmul.mubr.f32.gmra.mxu0 %v3976
    %v5001 = vpop.f32.mrf.mxu0
    %v5002 = vadd.f32 %v4867, %v5001
    %v5003 = vpop.f32.mrf.mxu0
    %5004 = vmatprep.mubr.f32.mxu0 0.0
    %5005 = vmatmul.mubr.f32.gmra.mxu0 %v3987
    %v5006 = vpop.f32.mrf.mxu0
    %v5007 = vadd.f32 %v4872, %v5006
    %v5008 = vpop.f32.mrf.mxu0
    %5009 = vmatprep.mubr.f32.mxu0 0.0
    %5010 = vmatmul.mubr.f32.gmra.mxu0 %v3998
    %v5011 = vpop.f32.mrf.mxu0
    %v5012 = vadd.f32 %v4877, %v5011
    %v5013 = vpop.f32.mrf.mxu0
    %5014 = vmatprep.mubr.f32.mxu0 0.0
    %5015 = vmatmul.mubr.f32.gmra.mxu0 %v4009
    %v5016 = vpop.f32.mrf.mxu0
    %v5017 = vadd.f32 %v4882, %v5016
    %v5018 = vpop.f32.mrf.mxu0
    %5019 = vmatprep.mubr.f32.mxu0 0.0
    %5020 = vmatmul.mubr.f32.gmra.mxu0 %v4020
    %v5021 = vpop.f32.mrf.mxu0
    %v5022 = vadd.f32 %v4887, %v5021
    %v5023 = vpop.f32.mrf.mxu0
    %5024 = vmatprep.mubr.f32.mxu0 0.0
    %5025 = vmatmul.mubr.f32.gmra.mxu0 %v4031
    %v5026 = vpop.f32.mrf.mxu0
    %v5027 = vadd.f32 %v4892, %v5026
    %v5028 = vpop.f32.mrf.mxu0
    %5029 = vmatprep.mubr.f32.mxu0 0.0
    %5030 = vmatmul.mubr.f32.gmra.mxu0 %v4042
    %v5031 = vpop.f32.mrf.mxu0
    %v5032 = vadd.f32 %v4897, %v5031
    %v5033 = vpop.f32.mrf.mxu0
    %5034 = vmatprep.mubr.f32.mxu0 0.0
    %5035 = vmatmul.mubr.f32.gmra.mxu0 %v4053
    %v5036 = vpop.f32.mrf.mxu0
    %v5037 = vadd.f32 %v4902, %v5036
    %v5038 = vpop.f32.mrf.mxu0
    %5039 = vdwg.mxu0
    %v5040 = vld [vmem:[#allocation17] sm:$0x1]
    %v5041 = vld [vmem:[#allocation17 + $0x1] sm:$0x1]
    %v5042 = vlaneseq
    %v5043 = vshrl.u32 %v5042, 7
    %v5044 = vsub.s32 0, %v5043
    %v5045 = vrot.slane %v5040, %v5044
    %v5046 = vmul.f32 %v4972, %v5045
    %v5047 = vmul.f32 %v4977, %v5045
    %v5048 = vmul.f32 %v4982, %v5045
    %v5049 = vmul.f32 %v4987, %v5045
    %v5050 = vmul.f32 %v4992, %v5045
    %v5051 = vmul.f32 %v4997, %v5045
    %v5052 = vmul.f32 %v5002, %v5045
    %v5053 = vmul.f32 %v5007, %v5045
    %v5054 = vmul.f32 %v5012, %v5045
    %v5055 = vmul.f32 %v5017, %v5045
    %v5056 = vmul.f32 %v5022, %v5045
    %v5057 = vmul.f32 %v5027, %v5045
    %v5058 = vmul.f32 %v5032, %v5045
    %v5059 = vmul.f32 %v5037, %v5045
    %v5060 = vlaneseq
    %v5061 = vshrl.u32 %v5060, 7
    %v5062 = vsub.s32 0, %v5061
    %v5063 = vrot.slane %v5041, %v5062
    %v5064 = vadd.f32 %v5046, %v5063
    %v5065 = vadd.f32 %v5047, %v5063
    %v5066 = vadd.f32 %v5048, %v5063
    %v5067 = vadd.f32 %v5049, %v5063
    %v5068 = vadd.f32 %v5050, %v5063
    %v5069 = vadd.f32 %v5051, %v5063
    %v5070 = vadd.f32 %v5052, %v5063
    %v5071 = vadd.f32 %v5053, %v5063
    %v5072 = vadd.f32 %v5054, %v5063
    %v5073 = vadd.f32 %v5055, %v5063
    %v5074 = vadd.f32 %v5056, %v5063
    %v5075 = vadd.f32 %v5057, %v5063
    %v5076 = vadd.f32 %v5058, %v5063
    %v5077 = vadd.f32 %v5059, %v5063
    %v5078 = vmax.f32 %v5064, 0.0
    %v5079 = vmax.f32 %v5065, 0.0
    %v5080 = vmax.f32 %v5066, 0.0
    %v5081 = vmax.f32 %v5067, 0.0
    %v5082 = vmax.f32 %v5068, 0.0
    %v5083 = vmax.f32 %v5069, 0.0
    %v5084 = vmax.f32 %v5070, 0.0
    %v5085 = vmax.f32 %v5071, 0.0
    %v5086 = vmax.f32 %v5072, 0.0
    %v5087 = vmax.f32 %v5073, 0.0
    %v5088 = vmax.f32 %v5074, 0.0
    %v5089 = vmax.f32 %v5075, 0.0
    %v5090 = vmax.f32 %v5076, 0.0
    %v5091 = vmax.f32 %v5077, 0.0
    %vm5092 = vcmask 523264
    %5093 = vst.msk [vmem:[#allocation11] sm:$0xff] %vm5092, %v5078
    %5094 = vst.msk [vmem:[#allocation11 + $0x8] sm:$0xff] %vm5092, %v5079
    %5095 = vst.msk [vmem:[#allocation11 + $0x10] sm:$0xff] %vm5092, %v5080
    %5096 = vst.msk [vmem:[#allocation11 + $0x18] sm:$0xff] %vm5092, %v5081
    %5097 = vst.msk [vmem:[#allocation11 + $0x20] sm:$0xff] %vm5092, %v5082
    %5098 = vst.msk [vmem:[#allocation11 + $0x28] sm:$0xff] %vm5092, %v5083
    %5099 = vst.msk [vmem:[#allocation11 + $0x30] sm:$0xff] %vm5092, %v5084
    %5100 = vst.msk [vmem:[#allocation11 + $0x38] sm:$0xff] %vm5092, %v5085
    %5101 = vst.msk [vmem:[#allocation11 + $0x40] sm:$0xff] %vm5092, %v5086
    %5102 = vst.msk [vmem:[#allocation11 + $0x48] sm:$0xff] %vm5092, %v5087
    %5103 = vst.msk [vmem:[#allocation11 + $0x50] sm:$0xff] %vm5092, %v5088
    %5104 = vst.msk [vmem:[#allocation11 + $0x58] sm:$0xff] %vm5092, %v5089
    %5105 = vst.msk [vmem:[#allocation11 + $0x60] sm:$0xff] %vm5092, %v5090
    %5106 = vst.msk [vmem:[#allocation11 + $0x68] sm:$0xff] %vm5092, %v5091
    %v5107 = vld [vmem:[#allocation11] ss:$2 sm:$0xff]
    %s5108 = scalar_lea.vmem [#allocation11], 16
    %v5109 = vld [vmem:[%s5108] ss:$2 sm:$0xff]
    %s5110 = scalar_lea.vmem [#allocation11], 32
    %v5111 = vld [vmem:[%s5110] ss:$2 sm:$0xff]
    %s5112 = scalar_lea.vmem [#allocation11], 1
    %v5113 = vld [vmem:[%s5112] ss:$2 sm:$0xff]
    %s5114 = scalar_lea.vmem [#allocation11], 17
    %v5115 = vld [vmem:[%s5114] ss:$2 sm:$0xff]
    %s5116 = scalar_lea.vmem [#allocation11], 33
    %v5117 = vld [vmem:[%s5116] ss:$2 sm:$0xff]
    %v5118 = vmax.f32 %v5107, %v5113
    %v5119 = vmax.f32 %v5109, %v5115
    %v5120 = vmax.f32 %v5111, %v5117
    %5121 = vst.msk [vmem:[#allocation12] sm:$0xff] %vm5092, %v5118
    %5122 = vst.msk [vmem:[#allocation12 + $0x8] sm:$0xff] %vm5092, %v5119
    %5123 = vst.msk [vmem:[#allocation12 + $0x10] sm:$0xff] %vm5092, %v5120
    %s5124 = scalar_lea.vmem [#allocation11], 56
    %v5125 = vld [vmem:[%s5124] ss:$2 sm:$0xff]
    %s5126 = scalar_lea.vmem [#allocation11], 72
    %v5127 = vld [vmem:[%s5126] ss:$2 sm:$0xff]
    %s5128 = scalar_lea.vmem [#allocation11], 88
    %v5129 = vld [vmem:[%s5128] ss:$2 sm:$0xff]
    %s5130 = scalar_lea.vmem [#allocation11], 57
    %v5131 = vld [vmem:[%s5130] ss:$2 sm:$0xff]
    %s5132 = scalar_lea.vmem [#allocation11], 73
    %v5133 = vld [vmem:[%s5132] ss:$2 sm:$0xff]
    %s5134 = scalar_lea.vmem [#allocation11], 89
    %v5135 = vld [vmem:[%s5134] ss:$2 sm:$0xff]
    %v5136 = vmax.f32 %v5125, %v5131
    %v5137 = vmax.f32 %v5127, %v5133
    %v5138 = vmax.f32 %v5129, %v5135
    %5139 = vst.msk [vmem:[#allocation12 + $0x18] sm:$0xff] %vm5092, %v5136
    %5140 = vst.msk [vmem:[#allocation12 + $0x20] sm:$0xff] %vm5092, %v5137
    %5141 = vst.msk [vmem:[#allocation12 + $0x28] sm:$0xff] %vm5092, %v5138
    %s5142 = smul.u32 4, 192
    %s5143 = smul.u32 %s5142, 4
    %s5144 = sshll.u32 %s5143, 4
    %5145 = dma.done %s511, %s5144
    %v5146 = vld [vmem:[#allocation18] sm:$0xf]
    %v5148 = vlaneseq
    %v5149 = vshrl.u32 %v5148, 7
    %v5150 = vsub.s32 0, %v5149
    %v5151 = vrot.slane %v5146, %v5150
    %v5152 = vlaneseq
    %v5153 = vshrl.u32 %v5152, 7
    %v5154 = vsub.s32 1, %v5153
    %v5155 = vrot.slane %v5146, %v5154
    %v5156 = vlaneseq
    %v5157 = vshrl.u32 %v5156, 7
    %v5158 = vsub.s32 2, %v5157
    %v5159 = vrot.slane %v5146, %v5158
    %v5160 = vlaneseq
    %v5161 = vshrl.u32 %v5160, 7
    %v5162 = vsub.s32 3, %v5161
    %v5163 = vrot.slane %v5146, %v5162
    %v5168 = vadd.f32 %v5151, 0.0
    %v5169 = vadd.f32 %v5155, 0.0
    %v5170 = vadd.f32 %v5159, 0.0
    %v5171 = vadd.f32 %v5163, 0.0
    %v5172 = vld [vmem:[#allocation12] ss:$24 sm:$0x3]
    %v5173 = vpack.c.bf16 %v5172, %v5172
    %v5174 = vld [vmem:[#allocation3] sm:$0xff]
    %v5175 = vld [vmem:[#allocation3 + $0x8] sm:$0xff]
    %v5176 = vld [vmem:[#allocation3 + $0x10] sm:$0xff]
    %v5177 = vld [vmem:[#allocation3 + $0x18] sm:$0xff]
    %v5178 = vld [vmem:[#allocation3 + $0x20] sm:$0xff]
    %v5179 = vld [vmem:[#allocation3 + $0x28] sm:$0xff]
    %v5180 = vld [vmem:[#allocation3 + $0x30] sm:$0xff]
    %v5181 = vld [vmem:[#allocation3 + $0x38] sm:$0xff]
    %v5182 = vld [vmem:[#allocation3 + $0x40] sm:$0xff]
    %v5183 = vld [vmem:[#allocation3 + $0x48] sm:$0xff]
    %v5184 = vld [vmem:[#allocation3 + $0x50] sm:$0xff]
    %v5185 = vld [vmem:[#allocation3 + $0x58] sm:$0xff]
    %v5186 = vld [vmem:[#allocation3 + $0x60] sm:$0xff]
    %v5187 = vld [vmem:[#allocation3 + $0x68] sm:$0xff]
    %v5188 = vld [vmem:[#allocation3 + $0x70] sm:$0xff]
    %v5189 = vld [vmem:[#allocation3 + $0x78] sm:$0xff]
    %v5206 = vunpack.c.l.b16 %v5174
    %v5207 = vunpack.c.h.b16 %v5174
    %v5208 = vunpack.c.l.b16 %v5175
    %v5209 = vunpack.c.h.b16 %v5175
    %v5210 = vunpack.c.l.b16 %v5176
    %v5211 = vunpack.c.h.b16 %v5176
    %v5212 = vunpack.c.l.b16 %v5177
    %v5213 = vunpack.c.h.b16 %v5177
    %v5214 = vunpack.c.l.b16 %v5178
    %v5215 = vunpack.c.h.b16 %v5178
    %v5216 = vunpack.c.l.b16 %v5179
    %v5217 = vunpack.c.h.b16 %v5179
    %v5218 = vunpack.c.l.b16 %v5180
    %v5219 = vunpack.c.h.b16 %v5180
    %v5220 = vunpack.c.l.b16 %v5181
    %v5221 = vunpack.c.h.b16 %v5181
    %v5222 = vunpack.c.l.b16 %v5182
    %v5223 = vunpack.c.h.b16 %v5182
    %v5224 = vunpack.c.l.b16 %v5183
    %v5225 = vunpack.c.h.b16 %v5183
    %v5226 = vunpack.c.l.b16 %v5184
    %v5227 = vunpack.c.h.b16 %v5184
    %v5228 = vunpack.c.l.b16 %v5185
    %v5229 = vunpack.c.h.b16 %v5185
    %v5230 = vunpack.c.l.b16 %v5186
    %v5231 = vunpack.c.h.b16 %v5186
    %v5232 = vunpack.c.l.b16 %v5187
    %v5233 = vunpack.c.h.b16 %v5187
    %v5234 = vunpack.c.l.b16 %v5188
    %v5235 = vunpack.c.h.b16 %v5188
    %v5236 = vunpack.c.l.b16 %v5189
    %v5237 = vunpack.c.h.b16 %v5189
    %v5238 = vpack.c.b16 %v5210, %v5206
    %v5239 = vpack.c.b16 %v5211, %v5207
    %v5240 = vpack.c.b16 %v5212, %v5208
    %v5241 = vpack.c.b16 %v5213, %v5209
    %v5242 = vpack.c.b16 %v5218, %v5214
    %v5243 = vpack.c.b16 %v5219, %v5215
    %v5244 = vpack.c.b16 %v5220, %v5216
    %v5245 = vpack.c.b16 %v5221, %v5217
    %v5246 = vpack.c.b16 %v5226, %v5222
    %v5247 = vpack.c.b16 %v5227, %v5223
    %v5248 = vpack.c.b16 %v5228, %v5224
    %v5249 = vpack.c.b16 %v5229, %v5225
    %v5250 = vpack.c.b16 %v5234, %v5230
    %v5251 = vpack.c.b16 %v5235, %v5231
    %v5252 = vpack.c.b16 %v5236, %v5232
    %v5253 = vpack.c.b16 %v5237, %v5233
    %v5271 = vsel %vm5092, %v5173, 0
    %5273 = vmatprep.subr.bf16.mxu0 0
    %5274 = vmatpush1.bf16.msra.mxu0 0
    %5275 = vmatprep.subr.bf16.mxu0 0
    %5276 = vmatpush1.bf16.msra.mxu0 0
    %5277 = vmatprep.subr.bf16.mxu0 0
    %5278 = vmatpush1.bf16.msra.mxu0 0
    %5279 = vmatprep.subr.bf16.mxu0 0
    %5280 = vmatpush1.bf16.msra.mxu0 0
    %5281 = vmatprep.subr.bf16.mxu0 %v5251
    %5282 = vmatpush1.bf16.msra.mxu0 %v5250
    %5283 = vmatprep.subr.bf16.mxu0 %v5247
    %5284 = vmatpush1.bf16.msra.mxu0 %v5246
    %5285 = vmatprep.subr.bf16.mxu0 %v5243
    %5286 = vmatpush1.bf16.msra.mxu0 %v5242
    %5287 = vmatprep.subr.bf16.mxu0 %v5239
    %5288 = vmatpush1.bf16.msra.mxu0 %v5238
    %5289 = vmatprep.subr.bf16.mxu0 0
    %5290 = vmatpush2.bf16.msra.mxu0 0
    %5291 = vmatprep.subr.bf16.mxu0 0
    %5292 = vmatpush2.bf16.msra.mxu0 0
    %5293 = vmatprep.subr.bf16.mxu0 0
    %5294 = vmatpush2.bf16.msra.mxu0 0
    %5295 = vmatprep.subr.bf16.mxu0 0
    %5296 = vmatpush2.bf16.msra.mxu0 0
    %5297 = vmatprep.subr.bf16.mxu0 0
    %5298 = vmatpush2.bf16.msra.mxu0 0
    %5299 = vmatprep.subr.bf16.mxu0 0
    %5300 = vmatpush2.bf16.msra.mxu0 0
    %5301 = vmatprep.subr.bf16.mxu0 0
    %5302 = vmatpush2.bf16.msra.mxu0 0
    %5303 = vmatprep.subr.bf16.mxu0 0
    %5304 = vmatpush2.bf16.msra.mxu0 0
    %5305 = vmatprep.mubr.bf16.mxu0 0
    %5306 = vmatmul.mubr.bf16.gmra.mxu0 %v5271
    %v5307 = vpop.f32.mrf.mxu0
    %v5308 = vadd.f32 0.0, %v5307
    %v5309 = vpop.f32.mrf.mxu0
    %v5310 = vadd.f32 0.0, %v5309
    %v5311 = vpop.f32.mrf.mxu0
    %v5312 = vpop.f32.mrf.mxu0
    %5313 = vdwg.mxu0
    %5314 = vmatprep.subr.bf16.mxu0 0
    %5315 = vmatpush1.bf16.msra.mxu0 0
    %5316 = vmatprep.subr.bf16.mxu0 0
    %5317 = vmatpush1.bf16.msra.mxu0 0
    %5318 = vmatprep.subr.bf16.mxu0 0
    %5319 = vmatpush1.bf16.msra.mxu0 0
    %5320 = vmatprep.subr.bf16.mxu0 0
    %5321 = vmatpush1.bf16.msra.mxu0 0
    %5322 = vmatprep.subr.bf16.mxu0 %v5253
    %5323 = vmatpush1.bf16.msra.mxu0 %v5252
    %5324 = vmatprep.subr.bf16.mxu0 %v5249
    %5325 = vmatpush1.bf16.msra.mxu0 %v5248
    %5326 = vmatprep.subr.bf16.mxu0 %v5245
    %5327 = vmatpush1.bf16.msra.mxu0 %v5244
    %5328 = vmatprep.subr.bf16.mxu0 %v5241
    %5329 = vmatpush1.bf16.msra.mxu0 %v5240
    %5330 = vmatprep.subr.bf16.mxu0 0
    %5331 = vmatpush2.bf16.msra.mxu0 0
    %5332 = vmatprep.subr.bf16.mxu0 0
    %5333 = vmatpush2.bf16.msra.mxu0 0
    %5334 = vmatprep.subr.bf16.mxu0 0
    %5335 = vmatpush2.bf16.msra.mxu0 0
    %5336 = vmatprep.subr.bf16.mxu0 0
    %5337 = vmatpush2.bf16.msra.mxu0 0
    %5338 = vmatprep.subr.bf16.mxu0 0
    %5339 = vmatpush2.bf16.msra.mxu0 0
    %5340 = vmatprep.subr.bf16.mxu0 0
    %5341 = vmatpush2.bf16.msra.mxu0 0
    %5342 = vmatprep.subr.bf16.mxu0 0
    %5343 = vmatpush2.bf16.msra.mxu0 0
    %5344 = vmatprep.subr.bf16.mxu0 0
    %5345 = vmatpush2.bf16.msra.mxu0 0
    %5346 = vmatprep.mubr.bf16.mxu0 0
    %5347 = vmatmul.mubr.bf16.gmra.mxu0 %v5271
    %v5348 = vpop.f32.mrf.mxu0
    %v5349 = vadd.f32 0.0, %v5348
    %v5350 = vpop.f32.mrf.mxu0
    %v5351 = vadd.f32 0.0, %v5350
    %v5352 = vpop.f32.mrf.mxu0
    %v5353 = vpop.f32.mrf.mxu0
    %5354 = vdwg.mxu0
    %v5355 = vadd.f32 %v5168, %v5308
    %v5356 = vadd.f32 %v5169, %v5310
    %v5357 = vadd.f32 %v5170, %v5349
    %v5358 = vadd.f32 %v5171, %v5351
    %s5359 = scalar_lea.vmem [#allocation12], 1
    %v5360 = vld [vmem:[%s5359] ss:$24 sm:$0x3]
    %v5361 = vpack.c.bf16 %v5360, %v5360
    %v5362 = vld [vmem:[#allocation3 + $0x80] sm:$0xff]
    %v5363 = vld [vmem:[#allocation3 + $0x88] sm:$0xff]
    %v5364 = vld [vmem:[#allocation3 + $0x90] sm:$0xff]
    %v5365 = vld [vmem:[#allocation3 + $0x98] sm:$0xff]
    %v5366 = vld [vmem:[#allocation3 + $0xa0] sm:$0xff]
    %v5367 = vld [vmem:[#allocation3 + $0xa8] sm:$0xff]
    %v5368 = vld [vmem:[#allocation3 + $0xb0] sm:$0xff]
    %v5369 = vld [vmem:[#allocation3 + $0xb8] sm:$0xff]
    %v5370 = vld [vmem:[#allocation3 + $0xc0] sm:$0xff]
    %v5371 = vld [vmem:[#allocation3 + $0xc8] sm:$0xff]
    %v5372 = vld [vmem:[#allocation3 + $0xd0] sm:$0xff]
    %v5373 = vld [vmem:[#allocation3 + $0xd8] sm:$0xff]
    %v5374 = vld [vmem:[#allocation3 + $0xe0] sm:$0xff]
    %v5375 = vld [vmem:[#allocation3 + $0xe8] sm:$0xff]
    %v5376 = vld [vmem:[#allocation3 + $0xf0] sm:$0xff]
    %v5377 = vld [vmem:[#allocation3 + $0xf8] sm:$0xff]
    %v5394 = vunpack.c.l.b16 %v5362
    %v5395 = vunpack.c.h.b16 %v5362
    %v5396 = vunpack.c.l.b16 %v5363
    %v5397 = vunpack.c.h.b16 %v5363
    %v5398 = vunpack.c.l.b16 %v5364
    %v5399 = vunpack.c.h.b16 %v5364
    %v5400 = vunpack.c.l.b16 %v5365
    %v5401 = vunpack.c.h.b16 %v5365
    %v5402 = vunpack.c.l.b16 %v5366
    %v5403 = vunpack.c.h.b16 %v5366
    %v5404 = vunpack.c.l.b16 %v5367
    %v5405 = vunpack.c.h.b16 %v5367
    %v5406 = vunpack.c.l.b16 %v5368
    %v5407 = vunpack.c.h.b16 %v5368
    %v5408 = vunpack.c.l.b16 %v5369
    %v5409 = vunpack.c.h.b16 %v5369
    %v5410 = vunpack.c.l.b16 %v5370
    %v5411 = vunpack.c.h.b16 %v5370
    %v5412 = vunpack.c.l.b16 %v5371
    %v5413 = vunpack.c.h.b16 %v5371
    %v5414 = vunpack.c.l.b16 %v5372
    %v5415 = vunpack.c.h.b16 %v5372
    %v5416 = vunpack.c.l.b16 %v5373
    %v5417 = vunpack.c.h.b16 %v5373
    %v5418 = vunpack.c.l.b16 %v5374
    %v5419 = vunpack.c.h.b16 %v5374
    %v5420 = vunpack.c.l.b16 %v5375
    %v5421 = vunpack.c.h.b16 %v5375
    %v5422 = vunpack.c.l.b16 %v5376
    %v5423 = vunpack.c.h.b16 %v5376
    %v5424 = vunpack.c.l.b16 %v5377
    %v5425 = vunpack.c.h.b16 %v5377
    %v5426 = vpack.c.b16 %v5398, %v5394
    %v5427 = vpack.c.b16 %v5399, %v5395
    %v5428 = vpack.c.b16 %v5400, %v5396
    %v5429 = vpack.c.b16 %v5401, %v5397
    %v5430 = vpack.c.b16 %v5406, %v5402
    %v5431 = vpack.c.b16 %v5407, %v5403
    %v5432 = vpack.c.b16 %v5408, %v5404
    %v5433 = vpack.c.b16 %v5409, %v5405
    %v5434 = vpack.c.b16 %v5414, %v5410
    %v5435 = vpack.c.b16 %v5415, %v5411
    %v5436 = vpack.c.b16 %v5416, %v5412
    %v5437 = vpack.c.b16 %v5417, %v5413
    %v5438 = vpack.c.b16 %v5422, %v5418
    %v5439 = vpack.c.b16 %v5423, %v5419
    %v5440 = vpack.c.b16 %v5424, %v5420
    %v5441 = vpack.c.b16 %v5425, %v5421
    %v5459 = vsel %vm5092, %v5361, 0
    %5461 = vmatprep.subr.bf16.mxu0 0
    %5462 = vmatpush1.bf16.msra.mxu0 0
    %5463 = vmatprep.subr.bf16.mxu0 0
    %5464 = vmatpush1.bf16.msra.mxu0 0
    %5465 = vmatprep.subr.bf16.mxu0 0
    %5466 = vmatpush1.bf16.msra.mxu0 0
    %5467 = vmatprep.subr.bf16.mxu0 0
    %5468 = vmatpush1.bf16.msra.mxu0 0
    %5469 = vmatprep.subr.bf16.mxu0 %v5439
    %5470 = vmatpush1.bf16.msra.mxu0 %v5438
    %5471 = vmatprep.subr.bf16.mxu0 %v5435
    %5472 = vmatpush1.bf16.msra.mxu0 %v5434
    %5473 = vmatprep.subr.bf16.mxu0 %v5431
    %5474 = vmatpush1.bf16.msra.mxu0 %v5430
    %5475 = vmatprep.subr.bf16.mxu0 %v5427
    %5476 = vmatpush1.bf16.msra.mxu0 %v5426
    %5477 = vmatprep.subr.bf16.mxu0 0
    %5478 = vmatpush2.bf16.msra.mxu0 0
    %5479 = vmatprep.subr.bf16.mxu0 0
    %5480 = vmatpush2.bf16.msra.mxu0 0
    %5481 = vmatprep.subr.bf16.mxu0 0
    %5482 = vmatpush2.bf16.msra.mxu0 0
    %5483 = vmatprep.subr.bf16.mxu0 0
    %5484 = vmatpush2.bf16.msra.mxu0 0
    %5485 = vmatprep.subr.bf16.mxu0 0
    %5486 = vmatpush2.bf16.msra.mxu0 0
    %5487 = vmatprep.subr.bf16.mxu0 0
    %5488 = vmatpush2.bf16.msra.mxu0 0
    %5489 = vmatprep.subr.bf16.mxu0 0
    %5490 = vmatpush2.bf16.msra.mxu0 0
    %5491 = vmatprep.subr.bf16.mxu0 0
    %5492 = vmatpush2.bf16.msra.mxu0 0
    %5493 = vmatprep.mubr.bf16.mxu0 0
    %5494 = vmatmul.mubr.bf16.gmra.mxu0 %v5459
    %v5495 = vpop.f32.mrf.mxu0
    %v5496 = vadd.f32 0.0, %v5495
    %v5497 = vpop.f32.mrf.mxu0
    %v5498 = vadd.f32 0.0, %v5497
    %v5499 = vpop.f32.mrf.mxu0
    %v5500 = vpop.f32.mrf.mxu0
    %5501 = vdwg.mxu0
    %5502 = vmatprep.subr.bf16.mxu0 0
    %5503 = vmatpush1.bf16.msra.mxu0 0
    %5504 = vmatprep.subr.bf16.mxu0 0
    %5505 = vmatpush1.bf16.msra.mxu0 0
    %5506 = vmatprep.subr.bf16.mxu0 0
    %5507 = vmatpush1.bf16.msra.mxu0 0
    %5508 = vmatprep.subr.bf16.mxu0 0
    %5509 = vmatpush1.bf16.msra.mxu0 0
    %5510 = vmatprep.subr.bf16.mxu0 %v5441
    %5511 = vmatpush1.bf16.msra.mxu0 %v5440
    %5512 = vmatprep.subr.bf16.mxu0 %v5437
    %5513 = vmatpush1.bf16.msra.mxu0 %v5436
    %5514 = vmatprep.subr.bf16.mxu0 %v5433
    %5515 = vmatpush1.bf16.msra.mxu0 %v5432
    %5516 = vmatprep.subr.bf16.mxu0 %v5429
    %5517 = vmatpush1.bf16.msra.mxu0 %v5428
    %5518 = vmatprep.subr.bf16.mxu0 0
    %5519 = vmatpush2.bf16.msra.mxu0 0
    %5520 = vmatprep.subr.bf16.mxu0 0
    %5521 = vmatpush2.bf16.msra.mxu0 0
    %5522 = vmatprep.subr.bf16.mxu0 0
    %5523 = vmatpush2.bf16.msra.mxu0 0
    %5524 = vmatprep.subr.bf16.mxu0 0
    %5525 = vmatpush2.bf16.msra.mxu0 0
    %5526 = vmatprep.subr.bf16.mxu0 0
    %5527 = vmatpush2.bf16.msra.mxu0 0
    %5528 = vmatprep.subr.bf16.mxu0 0
    %5529 = vmatpush2.bf16.msra.mxu0 0
    %5530 = vmatprep.subr.bf16.mxu0 0
    %5531 = vmatpush2.bf16.msra.mxu0 0
    %5532 = vmatprep.subr.bf16.mxu0 0
    %5533 = vmatpush2.bf16.msra.mxu0 0
    %5534 = vmatprep.mubr.bf16.mxu0 0
    %5535 = vmatmul.mubr.bf16.gmra.mxu0 %v5459
    %v5536 = vpop.f32.mrf.mxu0
    %v5537 = vadd.f32 0.0, %v5536
    %v5538 = vpop.f32.mrf.mxu0
    %v5539 = vadd.f32 0.0, %v5538
    %v5540 = vpop.f32.mrf.mxu0
    %v5541 = vpop.f32.mrf.mxu0
    %5542 = vdwg.mxu0
    %v5543 = vadd.f32 %v5355, %v5496
    %v5544 = vadd.f32 %v5356, %v5498
    %v5545 = vadd.f32 %v5357, %v5537
    %v5546 = vadd.f32 %v5358, %v5539
    %s5547 = scalar_lea.vmem [#allocation12], 2
    %v5548 = vld [vmem:[%s5547] ss:$24 sm:$0x3]
    %v5549 = vpack.c.bf16 %v5548, %v5548
    %v5550 = vld [vmem:[#allocation3 + $0x100] sm:$0xff]
    %v5551 = vld [vmem:[#allocation3 + $0x108] sm:$0xff]
    %v5552 = vld [vmem:[#allocation3 + $0x110] sm:$0xff]
    %v5553 = vld [vmem:[#allocation3 + $0x118] sm:$0xff]
    %v5554 = vld [vmem:[#allocation3 + $0x120] sm:$0xff]
    %v5555 = vld [vmem:[#allocation3 + $0x128] sm:$0xff]
    %v5556 = vld [vmem:[#allocation3 + $0x130] sm:$0xff]
    %v5557 = vld [vmem:[#allocation3 + $0x138] sm:$0xff]
    %v5558 = vld [vmem:[#allocation3 + $0x140] sm:$0xff]
    %v5559 = vld [vmem:[#allocation3 + $0x148] sm:$0xff]
    %v5560 = vld [vmem:[#allocation3 + $0x150] sm:$0xff]
    %v5561 = vld [vmem:[#allocation3 + $0x158] sm:$0xff]
    %v5562 = vld [vmem:[#allocation3 + $0x160] sm:$0xff]
    %v5563 = vld [vmem:[#allocation3 + $0x168] sm:$0xff]
    %v5564 = vld [vmem:[#allocation3 + $0x170] sm:$0xff]
    %v5565 = vld [vmem:[#allocation3 + $0x178] sm:$0xff]
    %v5582 = vunpack.c.l.b16 %v5550
    %v5583 = vunpack.c.h.b16 %v5550
    %v5584 = vunpack.c.l.b16 %v5551
    %v5585 = vunpack.c.h.b16 %v5551
    %v5586 = vunpack.c.l.b16 %v5552
    %v5587 = vunpack.c.h.b16 %v5552
    %v5588 = vunpack.c.l.b16 %v5553
    %v5589 = vunpack.c.h.b16 %v5553
    %v5590 = vunpack.c.l.b16 %v5554
    %v5591 = vunpack.c.h.b16 %v5554
    %v5592 = vunpack.c.l.b16 %v5555
    %v5593 = vunpack.c.h.b16 %v5555
    %v5594 = vunpack.c.l.b16 %v5556
    %v5595 = vunpack.c.h.b16 %v5556
    %v5596 = vunpack.c.l.b16 %v5557
    %v5597 = vunpack.c.h.b16 %v5557
    %v5598 = vunpack.c.l.b16 %v5558
    %v5599 = vunpack.c.h.b16 %v5558
    %v5600 = vunpack.c.l.b16 %v5559
    %v5601 = vunpack.c.h.b16 %v5559
    %v5602 = vunpack.c.l.b16 %v5560
    %v5603 = vunpack.c.h.b16 %v5560
    %v5604 = vunpack.c.l.b16 %v5561
    %v5605 = vunpack.c.h.b16 %v5561
    %v5606 = vunpack.c.l.b16 %v5562
    %v5607 = vunpack.c.h.b16 %v5562
    %v5608 = vunpack.c.l.b16 %v5563
    %v5609 = vunpack.c.h.b16 %v5563
    %v5610 = vunpack.c.l.b16 %v5564
    %v5611 = vunpack.c.h.b16 %v5564
    %v5612 = vunpack.c.l.b16 %v5565
    %v5613 = vunpack.c.h.b16 %v5565
    %v5614 = vpack.c.b16 %v5586, %v5582
    %v5615 = vpack.c.b16 %v5587, %v5583
    %v5616 = vpack.c.b16 %v5588, %v5584
    %v5617 = vpack.c.b16 %v5589, %v5585
    %v5618 = vpack.c.b16 %v5594, %v5590
    %v5619 = vpack.c.b16 %v5595, %v5591
    %v5620 = vpack.c.b16 %v5596, %v5592
    %v5621 = vpack.c.b16 %v5597, %v5593
    %v5622 = vpack.c.b16 %v5602, %v5598
    %v5623 = vpack.c.b16 %v5603, %v5599
    %v5624 = vpack.c.b16 %v5604, %v5600
    %v5625 = vpack.c.b16 %v5605, %v5601
    %v5626 = vpack.c.b16 %v5610, %v5606
    %v5627 = vpack.c.b16 %v5611, %v5607
    %v5628 = vpack.c.b16 %v5612, %v5608
    %v5629 = vpack.c.b16 %v5613, %v5609
    %v5647 = vsel %vm5092, %v5549, 0
    %5649 = vmatprep.subr.bf16.mxu0 0
    %5650 = vmatpush1.bf16.msra.mxu0 0
    %5651 = vmatprep.subr.bf16.mxu0 0
    %5652 = vmatpush1.bf16.msra.mxu0 0
    %5653 = vmatprep.subr.bf16.mxu0 0
    %5654 = vmatpush1.bf16.msra.mxu0 0
    %5655 = vmatprep.subr.bf16.mxu0 0
    %5656 = vmatpush1.bf16.msra.mxu0 0
    %5657 = vmatprep.subr.bf16.mxu0 %v5627
    %5658 = vmatpush1.bf16.msra.mxu0 %v5626
    %5659 = vmatprep.subr.bf16.mxu0 %v5623
    %5660 = vmatpush1.bf16.msra.mxu0 %v5622
    %5661 = vmatprep.subr.bf16.mxu0 %v5619
    %5662 = vmatpush1.bf16.msra.mxu0 %v5618
    %5663 = vmatprep.subr.bf16.mxu0 %v5615
    %5664 = vmatpush1.bf16.msra.mxu0 %v5614
    %5665 = vmatprep.subr.bf16.mxu0 0
    %5666 = vmatpush2.bf16.msra.mxu0 0
    %5667 = vmatprep.subr.bf16.mxu0 0
    %5668 = vmatpush2.bf16.msra.mxu0 0
    %5669 = vmatprep.subr.bf16.mxu0 0
    %5670 = vmatpush2.bf16.msra.mxu0 0
    %5671 = vmatprep.subr.bf16.mxu0 0
    %5672 = vmatpush2.bf16.msra.mxu0 0
    %5673 = vmatprep.subr.bf16.mxu0 0
    %5674 = vmatpush2.bf16.msra.mxu0 0
    %5675 = vmatprep.subr.bf16.mxu0 0
    %5676 = vmatpush2.bf16.msra.mxu0 0
    %5677 = vmatprep.subr.bf16.mxu0 0
    %5678 = vmatpush2.bf16.msra.mxu0 0
    %5679 = vmatprep.subr.bf16.mxu0 0
    %5680 = vmatpush2.bf16.msra.mxu0 0
    %5681 = vmatprep.mubr.bf16.mxu0 0
    %5682 = vmatmul.mubr.bf16.gmra.mxu0 %v5647
    %v5683 = vpop.f32.mrf.mxu0
    %v5684 = vadd.f32 0.0, %v5683
    %v5685 = vpop.f32.mrf.mxu0
    %v5686 = vadd.f32 0.0, %v5685
    %v5687 = vpop.f32.mrf.mxu0
    %v5688 = vpop.f32.mrf.mxu0
    %5689 = vdwg.mxu0
    %5690 = vmatprep.subr.bf16.mxu0 0
    %5691 = vmatpush1.bf16.msra.mxu0 0
    %5692 = vmatprep.subr.bf16.mxu0 0
    %5693 = vmatpush1.bf16.msra.mxu0 0
    %5694 = vmatprep.subr.bf16.mxu0 0
    %5695 = vmatpush1.bf16.msra.mxu0 0
    %5696 = vmatprep.subr.bf16.mxu0 0
    %5697 = vmatpush1.bf16.msra.mxu0 0
    %5698 = vmatprep.subr.bf16.mxu0 %v5629
    %5699 = vmatpush1.bf16.msra.mxu0 %v5628
    %5700 = vmatprep.subr.bf16.mxu0 %v5625
    %5701 = vmatpush1.bf16.msra.mxu0 %v5624
    %5702 = vmatprep.subr.bf16.mxu0 %v5621
    %5703 = vmatpush1.bf16.msra.mxu0 %v5620
    %5704 = vmatprep.subr.bf16.mxu0 %v5617
    %5705 = vmatpush1.bf16.msra.mxu0 %v5616
    %5706 = vmatprep.subr.bf16.mxu0 0
    %5707 = vmatpush2.bf16.msra.mxu0 0
    %5708 = vmatprep.subr.bf16.mxu0 0
    %5709 = vmatpush2.bf16.msra.mxu0 0
    %5710 = vmatprep.subr.bf16.mxu0 0
    %5711 = vmatpush2.bf16.msra.mxu0 0
    %5712 = vmatprep.subr.bf16.mxu0 0
    %5713 = vmatpush2.bf16.msra.mxu0 0
    %5714 = vmatprep.subr.bf16.mxu0 0
    %5715 = vmatpush2.bf16.msra.mxu0 0
    %5716 = vmatprep.subr.bf16.mxu0 0
    %5717 = vmatpush2.bf16.msra.mxu0 0
    %5718 = vmatprep.subr.bf16.mxu0 0
    %5719 = vmatpush2.bf16.msra.mxu0 0
    %5720 = vmatprep.subr.bf16.mxu0 0
    %5721 = vmatpush2.bf16.msra.mxu0 0
    %5722 = vmatprep.mubr.bf16.mxu0 0
    %5723 = vmatmul.mubr.bf16.gmra.mxu0 %v5647
    %v5724 = vpop.f32.mrf.mxu0
    %v5725 = vadd.f32 0.0, %v5724
    %v5726 = vpop.f32.mrf.mxu0
    %v5727 = vadd.f32 0.0, %v5726
    %v5728 = vpop.f32.mrf.mxu0
    %v5729 = vpop.f32.mrf.mxu0
    %5730 = vdwg.mxu0
    %v5731 = vadd.f32 %v5543, %v5684
    %v5732 = vadd.f32 %v5544, %v5686
    %v5733 = vadd.f32 %v5545, %v5725
    %v5734 = vadd.f32 %v5546, %v5727
    %s5735 = scalar_lea.vmem [#allocation12], 3
    %v5736 = vld [vmem:[%s5735] ss:$24 sm:$0x3]
    %v5737 = vpack.c.bf16 %v5736, %v5736
    %v5738 = vld [vmem:[#allocation3 + $0x180] sm:$0xff]
    %v5739 = vld [vmem:[#allocation3 + $0x188] sm:$0xff]
    %v5740 = vld [vmem:[#allocation3 + $0x190] sm:$0xff]
    %v5741 = vld [vmem:[#allocation3 + $0x198] sm:$0xff]
    %v5742 = vld [vmem:[#allocation3 + $0x1a0] sm:$0xff]
    %v5743 = vld [vmem:[#allocation3 + $0x1a8] sm:$0xff]
    %v5744 = vld [vmem:[#allocation3 + $0x1b0] sm:$0xff]
    %v5745 = vld [vmem:[#allocation3 + $0x1b8] sm:$0xff]
    %v5746 = vld [vmem:[#allocation3 + $0x1c0] sm:$0xff]
    %v5747 = vld [vmem:[#allocation3 + $0x1c8] sm:$0xff]
    %v5748 = vld [vmem:[#allocation3 + $0x1d0] sm:$0xff]
    %v5749 = vld [vmem:[#allocation3 + $0x1d8] sm:$0xff]
    %v5750 = vld [vmem:[#allocation3 + $0x1e0] sm:$0xff]
    %v5751 = vld [vmem:[#allocation3 + $0x1e8] sm:$0xff]
    %v5752 = vld [vmem:[#allocation3 + $0x1f0] sm:$0xff]
    %v5753 = vld [vmem:[#allocation3 + $0x1f8] sm:$0xff]
    %v5770 = vunpack.c.l.b16 %v5738
    %v5771 = vunpack.c.h.b16 %v5738
    %v5772 = vunpack.c.l.b16 %v5739
    %v5773 = vunpack.c.h.b16 %v5739
    %v5774 = vunpack.c.l.b16 %v5740
    %v5775 = vunpack.c.h.b16 %v5740
    %v5776 = vunpack.c.l.b16 %v5741
    %v5777 = vunpack.c.h.b16 %v5741
    %v5778 = vunpack.c.l.b16 %v5742
    %v5779 = vunpack.c.h.b16 %v5742
    %v5780 = vunpack.c.l.b16 %v5743
    %v5781 = vunpack.c.h.b16 %v5743
    %v5782 = vunpack.c.l.b16 %v5744
    %v5783 = vunpack.c.h.b16 %v5744
    %v5784 = vunpack.c.l.b16 %v5745
    %v5785 = vunpack.c.h.b16 %v5745
    %v5786 = vunpack.c.l.b16 %v5746
    %v5787 = vunpack.c.h.b16 %v5746
    %v5788 = vunpack.c.l.b16 %v5747
    %v5789 = vunpack.c.h.b16 %v5747
    %v5790 = vunpack.c.l.b16 %v5748
    %v5791 = vunpack.c.h.b16 %v5748
    %v5792 = vunpack.c.l.b16 %v5749
    %v5793 = vunpack.c.h.b16 %v5749
    %v5794 = vunpack.c.l.b16 %v5750
    %v5795 = vunpack.c.h.b16 %v5750
    %v5796 = vunpack.c.l.b16 %v5751
    %v5797 = vunpack.c.h.b16 %v5751
    %v5798 = vunpack.c.l.b16 %v5752
    %v5799 = vunpack.c.h.b16 %v5752
    %v5800 = vunpack.c.l.b16 %v5753
    %v5801 = vunpack.c.h.b16 %v5753
    %v5802 = vpack.c.b16 %v5774, %v5770
    %v5803 = vpack.c.b16 %v5775, %v5771
    %v5804 = vpack.c.b16 %v5776, %v5772
    %v5805 = vpack.c.b16 %v5777, %v5773
    %v5806 = vpack.c.b16 %v5782, %v5778
    %v5807 = vpack.c.b16 %v5783, %v5779
    %v5808 = vpack.c.b16 %v5784, %v5780
    %v5809 = vpack.c.b16 %v5785, %v5781
    %v5810 = vpack.c.b16 %v5790, %v5786
    %v5811 = vpack.c.b16 %v5791, %v5787
    %v5812 = vpack.c.b16 %v5792, %v5788
    %v5813 = vpack.c.b16 %v5793, %v5789
    %v5814 = vpack.c.b16 %v5798, %v5794
    %v5815 = vpack.c.b16 %v5799, %v5795
    %v5816 = vpack.c.b16 %v5800, %v5796
    %v5817 = vpack.c.b16 %v5801, %v5797
    %v5835 = vsel %vm5092, %v5737, 0
    %5837 = vmatprep.subr.bf16.mxu0 0
    %5838 = vmatpush1.bf16.msra.mxu0 0
    %5839 = vmatprep.subr.bf16.mxu0 0
    %5840 = vmatpush1.bf16.msra.mxu0 0
    %5841 = vmatprep.subr.bf16.mxu0 0
    %5842 = vmatpush1.bf16.msra.mxu0 0
    %5843 = vmatprep.subr.bf16.mxu0 0
    %5844 = vmatpush1.bf16.msra.mxu0 0
    %5845 = vmatprep.subr.bf16.mxu0 %v5815
    %5846 = vmatpush1.bf16.msra.mxu0 %v5814
    %5847 = vmatprep.subr.bf16.mxu0 %v5811
    %5848 = vmatpush1.bf16.msra.mxu0 %v5810
    %5849 = vmatprep.subr.bf16.mxu0 %v5807
    %5850 = vmatpush1.bf16.msra.mxu0 %v5806
    %5851 = vmatprep.subr.bf16.mxu0 %v5803
    %5852 = vmatpush1.bf16.msra.mxu0 %v5802
    %5853 = vmatprep.subr.bf16.mxu0 0
    %5854 = vmatpush2.bf16.msra.mxu0 0
    %5855 = vmatprep.subr.bf16.mxu0 0
    %5856 = vmatpush2.bf16.msra.mxu0 0
    %5857 = vmatprep.subr.bf16.mxu0 0
    %5858 = vmatpush2.bf16.msra.mxu0 0
    %5859 = vmatprep.subr.bf16.mxu0 0
    %5860 = vmatpush2.bf16.msra.mxu0 0
    %5861 = vmatprep.subr.bf16.mxu0 0
    %5862 = vmatpush2.bf16.msra.mxu0 0
    %5863 = vmatprep.subr.bf16.mxu0 0
    %5864 = vmatpush2.bf16.msra.mxu0 0
    %5865 = vmatprep.subr.bf16.mxu0 0
    %5866 = vmatpush2.bf16.msra.mxu0 0
    %5867 = vmatprep.subr.bf16.mxu0 0
    %5868 = vmatpush2.bf16.msra.mxu0 0
    %5869 = vmatprep.mubr.bf16.mxu0 0
    %5870 = vmatmul.mubr.bf16.gmra.mxu0 %v5835
    %v5871 = vpop.f32.mrf.mxu0
    %v5872 = vadd.f32 0.0, %v5871
    %v5873 = vpop.f32.mrf.mxu0
    %v5874 = vadd.f32 0.0, %v5873
    %v5875 = vpop.f32.mrf.mxu0
    %v5876 = vpop.f32.mrf.mxu0
    %5877 = vdwg.mxu0
    %5878 = vmatprep.subr.bf16.mxu0 0
    %5879 = vmatpush1.bf16.msra.mxu0 0
    %5880 = vmatprep.subr.bf16.mxu0 0
    %5881 = vmatpush1.bf16.msra.mxu0 0
    %5882 = vmatprep.subr.bf16.mxu0 0
    %5883 = vmatpush1.bf16.msra.mxu0 0
    %5884 = vmatprep.subr.bf16.mxu0 0
    %5885 = vmatpush1.bf16.msra.mxu0 0
    %5886 = vmatprep.subr.bf16.mxu0 %v5817
    %5887 = vmatpush1.bf16.msra.mxu0 %v5816
    %5888 = vmatprep.subr.bf16.mxu0 %v5813
    %5889 = vmatpush1.bf16.msra.mxu0 %v5812
    %5890 = vmatprep.subr.bf16.mxu0 %v5809
    %5891 = vmatpush1.bf16.msra.mxu0 %v5808
    %5892 = vmatprep.subr.bf16.mxu0 %v5805
    %5893 = vmatpush1.bf16.msra.mxu0 %v5804
    %5894 = vmatprep.subr.bf16.mxu0 0
    %5895 = vmatpush2.bf16.msra.mxu0 0
    %5896 = vmatprep.subr.bf16.mxu0 0
    %5897 = vmatpush2.bf16.msra.mxu0 0
    %5898 = vmatprep.subr.bf16.mxu0 0
    %5899 = vmatpush2.bf16.msra.mxu0 0
    %5900 = vmatprep.subr.bf16.mxu0 0
    %5901 = vmatpush2.bf16.msra.mxu0 0
    %5902 = vmatprep.subr.bf16.mxu0 0
    %5903 = vmatpush2.bf16.msra.mxu0 0
    %5904 = vmatprep.subr.bf16.mxu0 0
    %5905 = vmatpush2.bf16.msra.mxu0 0
    %5906 = vmatprep.subr.bf16.mxu0 0
    %5907 = vmatpush2.bf16.msra.mxu0 0
    %5908 = vmatprep.subr.bf16.mxu0 0
    %5909 = vmatpush2.bf16.msra.mxu0 0
    %5910 = vmatprep.mubr.bf16.mxu0 0
    %5911 = vmatmul.mubr.bf16.gmra.mxu0 %v5835
    %v5912 = vpop.f32.mrf.mxu0
    %v5913 = vadd.f32 0.0, %v5912
    %v5914 = vpop.f32.mrf.mxu0
    %v5915 = vadd.f32 0.0, %v5914
    %v5916 = vpop.f32.mrf.mxu0
    %v5917 = vpop.f32.mrf.mxu0
    %5918 = vdwg.mxu0
    %v5919 = vadd.f32 %v5731, %v5872
    %v5920 = vadd.f32 %v5732, %v5874
    %v5921 = vadd.f32 %v5733, %v5913
    %v5922 = vadd.f32 %v5734, %v5915
    %s5923 = scalar_lea.vmem [#allocation12], 4
    %v5924 = vld [vmem:[%s5923] ss:$24 sm:$0x3]
    %v5925 = vpack.c.bf16 %v5924, %v5924
    %v5926 = vld [vmem:[#allocation3 + $0x200] sm:$0xff]
    %v5927 = vld [vmem:[#allocation3 + $0x208] sm:$0xff]
    %v5928 = vld [vmem:[#allocation3 + $0x210] sm:$0xff]
    %v5929 = vld [vmem:[#allocation3 + $0x218] sm:$0xff]
    %v5930 = vld [vmem:[#allocation3 + $0x220] sm:$0xff]
    %v5931 = vld [vmem:[#allocation3 + $0x228] sm:$0xff]
    %v5932 = vld [vmem:[#allocation3 + $0x230] sm:$0xff]
    %v5933 = vld [vmem:[#allocation3 + $0x238] sm:$0xff]
    %v5934 = vld [vmem:[#allocation3 + $0x240] sm:$0xff]
    %v5935 = vld [vmem:[#allocation3 + $0x248] sm:$0xff]
    %v5936 = vld [vmem:[#allocation3 + $0x250] sm:$0xff]
    %v5937 = vld [vmem:[#allocation3 + $0x258] sm:$0xff]
    %v5938 = vld [vmem:[#allocation3 + $0x260] sm:$0xff]
    %v5939 = vld [vmem:[#allocation3 + $0x268] sm:$0xff]
    %v5940 = vld [vmem:[#allocation3 + $0x270] sm:$0xff]
    %v5941 = vld [vmem:[#allocation3 + $0x278] sm:$0xff]
    %v5958 = vunpack.c.l.b16 %v5926
    %v5959 = vunpack.c.h.b16 %v5926
    %v5960 = vunpack.c.l.b16 %v5927
    %v5961 = vunpack.c.h.b16 %v5927
    %v5962 = vunpack.c.l.b16 %v5928
    %v5963 = vunpack.c.h.b16 %v5928
    %v5964 = vunpack.c.l.b16 %v5929
    %v5965 = vunpack.c.h.b16 %v5929
    %v5966 = vunpack.c.l.b16 %v5930
    %v5967 = vunpack.c.h.b16 %v5930
    %v5968 = vunpack.c.l.b16 %v5931
    %v5969 = vunpack.c.h.b16 %v5931
    %v5970 = vunpack.c.l.b16 %v5932
    %v5971 = vunpack.c.h.b16 %v5932
    %v5972 = vunpack.c.l.b16 %v5933
    %v5973 = vunpack.c.h.b16 %v5933
    %v5974 = vunpack.c.l.b16 %v5934
    %v5975 = vunpack.c.h.b16 %v5934
    %v5976 = vunpack.c.l.b16 %v5935
    %v5977 = vunpack.c.h.b16 %v5935
    %v5978 = vunpack.c.l.b16 %v5936
    %v5979 = vunpack.c.h.b16 %v5936
    %v5980 = vunpack.c.l.b16 %v5937
    %v5981 = vunpack.c.h.b16 %v5937
    %v5982 = vunpack.c.l.b16 %v5938
    %v5983 = vunpack.c.h.b16 %v5938
    %v5984 = vunpack.c.l.b16 %v5939
    %v5985 = vunpack.c.h.b16 %v5939
    %v5986 = vunpack.c.l.b16 %v5940
    %v5987 = vunpack.c.h.b16 %v5940
    %v5988 = vunpack.c.l.b16 %v5941
    %v5989 = vunpack.c.h.b16 %v5941
    %v5990 = vpack.c.b16 %v5962, %v5958
    %v5991 = vpack.c.b16 %v5963, %v5959
    %v5992 = vpack.c.b16 %v5964, %v5960
    %v5993 = vpack.c.b16 %v5965, %v5961
    %v5994 = vpack.c.b16 %v5970, %v5966
    %v5995 = vpack.c.b16 %v5971, %v5967
    %v5996 = vpack.c.b16 %v5972, %v5968
    %v5997 = vpack.c.b16 %v5973, %v5969
    %v5998 = vpack.c.b16 %v5978, %v5974
    %v5999 = vpack.c.b16 %v5979, %v5975
    %v6000 = vpack.c.b16 %v5980, %v5976
    %v6001 = vpack.c.b16 %v5981, %v5977
    %v6002 = vpack.c.b16 %v5986, %v5982
    %v6003 = vpack.c.b16 %v5987, %v5983
    %v6004 = vpack.c.b16 %v5988, %v5984
    %v6005 = vpack.c.b16 %v5989, %v5985
    %v6023 = vsel %vm5092, %v5925, 0
    %6025 = vmatprep.subr.bf16.mxu0 0
    %6026 = vmatpush1.bf16.msra.mxu0 0
    %6027 = vmatprep.subr.bf16.mxu0 0
    %6028 = vmatpush1.bf16.msra.mxu0 0
    %6029 = vmatprep.subr.bf16.mxu0 0
    %6030 = vmatpush1.bf16.msra.mxu0 0
    %6031 = vmatprep.subr.bf16.mxu0 0
    %6032 = vmatpush1.bf16.msra.mxu0 0
    %6033 = vmatprep.subr.bf16.mxu0 %v6003
    %6034 = vmatpush1.bf16.msra.mxu0 %v6002
    %6035 = vmatprep.subr.bf16.mxu0 %v5999
    %6036 = vmatpush1.bf16.msra.mxu0 %v5998
    %6037 = vmatprep.subr.bf16.mxu0 %v5995
    %6038 = vmatpush1.bf16.msra.mxu0 %v5994
    %6039 = vmatprep.subr.bf16.mxu0 %v5991
    %6040 = vmatpush1.bf16.msra.mxu0 %v5990
    %6041 = vmatprep.subr.bf16.mxu0 0
    %6042 = vmatpush2.bf16.msra.mxu0 0
    %6043 = vmatprep.subr.bf16.mxu0 0
    %6044 = vmatpush2.bf16.msra.mxu0 0
    %6045 = vmatprep.subr.bf16.mxu0 0
    %6046 = vmatpush2.bf16.msra.mxu0 0
    %6047 = vmatprep.subr.bf16.mxu0 0
    %6048 = vmatpush2.bf16.msra.mxu0 0
    %6049 = vmatprep.subr.bf16.mxu0 0
    %6050 = vmatpush2.bf16.msra.mxu0 0
    %6051 = vmatprep.subr.bf16.mxu0 0
    %6052 = vmatpush2.bf16.msra.mxu0 0
    %6053 = vmatprep.subr.bf16.mxu0 0
    %6054 = vmatpush2.bf16.msra.mxu0 0
    %6055 = vmatprep.subr.bf16.mxu0 0
    %6056 = vmatpush2.bf16.msra.mxu0 0
    %6057 = vmatprep.mubr.bf16.mxu0 0
    %6058 = vmatmul.mubr.bf16.gmra.mxu0 %v6023
    %v6059 = vpop.f32.mrf.mxu0
    %v6060 = vadd.f32 0.0, %v6059
    %v6061 = vpop.f32.mrf.mxu0
    %v6062 = vadd.f32 0.0, %v6061
    %v6063 = vpop.f32.mrf.mxu0
    %v6064 = vpop.f32.mrf.mxu0
    %6065 = vdwg.mxu0
    %6066 = vmatprep.subr.bf16.mxu0 0
    %6067 = vmatpush1.bf16.msra.mxu0 0
    %6068 = vmatprep.subr.bf16.mxu0 0
    %6069 = vmatpush1.bf16.msra.mxu0 0
    %6070 = vmatprep.subr.bf16.mxu0 0
    %6071 = vmatpush1.bf16.msra.mxu0 0
    %6072 = vmatprep.subr.bf16.mxu0 0
    %6073 = vmatpush1.bf16.msra.mxu0 0
    %6074 = vmatprep.subr.bf16.mxu0 %v6005
    %6075 = vmatpush1.bf16.msra.mxu0 %v6004
    %6076 = vmatprep.subr.bf16.mxu0 %v6001
    %6077 = vmatpush1.bf16.msra.mxu0 %v6000
    %6078 = vmatprep.subr.bf16.mxu0 %v5997
    %6079 = vmatpush1.bf16.msra.mxu0 %v5996
    %6080 = vmatprep.subr.bf16.mxu0 %v5993
    %6081 = vmatpush1.bf16.msra.mxu0 %v5992
    %6082 = vmatprep.subr.bf16.mxu0 0
    %6083 = vmatpush2.bf16.msra.mxu0 0
    %6084 = vmatprep.subr.bf16.mxu0 0
    %6085 = vmatpush2.bf16.msra.mxu0 0
    %6086 = vmatprep.subr.bf16.mxu0 0
    %6087 = vmatpush2.bf16.msra.mxu0 0
    %6088 = vmatprep.subr.bf16.mxu0 0
    %6089 = vmatpush2.bf16.msra.mxu0 0
    %6090 = vmatprep.subr.bf16.mxu0 0
    %6091 = vmatpush2.bf16.msra.mxu0 0
    %6092 = vmatprep.subr.bf16.mxu0 0
    %6093 = vmatpush2.bf16.msra.mxu0 0
    %6094 = vmatprep.subr.bf16.mxu0 0
    %6095 = vmatpush2.bf16.msra.mxu0 0
    %6096 = vmatprep.subr.bf16.mxu0 0
    %6097 = vmatpush2.bf16.msra.mxu0 0
    %6098 = vmatprep.mubr.bf16.mxu0 0
    %6099 = vmatmul.mubr.bf16.gmra.mxu0 %v6023
    %v6100 = vpop.f32.mrf.mxu0
    %v6101 = vadd.f32 0.0, %v6100
    %v6102 = vpop.f32.mrf.mxu0
    %v6103 = vadd.f32 0.0, %v6102
    %v6104 = vpop.f32.mrf.mxu0
    %v6105 = vpop.f32.mrf.mxu0
    %6106 = vdwg.mxu0
    %v6107 = vadd.f32 %v5919, %v6060
    %v6108 = vadd.f32 %v5920, %v6062
    %v6109 = vadd.f32 %v5921, %v6101
    %v6110 = vadd.f32 %v5922, %v6103
    %s6111 = scalar_lea.vmem [#allocation12], 5
    %v6112 = vld [vmem:[%s6111] ss:$24 sm:$0x3]
    %v6113 = vpack.c.bf16 %v6112, %v6112
    %v6114 = vld [vmem:[#allocation3 + $0x280] sm:$0xff]
    %v6115 = vld [vmem:[#allocation3 + $0x288] sm:$0xff]
    %v6116 = vld [vmem:[#allocation3 + $0x290] sm:$0xff]
    %v6117 = vld [vmem:[#allocation3 + $0x298] sm:$0xff]
    %v6118 = vld [vmem:[#allocation3 + $0x2a0] sm:$0xff]
    %v6119 = vld [vmem:[#allocation3 + $0x2a8] sm:$0xff]
    %v6120 = vld [vmem:[#allocation3 + $0x2b0] sm:$0xff]
    %v6121 = vld [vmem:[#allocation3 + $0x2b8] sm:$0xff]
    %v6122 = vld [vmem:[#allocation3 + $0x2c0] sm:$0xff]
    %v6123 = vld [vmem:[#allocation3 + $0x2c8] sm:$0xff]
    %v6124 = vld [vmem:[#allocation3 + $0x2d0] sm:$0xff]
    %v6125 = vld [vmem:[#allocation3 + $0x2d8] sm:$0xff]
    %v6126 = vld [vmem:[#allocation3 + $0x2e0] sm:$0xff]
    %v6127 = vld [vmem:[#allocation3 + $0x2e8] sm:$0xff]
    %v6128 = vld [vmem:[#allocation3 + $0x2f0] sm:$0xff]
    %v6129 = vld [vmem:[#allocation3 + $0x2f8] sm:$0xff]
    %v6146 = vunpack.c.l.b16 %v6114
    %v6147 = vunpack.c.h.b16 %v6114
    %v6148 = vunpack.c.l.b16 %v6115
    %v6149 = vunpack.c.h.b16 %v6115
    %v6150 = vunpack.c.l.b16 %v6116
    %v6151 = vunpack.c.h.b16 %v6116
    %v6152 = vunpack.c.l.b16 %v6117
    %v6153 = vunpack.c.h.b16 %v6117
    %v6154 = vunpack.c.l.b16 %v6118
    %v6155 = vunpack.c.h.b16 %v6118
    %v6156 = vunpack.c.l.b16 %v6119
    %v6157 = vunpack.c.h.b16 %v6119
    %v6158 = vunpack.c.l.b16 %v6120
    %v6159 = vunpack.c.h.b16 %v6120
    %v6160 = vunpack.c.l.b16 %v6121
    %v6161 = vunpack.c.h.b16 %v6121
    %v6162 = vunpack.c.l.b16 %v6122
    %v6163 = vunpack.c.h.b16 %v6122
    %v6164 = vunpack.c.l.b16 %v6123
    %v6165 = vunpack.c.h.b16 %v6123
    %v6166 = vunpack.c.l.b16 %v6124
    %v6167 = vunpack.c.h.b16 %v6124
    %v6168 = vunpack.c.l.b16 %v6125
    %v6169 = vunpack.c.h.b16 %v6125
    %v6170 = vunpack.c.l.b16 %v6126
    %v6171 = vunpack.c.h.b16 %v6126
    %v6172 = vunpack.c.l.b16 %v6127
    %v6173 = vunpack.c.h.b16 %v6127
    %v6174 = vunpack.c.l.b16 %v6128
    %v6175 = vunpack.c.h.b16 %v6128
    %v6176 = vunpack.c.l.b16 %v6129
    %v6177 = vunpack.c.h.b16 %v6129
    %v6178 = vpack.c.b16 %v6150, %v6146
    %v6179 = vpack.c.b16 %v6151, %v6147
    %v6180 = vpack.c.b16 %v6152, %v6148
    %v6181 = vpack.c.b16 %v6153, %v6149
    %v6182 = vpack.c.b16 %v6158, %v6154
    %v6183 = vpack.c.b16 %v6159, %v6155
    %v6184 = vpack.c.b16 %v6160, %v6156
    %v6185 = vpack.c.b16 %v6161, %v6157
    %v6186 = vpack.c.b16 %v6166, %v6162
    %v6187 = vpack.c.b16 %v6167, %v6163
    %v6188 = vpack.c.b16 %v6168, %v6164
    %v6189 = vpack.c.b16 %v6169, %v6165
    %v6190 = vpack.c.b16 %v6174, %v6170
    %v6191 = vpack.c.b16 %v6175, %v6171
    %v6192 = vpack.c.b16 %v6176, %v6172
    %v6193 = vpack.c.b16 %v6177, %v6173
    %v6211 = vsel %vm5092, %v6113, 0
    %6213 = vmatprep.subr.bf16.mxu0 0
    %6214 = vmatpush1.bf16.msra.mxu0 0
    %6215 = vmatprep.subr.bf16.mxu0 0
    %6216 = vmatpush1.bf16.msra.mxu0 0
    %6217 = vmatprep.subr.bf16.mxu0 0
    %6218 = vmatpush1.bf16.msra.mxu0 0
    %6219 = vmatprep.subr.bf16.mxu0 0
    %6220 = vmatpush1.bf16.msra.mxu0 0
    %6221 = vmatprep.subr.bf16.mxu0 %v6191
    %6222 = vmatpush1.bf16.msra.mxu0 %v6190
    %6223 = vmatprep.subr.bf16.mxu0 %v6187
    %6224 = vmatpush1.bf16.msra.mxu0 %v6186
    %6225 = vmatprep.subr.bf16.mxu0 %v6183
    %6226 = vmatpush1.bf16.msra.mxu0 %v6182
    %6227 = vmatprep.subr.bf16.mxu0 %v6179
    %6228 = vmatpush1.bf16.msra.mxu0 %v6178
    %6229 = vmatprep.subr.bf16.mxu0 0
    %6230 = vmatpush2.bf16.msra.mxu0 0
    %6231 = vmatprep.subr.bf16.mxu0 0
    %6232 = vmatpush2.bf16.msra.mxu0 0
    %6233 = vmatprep.subr.bf16.mxu0 0
    %6234 = vmatpush2.bf16.msra.mxu0 0
    %6235 = vmatprep.subr.bf16.mxu0 0
    %6236 = vmatpush2.bf16.msra.mxu0 0
    %6237 = vmatprep.subr.bf16.mxu0 0
    %6238 = vmatpush2.bf16.msra.mxu0 0
    %6239 = vmatprep.subr.bf16.mxu0 0
    %6240 = vmatpush2.bf16.msra.mxu0 0
    %6241 = vmatprep.subr.bf16.mxu0 0
    %6242 = vmatpush2.bf16.msra.mxu0 0
    %6243 = vmatprep.subr.bf16.mxu0 0
    %6244 = vmatpush2.bf16.msra.mxu0 0
    %6245 = vmatprep.mubr.bf16.mxu0 0
    %6246 = vmatmul.mubr.bf16.gmra.mxu0 %v6211
    %v6247 = vpop.f32.mrf.mxu0
    %v6248 = vadd.f32 0.0, %v6247
    %v6249 = vpop.f32.mrf.mxu0
    %v6250 = vadd.f32 0.0, %v6249
    %v6251 = vpop.f32.mrf.mxu0
    %v6252 = vpop.f32.mrf.mxu0
    %6253 = vdwg.mxu0
    %6254 = vmatprep.subr.bf16.mxu0 0
    %6255 = vmatpush1.bf16.msra.mxu0 0
    %6256 = vmatprep.subr.bf16.mxu0 0
    %6257 = vmatpush1.bf16.msra.mxu0 0
    %6258 = vmatprep.subr.bf16.mxu0 0
    %6259 = vmatpush1.bf16.msra.mxu0 0
    %6260 = vmatprep.subr.bf16.mxu0 0
    %6261 = vmatpush1.bf16.msra.mxu0 0
    %6262 = vmatprep.subr.bf16.mxu0 %v6193
    %6263 = vmatpush1.bf16.msra.mxu0 %v6192
    %6264 = vmatprep.subr.bf16.mxu0 %v6189
    %6265 = vmatpush1.bf16.msra.mxu0 %v6188
    %6266 = vmatprep.subr.bf16.mxu0 %v6185
    %6267 = vmatpush1.bf16.msra.mxu0 %v6184
    %6268 = vmatprep.subr.bf16.mxu0 %v6181
    %6269 = vmatpush1.bf16.msra.mxu0 %v6180
    %6270 = vmatprep.subr.bf16.mxu0 0
    %6271 = vmatpush2.bf16.msra.mxu0 0
    %6272 = vmatprep.subr.bf16.mxu0 0
    %6273 = vmatpush2.bf16.msra.mxu0 0
    %6274 = vmatprep.subr.bf16.mxu0 0
    %6275 = vmatpush2.bf16.msra.mxu0 0
    %6276 = vmatprep.subr.bf16.mxu0 0
    %6277 = vmatpush2.bf16.msra.mxu0 0
    %6278 = vmatprep.subr.bf16.mxu0 0
    %6279 = vmatpush2.bf16.msra.mxu0 0
    %6280 = vmatprep.subr.bf16.mxu0 0
    %6281 = vmatpush2.bf16.msra.mxu0 0
    %6282 = vmatprep.subr.bf16.mxu0 0
    %6283 = vmatpush2.bf16.msra.mxu0 0
    %6284 = vmatprep.subr.bf16.mxu0 0
    %6285 = vmatpush2.bf16.msra.mxu0 0
    %6286 = vmatprep.mubr.bf16.mxu0 0
    %6287 = vmatmul.mubr.bf16.gmra.mxu0 %v6211
    %v6288 = vpop.f32.mrf.mxu0
    %v6289 = vadd.f32 0.0, %v6288
    %v6290 = vpop.f32.mrf.mxu0
    %v6291 = vadd.f32 0.0, %v6290
    %v6292 = vpop.f32.mrf.mxu0
    %v6293 = vpop.f32.mrf.mxu0
    %6294 = vdwg.mxu0
    %v6295 = vadd.f32 %v6107, %v6248
    %v6296 = vadd.f32 %v6108, %v6250
    %v6297 = vadd.f32 %v6109, %v6289
    %v6298 = vadd.f32 %v6110, %v6291
    %s6299 = scalar_lea.vmem [#allocation12], 6
    %v6300 = vld [vmem:[%s6299] ss:$24 sm:$0x3]
    %v6301 = vpack.c.bf16 %v6300, %v6300
    %v6302 = vld [vmem:[#allocation3 + $0x300] sm:$0xff]
    %v6303 = vld [vmem:[#allocation3 + $0x308] sm:$0xff]
    %v6304 = vld [vmem:[#allocation3 + $0x310] sm:$0xff]
    %v6305 = vld [vmem:[#allocation3 + $0x318] sm:$0xff]
    %v6306 = vld [vmem:[#allocation3 + $0x320] sm:$0xff]
    %v6307 = vld [vmem:[#allocation3 + $0x328] sm:$0xff]
    %v6308 = vld [vmem:[#allocation3 + $0x330] sm:$0xff]
    %v6309 = vld [vmem:[#allocation3 + $0x338] sm:$0xff]
    %v6310 = vld [vmem:[#allocation3 + $0x340] sm:$0xff]
    %v6311 = vld [vmem:[#allocation3 + $0x348] sm:$0xff]
    %v6312 = vld [vmem:[#allocation3 + $0x350] sm:$0xff]
    %v6313 = vld [vmem:[#allocation3 + $0x358] sm:$0xff]
    %v6314 = vld [vmem:[#allocation3 + $0x360] sm:$0xff]
    %v6315 = vld [vmem:[#allocation3 + $0x368] sm:$0xff]
    %v6316 = vld [vmem:[#allocation3 + $0x370] sm:$0xff]
    %v6317 = vld [vmem:[#allocation3 + $0x378] sm:$0xff]
    %v6334 = vunpack.c.l.b16 %v6302
    %v6335 = vunpack.c.h.b16 %v6302
    %v6336 = vunpack.c.l.b16 %v6303
    %v6337 = vunpack.c.h.b16 %v6303
    %v6338 = vunpack.c.l.b16 %v6304
    %v6339 = vunpack.c.h.b16 %v6304
    %v6340 = vunpack.c.l.b16 %v6305
    %v6341 = vunpack.c.h.b16 %v6305
    %v6342 = vunpack.c.l.b16 %v6306
    %v6343 = vunpack.c.h.b16 %v6306
    %v6344 = vunpack.c.l.b16 %v6307
    %v6345 = vunpack.c.h.b16 %v6307
    %v6346 = vunpack.c.l.b16 %v6308
    %v6347 = vunpack.c.h.b16 %v6308
    %v6348 = vunpack.c.l.b16 %v6309
    %v6349 = vunpack.c.h.b16 %v6309
    %v6350 = vunpack.c.l.b16 %v6310
    %v6351 = vunpack.c.h.b16 %v6310
    %v6352 = vunpack.c.l.b16 %v6311
    %v6353 = vunpack.c.h.b16 %v6311
    %v6354 = vunpack.c.l.b16 %v6312
    %v6355 = vunpack.c.h.b16 %v6312
    %v6356 = vunpack.c.l.b16 %v6313
    %v6357 = vunpack.c.h.b16 %v6313
    %v6358 = vunpack.c.l.b16 %v6314
    %v6359 = vunpack.c.h.b16 %v6314
    %v6360 = vunpack.c.l.b16 %v6315
    %v6361 = vunpack.c.h.b16 %v6315
    %v6362 = vunpack.c.l.b16 %v6316
    %v6363 = vunpack.c.h.b16 %v6316
    %v6364 = vunpack.c.l.b16 %v6317
    %v6365 = vunpack.c.h.b16 %v6317
    %v6366 = vpack.c.b16 %v6338, %v6334
    %v6367 = vpack.c.b16 %v6339, %v6335
    %v6368 = vpack.c.b16 %v6340, %v6336
    %v6369 = vpack.c.b16 %v6341, %v6337
    %v6370 = vpack.c.b16 %v6346, %v6342
    %v6371 = vpack.c.b16 %v6347, %v6343
    %v6372 = vpack.c.b16 %v6348, %v6344
    %v6373 = vpack.c.b16 %v6349, %v6345
    %v6374 = vpack.c.b16 %v6354, %v6350
    %v6375 = vpack.c.b16 %v6355, %v6351
    %v6376 = vpack.c.b16 %v6356, %v6352
    %v6377 = vpack.c.b16 %v6357, %v6353
    %v6378 = vpack.c.b16 %v6362, %v6358
    %v6379 = vpack.c.b16 %v6363, %v6359
    %v6380 = vpack.c.b16 %v6364, %v6360
    %v6381 = vpack.c.b16 %v6365, %v6361
    %v6399 = vsel %vm5092, %v6301, 0
    %6401 = vmatprep.subr.bf16.mxu0 0
    %6402 = vmatpush1.bf16.msra.mxu0 0
    %6403 = vmatprep.subr.bf16.mxu0 0
    %6404 = vmatpush1.bf16.msra.mxu0 0
    %6405 = vmatprep.subr.bf16.mxu0 0
    %6406 = vmatpush1.bf16.msra.mxu0 0
    %6407 = vmatprep.subr.bf16.mxu0 0
    %6408 = vmatpush1.bf16.msra.mxu0 0
    %6409 = vmatprep.subr.bf16.mxu0 %v6379
    %6410 = vmatpush1.bf16.msra.mxu0 %v6378
    %6411 = vmatprep.subr.bf16.mxu0 %v6375
    %6412 = vmatpush1.bf16.msra.mxu0 %v6374
    %6413 = vmatprep.subr.bf16.mxu0 %v6371
    %6414 = vmatpush1.bf16.msra.mxu0 %v6370
    %6415 = vmatprep.subr.bf16.mxu0 %v6367
    %6416 = vmatpush1.bf16.msra.mxu0 %v6366
    %6417 = vmatprep.subr.bf16.mxu0 0
    %6418 = vmatpush2.bf16.msra.mxu0 0
    %6419 = vmatprep.subr.bf16.mxu0 0
    %6420 = vmatpush2.bf16.msra.mxu0 0
    %6421 = vmatprep.subr.bf16.mxu0 0
    %6422 = vmatpush2.bf16.msra.mxu0 0
    %6423 = vmatprep.subr.bf16.mxu0 0
    %6424 = vmatpush2.bf16.msra.mxu0 0
    %6425 = vmatprep.subr.bf16.mxu0 0
    %6426 = vmatpush2.bf16.msra.mxu0 0
    %6427 = vmatprep.subr.bf16.mxu0 0
    %6428 = vmatpush2.bf16.msra.mxu0 0
    %6429 = vmatprep.subr.bf16.mxu0 0
    %6430 = vmatpush2.bf16.msra.mxu0 0
    %6431 = vmatprep.subr.bf16.mxu0 0
    %6432 = vmatpush2.bf16.msra.mxu0 0
    %6433 = vmatprep.mubr.bf16.mxu0 0
    %6434 = vmatmul.mubr.bf16.gmra.mxu0 %v6399
    %v6435 = vpop.f32.mrf.mxu0
    %v6436 = vadd.f32 0.0, %v6435
    %v6437 = vpop.f32.mrf.mxu0
    %v6438 = vadd.f32 0.0, %v6437
    %v6439 = vpop.f32.mrf.mxu0
    %v6440 = vpop.f32.mrf.mxu0
    %6441 = vdwg.mxu0
    %6442 = vmatprep.subr.bf16.mxu0 0
    %6443 = vmatpush1.bf16.msra.mxu0 0
    %6444 = vmatprep.subr.bf16.mxu0 0
    %6445 = vmatpush1.bf16.msra.mxu0 0
    %6446 = vmatprep.subr.bf16.mxu0 0
    %6447 = vmatpush1.bf16.msra.mxu0 0
    %6448 = vmatprep.subr.bf16.mxu0 0
    %6449 = vmatpush1.bf16.msra.mxu0 0
    %6450 = vmatprep.subr.bf16.mxu0 %v6381
    %6451 = vmatpush1.bf16.msra.mxu0 %v6380
    %6452 = vmatprep.subr.bf16.mxu0 %v6377
    %6453 = vmatpush1.bf16.msra.mxu0 %v6376
    %6454 = vmatprep.subr.bf16.mxu0 %v6373
    %6455 = vmatpush1.bf16.msra.mxu0 %v6372
    %6456 = vmatprep.subr.bf16.mxu0 %v6369
    %6457 = vmatpush1.bf16.msra.mxu0 %v6368
    %6458 = vmatprep.subr.bf16.mxu0 0
    %6459 = vmatpush2.bf16.msra.mxu0 0
    %6460 = vmatprep.subr.bf16.mxu0 0
    %6461 = vmatpush2.bf16.msra.mxu0 0
    %6462 = vmatprep.subr.bf16.mxu0 0
    %6463 = vmatpush2.bf16.msra.mxu0 0
    %6464 = vmatprep.subr.bf16.mxu0 0
    %6465 = vmatpush2.bf16.msra.mxu0 0
    %6466 = vmatprep.subr.bf16.mxu0 0
    %6467 = vmatpush2.bf16.msra.mxu0 0
    %6468 = vmatprep.subr.bf16.mxu0 0
    %6469 = vmatpush2.bf16.msra.mxu0 0
    %6470 = vmatprep.subr.bf16.mxu0 0
    %6471 = vmatpush2.bf16.msra.mxu0 0
    %6472 = vmatprep.subr.bf16.mxu0 0
    %6473 = vmatpush2.bf16.msra.mxu0 0
    %6474 = vmatprep.mubr.bf16.mxu0 0
    %6475 = vmatmul.mubr.bf16.gmra.mxu0 %v6399
    %v6476 = vpop.f32.mrf.mxu0
    %v6477 = vadd.f32 0.0, %v6476
    %v6478 = vpop.f32.mrf.mxu0
    %v6479 = vadd.f32 0.0, %v6478
    %v6480 = vpop.f32.mrf.mxu0
    %v6481 = vpop.f32.mrf.mxu0
    %6482 = vdwg.mxu0
    %v6483 = vadd.f32 %v6295, %v6436
    %v6484 = vadd.f32 %v6296, %v6438
    %v6485 = vadd.f32 %v6297, %v6477
    %v6486 = vadd.f32 %v6298, %v6479
    %s6487 = scalar_lea.vmem [#allocation12], 7
    %v6488 = vld [vmem:[%s6487] ss:$24 sm:$0x3]
    %v6489 = vpack.c.bf16 %v6488, %v6488
    %v6490 = vld [vmem:[#allocation3 + $0x380] sm:$0xff]
    %v6491 = vld [vmem:[#allocation3 + $0x388] sm:$0xff]
    %v6492 = vld [vmem:[#allocation3 + $0x390] sm:$0xff]
    %v6493 = vld [vmem:[#allocation3 + $0x398] sm:$0xff]
    %v6494 = vld [vmem:[#allocation3 + $0x3a0] sm:$0xff]
    %v6495 = vld [vmem:[#allocation3 + $0x3a8] sm:$0xff]
    %v6496 = vld [vmem:[#allocation3 + $0x3b0] sm:$0xff]
    %v6497 = vld [vmem:[#allocation3 + $0x3b8] sm:$0xff]
    %v6498 = vld [vmem:[#allocation3 + $0x3c0] sm:$0xff]
    %v6499 = vld [vmem:[#allocation3 + $0x3c8] sm:$0xff]
    %v6500 = vld [vmem:[#allocation3 + $0x3d0] sm:$0xff]
    %v6501 = vld [vmem:[#allocation3 + $0x3d8] sm:$0xff]
    %v6502 = vld [vmem:[#allocation3 + $0x3e0] sm:$0xff]
    %v6503 = vld [vmem:[#allocation3 + $0x3e8] sm:$0xff]
    %v6504 = vld [vmem:[#allocation3 + $0x3f0] sm:$0xff]
    %v6505 = vld [vmem:[#allocation3 + $0x3f8] sm:$0xff]
    %v6522 = vunpack.c.l.b16 %v6490
    %v6523 = vunpack.c.h.b16 %v6490
    %v6524 = vunpack.c.l.b16 %v6491
    %v6525 = vunpack.c.h.b16 %v6491
    %v6526 = vunpack.c.l.b16 %v6492
    %v6527 = vunpack.c.h.b16 %v6492
    %v6528 = vunpack.c.l.b16 %v6493
    %v6529 = vunpack.c.h.b16 %v6493
    %v6530 = vunpack.c.l.b16 %v6494
    %v6531 = vunpack.c.h.b16 %v6494
    %v6532 = vunpack.c.l.b16 %v6495
    %v6533 = vunpack.c.h.b16 %v6495
    %v6534 = vunpack.c.l.b16 %v6496
    %v6535 = vunpack.c.h.b16 %v6496
    %v6536 = vunpack.c.l.b16 %v6497
    %v6537 = vunpack.c.h.b16 %v6497
    %v6538 = vunpack.c.l.b16 %v6498
    %v6539 = vunpack.c.h.b16 %v6498
    %v6540 = vunpack.c.l.b16 %v6499
    %v6541 = vunpack.c.h.b16 %v6499
    %v6542 = vunpack.c.l.b16 %v6500
    %v6543 = vunpack.c.h.b16 %v6500
    %v6544 = vunpack.c.l.b16 %v6501
    %v6545 = vunpack.c.h.b16 %v6501
    %v6546 = vunpack.c.l.b16 %v6502
    %v6547 = vunpack.c.h.b16 %v6502
    %v6548 = vunpack.c.l.b16 %v6503
    %v6549 = vunpack.c.h.b16 %v6503
    %v6550 = vunpack.c.l.b16 %v6504
    %v6551 = vunpack.c.h.b16 %v6504
    %v6552 = vunpack.c.l.b16 %v6505
    %v6553 = vunpack.c.h.b16 %v6505
    %v6554 = vpack.c.b16 %v6526, %v6522
    %v6555 = vpack.c.b16 %v6527, %v6523
    %v6556 = vpack.c.b16 %v6528, %v6524
    %v6557 = vpack.c.b16 %v6529, %v6525
    %v6558 = vpack.c.b16 %v6534, %v6530
    %v6559 = vpack.c.b16 %v6535, %v6531
    %v6560 = vpack.c.b16 %v6536, %v6532
    %v6561 = vpack.c.b16 %v6537, %v6533
    %v6562 = vpack.c.b16 %v6542, %v6538
    %v6563 = vpack.c.b16 %v6543, %v6539
    %v6564 = vpack.c.b16 %v6544, %v6540
    %v6565 = vpack.c.b16 %v6545, %v6541
    %v6566 = vpack.c.b16 %v6550, %v6546
    %v6567 = vpack.c.b16 %v6551, %v6547
    %v6568 = vpack.c.b16 %v6552, %v6548
    %v6569 = vpack.c.b16 %v6553, %v6549
    %v6587 = vsel %vm5092, %v6489, 0
    %6589 = vmatprep.subr.bf16.mxu0 0
    %6590 = vmatpush1.bf16.msra.mxu0 0
    %6591 = vmatprep.subr.bf16.mxu0 0
    %6592 = vmatpush1.bf16.msra.mxu0 0
    %6593 = vmatprep.subr.bf16.mxu0 0
    %6594 = vmatpush1.bf16.msra.mxu0 0
    %6595 = vmatprep.subr.bf16.mxu0 0
    %6596 = vmatpush1.bf16.msra.mxu0 0
    %6597 = vmatprep.subr.bf16.mxu0 %v6567
    %6598 = vmatpush1.bf16.msra.mxu0 %v6566
    %6599 = vmatprep.subr.bf16.mxu0 %v6563
    %6600 = vmatpush1.bf16.msra.mxu0 %v6562
    %6601 = vmatprep.subr.bf16.mxu0 %v6559
    %6602 = vmatpush1.bf16.msra.mxu0 %v6558
    %6603 = vmatprep.subr.bf16.mxu0 %v6555
    %6604 = vmatpush1.bf16.msra.mxu0 %v6554
    %6605 = vmatprep.subr.bf16.mxu0 0
    %6606 = vmatpush2.bf16.msra.mxu0 0
    %6607 = vmatprep.subr.bf16.mxu0 0
    %6608 = vmatpush2.bf16.msra.mxu0 0
    %6609 = vmatprep.subr.bf16.mxu0 0
    %6610 = vmatpush2.bf16.msra.mxu0 0
    %6611 = vmatprep.subr.bf16.mxu0 0
    %6612 = vmatpush2.bf16.msra.mxu0 0
    %6613 = vmatprep.subr.bf16.mxu0 0
    %6614 = vmatpush2.bf16.msra.mxu0 0
    %6615 = vmatprep.subr.bf16.mxu0 0
    %6616 = vmatpush2.bf16.msra.mxu0 0
    %6617 = vmatprep.subr.bf16.mxu0 0
    %6618 = vmatpush2.bf16.msra.mxu0 0
    %6619 = vmatprep.subr.bf16.mxu0 0
    %6620 = vmatpush2.bf16.msra.mxu0 0
    %6621 = vmatprep.mubr.bf16.mxu0 0
    %6622 = vmatmul.mubr.bf16.gmra.mxu0 %v6587
    %v6623 = vpop.f32.mrf.mxu0
    %v6624 = vadd.f32 0.0, %v6623
    %v6625 = vpop.f32.mrf.mxu0
    %v6626 = vadd.f32 0.0, %v6625
    %v6627 = vpop.f32.mrf.mxu0
    %v6628 = vpop.f32.mrf.mxu0
    %6629 = vdwg.mxu0
    %6630 = vmatprep.subr.bf16.mxu0 0
    %6631 = vmatpush1.bf16.msra.mxu0 0
    %6632 = vmatprep.subr.bf16.mxu0 0
    %6633 = vmatpush1.bf16.msra.mxu0 0
    %6634 = vmatprep.subr.bf16.mxu0 0
    %6635 = vmatpush1.bf16.msra.mxu0 0
    %6636 = vmatprep.subr.bf16.mxu0 0
    %6637 = vmatpush1.bf16.msra.mxu0 0
    %6638 = vmatprep.subr.bf16.mxu0 %v6569
    %6639 = vmatpush1.bf16.msra.mxu0 %v6568
    %6640 = vmatprep.subr.bf16.mxu0 %v6565
    %6641 = vmatpush1.bf16.msra.mxu0 %v6564
    %6642 = vmatprep.subr.bf16.mxu0 %v6561
    %6643 = vmatpush1.bf16.msra.mxu0 %v6560
    %6644 = vmatprep.subr.bf16.mxu0 %v6557
    %6645 = vmatpush1.bf16.msra.mxu0 %v6556
    %6646 = vmatprep.subr.bf16.mxu0 0
    %6647 = vmatpush2.bf16.msra.mxu0 0
    %6648 = vmatprep.subr.bf16.mxu0 0
    %6649 = vmatpush2.bf16.msra.mxu0 0
    %6650 = vmatprep.subr.bf16.mxu0 0
    %6651 = vmatpush2.bf16.msra.mxu0 0
    %6652 = vmatprep.subr.bf16.mxu0 0
    %6653 = vmatpush2.bf16.msra.mxu0 0
    %6654 = vmatprep.subr.bf16.mxu0 0
    %6655 = vmatpush2.bf16.msra.mxu0 0
    %6656 = vmatprep.subr.bf16.mxu0 0
    %6657 = vmatpush2.bf16.msra.mxu0 0
    %6658 = vmatprep.subr.bf16.mxu0 0
    %6659 = vmatpush2.bf16.msra.mxu0 0
    %6660 = vmatprep.subr.bf16.mxu0 0
    %6661 = vmatpush2.bf16.msra.mxu0 0
    %6662 = vmatprep.mubr.bf16.mxu0 0
    %6663 = vmatmul.mubr.bf16.gmra.mxu0 %v6587
    %v6664 = vpop.f32.mrf.mxu0
    %v6665 = vadd.f32 0.0, %v6664
    %v6666 = vpop.f32.mrf.mxu0
    %v6667 = vadd.f32 0.0, %v6666
    %v6668 = vpop.f32.mrf.mxu0
    %v6669 = vpop.f32.mrf.mxu0
    %6670 = vdwg.mxu0
    %v6671 = vadd.f32 %v6483, %v6624
    %v6672 = vadd.f32 %v6484, %v6626
    %v6673 = vadd.f32 %v6485, %v6665
    %v6674 = vadd.f32 %v6486, %v6667
    %s6675 = scalar_lea.vmem [#allocation12], 8
    %v6676 = vld [vmem:[%s6675] ss:$24 sm:$0x3]
    %v6677 = vpack.c.bf16 %v6676, %v6676
    %v6678 = vld [vmem:[#allocation3 + $0x400] sm:$0xff]
    %v6679 = vld [vmem:[#allocation3 + $0x408] sm:$0xff]
    %v6680 = vld [vmem:[#allocation3 + $0x410] sm:$0xff]
    %v6681 = vld [vmem:[#allocation3 + $0x418] sm:$0xff]
    %v6682 = vld [vmem:[#allocation3 + $0x420] sm:$0xff]
    %v6683 = vld [vmem:[#allocation3 + $0x428] sm:$0xff]
    %v6684 = vld [vmem:[#allocation3 + $0x430] sm:$0xff]
    %v6685 = vld [vmem:[#allocation3 + $0x438] sm:$0xff]
    %v6686 = vld [vmem:[#allocation3 + $0x440] sm:$0xff]
    %v6687 = vld [vmem:[#allocation3 + $0x448] sm:$0xff]
    %v6688 = vld [vmem:[#allocation3 + $0x450] sm:$0xff]
    %v6689 = vld [vmem:[#allocation3 + $0x458] sm:$0xff]
    %v6690 = vld [vmem:[#allocation3 + $0x460] sm:$0xff]
    %v6691 = vld [vmem:[#allocation3 + $0x468] sm:$0xff]
    %v6692 = vld [vmem:[#allocation3 + $0x470] sm:$0xff]
    %v6693 = vld [vmem:[#allocation3 + $0x478] sm:$0xff]
    %v6710 = vunpack.c.l.b16 %v6678
    %v6711 = vunpack.c.h.b16 %v6678
    %v6712 = vunpack.c.l.b16 %v6679
    %v6713 = vunpack.c.h.b16 %v6679
    %v6714 = vunpack.c.l.b16 %v6680
    %v6715 = vunpack.c.h.b16 %v6680
    %v6716 = vunpack.c.l.b16 %v6681
    %v6717 = vunpack.c.h.b16 %v6681
    %v6718 = vunpack.c.l.b16 %v6682
    %v6719 = vunpack.c.h.b16 %v6682
    %v6720 = vunpack.c.l.b16 %v6683
    %v6721 = vunpack.c.h.b16 %v6683
    %v6722 = vunpack.c.l.b16 %v6684
    %v6723 = vunpack.c.h.b16 %v6684
    %v6724 = vunpack.c.l.b16 %v6685
    %v6725 = vunpack.c.h.b16 %v6685
    %v6726 = vunpack.c.l.b16 %v6686
    %v6727 = vunpack.c.h.b16 %v6686
    %v6728 = vunpack.c.l.b16 %v6687
    %v6729 = vunpack.c.h.b16 %v6687
    %v6730 = vunpack.c.l.b16 %v6688
    %v6731 = vunpack.c.h.b16 %v6688
    %v6732 = vunpack.c.l.b16 %v6689
    %v6733 = vunpack.c.h.b16 %v6689
    %v6734 = vunpack.c.l.b16 %v6690
    %v6735 = vunpack.c.h.b16 %v6690
    %v6736 = vunpack.c.l.b16 %v6691
    %v6737 = vunpack.c.h.b16 %v6691
    %v6738 = vunpack.c.l.b16 %v6692
    %v6739 = vunpack.c.h.b16 %v6692
    %v6740 = vunpack.c.l.b16 %v6693
    %v6741 = vunpack.c.h.b16 %v6693
    %v6742 = vpack.c.b16 %v6714, %v6710
    %v6743 = vpack.c.b16 %v6715, %v6711
    %v6744 = vpack.c.b16 %v6716, %v6712
    %v6745 = vpack.c.b16 %v6717, %v6713
    %v6746 = vpack.c.b16 %v6722, %v6718
    %v6747 = vpack.c.b16 %v6723, %v6719
    %v6748 = vpack.c.b16 %v6724, %v6720
    %v6749 = vpack.c.b16 %v6725, %v6721
    %v6750 = vpack.c.b16 %v6730, %v6726
    %v6751 = vpack.c.b16 %v6731, %v6727
    %v6752 = vpack.c.b16 %v6732, %v6728
    %v6753 = vpack.c.b16 %v6733, %v6729
    %v6754 = vpack.c.b16 %v6738, %v6734
    %v6755 = vpack.c.b16 %v6739, %v6735
    %v6756 = vpack.c.b16 %v6740, %v6736
    %v6757 = vpack.c.b16 %v6741, %v6737
    %v6775 = vsel %vm5092, %v6677, 0
    %6777 = vmatprep.subr.bf16.mxu0 0
    %6778 = vmatpush1.bf16.msra.mxu0 0
    %6779 = vmatprep.subr.bf16.mxu0 0
    %6780 = vmatpush1.bf16.msra.mxu0 0
    %6781 = vmatprep.subr.bf16.mxu0 0
    %6782 = vmatpush1.bf16.msra.mxu0 0
    %6783 = vmatprep.subr.bf16.mxu0 0
    %6784 = vmatpush1.bf16.msra.mxu0 0
    %6785 = vmatprep.subr.bf16.mxu0 %v6755
    %6786 = vmatpush1.bf16.msra.mxu0 %v6754
    %6787 = vmatprep.subr.bf16.mxu0 %v6751
    %6788 = vmatpush1.bf16.msra.mxu0 %v6750
    %6789 = vmatprep.subr.bf16.mxu0 %v6747
    %6790 = vmatpush1.bf16.msra.mxu0 %v6746
    %6791 = vmatprep.subr.bf16.mxu0 %v6743
    %6792 = vmatpush1.bf16.msra.mxu0 %v6742
    %6793 = vmatprep.subr.bf16.mxu0 0
    %6794 = vmatpush2.bf16.msra.mxu0 0
    %6795 = vmatprep.subr.bf16.mxu0 0
    %6796 = vmatpush2.bf16.msra.mxu0 0
    %6797 = vmatprep.subr.bf16.mxu0 0
    %6798 = vmatpush2.bf16.msra.mxu0 0
    %6799 = vmatprep.subr.bf16.mxu0 0
    %6800 = vmatpush2.bf16.msra.mxu0 0
    %6801 = vmatprep.subr.bf16.mxu0 0
    %6802 = vmatpush2.bf16.msra.mxu0 0
    %6803 = vmatprep.subr.bf16.mxu0 0
    %6804 = vmatpush2.bf16.msra.mxu0 0
    %6805 = vmatprep.subr.bf16.mxu0 0
    %6806 = vmatpush2.bf16.msra.mxu0 0
    %6807 = vmatprep.subr.bf16.mxu0 0
    %6808 = vmatpush2.bf16.msra.mxu0 0
    %6809 = vmatprep.mubr.bf16.mxu0 0
    %6810 = vmatmul.mubr.bf16.gmra.mxu0 %v6775
    %v6811 = vpop.f32.mrf.mxu0
    %v6812 = vadd.f32 0.0, %v6811
    %v6813 = vpop.f32.mrf.mxu0
    %v6814 = vadd.f32 0.0, %v6813
    %v6815 = vpop.f32.mrf.mxu0
    %v6816 = vpop.f32.mrf.mxu0
    %6817 = vdwg.mxu0
    %6818 = vmatprep.subr.bf16.mxu0 0
    %6819 = vmatpush1.bf16.msra.mxu0 0
    %6820 = vmatprep.subr.bf16.mxu0 0
    %6821 = vmatpush1.bf16.msra.mxu0 0
    %6822 = vmatprep.subr.bf16.mxu0 0
    %6823 = vmatpush1.bf16.msra.mxu0 0
    %6824 = vmatprep.subr.bf16.mxu0 0
    %6825 = vmatpush1.bf16.msra.mxu0 0
    %6826 = vmatprep.subr.bf16.mxu0 %v6757
    %6827 = vmatpush1.bf16.msra.mxu0 %v6756
    %6828 = vmatprep.subr.bf16.mxu0 %v6753
    %6829 = vmatpush1.bf16.msra.mxu0 %v6752
    %6830 = vmatprep.subr.bf16.mxu0 %v6749
    %6831 = vmatpush1.bf16.msra.mxu0 %v6748
    %6832 = vmatprep.subr.bf16.mxu0 %v6745
    %6833 = vmatpush1.bf16.msra.mxu0 %v6744
    %6834 = vmatprep.subr.bf16.mxu0 0
    %6835 = vmatpush2.bf16.msra.mxu0 0
    %6836 = vmatprep.subr.bf16.mxu0 0
    %6837 = vmatpush2.bf16.msra.mxu0 0
    %6838 = vmatprep.subr.bf16.mxu0 0
    %6839 = vmatpush2.bf16.msra.mxu0 0
    %6840 = vmatprep.subr.bf16.mxu0 0
    %6841 = vmatpush2.bf16.msra.mxu0 0
    %6842 = vmatprep.subr.bf16.mxu0 0
    %6843 = vmatpush2.bf16.msra.mxu0 0
    %6844 = vmatprep.subr.bf16.mxu0 0
    %6845 = vmatpush2.bf16.msra.mxu0 0
    %6846 = vmatprep.subr.bf16.mxu0 0
    %6847 = vmatpush2.bf16.msra.mxu0 0
    %6848 = vmatprep.subr.bf16.mxu0 0
    %6849 = vmatpush2.bf16.msra.mxu0 0
    %6850 = vmatprep.mubr.bf16.mxu0 0
    %6851 = vmatmul.mubr.bf16.gmra.mxu0 %v6775
    %v6852 = vpop.f32.mrf.mxu0
    %v6853 = vadd.f32 0.0, %v6852
    %v6854 = vpop.f32.mrf.mxu0
    %v6855 = vadd.f32 0.0, %v6854
    %v6856 = vpop.f32.mrf.mxu0
    %v6857 = vpop.f32.mrf.mxu0
    %6858 = vdwg.mxu0
    %v6859 = vadd.f32 %v6671, %v6812
    %v6860 = vadd.f32 %v6672, %v6814
    %v6861 = vadd.f32 %v6673, %v6853
    %v6862 = vadd.f32 %v6674, %v6855
    %s6863 = scalar_lea.vmem [#allocation12], 9
    %v6864 = vld [vmem:[%s6863] ss:$24 sm:$0x3]
    %v6865 = vpack.c.bf16 %v6864, %v6864
    %v6866 = vld [vmem:[#allocation3 + $0x480] sm:$0xff]
    %v6867 = vld [vmem:[#allocation3 + $0x488] sm:$0xff]
    %v6868 = vld [vmem:[#allocation3 + $0x490] sm:$0xff]
    %v6869 = vld [vmem:[#allocation3 + $0x498] sm:$0xff]
    %v6870 = vld [vmem:[#allocation3 + $0x4a0] sm:$0xff]
    %v6871 = vld [vmem:[#allocation3 + $0x4a8] sm:$0xff]
    %v6872 = vld [vmem:[#allocation3 + $0x4b0] sm:$0xff]
    %v6873 = vld [vmem:[#allocation3 + $0x4b8] sm:$0xff]
    %v6874 = vld [vmem:[#allocation3 + $0x4c0] sm:$0xff]
    %v6875 = vld [vmem:[#allocation3 + $0x4c8] sm:$0xff]
    %v6876 = vld [vmem:[#allocation3 + $0x4d0] sm:$0xff]
    %v6877 = vld [vmem:[#allocation3 + $0x4d8] sm:$0xff]
    %v6878 = vld [vmem:[#allocation3 + $0x4e0] sm:$0xff]
    %v6879 = vld [vmem:[#allocation3 + $0x4e8] sm:$0xff]
    %v6880 = vld [vmem:[#allocation3 + $0x4f0] sm:$0xff]
    %v6881 = vld [vmem:[#allocation3 + $0x4f8] sm:$0xff]
    %v6898 = vunpack.c.l.b16 %v6866
    %v6899 = vunpack.c.h.b16 %v6866
    %v6900 = vunpack.c.l.b16 %v6867
    %v6901 = vunpack.c.h.b16 %v6867
    %v6902 = vunpack.c.l.b16 %v6868
    %v6903 = vunpack.c.h.b16 %v6868
    %v6904 = vunpack.c.l.b16 %v6869
    %v6905 = vunpack.c.h.b16 %v6869
    %v6906 = vunpack.c.l.b16 %v6870
    %v6907 = vunpack.c.h.b16 %v6870
    %v6908 = vunpack.c.l.b16 %v6871
    %v6909 = vunpack.c.h.b16 %v6871
    %v6910 = vunpack.c.l.b16 %v6872
    %v6911 = vunpack.c.h.b16 %v6872
    %v6912 = vunpack.c.l.b16 %v6873
    %v6913 = vunpack.c.h.b16 %v6873
    %v6914 = vunpack.c.l.b16 %v6874
    %v6915 = vunpack.c.h.b16 %v6874
    %v6916 = vunpack.c.l.b16 %v6875
    %v6917 = vunpack.c.h.b16 %v6875
    %v6918 = vunpack.c.l.b16 %v6876
    %v6919 = vunpack.c.h.b16 %v6876
    %v6920 = vunpack.c.l.b16 %v6877
    %v6921 = vunpack.c.h.b16 %v6877
    %v6922 = vunpack.c.l.b16 %v6878
    %v6923 = vunpack.c.h.b16 %v6878
    %v6924 = vunpack.c.l.b16 %v6879
    %v6925 = vunpack.c.h.b16 %v6879
    %v6926 = vunpack.c.l.b16 %v6880
    %v6927 = vunpack.c.h.b16 %v6880
    %v6928 = vunpack.c.l.b16 %v6881
    %v6929 = vunpack.c.h.b16 %v6881
    %v6930 = vpack.c.b16 %v6902, %v6898
    %v6931 = vpack.c.b16 %v6903, %v6899
    %v6932 = vpack.c.b16 %v6904, %v6900
    %v6933 = vpack.c.b16 %v6905, %v6901
    %v6934 = vpack.c.b16 %v6910, %v6906
    %v6935 = vpack.c.b16 %v6911, %v6907
    %v6936 = vpack.c.b16 %v6912, %v6908
    %v6937 = vpack.c.b16 %v6913, %v6909
    %v6938 = vpack.c.b16 %v6918, %v6914
    %v6939 = vpack.c.b16 %v6919, %v6915
    %v6940 = vpack.c.b16 %v6920, %v6916
    %v6941 = vpack.c.b16 %v6921, %v6917
    %v6942 = vpack.c.b16 %v6926, %v6922
    %v6943 = vpack.c.b16 %v6927, %v6923
    %v6944 = vpack.c.b16 %v6928, %v6924
    %v6945 = vpack.c.b16 %v6929, %v6925
    %v6963 = vsel %vm5092, %v6865, 0
    %6965 = vmatprep.subr.bf16.mxu0 0
    %6966 = vmatpush1.bf16.msra.mxu0 0
    %6967 = vmatprep.subr.bf16.mxu0 0
    %6968 = vmatpush1.bf16.msra.mxu0 0
    %6969 = vmatprep.subr.bf16.mxu0 0
    %6970 = vmatpush1.bf16.msra.mxu0 0
    %6971 = vmatprep.subr.bf16.mxu0 0
    %6972 = vmatpush1.bf16.msra.mxu0 0
    %6973 = vmatprep.subr.bf16.mxu0 %v6943
    %6974 = vmatpush1.bf16.msra.mxu0 %v6942
    %6975 = vmatprep.subr.bf16.mxu0 %v6939
    %6976 = vmatpush1.bf16.msra.mxu0 %v6938
    %6977 = vmatprep.subr.bf16.mxu0 %v6935
    %6978 = vmatpush1.bf16.msra.mxu0 %v6934
    %6979 = vmatprep.subr.bf16.mxu0 %v6931
    %6980 = vmatpush1.bf16.msra.mxu0 %v6930
    %6981 = vmatprep.subr.bf16.mxu0 0
    %6982 = vmatpush2.bf16.msra.mxu0 0
    %6983 = vmatprep.subr.bf16.mxu0 0
    %6984 = vmatpush2.bf16.msra.mxu0 0
    %6985 = vmatprep.subr.bf16.mxu0 0
    %6986 = vmatpush2.bf16.msra.mxu0 0
    %6987 = vmatprep.subr.bf16.mxu0 0
    %6988 = vmatpush2.bf16.msra.mxu0 0
    %6989 = vmatprep.subr.bf16.mxu0 0
    %6990 = vmatpush2.bf16.msra.mxu0 0
    %6991 = vmatprep.subr.bf16.mxu0 0
    %6992 = vmatpush2.bf16.msra.mxu0 0
    %6993 = vmatprep.subr.bf16.mxu0 0
    %6994 = vmatpush2.bf16.msra.mxu0 0
    %6995 = vmatprep.subr.bf16.mxu0 0
    %6996 = vmatpush2.bf16.msra.mxu0 0
    %6997 = vmatprep.mubr.bf16.mxu0 0
    %6998 = vmatmul.mubr.bf16.gmra.mxu0 %v6963
    %v6999 = vpop.f32.mrf.mxu0
    %v7000 = vadd.f32 0.0, %v6999
    %v7001 = vpop.f32.mrf.mxu0
    %v7002 = vadd.f32 0.0, %v7001
    %v7003 = vpop.f32.mrf.mxu0
    %v7004 = vpop.f32.mrf.mxu0
    %7005 = vdwg.mxu0
    %7006 = vmatprep.subr.bf16.mxu0 0
    %7007 = vmatpush1.bf16.msra.mxu0 0
    %7008 = vmatprep.subr.bf16.mxu0 0
    %7009 = vmatpush1.bf16.msra.mxu0 0
    %7010 = vmatprep.subr.bf16.mxu0 0
    %7011 = vmatpush1.bf16.msra.mxu0 0
    %7012 = vmatprep.subr.bf16.mxu0 0
    %7013 = vmatpush1.bf16.msra.mxu0 0
    %7014 = vmatprep.subr.bf16.mxu0 %v6945
    %7015 = vmatpush1.bf16.msra.mxu0 %v6944
    %7016 = vmatprep.subr.bf16.mxu0 %v6941
    %7017 = vmatpush1.bf16.msra.mxu0 %v6940
    %7018 = vmatprep.subr.bf16.mxu0 %v6937
    %7019 = vmatpush1.bf16.msra.mxu0 %v6936
    %7020 = vmatprep.subr.bf16.mxu0 %v6933
    %7021 = vmatpush1.bf16.msra.mxu0 %v6932
    %7022 = vmatprep.subr.bf16.mxu0 0
    %7023 = vmatpush2.bf16.msra.mxu0 0
    %7024 = vmatprep.subr.bf16.mxu0 0
    %7025 = vmatpush2.bf16.msra.mxu0 0
    %7026 = vmatprep.subr.bf16.mxu0 0
    %7027 = vmatpush2.bf16.msra.mxu0 0
    %7028 = vmatprep.subr.bf16.mxu0 0
    %7029 = vmatpush2.bf16.msra.mxu0 0
    %7030 = vmatprep.subr.bf16.mxu0 0
    %7031 = vmatpush2.bf16.msra.mxu0 0
    %7032 = vmatprep.subr.bf16.mxu0 0
    %7033 = vmatpush2.bf16.msra.mxu0 0
    %7034 = vmatprep.subr.bf16.mxu0 0
    %7035 = vmatpush2.bf16.msra.mxu0 0
    %7036 = vmatprep.subr.bf16.mxu0 0
    %7037 = vmatpush2.bf16.msra.mxu0 0
    %7038 = vmatprep.mubr.bf16.mxu0 0
    %7039 = vmatmul.mubr.bf16.gmra.mxu0 %v6963
    %v7040 = vpop.f32.mrf.mxu0
    %v7041 = vadd.f32 0.0, %v7040
    %v7042 = vpop.f32.mrf.mxu0
    %v7043 = vadd.f32 0.0, %v7042
    %v7044 = vpop.f32.mrf.mxu0
    %v7045 = vpop.f32.mrf.mxu0
    %7046 = vdwg.mxu0
    %v7047 = vadd.f32 %v6859, %v7000
    %v7048 = vadd.f32 %v6860, %v7002
    %v7049 = vadd.f32 %v6861, %v7041
    %v7050 = vadd.f32 %v6862, %v7043
    %s7051 = scalar_lea.vmem [#allocation12], 10
    %v7052 = vld [vmem:[%s7051] ss:$24 sm:$0x3]
    %v7053 = vpack.c.bf16 %v7052, %v7052
    %v7054 = vld [vmem:[#allocation3 + $0x500] sm:$0xff]
    %v7055 = vld [vmem:[#allocation3 + $0x508] sm:$0xff]
    %v7056 = vld [vmem:[#allocation3 + $0x510] sm:$0xff]
    %v7057 = vld [vmem:[#allocation3 + $0x518] sm:$0xff]
    %v7058 = vld [vmem:[#allocation3 + $0x520] sm:$0xff]
    %v7059 = vld [vmem:[#allocation3 + $0x528] sm:$0xff]
    %v7060 = vld [vmem:[#allocation3 + $0x530] sm:$0xff]
    %v7061 = vld [vmem:[#allocation3 + $0x538] sm:$0xff]
    %v7062 = vld [vmem:[#allocation3 + $0x540] sm:$0xff]
    %v7063 = vld [vmem:[#allocation3 + $0x548] sm:$0xff]
    %v7064 = vld [vmem:[#allocation3 + $0x550] sm:$0xff]
    %v7065 = vld [vmem:[#allocation3 + $0x558] sm:$0xff]
    %v7066 = vld [vmem:[#allocation3 + $0x560] sm:$0xff]
    %v7067 = vld [vmem:[#allocation3 + $0x568] sm:$0xff]
    %v7068 = vld [vmem:[#allocation3 + $0x570] sm:$0xff]
    %v7069 = vld [vmem:[#allocation3 + $0x578] sm:$0xff]
    %v7086 = vunpack.c.l.b16 %v7054
    %v7087 = vunpack.c.h.b16 %v7054
    %v7088 = vunpack.c.l.b16 %v7055
    %v7089 = vunpack.c.h.b16 %v7055
    %v7090 = vunpack.c.l.b16 %v7056
    %v7091 = vunpack.c.h.b16 %v7056
    %v7092 = vunpack.c.l.b16 %v7057
    %v7093 = vunpack.c.h.b16 %v7057
    %v7094 = vunpack.c.l.b16 %v7058
    %v7095 = vunpack.c.h.b16 %v7058
    %v7096 = vunpack.c.l.b16 %v7059
    %v7097 = vunpack.c.h.b16 %v7059
    %v7098 = vunpack.c.l.b16 %v7060
    %v7099 = vunpack.c.h.b16 %v7060
    %v7100 = vunpack.c.l.b16 %v7061
    %v7101 = vunpack.c.h.b16 %v7061
    %v7102 = vunpack.c.l.b16 %v7062
    %v7103 = vunpack.c.h.b16 %v7062
    %v7104 = vunpack.c.l.b16 %v7063
    %v7105 = vunpack.c.h.b16 %v7063
    %v7106 = vunpack.c.l.b16 %v7064
    %v7107 = vunpack.c.h.b16 %v7064
    %v7108 = vunpack.c.l.b16 %v7065
    %v7109 = vunpack.c.h.b16 %v7065
    %v7110 = vunpack.c.l.b16 %v7066
    %v7111 = vunpack.c.h.b16 %v7066
    %v7112 = vunpack.c.l.b16 %v7067
    %v7113 = vunpack.c.h.b16 %v7067
    %v7114 = vunpack.c.l.b16 %v7068
    %v7115 = vunpack.c.h.b16 %v7068
    %v7116 = vunpack.c.l.b16 %v7069
    %v7117 = vunpack.c.h.b16 %v7069
    %v7118 = vpack.c.b16 %v7090, %v7086
    %v7119 = vpack.c.b16 %v7091, %v7087
    %v7120 = vpack.c.b16 %v7092, %v7088
    %v7121 = vpack.c.b16 %v7093, %v7089
    %v7122 = vpack.c.b16 %v7098, %v7094
    %v7123 = vpack.c.b16 %v7099, %v7095
    %v7124 = vpack.c.b16 %v7100, %v7096
    %v7125 = vpack.c.b16 %v7101, %v7097
    %v7126 = vpack.c.b16 %v7106, %v7102
    %v7127 = vpack.c.b16 %v7107, %v7103
    %v7128 = vpack.c.b16 %v7108, %v7104
    %v7129 = vpack.c.b16 %v7109, %v7105
    %v7130 = vpack.c.b16 %v7114, %v7110
    %v7131 = vpack.c.b16 %v7115, %v7111
    %v7132 = vpack.c.b16 %v7116, %v7112
    %v7133 = vpack.c.b16 %v7117, %v7113
    %v7151 = vsel %vm5092, %v7053, 0
    %7153 = vmatprep.subr.bf16.mxu0 0
    %7154 = vmatpush1.bf16.msra.mxu0 0
    %7155 = vmatprep.subr.bf16.mxu0 0
    %7156 = vmatpush1.bf16.msra.mxu0 0
    %7157 = vmatprep.subr.bf16.mxu0 0
    %7158 = vmatpush1.bf16.msra.mxu0 0
    %7159 = vmatprep.subr.bf16.mxu0 0
    %7160 = vmatpush1.bf16.msra.mxu0 0
    %7161 = vmatprep.subr.bf16.mxu0 %v7131
    %7162 = vmatpush1.bf16.msra.mxu0 %v7130
    %7163 = vmatprep.subr.bf16.mxu0 %v7127
    %7164 = vmatpush1.bf16.msra.mxu0 %v7126
    %7165 = vmatprep.subr.bf16.mxu0 %v7123
    %7166 = vmatpush1.bf16.msra.mxu0 %v7122
    %7167 = vmatprep.subr.bf16.mxu0 %v7119
    %7168 = vmatpush1.bf16.msra.mxu0 %v7118
    %7169 = vmatprep.subr.bf16.mxu0 0
    %7170 = vmatpush2.bf16.msra.mxu0 0
    %7171 = vmatprep.subr.bf16.mxu0 0
    %7172 = vmatpush2.bf16.msra.mxu0 0
    %7173 = vmatprep.subr.bf16.mxu0 0
    %7174 = vmatpush2.bf16.msra.mxu0 0
    %7175 = vmatprep.subr.bf16.mxu0 0
    %7176 = vmatpush2.bf16.msra.mxu0 0
    %7177 = vmatprep.subr.bf16.mxu0 0
    %7178 = vmatpush2.bf16.msra.mxu0 0
    %7179 = vmatprep.subr.bf16.mxu0 0
    %7180 = vmatpush2.bf16.msra.mxu0 0
    %7181 = vmatprep.subr.bf16.mxu0 0
    %7182 = vmatpush2.bf16.msra.mxu0 0
    %7183 = vmatprep.subr.bf16.mxu0 0
    %7184 = vmatpush2.bf16.msra.mxu0 0
    %7185 = vmatprep.mubr.bf16.mxu0 0
    %7186 = vmatmul.mubr.bf16.gmra.mxu0 %v7151
    %v7187 = vpop.f32.mrf.mxu0
    %v7188 = vadd.f32 0.0, %v7187
    %v7189 = vpop.f32.mrf.mxu0
    %v7190 = vadd.f32 0.0, %v7189
    %v7191 = vpop.f32.mrf.mxu0
    %v7192 = vpop.f32.mrf.mxu0
    %7193 = vdwg.mxu0
    %7194 = vmatprep.subr.bf16.mxu0 0
    %7195 = vmatpush1.bf16.msra.mxu0 0
    %7196 = vmatprep.subr.bf16.mxu0 0
    %7197 = vmatpush1.bf16.msra.mxu0 0
    %7198 = vmatprep.subr.bf16.mxu0 0
    %7199 = vmatpush1.bf16.msra.mxu0 0
    %7200 = vmatprep.subr.bf16.mxu0 0
    %7201 = vmatpush1.bf16.msra.mxu0 0
    %7202 = vmatprep.subr.bf16.mxu0 %v7133
    %7203 = vmatpush1.bf16.msra.mxu0 %v7132
    %7204 = vmatprep.subr.bf16.mxu0 %v7129
    %7205 = vmatpush1.bf16.msra.mxu0 %v7128
    %7206 = vmatprep.subr.bf16.mxu0 %v7125
    %7207 = vmatpush1.bf16.msra.mxu0 %v7124
    %7208 = vmatprep.subr.bf16.mxu0 %v7121
    %7209 = vmatpush1.bf16.msra.mxu0 %v7120
    %7210 = vmatprep.subr.bf16.mxu0 0
    %7211 = vmatpush2.bf16.msra.mxu0 0
    %7212 = vmatprep.subr.bf16.mxu0 0
    %7213 = vmatpush2.bf16.msra.mxu0 0
    %7214 = vmatprep.subr.bf16.mxu0 0
    %7215 = vmatpush2.bf16.msra.mxu0 0
    %7216 = vmatprep.subr.bf16.mxu0 0
    %7217 = vmatpush2.bf16.msra.mxu0 0
    %7218 = vmatprep.subr.bf16.mxu0 0
    %7219 = vmatpush2.bf16.msra.mxu0 0
    %7220 = vmatprep.subr.bf16.mxu0 0
    %7221 = vmatpush2.bf16.msra.mxu0 0
    %7222 = vmatprep.subr.bf16.mxu0 0
    %7223 = vmatpush2.bf16.msra.mxu0 0
    %7224 = vmatprep.subr.bf16.mxu0 0
    %7225 = vmatpush2.bf16.msra.mxu0 0
    %7226 = vmatprep.mubr.bf16.mxu0 0
    %7227 = vmatmul.mubr.bf16.gmra.mxu0 %v7151
    %v7228 = vpop.f32.mrf.mxu0
    %v7229 = vadd.f32 0.0, %v7228
    %v7230 = vpop.f32.mrf.mxu0
    %v7231 = vadd.f32 0.0, %v7230
    %v7232 = vpop.f32.mrf.mxu0
    %v7233 = vpop.f32.mrf.mxu0
    %7234 = vdwg.mxu0
    %v7235 = vadd.f32 %v7047, %v7188
    %v7236 = vadd.f32 %v7048, %v7190
    %v7237 = vadd.f32 %v7049, %v7229
    %v7238 = vadd.f32 %v7050, %v7231
    %s7239 = scalar_lea.vmem [#allocation12], 11
    %v7240 = vld [vmem:[%s7239] ss:$24 sm:$0x3]
    %v7241 = vpack.c.bf16 %v7240, %v7240
    %v7242 = vld [vmem:[#allocation3 + $0x580] sm:$0xff]
    %v7243 = vld [vmem:[#allocation3 + $0x588] sm:$0xff]
    %v7244 = vld [vmem:[#allocation3 + $0x590] sm:$0xff]
    %v7245 = vld [vmem:[#allocation3 + $0x598] sm:$0xff]
    %v7246 = vld [vmem:[#allocation3 + $0x5a0] sm:$0xff]
    %v7247 = vld [vmem:[#allocation3 + $0x5a8] sm:$0xff]
    %v7248 = vld [vmem:[#allocation3 + $0x5b0] sm:$0xff]
    %v7249 = vld [vmem:[#allocation3 + $0x5b8] sm:$0xff]
    %v7250 = vld [vmem:[#allocation3 + $0x5c0] sm:$0xff]
    %v7251 = vld [vmem:[#allocation3 + $0x5c8] sm:$0xff]
    %v7252 = vld [vmem:[#allocation3 + $0x5d0] sm:$0xff]
    %v7253 = vld [vmem:[#allocation3 + $0x5d8] sm:$0xff]
    %v7254 = vld [vmem:[#allocation3 + $0x5e0] sm:$0xff]
    %v7255 = vld [vmem:[#allocation3 + $0x5e8] sm:$0xff]
    %v7256 = vld [vmem:[#allocation3 + $0x5f0] sm:$0xff]
    %v7257 = vld [vmem:[#allocation3 + $0x5f8] sm:$0xff]
    %v7274 = vunpack.c.l.b16 %v7242
    %v7275 = vunpack.c.h.b16 %v7242
    %v7276 = vunpack.c.l.b16 %v7243
    %v7277 = vunpack.c.h.b16 %v7243
    %v7278 = vunpack.c.l.b16 %v7244
    %v7279 = vunpack.c.h.b16 %v7244
    %v7280 = vunpack.c.l.b16 %v7245
    %v7281 = vunpack.c.h.b16 %v7245
    %v7282 = vunpack.c.l.b16 %v7246
    %v7283 = vunpack.c.h.b16 %v7246
    %v7284 = vunpack.c.l.b16 %v7247
    %v7285 = vunpack.c.h.b16 %v7247
    %v7286 = vunpack.c.l.b16 %v7248
    %v7287 = vunpack.c.h.b16 %v7248
    %v7288 = vunpack.c.l.b16 %v7249
    %v7289 = vunpack.c.h.b16 %v7249
    %v7290 = vunpack.c.l.b16 %v7250
    %v7291 = vunpack.c.h.b16 %v7250
    %v7292 = vunpack.c.l.b16 %v7251
    %v7293 = vunpack.c.h.b16 %v7251
    %v7294 = vunpack.c.l.b16 %v7252
    %v7295 = vunpack.c.h.b16 %v7252
    %v7296 = vunpack.c.l.b16 %v7253
    %v7297 = vunpack.c.h.b16 %v7253
    %v7298 = vunpack.c.l.b16 %v7254
    %v7299 = vunpack.c.h.b16 %v7254
    %v7300 = vunpack.c.l.b16 %v7255
    %v7301 = vunpack.c.h.b16 %v7255
    %v7302 = vunpack.c.l.b16 %v7256
    %v7303 = vunpack.c.h.b16 %v7256
    %v7304 = vunpack.c.l.b16 %v7257
    %v7305 = vunpack.c.h.b16 %v7257
    %v7306 = vpack.c.b16 %v7278, %v7274
    %v7307 = vpack.c.b16 %v7279, %v7275
    %v7308 = vpack.c.b16 %v7280, %v7276
    %v7309 = vpack.c.b16 %v7281, %v7277
    %v7310 = vpack.c.b16 %v7286, %v7282
    %v7311 = vpack.c.b16 %v7287, %v7283
    %v7312 = vpack.c.b16 %v7288, %v7284
    %v7313 = vpack.c.b16 %v7289, %v7285
    %v7314 = vpack.c.b16 %v7294, %v7290
    %v7315 = vpack.c.b16 %v7295, %v7291
    %v7316 = vpack.c.b16 %v7296, %v7292
    %v7317 = vpack.c.b16 %v7297, %v7293
    %v7318 = vpack.c.b16 %v7302, %v7298
    %v7319 = vpack.c.b16 %v7303, %v7299
    %v7320 = vpack.c.b16 %v7304, %v7300
    %v7321 = vpack.c.b16 %v7305, %v7301
    %v7339 = vsel %vm5092, %v7241, 0
    %7341 = vmatprep.subr.bf16.mxu0 0
    %7342 = vmatpush1.bf16.msra.mxu0 0
    %7343 = vmatprep.subr.bf16.mxu0 0
    %7344 = vmatpush1.bf16.msra.mxu0 0
    %7345 = vmatprep.subr.bf16.mxu0 0
    %7346 = vmatpush1.bf16.msra.mxu0 0
    %7347 = vmatprep.subr.bf16.mxu0 0
    %7348 = vmatpush1.bf16.msra.mxu0 0
    %7349 = vmatprep.subr.bf16.mxu0 %v7319
    %7350 = vmatpush1.bf16.msra.mxu0 %v7318
    %7351 = vmatprep.subr.bf16.mxu0 %v7315
    %7352 = vmatpush1.bf16.msra.mxu0 %v7314
    %7353 = vmatprep.subr.bf16.mxu0 %v7311
    %7354 = vmatpush1.bf16.msra.mxu0 %v7310
    %7355 = vmatprep.subr.bf16.mxu0 %v7307
    %7356 = vmatpush1.bf16.msra.mxu0 %v7306
    %7357 = vmatprep.subr.bf16.mxu0 0
    %7358 = vmatpush2.bf16.msra.mxu0 0
    %7359 = vmatprep.subr.bf16.mxu0 0
    %7360 = vmatpush2.bf16.msra.mxu0 0
    %7361 = vmatprep.subr.bf16.mxu0 0
    %7362 = vmatpush2.bf16.msra.mxu0 0
    %7363 = vmatprep.subr.bf16.mxu0 0
    %7364 = vmatpush2.bf16.msra.mxu0 0
    %7365 = vmatprep.subr.bf16.mxu0 0
    %7366 = vmatpush2.bf16.msra.mxu0 0
    %7367 = vmatprep.subr.bf16.mxu0 0
    %7368 = vmatpush2.bf16.msra.mxu0 0
    %7369 = vmatprep.subr.bf16.mxu0 0
    %7370 = vmatpush2.bf16.msra.mxu0 0
    %7371 = vmatprep.subr.bf16.mxu0 0
    %7372 = vmatpush2.bf16.msra.mxu0 0
    %7373 = vmatprep.mubr.bf16.mxu0 0
    %7374 = vmatmul.mubr.bf16.gmra.mxu0 %v7339
    %v7375 = vpop.f32.mrf.mxu0
    %v7376 = vadd.f32 0.0, %v7375
    %v7377 = vpop.f32.mrf.mxu0
    %v7378 = vadd.f32 0.0, %v7377
    %v7379 = vpop.f32.mrf.mxu0
    %v7380 = vpop.f32.mrf.mxu0
    %7381 = vdwg.mxu0
    %7382 = vmatprep.subr.bf16.mxu0 0
    %7383 = vmatpush1.bf16.msra.mxu0 0
    %7384 = vmatprep.subr.bf16.mxu0 0
    %7385 = vmatpush1.bf16.msra.mxu0 0
    %7386 = vmatprep.subr.bf16.mxu0 0
    %7387 = vmatpush1.bf16.msra.mxu0 0
    %7388 = vmatprep.subr.bf16.mxu0 0
    %7389 = vmatpush1.bf16.msra.mxu0 0
    %7390 = vmatprep.subr.bf16.mxu0 %v7321
    %7391 = vmatpush1.bf16.msra.mxu0 %v7320
    %7392 = vmatprep.subr.bf16.mxu0 %v7317
    %7393 = vmatpush1.bf16.msra.mxu0 %v7316
    %7394 = vmatprep.subr.bf16.mxu0 %v7313
    %7395 = vmatpush1.bf16.msra.mxu0 %v7312
    %7396 = vmatprep.subr.bf16.mxu0 %v7309
    %7397 = vmatpush1.bf16.msra.mxu0 %v7308
    %7398 = vmatprep.subr.bf16.mxu0 0
    %7399 = vmatpush2.bf16.msra.mxu0 0
    %7400 = vmatprep.subr.bf16.mxu0 0
    %7401 = vmatpush2.bf16.msra.mxu0 0
    %7402 = vmatprep.subr.bf16.mxu0 0
    %7403 = vmatpush2.bf16.msra.mxu0 0
    %7404 = vmatprep.subr.bf16.mxu0 0
    %7405 = vmatpush2.bf16.msra.mxu0 0
    %7406 = vmatprep.subr.bf16.mxu0 0
    %7407 = vmatpush2.bf16.msra.mxu0 0
    %7408 = vmatprep.subr.bf16.mxu0 0
    %7409 = vmatpush2.bf16.msra.mxu0 0
    %7410 = vmatprep.subr.bf16.mxu0 0
    %7411 = vmatpush2.bf16.msra.mxu0 0
    %7412 = vmatprep.subr.bf16.mxu0 0
    %7413 = vmatpush2.bf16.msra.mxu0 0
    %7414 = vmatprep.mubr.bf16.mxu0 0
    %7415 = vmatmul.mubr.bf16.gmra.mxu0 %v7339
    %v7416 = vpop.f32.mrf.mxu0
    %v7417 = vadd.f32 0.0, %v7416
    %v7418 = vpop.f32.mrf.mxu0
    %v7419 = vadd.f32 0.0, %v7418
    %v7420 = vpop.f32.mrf.mxu0
    %v7421 = vpop.f32.mrf.mxu0
    %7422 = vdwg.mxu0
    %v7423 = vadd.f32 %v7235, %v7376
    %v7424 = vadd.f32 %v7236, %v7378
    %v7425 = vadd.f32 %v7237, %v7417
    %v7426 = vadd.f32 %v7238, %v7419
    %s7427 = scalar_lea.vmem [#allocation12], 12
    %v7428 = vld [vmem:[%s7427] ss:$24 sm:$0x3]
    %v7429 = vpack.c.bf16 %v7428, %v7428
    %v7430 = vld [vmem:[#allocation3 + $0x600] sm:$0xff]
    %v7431 = vld [vmem:[#allocation3 + $0x608] sm:$0xff]
    %v7432 = vld [vmem:[#allocation3 + $0x610] sm:$0xff]
    %v7433 = vld [vmem:[#allocation3 + $0x618] sm:$0xff]
    %v7434 = vld [vmem:[#allocation3 + $0x620] sm:$0xff]
    %v7435 = vld [vmem:[#allocation3 + $0x628] sm:$0xff]
    %v7436 = vld [vmem:[#allocation3 + $0x630] sm:$0xff]
    %v7437 = vld [vmem:[#allocation3 + $0x638] sm:$0xff]
    %v7438 = vld [vmem:[#allocation3 + $0x640] sm:$0xff]
    %v7439 = vld [vmem:[#allocation3 + $0x648] sm:$0xff]
    %v7440 = vld [vmem:[#allocation3 + $0x650] sm:$0xff]
    %v7441 = vld [vmem:[#allocation3 + $0x658] sm:$0xff]
    %v7442 = vld [vmem:[#allocation3 + $0x660] sm:$0xff]
    %v7443 = vld [vmem:[#allocation3 + $0x668] sm:$0xff]
    %v7444 = vld [vmem:[#allocation3 + $0x670] sm:$0xff]
    %v7445 = vld [vmem:[#allocation3 + $0x678] sm:$0xff]
    %v7462 = vunpack.c.l.b16 %v7430
    %v7463 = vunpack.c.h.b16 %v7430
    %v7464 = vunpack.c.l.b16 %v7431
    %v7465 = vunpack.c.h.b16 %v7431
    %v7466 = vunpack.c.l.b16 %v7432
    %v7467 = vunpack.c.h.b16 %v7432
    %v7468 = vunpack.c.l.b16 %v7433
    %v7469 = vunpack.c.h.b16 %v7433
    %v7470 = vunpack.c.l.b16 %v7434
    %v7471 = vunpack.c.h.b16 %v7434
    %v7472 = vunpack.c.l.b16 %v7435
    %v7473 = vunpack.c.h.b16 %v7435
    %v7474 = vunpack.c.l.b16 %v7436
    %v7475 = vunpack.c.h.b16 %v7436
    %v7476 = vunpack.c.l.b16 %v7437
    %v7477 = vunpack.c.h.b16 %v7437
    %v7478 = vunpack.c.l.b16 %v7438
    %v7479 = vunpack.c.h.b16 %v7438
    %v7480 = vunpack.c.l.b16 %v7439
    %v7481 = vunpack.c.h.b16 %v7439
    %v7482 = vunpack.c.l.b16 %v7440
    %v7483 = vunpack.c.h.b16 %v7440
    %v7484 = vunpack.c.l.b16 %v7441
    %v7485 = vunpack.c.h.b16 %v7441
    %v7486 = vunpack.c.l.b16 %v7442
    %v7487 = vunpack.c.h.b16 %v7442
    %v7488 = vunpack.c.l.b16 %v7443
    %v7489 = vunpack.c.h.b16 %v7443
    %v7490 = vunpack.c.l.b16 %v7444
    %v7491 = vunpack.c.h.b16 %v7444
    %v7492 = vunpack.c.l.b16 %v7445
    %v7493 = vunpack.c.h.b16 %v7445
    %v7494 = vpack.c.b16 %v7466, %v7462
    %v7495 = vpack.c.b16 %v7467, %v7463
    %v7496 = vpack.c.b16 %v7468, %v7464
    %v7497 = vpack.c.b16 %v7469, %v7465
    %v7498 = vpack.c.b16 %v7474, %v7470
    %v7499 = vpack.c.b16 %v7475, %v7471
    %v7500 = vpack.c.b16 %v7476, %v7472
    %v7501 = vpack.c.b16 %v7477, %v7473
    %v7502 = vpack.c.b16 %v7482, %v7478
    %v7503 = vpack.c.b16 %v7483, %v7479
    %v7504 = vpack.c.b16 %v7484, %v7480
    %v7505 = vpack.c.b16 %v7485, %v7481
    %v7506 = vpack.c.b16 %v7490, %v7486
    %v7507 = vpack.c.b16 %v7491, %v7487
    %v7508 = vpack.c.b16 %v7492, %v7488
    %v7509 = vpack.c.b16 %v7493, %v7489
    %v7527 = vsel %vm5092, %v7429, 0
    %7529 = vmatprep.subr.bf16.mxu0 0
    %7530 = vmatpush1.bf16.msra.mxu0 0
    %7531 = vmatprep.subr.bf16.mxu0 0
    %7532 = vmatpush1.bf16.msra.mxu0 0
    %7533 = vmatprep.subr.bf16.mxu0 0
    %7534 = vmatpush1.bf16.msra.mxu0 0
    %7535 = vmatprep.subr.bf16.mxu0 0
    %7536 = vmatpush1.bf16.msra.mxu0 0
    %7537 = vmatprep.subr.bf16.mxu0 %v7507
    %7538 = vmatpush1.bf16.msra.mxu0 %v7506
    %7539 = vmatprep.subr.bf16.mxu0 %v7503
    %7540 = vmatpush1.bf16.msra.mxu0 %v7502
    %7541 = vmatprep.subr.bf16.mxu0 %v7499
    %7542 = vmatpush1.bf16.msra.mxu0 %v7498
    %7543 = vmatprep.subr.bf16.mxu0 %v7495
    %7544 = vmatpush1.bf16.msra.mxu0 %v7494
    %7545 = vmatprep.subr.bf16.mxu0 0
    %7546 = vmatpush2.bf16.msra.mxu0 0
    %7547 = vmatprep.subr.bf16.mxu0 0
    %7548 = vmatpush2.bf16.msra.mxu0 0
    %7549 = vmatprep.subr.bf16.mxu0 0
    %7550 = vmatpush2.bf16.msra.mxu0 0
    %7551 = vmatprep.subr.bf16.mxu0 0
    %7552 = vmatpush2.bf16.msra.mxu0 0
    %7553 = vmatprep.subr.bf16.mxu0 0
    %7554 = vmatpush2.bf16.msra.mxu0 0
    %7555 = vmatprep.subr.bf16.mxu0 0
    %7556 = vmatpush2.bf16.msra.mxu0 0
    %7557 = vmatprep.subr.bf16.mxu0 0
    %7558 = vmatpush2.bf16.msra.mxu0 0
    %7559 = vmatprep.subr.bf16.mxu0 0
    %7560 = vmatpush2.bf16.msra.mxu0 0
    %7561 = vmatprep.mubr.bf16.mxu0 0
    %7562 = vmatmul.mubr.bf16.gmra.mxu0 %v7527
    %v7563 = vpop.f32.mrf.mxu0
    %v7564 = vadd.f32 0.0, %v7563
    %v7565 = vpop.f32.mrf.mxu0
    %v7566 = vadd.f32 0.0, %v7565
    %v7567 = vpop.f32.mrf.mxu0
    %v7568 = vpop.f32.mrf.mxu0
    %7569 = vdwg.mxu0
    %7570 = vmatprep.subr.bf16.mxu0 0
    %7571 = vmatpush1.bf16.msra.mxu0 0
    %7572 = vmatprep.subr.bf16.mxu0 0
    %7573 = vmatpush1.bf16.msra.mxu0 0
    %7574 = vmatprep.subr.bf16.mxu0 0
    %7575 = vmatpush1.bf16.msra.mxu0 0
    %7576 = vmatprep.subr.bf16.mxu0 0
    %7577 = vmatpush1.bf16.msra.mxu0 0
    %7578 = vmatprep.subr.bf16.mxu0 %v7509
    %7579 = vmatpush1.bf16.msra.mxu0 %v7508
    %7580 = vmatprep.subr.bf16.mxu0 %v7505
    %7581 = vmatpush1.bf16.msra.mxu0 %v7504
    %7582 = vmatprep.subr.bf16.mxu0 %v7501
    %7583 = vmatpush1.bf16.msra.mxu0 %v7500
    %7584 = vmatprep.subr.bf16.mxu0 %v7497
    %7585 = vmatpush1.bf16.msra.mxu0 %v7496
    %7586 = vmatprep.subr.bf16.mxu0 0
    %7587 = vmatpush2.bf16.msra.mxu0 0
    %7588 = vmatprep.subr.bf16.mxu0 0
    %7589 = vmatpush2.bf16.msra.mxu0 0
    %7590 = vmatprep.subr.bf16.mxu0 0
    %7591 = vmatpush2.bf16.msra.mxu0 0
    %7592 = vmatprep.subr.bf16.mxu0 0
    %7593 = vmatpush2.bf16.msra.mxu0 0
    %7594 = vmatprep.subr.bf16.mxu0 0
    %7595 = vmatpush2.bf16.msra.mxu0 0
    %7596 = vmatprep.subr.bf16.mxu0 0
    %7597 = vmatpush2.bf16.msra.mxu0 0
    %7598 = vmatprep.subr.bf16.mxu0 0
    %7599 = vmatpush2.bf16.msra.mxu0 0
    %7600 = vmatprep.subr.bf16.mxu0 0
    %7601 = vmatpush2.bf16.msra.mxu0 0
    %7602 = vmatprep.mubr.bf16.mxu0 0
    %7603 = vmatmul.mubr.bf16.gmra.mxu0 %v7527
    %v7604 = vpop.f32.mrf.mxu0
    %v7605 = vadd.f32 0.0, %v7604
    %v7606 = vpop.f32.mrf.mxu0
    %v7607 = vadd.f32 0.0, %v7606
    %v7608 = vpop.f32.mrf.mxu0
    %v7609 = vpop.f32.mrf.mxu0
    %7610 = vdwg.mxu0
    %v7611 = vadd.f32 %v7423, %v7564
    %v7612 = vadd.f32 %v7424, %v7566
    %v7613 = vadd.f32 %v7425, %v7605
    %v7614 = vadd.f32 %v7426, %v7607
    %s7615 = scalar_lea.vmem [#allocation12], 13
    %v7616 = vld [vmem:[%s7615] ss:$24 sm:$0x3]
    %v7617 = vpack.c.bf16 %v7616, %v7616
    %v7618 = vld [vmem:[#allocation3 + $0x680] sm:$0xff]
    %v7619 = vld [vmem:[#allocation3 + $0x688] sm:$0xff]
    %v7620 = vld [vmem:[#allocation3 + $0x690] sm:$0xff]
    %v7621 = vld [vmem:[#allocation3 + $0x698] sm:$0xff]
    %v7622 = vld [vmem:[#allocation3 + $0x6a0] sm:$0xff]
    %v7623 = vld [vmem:[#allocation3 + $0x6a8] sm:$0xff]
    %v7624 = vld [vmem:[#allocation3 + $0x6b0] sm:$0xff]
    %v7625 = vld [vmem:[#allocation3 + $0x6b8] sm:$0xff]
    %v7626 = vld [vmem:[#allocation3 + $0x6c0] sm:$0xff]
    %v7627 = vld [vmem:[#allocation3 + $0x6c8] sm:$0xff]
    %v7628 = vld [vmem:[#allocation3 + $0x6d0] sm:$0xff]
    %v7629 = vld [vmem:[#allocation3 + $0x6d8] sm:$0xff]
    %v7630 = vld [vmem:[#allocation3 + $0x6e0] sm:$0xff]
    %v7631 = vld [vmem:[#allocation3 + $0x6e8] sm:$0xff]
    %v7632 = vld [vmem:[#allocation3 + $0x6f0] sm:$0xff]
    %v7633 = vld [vmem:[#allocation3 + $0x6f8] sm:$0xff]
    %v7650 = vunpack.c.l.b16 %v7618
    %v7651 = vunpack.c.h.b16 %v7618
    %v7652 = vunpack.c.l.b16 %v7619
    %v7653 = vunpack.c.h.b16 %v7619
    %v7654 = vunpack.c.l.b16 %v7620
    %v7655 = vunpack.c.h.b16 %v7620
    %v7656 = vunpack.c.l.b16 %v7621
    %v7657 = vunpack.c.h.b16 %v7621
    %v7658 = vunpack.c.l.b16 %v7622
    %v7659 = vunpack.c.h.b16 %v7622
    %v7660 = vunpack.c.l.b16 %v7623
    %v7661 = vunpack.c.h.b16 %v7623
    %v7662 = vunpack.c.l.b16 %v7624
    %v7663 = vunpack.c.h.b16 %v7624
    %v7664 = vunpack.c.l.b16 %v7625
    %v7665 = vunpack.c.h.b16 %v7625
    %v7666 = vunpack.c.l.b16 %v7626
    %v7667 = vunpack.c.h.b16 %v7626
    %v7668 = vunpack.c.l.b16 %v7627
    %v7669 = vunpack.c.h.b16 %v7627
    %v7670 = vunpack.c.l.b16 %v7628
    %v7671 = vunpack.c.h.b16 %v7628
    %v7672 = vunpack.c.l.b16 %v7629
    %v7673 = vunpack.c.h.b16 %v7629
    %v7674 = vunpack.c.l.b16 %v7630
    %v7675 = vunpack.c.h.b16 %v7630
    %v7676 = vunpack.c.l.b16 %v7631
    %v7677 = vunpack.c.h.b16 %v7631
    %v7678 = vunpack.c.l.b16 %v7632
    %v7679 = vunpack.c.h.b16 %v7632
    %v7680 = vunpack.c.l.b16 %v7633
    %v7681 = vunpack.c.h.b16 %v7633
    %v7682 = vpack.c.b16 %v7654, %v7650
    %v7683 = vpack.c.b16 %v7655, %v7651
    %v7684 = vpack.c.b16 %v7656, %v7652
    %v7685 = vpack.c.b16 %v7657, %v7653
    %v7686 = vpack.c.b16 %v7662, %v7658
    %v7687 = vpack.c.b16 %v7663, %v7659
    %v7688 = vpack.c.b16 %v7664, %v7660
    %v7689 = vpack.c.b16 %v7665, %v7661
    %v7690 = vpack.c.b16 %v7670, %v7666
    %v7691 = vpack.c.b16 %v7671, %v7667
    %v7692 = vpack.c.b16 %v7672, %v7668
    %v7693 = vpack.c.b16 %v7673, %v7669
    %v7694 = vpack.c.b16 %v7678, %v7674
    %v7695 = vpack.c.b16 %v7679, %v7675
    %v7696 = vpack.c.b16 %v7680, %v7676
    %v7697 = vpack.c.b16 %v7681, %v7677
    %v7715 = vsel %vm5092, %v7617, 0
    %7717 = vmatprep.subr.bf16.mxu0 0
    %7718 = vmatpush1.bf16.msra.mxu0 0
    %7719 = vmatprep.subr.bf16.mxu0 0
    %7720 = vmatpush1.bf16.msra.mxu0 0
    %7721 = vmatprep.subr.bf16.mxu0 0
    %7722 = vmatpush1.bf16.msra.mxu0 0
    %7723 = vmatprep.subr.bf16.mxu0 0
    %7724 = vmatpush1.bf16.msra.mxu0 0
    %7725 = vmatprep.subr.bf16.mxu0 %v7695
    %7726 = vmatpush1.bf16.msra.mxu0 %v7694
    %7727 = vmatprep.subr.bf16.mxu0 %v7691
    %7728 = vmatpush1.bf16.msra.mxu0 %v7690
    %7729 = vmatprep.subr.bf16.mxu0 %v7687
    %7730 = vmatpush1.bf16.msra.mxu0 %v7686
    %7731 = vmatprep.subr.bf16.mxu0 %v7683
    %7732 = vmatpush1.bf16.msra.mxu0 %v7682
    %7733 = vmatprep.subr.bf16.mxu0 0
    %7734 = vmatpush2.bf16.msra.mxu0 0
    %7735 = vmatprep.subr.bf16.mxu0 0
    %7736 = vmatpush2.bf16.msra.mxu0 0
    %7737 = vmatprep.subr.bf16.mxu0 0
    %7738 = vmatpush2.bf16.msra.mxu0 0
    %7739 = vmatprep.subr.bf16.mxu0 0
    %7740 = vmatpush2.bf16.msra.mxu0 0
    %7741 = vmatprep.subr.bf16.mxu0 0
    %7742 = vmatpush2.bf16.msra.mxu0 0
    %7743 = vmatprep.subr.bf16.mxu0 0
    %7744 = vmatpush2.bf16.msra.mxu0 0
    %7745 = vmatprep.subr.bf16.mxu0 0
    %7746 = vmatpush2.bf16.msra.mxu0 0
    %7747 = vmatprep.subr.bf16.mxu0 0
    %7748 = vmatpush2.bf16.msra.mxu0 0
    %7749 = vmatprep.mubr.bf16.mxu0 0
    %7750 = vmatmul.mubr.bf16.gmra.mxu0 %v7715
    %v7751 = vpop.f32.mrf.mxu0
    %v7752 = vadd.f32 0.0, %v7751
    %v7753 = vpop.f32.mrf.mxu0
    %v7754 = vadd.f32 0.0, %v7753
    %v7755 = vpop.f32.mrf.mxu0
    %v7756 = vpop.f32.mrf.mxu0
    %7757 = vdwg.mxu0
    %7758 = vmatprep.subr.bf16.mxu0 0
    %7759 = vmatpush1.bf16.msra.mxu0 0
    %7760 = vmatprep.subr.bf16.mxu0 0
    %7761 = vmatpush1.bf16.msra.mxu0 0
    %7762 = vmatprep.subr.bf16.mxu0 0
    %7763 = vmatpush1.bf16.msra.mxu0 0
    %7764 = vmatprep.subr.bf16.mxu0 0
    %7765 = vmatpush1.bf16.msra.mxu0 0
    %7766 = vmatprep.subr.bf16.mxu0 %v7697
    %7767 = vmatpush1.bf16.msra.mxu0 %v7696
    %7768 = vmatprep.subr.bf16.mxu0 %v7693
    %7769 = vmatpush1.bf16.msra.mxu0 %v7692
    %7770 = vmatprep.subr.bf16.mxu0 %v7689
    %7771 = vmatpush1.bf16.msra.mxu0 %v7688
    %7772 = vmatprep.subr.bf16.mxu0 %v7685
    %7773 = vmatpush1.bf16.msra.mxu0 %v7684
    %7774 = vmatprep.subr.bf16.mxu0 0
    %7775 = vmatpush2.bf16.msra.mxu0 0
    %7776 = vmatprep.subr.bf16.mxu0 0
    %7777 = vmatpush2.bf16.msra.mxu0 0
    %7778 = vmatprep.subr.bf16.mxu0 0
    %7779 = vmatpush2.bf16.msra.mxu0 0
    %7780 = vmatprep.subr.bf16.mxu0 0
    %7781 = vmatpush2.bf16.msra.mxu0 0
    %7782 = vmatprep.subr.bf16.mxu0 0
    %7783 = vmatpush2.bf16.msra.mxu0 0
    %7784 = vmatprep.subr.bf16.mxu0 0
    %7785 = vmatpush2.bf16.msra.mxu0 0
    %7786 = vmatprep.subr.bf16.mxu0 0
    %7787 = vmatpush2.bf16.msra.mxu0 0
    %7788 = vmatprep.subr.bf16.mxu0 0
    %7789 = vmatpush2.bf16.msra.mxu0 0
    %7790 = vmatprep.mubr.bf16.mxu0 0
    %7791 = vmatmul.mubr.bf16.gmra.mxu0 %v7715
    %v7792 = vpop.f32.mrf.mxu0
    %v7793 = vadd.f32 0.0, %v7792
    %v7794 = vpop.f32.mrf.mxu0
    %v7795 = vadd.f32 0.0, %v7794
    %v7796 = vpop.f32.mrf.mxu0
    %v7797 = vpop.f32.mrf.mxu0
    %7798 = vdwg.mxu0
    %v7799 = vadd.f32 %v7611, %v7752
    %v7800 = vadd.f32 %v7612, %v7754
    %v7801 = vadd.f32 %v7613, %v7793
    %v7802 = vadd.f32 %v7614, %v7795
    %s7803 = scalar_lea.vmem [#allocation12], 14
    %v7804 = vld [vmem:[%s7803] ss:$24 sm:$0x3]
    %v7805 = vpack.c.bf16 %v7804, %v7804
    %v7806 = vld [vmem:[#allocation3 + $0x700] sm:$0xff]
    %v7807 = vld [vmem:[#allocation3 + $0x708] sm:$0xff]
    %v7808 = vld [vmem:[#allocation3 + $0x710] sm:$0xff]
    %v7809 = vld [vmem:[#allocation3 + $0x718] sm:$0xff]
    %v7810 = vld [vmem:[#allocation3 + $0x720] sm:$0xff]
    %v7811 = vld [vmem:[#allocation3 + $0x728] sm:$0xff]
    %v7812 = vld [vmem:[#allocation3 + $0x730] sm:$0xff]
    %v7813 = vld [vmem:[#allocation3 + $0x738] sm:$0xff]
    %v7814 = vld [vmem:[#allocation3 + $0x740] sm:$0xff]
    %v7815 = vld [vmem:[#allocation3 + $0x748] sm:$0xff]
    %v7816 = vld [vmem:[#allocation3 + $0x750] sm:$0xff]
    %v7817 = vld [vmem:[#allocation3 + $0x758] sm:$0xff]
    %v7818 = vld [vmem:[#allocation3 + $0x760] sm:$0xff]
    %v7819 = vld [vmem:[#allocation3 + $0x768] sm:$0xff]
    %v7820 = vld [vmem:[#allocation3 + $0x770] sm:$0xff]
    %v7821 = vld [vmem:[#allocation3 + $0x778] sm:$0xff]
    %v7838 = vunpack.c.l.b16 %v7806
    %v7839 = vunpack.c.h.b16 %v7806
    %v7840 = vunpack.c.l.b16 %v7807
    %v7841 = vunpack.c.h.b16 %v7807
    %v7842 = vunpack.c.l.b16 %v7808
    %v7843 = vunpack.c.h.b16 %v7808
    %v7844 = vunpack.c.l.b16 %v7809
    %v7845 = vunpack.c.h.b16 %v7809
    %v7846 = vunpack.c.l.b16 %v7810
    %v7847 = vunpack.c.h.b16 %v7810
    %v7848 = vunpack.c.l.b16 %v7811
    %v7849 = vunpack.c.h.b16 %v7811
    %v7850 = vunpack.c.l.b16 %v7812
    %v7851 = vunpack.c.h.b16 %v7812
    %v7852 = vunpack.c.l.b16 %v7813
    %v7853 = vunpack.c.h.b16 %v7813
    %v7854 = vunpack.c.l.b16 %v7814
    %v7855 = vunpack.c.h.b16 %v7814
    %v7856 = vunpack.c.l.b16 %v7815
    %v7857 = vunpack.c.h.b16 %v7815
    %v7858 = vunpack.c.l.b16 %v7816
    %v7859 = vunpack.c.h.b16 %v7816
    %v7860 = vunpack.c.l.b16 %v7817
    %v7861 = vunpack.c.h.b16 %v7817
    %v7862 = vunpack.c.l.b16 %v7818
    %v7863 = vunpack.c.h.b16 %v7818
    %v7864 = vunpack.c.l.b16 %v7819
    %v7865 = vunpack.c.h.b16 %v7819
    %v7866 = vunpack.c.l.b16 %v7820
    %v7867 = vunpack.c.h.b16 %v7820
    %v7868 = vunpack.c.l.b16 %v7821
    %v7869 = vunpack.c.h.b16 %v7821
    %v7870 = vpack.c.b16 %v7842, %v7838
    %v7871 = vpack.c.b16 %v7843, %v7839
    %v7872 = vpack.c.b16 %v7844, %v7840
    %v7873 = vpack.c.b16 %v7845, %v7841
    %v7874 = vpack.c.b16 %v7850, %v7846
    %v7875 = vpack.c.b16 %v7851, %v7847
    %v7876 = vpack.c.b16 %v7852, %v7848
    %v7877 = vpack.c.b16 %v7853, %v7849
    %v7878 = vpack.c.b16 %v7858, %v7854
    %v7879 = vpack.c.b16 %v7859, %v7855
    %v7880 = vpack.c.b16 %v7860, %v7856
    %v7881 = vpack.c.b16 %v7861, %v7857
    %v7882 = vpack.c.b16 %v7866, %v7862
    %v7883 = vpack.c.b16 %v7867, %v7863
    %v7884 = vpack.c.b16 %v7868, %v7864
    %v7885 = vpack.c.b16 %v7869, %v7865
    %v7903 = vsel %vm5092, %v7805, 0
    %7905 = vmatprep.subr.bf16.mxu0 0
    %7906 = vmatpush1.bf16.msra.mxu0 0
    %7907 = vmatprep.subr.bf16.mxu0 0
    %7908 = vmatpush1.bf16.msra.mxu0 0
    %7909 = vmatprep.subr.bf16.mxu0 0
    %7910 = vmatpush1.bf16.msra.mxu0 0
    %7911 = vmatprep.subr.bf16.mxu0 0
    %7912 = vmatpush1.bf16.msra.mxu0 0
    %7913 = vmatprep.subr.bf16.mxu0 %v7883
    %7914 = vmatpush1.bf16.msra.mxu0 %v7882
    %7915 = vmatprep.subr.bf16.mxu0 %v7879
    %7916 = vmatpush1.bf16.msra.mxu0 %v7878
    %7917 = vmatprep.subr.bf16.mxu0 %v7875
    %7918 = vmatpush1.bf16.msra.mxu0 %v7874
    %7919 = vmatprep.subr.bf16.mxu0 %v7871
    %7920 = vmatpush1.bf16.msra.mxu0 %v7870
    %7921 = vmatprep.subr.bf16.mxu0 0
    %7922 = vmatpush2.bf16.msra.mxu0 0
    %7923 = vmatprep.subr.bf16.mxu0 0
    %7924 = vmatpush2.bf16.msra.mxu0 0
    %7925 = vmatprep.subr.bf16.mxu0 0
    %7926 = vmatpush2.bf16.msra.mxu0 0
    %7927 = vmatprep.subr.bf16.mxu0 0
    %7928 = vmatpush2.bf16.msra.mxu0 0
    %7929 = vmatprep.subr.bf16.mxu0 0
    %7930 = vmatpush2.bf16.msra.mxu0 0
    %7931 = vmatprep.subr.bf16.mxu0 0
    %7932 = vmatpush2.bf16.msra.mxu0 0
    %7933 = vmatprep.subr.bf16.mxu0 0
    %7934 = vmatpush2.bf16.msra.mxu0 0
    %7935 = vmatprep.subr.bf16.mxu0 0
    %7936 = vmatpush2.bf16.msra.mxu0 0
    %7937 = vmatprep.mubr.bf16.mxu0 0
    %7938 = vmatmul.mubr.bf16.gmra.mxu0 %v7903
    %v7939 = vpop.f32.mrf.mxu0
    %v7940 = vadd.f32 0.0, %v7939
    %v7941 = vpop.f32.mrf.mxu0
    %v7942 = vadd.f32 0.0, %v7941
    %v7943 = vpop.f32.mrf.mxu0
    %v7944 = vpop.f32.mrf.mxu0
    %7945 = vdwg.mxu0
    %7946 = vmatprep.subr.bf16.mxu0 0
    %7947 = vmatpush1.bf16.msra.mxu0 0
    %7948 = vmatprep.subr.bf16.mxu0 0
    %7949 = vmatpush1.bf16.msra.mxu0 0
    %7950 = vmatprep.subr.bf16.mxu0 0
    %7951 = vmatpush1.bf16.msra.mxu0 0
    %7952 = vmatprep.subr.bf16.mxu0 0
    %7953 = vmatpush1.bf16.msra.mxu0 0
    %7954 = vmatprep.subr.bf16.mxu0 %v7885
    %7955 = vmatpush1.bf16.msra.mxu0 %v7884
    %7956 = vmatprep.subr.bf16.mxu0 %v7881
    %7957 = vmatpush1.bf16.msra.mxu0 %v7880
    %7958 = vmatprep.subr.bf16.mxu0 %v7877
    %7959 = vmatpush1.bf16.msra.mxu0 %v7876
    %7960 = vmatprep.subr.bf16.mxu0 %v7873
    %7961 = vmatpush1.bf16.msra.mxu0 %v7872
    %7962 = vmatprep.subr.bf16.mxu0 0
    %7963 = vmatpush2.bf16.msra.mxu0 0
    %7964 = vmatprep.subr.bf16.mxu0 0
    %7965 = vmatpush2.bf16.msra.mxu0 0
    %7966 = vmatprep.subr.bf16.mxu0 0
    %7967 = vmatpush2.bf16.msra.mxu0 0
    %7968 = vmatprep.subr.bf16.mxu0 0
    %7969 = vmatpush2.bf16.msra.mxu0 0
    %7970 = vmatprep.subr.bf16.mxu0 0
    %7971 = vmatpush2.bf16.msra.mxu0 0
    %7972 = vmatprep.subr.bf16.mxu0 0
    %7973 = vmatpush2.bf16.msra.mxu0 0
    %7974 = vmatprep.subr.bf16.mxu0 0
    %7975 = vmatpush2.bf16.msra.mxu0 0
    %7976 = vmatprep.subr.bf16.mxu0 0
    %7977 = vmatpush2.bf16.msra.mxu0 0
    %7978 = vmatprep.mubr.bf16.mxu0 0
    %7979 = vmatmul.mubr.bf16.gmra.mxu0 %v7903
    %v7980 = vpop.f32.mrf.mxu0
    %v7981 = vadd.f32 0.0, %v7980
    %v7982 = vpop.f32.mrf.mxu0
    %v7983 = vadd.f32 0.0, %v7982
    %v7984 = vpop.f32.mrf.mxu0
    %v7985 = vpop.f32.mrf.mxu0
    %7986 = vdwg.mxu0
    %v7987 = vadd.f32 %v7799, %v7940
    %v7988 = vadd.f32 %v7800, %v7942
    %v7989 = vadd.f32 %v7801, %v7981
    %v7990 = vadd.f32 %v7802, %v7983
    %s7991 = scalar_lea.vmem [#allocation12], 15
    %v7992 = vld [vmem:[%s7991] ss:$24 sm:$0x3]
    %v7993 = vpack.c.bf16 %v7992, %v7992
    %v7994 = vld [vmem:[#allocation3 + $0x780] sm:$0xff]
    %v7995 = vld [vmem:[#allocation3 + $0x788] sm:$0xff]
    %v7996 = vld [vmem:[#allocation3 + $0x790] sm:$0xff]
    %v7997 = vld [vmem:[#allocation3 + $0x798] sm:$0xff]
    %v7998 = vld [vmem:[#allocation3 + $0x7a0] sm:$0xff]
    %v7999 = vld [vmem:[#allocation3 + $0x7a8] sm:$0xff]
    %v8000 = vld [vmem:[#allocation3 + $0x7b0] sm:$0xff]
    %v8001 = vld [vmem:[#allocation3 + $0x7b8] sm:$0xff]
    %v8002 = vld [vmem:[#allocation3 + $0x7c0] sm:$0xff]
    %v8003 = vld [vmem:[#allocation3 + $0x7c8] sm:$0xff]
    %v8004 = vld [vmem:[#allocation3 + $0x7d0] sm:$0xff]
    %v8005 = vld [vmem:[#allocation3 + $0x7d8] sm:$0xff]
    %v8006 = vld [vmem:[#allocation3 + $0x7e0] sm:$0xff]
    %v8007 = vld [vmem:[#allocation3 + $0x7e8] sm:$0xff]
    %v8008 = vld [vmem:[#allocation3 + $0x7f0] sm:$0xff]
    %v8009 = vld [vmem:[#allocation3 + $0x7f8] sm:$0xff]
    %v8026 = vunpack.c.l.b16 %v7994
    %v8027 = vunpack.c.h.b16 %v7994
    %v8028 = vunpack.c.l.b16 %v7995
    %v8029 = vunpack.c.h.b16 %v7995
    %v8030 = vunpack.c.l.b16 %v7996
    %v8031 = vunpack.c.h.b16 %v7996
    %v8032 = vunpack.c.l.b16 %v7997
    %v8033 = vunpack.c.h.b16 %v7997
    %v8034 = vunpack.c.l.b16 %v7998
    %v8035 = vunpack.c.h.b16 %v7998
    %v8036 = vunpack.c.l.b16 %v7999
    %v8037 = vunpack.c.h.b16 %v7999
    %v8038 = vunpack.c.l.b16 %v8000
    %v8039 = vunpack.c.h.b16 %v8000
    %v8040 = vunpack.c.l.b16 %v8001
    %v8041 = vunpack.c.h.b16 %v8001
    %v8042 = vunpack.c.l.b16 %v8002
    %v8043 = vunpack.c.h.b16 %v8002
    %v8044 = vunpack.c.l.b16 %v8003
    %v8045 = vunpack.c.h.b16 %v8003
    %v8046 = vunpack.c.l.b16 %v8004
    %v8047 = vunpack.c.h.b16 %v8004
    %v8048 = vunpack.c.l.b16 %v8005
    %v8049 = vunpack.c.h.b16 %v8005
    %v8050 = vunpack.c.l.b16 %v8006
    %v8051 = vunpack.c.h.b16 %v8006
    %v8052 = vunpack.c.l.b16 %v8007
    %v8053 = vunpack.c.h.b16 %v8007
    %v8054 = vunpack.c.l.b16 %v8008
    %v8055 = vunpack.c.h.b16 %v8008
    %v8056 = vunpack.c.l.b16 %v8009
    %v8057 = vunpack.c.h.b16 %v8009
    %v8058 = vpack.c.b16 %v8030, %v8026
    %v8059 = vpack.c.b16 %v8031, %v8027
    %v8060 = vpack.c.b16 %v8032, %v8028
    %v8061 = vpack.c.b16 %v8033, %v8029
    %v8062 = vpack.c.b16 %v8038, %v8034
    %v8063 = vpack.c.b16 %v8039, %v8035
    %v8064 = vpack.c.b16 %v8040, %v8036
    %v8065 = vpack.c.b16 %v8041, %v8037
    %v8066 = vpack.c.b16 %v8046, %v8042
    %v8067 = vpack.c.b16 %v8047, %v8043
    %v8068 = vpack.c.b16 %v8048, %v8044
    %v8069 = vpack.c.b16 %v8049, %v8045
    %v8070 = vpack.c.b16 %v8054, %v8050
    %v8071 = vpack.c.b16 %v8055, %v8051
    %v8072 = vpack.c.b16 %v8056, %v8052
    %v8073 = vpack.c.b16 %v8057, %v8053
    %v8091 = vsel %vm5092, %v7993, 0
    %8093 = vmatprep.subr.bf16.mxu0 0
    %8094 = vmatpush1.bf16.msra.mxu0 0
    %8095 = vmatprep.subr.bf16.mxu0 0
    %8096 = vmatpush1.bf16.msra.mxu0 0
    %8097 = vmatprep.subr.bf16.mxu0 0
    %8098 = vmatpush1.bf16.msra.mxu0 0
    %8099 = vmatprep.subr.bf16.mxu0 0
    %8100 = vmatpush1.bf16.msra.mxu0 0
    %8101 = vmatprep.subr.bf16.mxu0 %v8071
    %8102 = vmatpush1.bf16.msra.mxu0 %v8070
    %8103 = vmatprep.subr.bf16.mxu0 %v8067
    %8104 = vmatpush1.bf16.msra.mxu0 %v8066
    %8105 = vmatprep.subr.bf16.mxu0 %v8063
    %8106 = vmatpush1.bf16.msra.mxu0 %v8062
    %8107 = vmatprep.subr.bf16.mxu0 %v8059
    %8108 = vmatpush1.bf16.msra.mxu0 %v8058
    %8109 = vmatprep.subr.bf16.mxu0 0
    %8110 = vmatpush2.bf16.msra.mxu0 0
    %8111 = vmatprep.subr.bf16.mxu0 0
    %8112 = vmatpush2.bf16.msra.mxu0 0
    %8113 = vmatprep.subr.bf16.mxu0 0
    %8114 = vmatpush2.bf16.msra.mxu0 0
    %8115 = vmatprep.subr.bf16.mxu0 0
    %8116 = vmatpush2.bf16.msra.mxu0 0
    %8117 = vmatprep.subr.bf16.mxu0 0
    %8118 = vmatpush2.bf16.msra.mxu0 0
    %8119 = vmatprep.subr.bf16.mxu0 0
    %8120 = vmatpush2.bf16.msra.mxu0 0
    %8121 = vmatprep.subr.bf16.mxu0 0
    %8122 = vmatpush2.bf16.msra.mxu0 0
    %8123 = vmatprep.subr.bf16.mxu0 0
    %8124 = vmatpush2.bf16.msra.mxu0 0
    %8125 = vmatprep.mubr.bf16.mxu0 0
    %8126 = vmatmul.mubr.bf16.gmra.mxu0 %v8091
    %v8127 = vpop.f32.mrf.mxu0
    %v8128 = vadd.f32 0.0, %v8127
    %v8129 = vpop.f32.mrf.mxu0
    %v8130 = vadd.f32 0.0, %v8129
    %v8131 = vpop.f32.mrf.mxu0
    %v8132 = vpop.f32.mrf.mxu0
    %8133 = vdwg.mxu0
    %8134 = vmatprep.subr.bf16.mxu0 0
    %8135 = vmatpush1.bf16.msra.mxu0 0
    %8136 = vmatprep.subr.bf16.mxu0 0
    %8137 = vmatpush1.bf16.msra.mxu0 0
    %8138 = vmatprep.subr.bf16.mxu0 0
    %8139 = vmatpush1.bf16.msra.mxu0 0
    %8140 = vmatprep.subr.bf16.mxu0 0
    %8141 = vmatpush1.bf16.msra.mxu0 0
    %8142 = vmatprep.subr.bf16.mxu0 %v8073
    %8143 = vmatpush1.bf16.msra.mxu0 %v8072
    %8144 = vmatprep.subr.bf16.mxu0 %v8069
    %8145 = vmatpush1.bf16.msra.mxu0 %v8068
    %8146 = vmatprep.subr.bf16.mxu0 %v8065
    %8147 = vmatpush1.bf16.msra.mxu0 %v8064
    %8148 = vmatprep.subr.bf16.mxu0 %v8061
    %8149 = vmatpush1.bf16.msra.mxu0 %v8060
    %8150 = vmatprep.subr.bf16.mxu0 0
    %8151 = vmatpush2.bf16.msra.mxu0 0
    %8152 = vmatprep.subr.bf16.mxu0 0
    %8153 = vmatpush2.bf16.msra.mxu0 0
    %8154 = vmatprep.subr.bf16.mxu0 0
    %8155 = vmatpush2.bf16.msra.mxu0 0
    %8156 = vmatprep.subr.bf16.mxu0 0
    %8157 = vmatpush2.bf16.msra.mxu0 0
    %8158 = vmatprep.subr.bf16.mxu0 0
    %8159 = vmatpush2.bf16.msra.mxu0 0
    %8160 = vmatprep.subr.bf16.mxu0 0
    %8161 = vmatpush2.bf16.msra.mxu0 0
    %8162 = vmatprep.subr.bf16.mxu0 0
    %8163 = vmatpush2.bf16.msra.mxu0 0
    %8164 = vmatprep.subr.bf16.mxu0 0
    %8165 = vmatpush2.bf16.msra.mxu0 0
    %8166 = vmatprep.mubr.bf16.mxu0 0
    %8167 = vmatmul.mubr.bf16.gmra.mxu0 %v8091
    %v8168 = vpop.f32.mrf.mxu0
    %v8169 = vadd.f32 0.0, %v8168
    %v8170 = vpop.f32.mrf.mxu0
    %v8171 = vadd.f32 0.0, %v8170
    %v8172 = vpop.f32.mrf.mxu0
    %v8173 = vpop.f32.mrf.mxu0
    %8174 = vdwg.mxu0
    %v8175 = vadd.f32 %v7987, %v8128
    %v8176 = vadd.f32 %v7988, %v8130
    %v8177 = vadd.f32 %v7989, %v8169
    %v8178 = vadd.f32 %v7990, %v8171
    %s8179 = scalar_lea.vmem [#allocation12], 16
    %v8180 = vld [vmem:[%s8179] ss:$24 sm:$0x3]
    %v8181 = vpack.c.bf16 %v8180, %v8180
    %v8182 = vld [vmem:[#allocation3 + $0x800] sm:$0xff]
    %v8183 = vld [vmem:[#allocation3 + $0x808] sm:$0xff]
    %v8184 = vld [vmem:[#allocation3 + $0x810] sm:$0xff]
    %v8185 = vld [vmem:[#allocation3 + $0x818] sm:$0xff]
    %v8186 = vld [vmem:[#allocation3 + $0x820] sm:$0xff]
    %v8187 = vld [vmem:[#allocation3 + $0x828] sm:$0xff]
    %v8188 = vld [vmem:[#allocation3 + $0x830] sm:$0xff]
    %v8189 = vld [vmem:[#allocation3 + $0x838] sm:$0xff]
    %v8190 = vld [vmem:[#allocation3 + $0x840] sm:$0xff]
    %v8191 = vld [vmem:[#allocation3 + $0x848] sm:$0xff]
    %v8192 = vld [vmem:[#allocation3 + $0x850] sm:$0xff]
    %v8193 = vld [vmem:[#allocation3 + $0x858] sm:$0xff]
    %v8194 = vld [vmem:[#allocation3 + $0x860] sm:$0xff]
    %v8195 = vld [vmem:[#allocation3 + $0x868] sm:$0xff]
    %v8196 = vld [vmem:[#allocation3 + $0x870] sm:$0xff]
    %v8197 = vld [vmem:[#allocation3 + $0x878] sm:$0xff]
    %v8214 = vunpack.c.l.b16 %v8182
    %v8215 = vunpack.c.h.b16 %v8182
    %v8216 = vunpack.c.l.b16 %v8183
    %v8217 = vunpack.c.h.b16 %v8183
    %v8218 = vunpack.c.l.b16 %v8184
    %v8219 = vunpack.c.h.b16 %v8184
    %v8220 = vunpack.c.l.b16 %v8185
    %v8221 = vunpack.c.h.b16 %v8185
    %v8222 = vunpack.c.l.b16 %v8186
    %v8223 = vunpack.c.h.b16 %v8186
    %v8224 = vunpack.c.l.b16 %v8187
    %v8225 = vunpack.c.h.b16 %v8187
    %v8226 = vunpack.c.l.b16 %v8188
    %v8227 = vunpack.c.h.b16 %v8188
    %v8228 = vunpack.c.l.b16 %v8189
    %v8229 = vunpack.c.h.b16 %v8189
    %v8230 = vunpack.c.l.b16 %v8190
    %v8231 = vunpack.c.h.b16 %v8190
    %v8232 = vunpack.c.l.b16 %v8191
    %v8233 = vunpack.c.h.b16 %v8191
    %v8234 = vunpack.c.l.b16 %v8192
    %v8235 = vunpack.c.h.b16 %v8192
    %v8236 = vunpack.c.l.b16 %v8193
    %v8237 = vunpack.c.h.b16 %v8193
    %v8238 = vunpack.c.l.b16 %v8194
    %v8239 = vunpack.c.h.b16 %v8194
    %v8240 = vunpack.c.l.b16 %v8195
    %v8241 = vunpack.c.h.b16 %v8195
    %v8242 = vunpack.c.l.b16 %v8196
    %v8243 = vunpack.c.h.b16 %v8196
    %v8244 = vunpack.c.l.b16 %v8197
    %v8245 = vunpack.c.h.b16 %v8197
    %v8246 = vpack.c.b16 %v8218, %v8214
    %v8247 = vpack.c.b16 %v8219, %v8215
    %v8248 = vpack.c.b16 %v8220, %v8216
    %v8249 = vpack.c.b16 %v8221, %v8217
    %v8250 = vpack.c.b16 %v8226, %v8222
    %v8251 = vpack.c.b16 %v8227, %v8223
    %v8252 = vpack.c.b16 %v8228, %v8224
    %v8253 = vpack.c.b16 %v8229, %v8225
    %v8254 = vpack.c.b16 %v8234, %v8230
    %v8255 = vpack.c.b16 %v8235, %v8231
    %v8256 = vpack.c.b16 %v8236, %v8232
    %v8257 = vpack.c.b16 %v8237, %v8233
    %v8258 = vpack.c.b16 %v8242, %v8238
    %v8259 = vpack.c.b16 %v8243, %v8239
    %v8260 = vpack.c.b16 %v8244, %v8240
    %v8261 = vpack.c.b16 %v8245, %v8241
    %v8279 = vsel %vm5092, %v8181, 0
    %8281 = vmatprep.subr.bf16.mxu0 0
    %8282 = vmatpush1.bf16.msra.mxu0 0
    %8283 = vmatprep.subr.bf16.mxu0 0
    %8284 = vmatpush1.bf16.msra.mxu0 0
    %8285 = vmatprep.subr.bf16.mxu0 0
    %8286 = vmatpush1.bf16.msra.mxu0 0
    %8287 = vmatprep.subr.bf16.mxu0 0
    %8288 = vmatpush1.bf16.msra.mxu0 0
    %8289 = vmatprep.subr.bf16.mxu0 %v8259
    %8290 = vmatpush1.bf16.msra.mxu0 %v8258
    %8291 = vmatprep.subr.bf16.mxu0 %v8255
    %8292 = vmatpush1.bf16.msra.mxu0 %v8254
    %8293 = vmatprep.subr.bf16.mxu0 %v8251
    %8294 = vmatpush1.bf16.msra.mxu0 %v8250
    %8295 = vmatprep.subr.bf16.mxu0 %v8247
    %8296 = vmatpush1.bf16.msra.mxu0 %v8246
    %8297 = vmatprep.subr.bf16.mxu0 0
    %8298 = vmatpush2.bf16.msra.mxu0 0
    %8299 = vmatprep.subr.bf16.mxu0 0
    %8300 = vmatpush2.bf16.msra.mxu0 0
    %8301 = vmatprep.subr.bf16.mxu0 0
    %8302 = vmatpush2.bf16.msra.mxu0 0
    %8303 = vmatprep.subr.bf16.mxu0 0
    %8304 = vmatpush2.bf16.msra.mxu0 0
    %8305 = vmatprep.subr.bf16.mxu0 0
    %8306 = vmatpush2.bf16.msra.mxu0 0
    %8307 = vmatprep.subr.bf16.mxu0 0
    %8308 = vmatpush2.bf16.msra.mxu0 0
    %8309 = vmatprep.subr.bf16.mxu0 0
    %8310 = vmatpush2.bf16.msra.mxu0 0
    %8311 = vmatprep.subr.bf16.mxu0 0
    %8312 = vmatpush2.bf16.msra.mxu0 0
    %8313 = vmatprep.mubr.bf16.mxu0 0
    %8314 = vmatmul.mubr.bf16.gmra.mxu0 %v8279
    %v8315 = vpop.f32.mrf.mxu0
    %v8316 = vadd.f32 0.0, %v8315
    %v8317 = vpop.f32.mrf.mxu0
    %v8318 = vadd.f32 0.0, %v8317
    %v8319 = vpop.f32.mrf.mxu0
    %v8320 = vpop.f32.mrf.mxu0
    %8321 = vdwg.mxu0
    %8322 = vmatprep.subr.bf16.mxu0 0
    %8323 = vmatpush1.bf16.msra.mxu0 0
    %8324 = vmatprep.subr.bf16.mxu0 0
    %8325 = vmatpush1.bf16.msra.mxu0 0
    %8326 = vmatprep.subr.bf16.mxu0 0
    %8327 = vmatpush1.bf16.msra.mxu0 0
    %8328 = vmatprep.subr.bf16.mxu0 0
    %8329 = vmatpush1.bf16.msra.mxu0 0
    %8330 = vmatprep.subr.bf16.mxu0 %v8261
    %8331 = vmatpush1.bf16.msra.mxu0 %v8260
    %8332 = vmatprep.subr.bf16.mxu0 %v8257
    %8333 = vmatpush1.bf16.msra.mxu0 %v8256
    %8334 = vmatprep.subr.bf16.mxu0 %v8253
    %8335 = vmatpush1.bf16.msra.mxu0 %v8252
    %8336 = vmatprep.subr.bf16.mxu0 %v8249
    %8337 = vmatpush1.bf16.msra.mxu0 %v8248
    %8338 = vmatprep.subr.bf16.mxu0 0
    %8339 = vmatpush2.bf16.msra.mxu0 0
    %8340 = vmatprep.subr.bf16.mxu0 0
    %8341 = vmatpush2.bf16.msra.mxu0 0
    %8342 = vmatprep.subr.bf16.mxu0 0
    %8343 = vmatpush2.bf16.msra.mxu0 0
    %8344 = vmatprep.subr.bf16.mxu0 0
    %8345 = vmatpush2.bf16.msra.mxu0 0
    %8346 = vmatprep.subr.bf16.mxu0 0
    %8347 = vmatpush2.bf16.msra.mxu0 0
    %8348 = vmatprep.subr.bf16.mxu0 0
    %8349 = vmatpush2.bf16.msra.mxu0 0
    %8350 = vmatprep.subr.bf16.mxu0 0
    %8351 = vmatpush2.bf16.msra.mxu0 0
    %8352 = vmatprep.subr.bf16.mxu0 0
    %8353 = vmatpush2.bf16.msra.mxu0 0
    %8354 = vmatprep.mubr.bf16.mxu0 0
    %8355 = vmatmul.mubr.bf16.gmra.mxu0 %v8279
    %v8356 = vpop.f32.mrf.mxu0
    %v8357 = vadd.f32 0.0, %v8356
    %v8358 = vpop.f32.mrf.mxu0
    %v8359 = vadd.f32 0.0, %v8358
    %v8360 = vpop.f32.mrf.mxu0
    %v8361 = vpop.f32.mrf.mxu0
    %8362 = vdwg.mxu0
    %v8363 = vadd.f32 %v8175, %v8316
    %v8364 = vadd.f32 %v8176, %v8318
    %v8365 = vadd.f32 %v8177, %v8357
    %v8366 = vadd.f32 %v8178, %v8359
    %s8367 = scalar_lea.vmem [#allocation12], 17
    %v8368 = vld [vmem:[%s8367] ss:$24 sm:$0x3]
    %v8369 = vpack.c.bf16 %v8368, %v8368
    %v8370 = vld [vmem:[#allocation3 + $0x880] sm:$0xff]
    %v8371 = vld [vmem:[#allocation3 + $0x888] sm:$0xff]
    %v8372 = vld [vmem:[#allocation3 + $0x890] sm:$0xff]
    %v8373 = vld [vmem:[#allocation3 + $0x898] sm:$0xff]
    %v8374 = vld [vmem:[#allocation3 + $0x8a0] sm:$0xff]
    %v8375 = vld [vmem:[#allocation3 + $0x8a8] sm:$0xff]
    %v8376 = vld [vmem:[#allocation3 + $0x8b0] sm:$0xff]
    %v8377 = vld [vmem:[#allocation3 + $0x8b8] sm:$0xff]
    %v8378 = vld [vmem:[#allocation3 + $0x8c0] sm:$0xff]
    %v8379 = vld [vmem:[#allocation3 + $0x8c8] sm:$0xff]
    %v8380 = vld [vmem:[#allocation3 + $0x8d0] sm:$0xff]
    %v8381 = vld [vmem:[#allocation3 + $0x8d8] sm:$0xff]
    %v8382 = vld [vmem:[#allocation3 + $0x8e0] sm:$0xff]
    %v8383 = vld [vmem:[#allocation3 + $0x8e8] sm:$0xff]
    %v8384 = vld [vmem:[#allocation3 + $0x8f0] sm:$0xff]
    %v8385 = vld [vmem:[#allocation3 + $0x8f8] sm:$0xff]
    %v8402 = vunpack.c.l.b16 %v8370
    %v8403 = vunpack.c.h.b16 %v8370
    %v8404 = vunpack.c.l.b16 %v8371
    %v8405 = vunpack.c.h.b16 %v8371
    %v8406 = vunpack.c.l.b16 %v8372
    %v8407 = vunpack.c.h.b16 %v8372
    %v8408 = vunpack.c.l.b16 %v8373
    %v8409 = vunpack.c.h.b16 %v8373
    %v8410 = vunpack.c.l.b16 %v8374
    %v8411 = vunpack.c.h.b16 %v8374
    %v8412 = vunpack.c.l.b16 %v8375
    %v8413 = vunpack.c.h.b16 %v8375
    %v8414 = vunpack.c.l.b16 %v8376
    %v8415 = vunpack.c.h.b16 %v8376
    %v8416 = vunpack.c.l.b16 %v8377
    %v8417 = vunpack.c.h.b16 %v8377
    %v8418 = vunpack.c.l.b16 %v8378
    %v8419 = vunpack.c.h.b16 %v8378
    %v8420 = vunpack.c.l.b16 %v8379
    %v8421 = vunpack.c.h.b16 %v8379
    %v8422 = vunpack.c.l.b16 %v8380
    %v8423 = vunpack.c.h.b16 %v8380
    %v8424 = vunpack.c.l.b16 %v8381
    %v8425 = vunpack.c.h.b16 %v8381
    %v8426 = vunpack.c.l.b16 %v8382
    %v8427 = vunpack.c.h.b16 %v8382
    %v8428 = vunpack.c.l.b16 %v8383
    %v8429 = vunpack.c.h.b16 %v8383
    %v8430 = vunpack.c.l.b16 %v8384
    %v8431 = vunpack.c.h.b16 %v8384
    %v8432 = vunpack.c.l.b16 %v8385
    %v8433 = vunpack.c.h.b16 %v8385
    %v8434 = vpack.c.b16 %v8406, %v8402
    %v8435 = vpack.c.b16 %v8407, %v8403
    %v8436 = vpack.c.b16 %v8408, %v8404
    %v8437 = vpack.c.b16 %v8409, %v8405
    %v8438 = vpack.c.b16 %v8414, %v8410
    %v8439 = vpack.c.b16 %v8415, %v8411
    %v8440 = vpack.c.b16 %v8416, %v8412
    %v8441 = vpack.c.b16 %v8417, %v8413
    %v8442 = vpack.c.b16 %v8422, %v8418
    %v8443 = vpack.c.b16 %v8423, %v8419
    %v8444 = vpack.c.b16 %v8424, %v8420
    %v8445 = vpack.c.b16 %v8425, %v8421
    %v8446 = vpack.c.b16 %v8430, %v8426
    %v8447 = vpack.c.b16 %v8431, %v8427
    %v8448 = vpack.c.b16 %v8432, %v8428
    %v8449 = vpack.c.b16 %v8433, %v8429
    %v8467 = vsel %vm5092, %v8369, 0
    %8469 = vmatprep.subr.bf16.mxu0 0
    %8470 = vmatpush1.bf16.msra.mxu0 0
    %8471 = vmatprep.subr.bf16.mxu0 0
    %8472 = vmatpush1.bf16.msra.mxu0 0
    %8473 = vmatprep.subr.bf16.mxu0 0
    %8474 = vmatpush1.bf16.msra.mxu0 0
    %8475 = vmatprep.subr.bf16.mxu0 0
    %8476 = vmatpush1.bf16.msra.mxu0 0
    %8477 = vmatprep.subr.bf16.mxu0 %v8447
    %8478 = vmatpush1.bf16.msra.mxu0 %v8446
    %8479 = vmatprep.subr.bf16.mxu0 %v8443
    %8480 = vmatpush1.bf16.msra.mxu0 %v8442
    %8481 = vmatprep.subr.bf16.mxu0 %v8439
    %8482 = vmatpush1.bf16.msra.mxu0 %v8438
    %8483 = vmatprep.subr.bf16.mxu0 %v8435
    %8484 = vmatpush1.bf16.msra.mxu0 %v8434
    %8485 = vmatprep.subr.bf16.mxu0 0
    %8486 = vmatpush2.bf16.msra.mxu0 0
    %8487 = vmatprep.subr.bf16.mxu0 0
    %8488 = vmatpush2.bf16.msra.mxu0 0
    %8489 = vmatprep.subr.bf16.mxu0 0
    %8490 = vmatpush2.bf16.msra.mxu0 0
    %8491 = vmatprep.subr.bf16.mxu0 0
    %8492 = vmatpush2.bf16.msra.mxu0 0
    %8493 = vmatprep.subr.bf16.mxu0 0
    %8494 = vmatpush2.bf16.msra.mxu0 0
    %8495 = vmatprep.subr.bf16.mxu0 0
    %8496 = vmatpush2.bf16.msra.mxu0 0
    %8497 = vmatprep.subr.bf16.mxu0 0
    %8498 = vmatpush2.bf16.msra.mxu0 0
    %8499 = vmatprep.subr.bf16.mxu0 0
    %8500 = vmatpush2.bf16.msra.mxu0 0
    %8501 = vmatprep.mubr.bf16.mxu0 0
    %8502 = vmatmul.mubr.bf16.gmra.mxu0 %v8467
    %v8503 = vpop.f32.mrf.mxu0
    %v8504 = vadd.f32 0.0, %v8503
    %v8505 = vpop.f32.mrf.mxu0
    %v8506 = vadd.f32 0.0, %v8505
    %v8507 = vpop.f32.mrf.mxu0
    %v8508 = vpop.f32.mrf.mxu0
    %8509 = vdwg.mxu0
    %8510 = vmatprep.subr.bf16.mxu0 0
    %8511 = vmatpush1.bf16.msra.mxu0 0
    %8512 = vmatprep.subr.bf16.mxu0 0
    %8513 = vmatpush1.bf16.msra.mxu0 0
    %8514 = vmatprep.subr.bf16.mxu0 0
    %8515 = vmatpush1.bf16.msra.mxu0 0
    %8516 = vmatprep.subr.bf16.mxu0 0
    %8517 = vmatpush1.bf16.msra.mxu0 0
    %8518 = vmatprep.subr.bf16.mxu0 %v8449
    %8519 = vmatpush1.bf16.msra.mxu0 %v8448
    %8520 = vmatprep.subr.bf16.mxu0 %v8445
    %8521 = vmatpush1.bf16.msra.mxu0 %v8444
    %8522 = vmatprep.subr.bf16.mxu0 %v8441
    %8523 = vmatpush1.bf16.msra.mxu0 %v8440
    %8524 = vmatprep.subr.bf16.mxu0 %v8437
    %8525 = vmatpush1.bf16.msra.mxu0 %v8436
    %8526 = vmatprep.subr.bf16.mxu0 0
    %8527 = vmatpush2.bf16.msra.mxu0 0
    %8528 = vmatprep.subr.bf16.mxu0 0
    %8529 = vmatpush2.bf16.msra.mxu0 0
    %8530 = vmatprep.subr.bf16.mxu0 0
    %8531 = vmatpush2.bf16.msra.mxu0 0
    %8532 = vmatprep.subr.bf16.mxu0 0
    %8533 = vmatpush2.bf16.msra.mxu0 0
    %8534 = vmatprep.subr.bf16.mxu0 0
    %8535 = vmatpush2.bf16.msra.mxu0 0
    %8536 = vmatprep.subr.bf16.mxu0 0
    %8537 = vmatpush2.bf16.msra.mxu0 0
    %8538 = vmatprep.subr.bf16.mxu0 0
    %8539 = vmatpush2.bf16.msra.mxu0 0
    %8540 = vmatprep.subr.bf16.mxu0 0
    %8541 = vmatpush2.bf16.msra.mxu0 0
    %8542 = vmatprep.mubr.bf16.mxu0 0
    %8543 = vmatmul.mubr.bf16.gmra.mxu0 %v8467
    %v8544 = vpop.f32.mrf.mxu0
    %v8545 = vadd.f32 0.0, %v8544
    %v8546 = vpop.f32.mrf.mxu0
    %v8547 = vadd.f32 0.0, %v8546
    %v8548 = vpop.f32.mrf.mxu0
    %v8549 = vpop.f32.mrf.mxu0
    %8550 = vdwg.mxu0
    %v8551 = vadd.f32 %v8363, %v8504
    %v8552 = vadd.f32 %v8364, %v8506
    %v8553 = vadd.f32 %v8365, %v8545
    %v8554 = vadd.f32 %v8366, %v8547
    %s8555 = scalar_lea.vmem [#allocation12], 18
    %v8556 = vld [vmem:[%s8555] ss:$24 sm:$0x3]
    %v8557 = vpack.c.bf16 %v8556, %v8556
    %v8558 = vld [vmem:[#allocation3 + $0x900] sm:$0xff]
    %v8559 = vld [vmem:[#allocation3 + $0x908] sm:$0xff]
    %v8560 = vld [vmem:[#allocation3 + $0x910] sm:$0xff]
    %v8561 = vld [vmem:[#allocation3 + $0x918] sm:$0xff]
    %v8562 = vld [vmem:[#allocation3 + $0x920] sm:$0xff]
    %v8563 = vld [vmem:[#allocation3 + $0x928] sm:$0xff]
    %v8564 = vld [vmem:[#allocation3 + $0x930] sm:$0xff]
    %v8565 = vld [vmem:[#allocation3 + $0x938] sm:$0xff]
    %v8566 = vld [vmem:[#allocation3 + $0x940] sm:$0xff]
    %v8567 = vld [vmem:[#allocation3 + $0x948] sm:$0xff]
    %v8568 = vld [vmem:[#allocation3 + $0x950] sm:$0xff]
    %v8569 = vld [vmem:[#allocation3 + $0x958] sm:$0xff]
    %v8570 = vld [vmem:[#allocation3 + $0x960] sm:$0xff]
    %v8571 = vld [vmem:[#allocation3 + $0x968] sm:$0xff]
    %v8572 = vld [vmem:[#allocation3 + $0x970] sm:$0xff]
    %v8573 = vld [vmem:[#allocation3 + $0x978] sm:$0xff]
    %v8590 = vunpack.c.l.b16 %v8558
    %v8591 = vunpack.c.h.b16 %v8558
    %v8592 = vunpack.c.l.b16 %v8559
    %v8593 = vunpack.c.h.b16 %v8559
    %v8594 = vunpack.c.l.b16 %v8560
    %v8595 = vunpack.c.h.b16 %v8560
    %v8596 = vunpack.c.l.b16 %v8561
    %v8597 = vunpack.c.h.b16 %v8561
    %v8598 = vunpack.c.l.b16 %v8562
    %v8599 = vunpack.c.h.b16 %v8562
    %v8600 = vunpack.c.l.b16 %v8563
    %v8601 = vunpack.c.h.b16 %v8563
    %v8602 = vunpack.c.l.b16 %v8564
    %v8603 = vunpack.c.h.b16 %v8564
    %v8604 = vunpack.c.l.b16 %v8565
    %v8605 = vunpack.c.h.b16 %v8565
    %v8606 = vunpack.c.l.b16 %v8566
    %v8607 = vunpack.c.h.b16 %v8566
    %v8608 = vunpack.c.l.b16 %v8567
    %v8609 = vunpack.c.h.b16 %v8567
    %v8610 = vunpack.c.l.b16 %v8568
    %v8611 = vunpack.c.h.b16 %v8568
    %v8612 = vunpack.c.l.b16 %v8569
    %v8613 = vunpack.c.h.b16 %v8569
    %v8614 = vunpack.c.l.b16 %v8570
    %v8615 = vunpack.c.h.b16 %v8570
    %v8616 = vunpack.c.l.b16 %v8571
    %v8617 = vunpack.c.h.b16 %v8571
    %v8618 = vunpack.c.l.b16 %v8572
    %v8619 = vunpack.c.h.b16 %v8572
    %v8620 = vunpack.c.l.b16 %v8573
    %v8621 = vunpack.c.h.b16 %v8573
    %v8622 = vpack.c.b16 %v8594, %v8590
    %v8623 = vpack.c.b16 %v8595, %v8591
    %v8624 = vpack.c.b16 %v8596, %v8592
    %v8625 = vpack.c.b16 %v8597, %v8593
    %v8626 = vpack.c.b16 %v8602, %v8598
    %v8627 = vpack.c.b16 %v8603, %v8599
    %v8628 = vpack.c.b16 %v8604, %v8600
    %v8629 = vpack.c.b16 %v8605, %v8601
    %v8630 = vpack.c.b16 %v8610, %v8606
    %v8631 = vpack.c.b16 %v8611, %v8607
    %v8632 = vpack.c.b16 %v8612, %v8608
    %v8633 = vpack.c.b16 %v8613, %v8609
    %v8634 = vpack.c.b16 %v8618, %v8614
    %v8635 = vpack.c.b16 %v8619, %v8615
    %v8636 = vpack.c.b16 %v8620, %v8616
    %v8637 = vpack.c.b16 %v8621, %v8617
    %v8655 = vsel %vm5092, %v8557, 0
    %8657 = vmatprep.subr.bf16.mxu0 0
    %8658 = vmatpush1.bf16.msra.mxu0 0
    %8659 = vmatprep.subr.bf16.mxu0 0
    %8660 = vmatpush1.bf16.msra.mxu0 0
    %8661 = vmatprep.subr.bf16.mxu0 0
    %8662 = vmatpush1.bf16.msra.mxu0 0
    %8663 = vmatprep.subr.bf16.mxu0 0
    %8664 = vmatpush1.bf16.msra.mxu0 0
    %8665 = vmatprep.subr.bf16.mxu0 %v8635
    %8666 = vmatpush1.bf16.msra.mxu0 %v8634
    %8667 = vmatprep.subr.bf16.mxu0 %v8631
    %8668 = vmatpush1.bf16.msra.mxu0 %v8630
    %8669 = vmatprep.subr.bf16.mxu0 %v8627
    %8670 = vmatpush1.bf16.msra.mxu0 %v8626
    %8671 = vmatprep.subr.bf16.mxu0 %v8623
    %8672 = vmatpush1.bf16.msra.mxu0 %v8622
    %8673 = vmatprep.subr.bf16.mxu0 0
    %8674 = vmatpush2.bf16.msra.mxu0 0
    %8675 = vmatprep.subr.bf16.mxu0 0
    %8676 = vmatpush2.bf16.msra.mxu0 0
    %8677 = vmatprep.subr.bf16.mxu0 0
    %8678 = vmatpush2.bf16.msra.mxu0 0
    %8679 = vmatprep.subr.bf16.mxu0 0
    %8680 = vmatpush2.bf16.msra.mxu0 0
    %8681 = vmatprep.subr.bf16.mxu0 0
    %8682 = vmatpush2.bf16.msra.mxu0 0
    %8683 = vmatprep.subr.bf16.mxu0 0
    %8684 = vmatpush2.bf16.msra.mxu0 0
    %8685 = vmatprep.subr.bf16.mxu0 0
    %8686 = vmatpush2.bf16.msra.mxu0 0
    %8687 = vmatprep.subr.bf16.mxu0 0
    %8688 = vmatpush2.bf16.msra.mxu0 0
    %8689 = vmatprep.mubr.bf16.mxu0 0
    %8690 = vmatmul.mubr.bf16.gmra.mxu0 %v8655
    %v8691 = vpop.f32.mrf.mxu0
    %v8692 = vadd.f32 0.0, %v8691
    %v8693 = vpop.f32.mrf.mxu0
    %v8694 = vadd.f32 0.0, %v8693
    %v8695 = vpop.f32.mrf.mxu0
    %v8696 = vpop.f32.mrf.mxu0
    %8697 = vdwg.mxu0
    %8698 = vmatprep.subr.bf16.mxu0 0
    %8699 = vmatpush1.bf16.msra.mxu0 0
    %8700 = vmatprep.subr.bf16.mxu0 0
    %8701 = vmatpush1.bf16.msra.mxu0 0
    %8702 = vmatprep.subr.bf16.mxu0 0
    %8703 = vmatpush1.bf16.msra.mxu0 0
    %8704 = vmatprep.subr.bf16.mxu0 0
    %8705 = vmatpush1.bf16.msra.mxu0 0
    %8706 = vmatprep.subr.bf16.mxu0 %v8637
    %8707 = vmatpush1.bf16.msra.mxu0 %v8636
    %8708 = vmatprep.subr.bf16.mxu0 %v8633
    %8709 = vmatpush1.bf16.msra.mxu0 %v8632
    %8710 = vmatprep.subr.bf16.mxu0 %v8629
    %8711 = vmatpush1.bf16.msra.mxu0 %v8628
    %8712 = vmatprep.subr.bf16.mxu0 %v8625
    %8713 = vmatpush1.bf16.msra.mxu0 %v8624
    %8714 = vmatprep.subr.bf16.mxu0 0
    %8715 = vmatpush2.bf16.msra.mxu0 0
    %8716 = vmatprep.subr.bf16.mxu0 0
    %8717 = vmatpush2.bf16.msra.mxu0 0
    %8718 = vmatprep.subr.bf16.mxu0 0
    %8719 = vmatpush2.bf16.msra.mxu0 0
    %8720 = vmatprep.subr.bf16.mxu0 0
    %8721 = vmatpush2.bf16.msra.mxu0 0
    %8722 = vmatprep.subr.bf16.mxu0 0
    %8723 = vmatpush2.bf16.msra.mxu0 0
    %8724 = vmatprep.subr.bf16.mxu0 0
    %8725 = vmatpush2.bf16.msra.mxu0 0
    %8726 = vmatprep.subr.bf16.mxu0 0
    %8727 = vmatpush2.bf16.msra.mxu0 0
    %8728 = vmatprep.subr.bf16.mxu0 0
    %8729 = vmatpush2.bf16.msra.mxu0 0
    %8730 = vmatprep.mubr.bf16.mxu0 0
    %8731 = vmatmul.mubr.bf16.gmra.mxu0 %v8655
    %v8732 = vpop.f32.mrf.mxu0
    %v8733 = vadd.f32 0.0, %v8732
    %v8734 = vpop.f32.mrf.mxu0
    %v8735 = vadd.f32 0.0, %v8734
    %v8736 = vpop.f32.mrf.mxu0
    %v8737 = vpop.f32.mrf.mxu0
    %8738 = vdwg.mxu0
    %v8739 = vadd.f32 %v8551, %v8692
    %v8740 = vadd.f32 %v8552, %v8694
    %v8741 = vadd.f32 %v8553, %v8733
    %v8742 = vadd.f32 %v8554, %v8735
    %s8743 = scalar_lea.vmem [#allocation12], 19
    %v8744 = vld [vmem:[%s8743] ss:$24 sm:$0x3]
    %v8745 = vpack.c.bf16 %v8744, %v8744
    %v8746 = vld [vmem:[#allocation3 + $0x980] sm:$0xff]
    %v8747 = vld [vmem:[#allocation3 + $0x988] sm:$0xff]
    %v8748 = vld [vmem:[#allocation3 + $0x990] sm:$0xff]
    %v8749 = vld [vmem:[#allocation3 + $0x998] sm:$0xff]
    %v8750 = vld [vmem:[#allocation3 + $0x9a0] sm:$0xff]
    %v8751 = vld [vmem:[#allocation3 + $0x9a8] sm:$0xff]
    %v8752 = vld [vmem:[#allocation3 + $0x9b0] sm:$0xff]
    %v8753 = vld [vmem:[#allocation3 + $0x9b8] sm:$0xff]
    %v8754 = vld [vmem:[#allocation3 + $0x9c0] sm:$0xff]
    %v8755 = vld [vmem:[#allocation3 + $0x9c8] sm:$0xff]
    %v8756 = vld [vmem:[#allocation3 + $0x9d0] sm:$0xff]
    %v8757 = vld [vmem:[#allocation3 + $0x9d8] sm:$0xff]
    %v8758 = vld [vmem:[#allocation3 + $0x9e0] sm:$0xff]
    %v8759 = vld [vmem:[#allocation3 + $0x9e8] sm:$0xff]
    %v8760 = vld [vmem:[#allocation3 + $0x9f0] sm:$0xff]
    %v8761 = vld [vmem:[#allocation3 + $0x9f8] sm:$0xff]
    %v8778 = vunpack.c.l.b16 %v8746
    %v8779 = vunpack.c.h.b16 %v8746
    %v8780 = vunpack.c.l.b16 %v8747
    %v8781 = vunpack.c.h.b16 %v8747
    %v8782 = vunpack.c.l.b16 %v8748
    %v8783 = vunpack.c.h.b16 %v8748
    %v8784 = vunpack.c.l.b16 %v8749
    %v8785 = vunpack.c.h.b16 %v8749
    %v8786 = vunpack.c.l.b16 %v8750
    %v8787 = vunpack.c.h.b16 %v8750
    %v8788 = vunpack.c.l.b16 %v8751
    %v8789 = vunpack.c.h.b16 %v8751
    %v8790 = vunpack.c.l.b16 %v8752
    %v8791 = vunpack.c.h.b16 %v8752
    %v8792 = vunpack.c.l.b16 %v8753
    %v8793 = vunpack.c.h.b16 %v8753
    %v8794 = vunpack.c.l.b16 %v8754
    %v8795 = vunpack.c.h.b16 %v8754
    %v8796 = vunpack.c.l.b16 %v8755
    %v8797 = vunpack.c.h.b16 %v8755
    %v8798 = vunpack.c.l.b16 %v8756
    %v8799 = vunpack.c.h.b16 %v8756
    %v8800 = vunpack.c.l.b16 %v8757
    %v8801 = vunpack.c.h.b16 %v8757
    %v8802 = vunpack.c.l.b16 %v8758
    %v8803 = vunpack.c.h.b16 %v8758
    %v8804 = vunpack.c.l.b16 %v8759
    %v8805 = vunpack.c.h.b16 %v8759
    %v8806 = vunpack.c.l.b16 %v8760
    %v8807 = vunpack.c.h.b16 %v8760
    %v8808 = vunpack.c.l.b16 %v8761
    %v8809 = vunpack.c.h.b16 %v8761
    %v8810 = vpack.c.b16 %v8782, %v8778
    %v8811 = vpack.c.b16 %v8783, %v8779
    %v8812 = vpack.c.b16 %v8784, %v8780
    %v8813 = vpack.c.b16 %v8785, %v8781
    %v8814 = vpack.c.b16 %v8790, %v8786
    %v8815 = vpack.c.b16 %v8791, %v8787
    %v8816 = vpack.c.b16 %v8792, %v8788
    %v8817 = vpack.c.b16 %v8793, %v8789
    %v8818 = vpack.c.b16 %v8798, %v8794
    %v8819 = vpack.c.b16 %v8799, %v8795
    %v8820 = vpack.c.b16 %v8800, %v8796
    %v8821 = vpack.c.b16 %v8801, %v8797
    %v8822 = vpack.c.b16 %v8806, %v8802
    %v8823 = vpack.c.b16 %v8807, %v8803
    %v8824 = vpack.c.b16 %v8808, %v8804
    %v8825 = vpack.c.b16 %v8809, %v8805
    %v8843 = vsel %vm5092, %v8745, 0
    %8845 = vmatprep.subr.bf16.mxu0 0
    %8846 = vmatpush1.bf16.msra.mxu0 0
    %8847 = vmatprep.subr.bf16.mxu0 0
    %8848 = vmatpush1.bf16.msra.mxu0 0
    %8849 = vmatprep.subr.bf16.mxu0 0
    %8850 = vmatpush1.bf16.msra.mxu0 0
    %8851 = vmatprep.subr.bf16.mxu0 0
    %8852 = vmatpush1.bf16.msra.mxu0 0
    %8853 = vmatprep.subr.bf16.mxu0 %v8823
    %8854 = vmatpush1.bf16.msra.mxu0 %v8822
    %8855 = vmatprep.subr.bf16.mxu0 %v8819
    %8856 = vmatpush1.bf16.msra.mxu0 %v8818
    %8857 = vmatprep.subr.bf16.mxu0 %v8815
    %8858 = vmatpush1.bf16.msra.mxu0 %v8814
    %8859 = vmatprep.subr.bf16.mxu0 %v8811
    %8860 = vmatpush1.bf16.msra.mxu0 %v8810
    %8861 = vmatprep.subr.bf16.mxu0 0
    %8862 = vmatpush2.bf16.msra.mxu0 0
    %8863 = vmatprep.subr.bf16.mxu0 0
    %8864 = vmatpush2.bf16.msra.mxu0 0
    %8865 = vmatprep.subr.bf16.mxu0 0
    %8866 = vmatpush2.bf16.msra.mxu0 0
    %8867 = vmatprep.subr.bf16.mxu0 0
    %8868 = vmatpush2.bf16.msra.mxu0 0
    %8869 = vmatprep.subr.bf16.mxu0 0
    %8870 = vmatpush2.bf16.msra.mxu0 0
    %8871 = vmatprep.subr.bf16.mxu0 0
    %8872 = vmatpush2.bf16.msra.mxu0 0
    %8873 = vmatprep.subr.bf16.mxu0 0
    %8874 = vmatpush2.bf16.msra.mxu0 0
    %8875 = vmatprep.subr.bf16.mxu0 0
    %8876 = vmatpush2.bf16.msra.mxu0 0
    %8877 = vmatprep.mubr.bf16.mxu0 0
    %8878 = vmatmul.mubr.bf16.gmra.mxu0 %v8843
    %v8879 = vpop.f32.mrf.mxu0
    %v8880 = vadd.f32 0.0, %v8879
    %v8881 = vpop.f32.mrf.mxu0
    %v8882 = vadd.f32 0.0, %v8881
    %v8883 = vpop.f32.mrf.mxu0
    %v8884 = vpop.f32.mrf.mxu0
    %8885 = vdwg.mxu0
    %8886 = vmatprep.subr.bf16.mxu0 0
    %8887 = vmatpush1.bf16.msra.mxu0 0
    %8888 = vmatprep.subr.bf16.mxu0 0
    %8889 = vmatpush1.bf16.msra.mxu0 0
    %8890 = vmatprep.subr.bf16.mxu0 0
    %8891 = vmatpush1.bf16.msra.mxu0 0
    %8892 = vmatprep.subr.bf16.mxu0 0
    %8893 = vmatpush1.bf16.msra.mxu0 0
    %8894 = vmatprep.subr.bf16.mxu0 %v8825
    %8895 = vmatpush1.bf16.msra.mxu0 %v8824
    %8896 = vmatprep.subr.bf16.mxu0 %v8821
    %8897 = vmatpush1.bf16.msra.mxu0 %v8820
    %8898 = vmatprep.subr.bf16.mxu0 %v8817
    %8899 = vmatpush1.bf16.msra.mxu0 %v8816
    %8900 = vmatprep.subr.bf16.mxu0 %v8813
    %8901 = vmatpush1.bf16.msra.mxu0 %v8812
    %8902 = vmatprep.subr.bf16.mxu0 0
    %8903 = vmatpush2.bf16.msra.mxu0 0
    %8904 = vmatprep.subr.bf16.mxu0 0
    %8905 = vmatpush2.bf16.msra.mxu0 0
    %8906 = vmatprep.subr.bf16.mxu0 0
    %8907 = vmatpush2.bf16.msra.mxu0 0
    %8908 = vmatprep.subr.bf16.mxu0 0
    %8909 = vmatpush2.bf16.msra.mxu0 0
    %8910 = vmatprep.subr.bf16.mxu0 0
    %8911 = vmatpush2.bf16.msra.mxu0 0
    %8912 = vmatprep.subr.bf16.mxu0 0
    %8913 = vmatpush2.bf16.msra.mxu0 0
    %8914 = vmatprep.subr.bf16.mxu0 0
    %8915 = vmatpush2.bf16.msra.mxu0 0
    %8916 = vmatprep.subr.bf16.mxu0 0
    %8917 = vmatpush2.bf16.msra.mxu0 0
    %8918 = vmatprep.mubr.bf16.mxu0 0
    %8919 = vmatmul.mubr.bf16.gmra.mxu0 %v8843
    %v8920 = vpop.f32.mrf.mxu0
    %v8921 = vadd.f32 0.0, %v8920
    %v8922 = vpop.f32.mrf.mxu0
    %v8923 = vadd.f32 0.0, %v8922
    %v8924 = vpop.f32.mrf.mxu0
    %v8925 = vpop.f32.mrf.mxu0
    %8926 = vdwg.mxu0
    %v8927 = vadd.f32 %v8739, %v8880
    %v8928 = vadd.f32 %v8740, %v8882
    %v8929 = vadd.f32 %v8741, %v8921
    %v8930 = vadd.f32 %v8742, %v8923
    %s8931 = scalar_lea.vmem [#allocation12], 20
    %v8932 = vld [vmem:[%s8931] ss:$24 sm:$0x3]
    %v8933 = vpack.c.bf16 %v8932, %v8932
    %v8934 = vld [vmem:[#allocation3 + $0xa00] sm:$0xff]
    %v8935 = vld [vmem:[#allocation3 + $0xa08] sm:$0xff]
    %v8936 = vld [vmem:[#allocation3 + $0xa10] sm:$0xff]
    %v8937 = vld [vmem:[#allocation3 + $0xa18] sm:$0xff]
    %v8938 = vld [vmem:[#allocation3 + $0xa20] sm:$0xff]
    %v8939 = vld [vmem:[#allocation3 + $0xa28] sm:$0xff]
    %v8940 = vld [vmem:[#allocation3 + $0xa30] sm:$0xff]
    %v8941 = vld [vmem:[#allocation3 + $0xa38] sm:$0xff]
    %v8942 = vld [vmem:[#allocation3 + $0xa40] sm:$0xff]
    %v8943 = vld [vmem:[#allocation3 + $0xa48] sm:$0xff]
    %v8944 = vld [vmem:[#allocation3 + $0xa50] sm:$0xff]
    %v8945 = vld [vmem:[#allocation3 + $0xa58] sm:$0xff]
    %v8946 = vld [vmem:[#allocation3 + $0xa60] sm:$0xff]
    %v8947 = vld [vmem:[#allocation3 + $0xa68] sm:$0xff]
    %v8948 = vld [vmem:[#allocation3 + $0xa70] sm:$0xff]
    %v8949 = vld [vmem:[#allocation3 + $0xa78] sm:$0xff]
    %v8966 = vunpack.c.l.b16 %v8934
    %v8967 = vunpack.c.h.b16 %v8934
    %v8968 = vunpack.c.l.b16 %v8935
    %v8969 = vunpack.c.h.b16 %v8935
    %v8970 = vunpack.c.l.b16 %v8936
    %v8971 = vunpack.c.h.b16 %v8936
    %v8972 = vunpack.c.l.b16 %v8937
    %v8973 = vunpack.c.h.b16 %v8937
    %v8974 = vunpack.c.l.b16 %v8938
    %v8975 = vunpack.c.h.b16 %v8938
    %v8976 = vunpack.c.l.b16 %v8939
    %v8977 = vunpack.c.h.b16 %v8939
    %v8978 = vunpack.c.l.b16 %v8940
    %v8979 = vunpack.c.h.b16 %v8940
    %v8980 = vunpack.c.l.b16 %v8941
    %v8981 = vunpack.c.h.b16 %v8941
    %v8982 = vunpack.c.l.b16 %v8942
    %v8983 = vunpack.c.h.b16 %v8942
    %v8984 = vunpack.c.l.b16 %v8943
    %v8985 = vunpack.c.h.b16 %v8943
    %v8986 = vunpack.c.l.b16 %v8944
    %v8987 = vunpack.c.h.b16 %v8944
    %v8988 = vunpack.c.l.b16 %v8945
    %v8989 = vunpack.c.h.b16 %v8945
    %v8990 = vunpack.c.l.b16 %v8946
    %v8991 = vunpack.c.h.b16 %v8946
    %v8992 = vunpack.c.l.b16 %v8947
    %v8993 = vunpack.c.h.b16 %v8947
    %v8994 = vunpack.c.l.b16 %v8948
    %v8995 = vunpack.c.h.b16 %v8948
    %v8996 = vunpack.c.l.b16 %v8949
    %v8997 = vunpack.c.h.b16 %v8949
    %v8998 = vpack.c.b16 %v8970, %v8966
    %v8999 = vpack.c.b16 %v8971, %v8967
    %v9000 = vpack.c.b16 %v8972, %v8968
    %v9001 = vpack.c.b16 %v8973, %v8969
    %v9002 = vpack.c.b16 %v8978, %v8974
    %v9003 = vpack.c.b16 %v8979, %v8975
    %v9004 = vpack.c.b16 %v8980, %v8976
    %v9005 = vpack.c.b16 %v8981, %v8977
    %v9006 = vpack.c.b16 %v8986, %v8982
    %v9007 = vpack.c.b16 %v8987, %v8983
    %v9008 = vpack.c.b16 %v8988, %v8984
    %v9009 = vpack.c.b16 %v8989, %v8985
    %v9010 = vpack.c.b16 %v8994, %v8990
    %v9011 = vpack.c.b16 %v8995, %v8991
    %v9012 = vpack.c.b16 %v8996, %v8992
    %v9013 = vpack.c.b16 %v8997, %v8993
    %v9031 = vsel %vm5092, %v8933, 0
    %9033 = vmatprep.subr.bf16.mxu0 0
    %9034 = vmatpush1.bf16.msra.mxu0 0
    %9035 = vmatprep.subr.bf16.mxu0 0
    %9036 = vmatpush1.bf16.msra.mxu0 0
    %9037 = vmatprep.subr.bf16.mxu0 0
    %9038 = vmatpush1.bf16.msra.mxu0 0
    %9039 = vmatprep.subr.bf16.mxu0 0
    %9040 = vmatpush1.bf16.msra.mxu0 0
    %9041 = vmatprep.subr.bf16.mxu0 %v9011
    %9042 = vmatpush1.bf16.msra.mxu0 %v9010
    %9043 = vmatprep.subr.bf16.mxu0 %v9007
    %9044 = vmatpush1.bf16.msra.mxu0 %v9006
    %9045 = vmatprep.subr.bf16.mxu0 %v9003
    %9046 = vmatpush1.bf16.msra.mxu0 %v9002
    %9047 = vmatprep.subr.bf16.mxu0 %v8999
    %9048 = vmatpush1.bf16.msra.mxu0 %v8998
    %9049 = vmatprep.subr.bf16.mxu0 0
    %9050 = vmatpush2.bf16.msra.mxu0 0
    %9051 = vmatprep.subr.bf16.mxu0 0
    %9052 = vmatpush2.bf16.msra.mxu0 0
    %9053 = vmatprep.subr.bf16.mxu0 0
    %9054 = vmatpush2.bf16.msra.mxu0 0
    %9055 = vmatprep.subr.bf16.mxu0 0
    %9056 = vmatpush2.bf16.msra.mxu0 0
    %9057 = vmatprep.subr.bf16.mxu0 0
    %9058 = vmatpush2.bf16.msra.mxu0 0
    %9059 = vmatprep.subr.bf16.mxu0 0
    %9060 = vmatpush2.bf16.msra.mxu0 0
    %9061 = vmatprep.subr.bf16.mxu0 0
    %9062 = vmatpush2.bf16.msra.mxu0 0
    %9063 = vmatprep.subr.bf16.mxu0 0
    %9064 = vmatpush2.bf16.msra.mxu0 0
    %9065 = vmatprep.mubr.bf16.mxu0 0
    %9066 = vmatmul.mubr.bf16.gmra.mxu0 %v9031
    %v9067 = vpop.f32.mrf.mxu0
    %v9068 = vadd.f32 0.0, %v9067
    %v9069 = vpop.f32.mrf.mxu0
    %v9070 = vadd.f32 0.0, %v9069
    %v9071 = vpop.f32.mrf.mxu0
    %v9072 = vpop.f32.mrf.mxu0
    %9073 = vdwg.mxu0
    %9074 = vmatprep.subr.bf16.mxu0 0
    %9075 = vmatpush1.bf16.msra.mxu0 0
    %9076 = vmatprep.subr.bf16.mxu0 0
    %9077 = vmatpush1.bf16.msra.mxu0 0
    %9078 = vmatprep.subr.bf16.mxu0 0
    %9079 = vmatpush1.bf16.msra.mxu0 0
    %9080 = vmatprep.subr.bf16.mxu0 0
    %9081 = vmatpush1.bf16.msra.mxu0 0
    %9082 = vmatprep.subr.bf16.mxu0 %v9013
    %9083 = vmatpush1.bf16.msra.mxu0 %v9012
    %9084 = vmatprep.subr.bf16.mxu0 %v9009
    %9085 = vmatpush1.bf16.msra.mxu0 %v9008
    %9086 = vmatprep.subr.bf16.mxu0 %v9005
    %9087 = vmatpush1.bf16.msra.mxu0 %v9004
    %9088 = vmatprep.subr.bf16.mxu0 %v9001
    %9089 = vmatpush1.bf16.msra.mxu0 %v9000
    %9090 = vmatprep.subr.bf16.mxu0 0
    %9091 = vmatpush2.bf16.msra.mxu0 0
    %9092 = vmatprep.subr.bf16.mxu0 0
    %9093 = vmatpush2.bf16.msra.mxu0 0
    %9094 = vmatprep.subr.bf16.mxu0 0
    %9095 = vmatpush2.bf16.msra.mxu0 0
    %9096 = vmatprep.subr.bf16.mxu0 0
    %9097 = vmatpush2.bf16.msra.mxu0 0
    %9098 = vmatprep.subr.bf16.mxu0 0
    %9099 = vmatpush2.bf16.msra.mxu0 0
    %9100 = vmatprep.subr.bf16.mxu0 0
    %9101 = vmatpush2.bf16.msra.mxu0 0
    %9102 = vmatprep.subr.bf16.mxu0 0
    %9103 = vmatpush2.bf16.msra.mxu0 0
    %9104 = vmatprep.subr.bf16.mxu0 0
    %9105 = vmatpush2.bf16.msra.mxu0 0
    %9106 = vmatprep.mubr.bf16.mxu0 0
    %9107 = vmatmul.mubr.bf16.gmra.mxu0 %v9031
    %v9108 = vpop.f32.mrf.mxu0
    %v9109 = vadd.f32 0.0, %v9108
    %v9110 = vpop.f32.mrf.mxu0
    %v9111 = vadd.f32 0.0, %v9110
    %v9112 = vpop.f32.mrf.mxu0
    %v9113 = vpop.f32.mrf.mxu0
    %9114 = vdwg.mxu0
    %v9115 = vadd.f32 %v8927, %v9068
    %v9116 = vadd.f32 %v8928, %v9070
    %v9117 = vadd.f32 %v8929, %v9109
    %v9118 = vadd.f32 %v8930, %v9111
    %s9119 = scalar_lea.vmem [#allocation12], 21
    %v9120 = vld [vmem:[%s9119] ss:$24 sm:$0x3]
    %v9121 = vpack.c.bf16 %v9120, %v9120
    %v9122 = vld [vmem:[#allocation3 + $0xa80] sm:$0xff]
    %v9123 = vld [vmem:[#allocation3 + $0xa88] sm:$0xff]
    %v9124 = vld [vmem:[#allocation3 + $0xa90] sm:$0xff]
    %v9125 = vld [vmem:[#allocation3 + $0xa98] sm:$0xff]
    %v9126 = vld [vmem:[#allocation3 + $0xaa0] sm:$0xff]
    %v9127 = vld [vmem:[#allocation3 + $0xaa8] sm:$0xff]
    %v9128 = vld [vmem:[#allocation3 + $0xab0] sm:$0xff]
    %v9129 = vld [vmem:[#allocation3 + $0xab8] sm:$0xff]
    %v9130 = vld [vmem:[#allocation3 + $0xac0] sm:$0xff]
    %v9131 = vld [vmem:[#allocation3 + $0xac8] sm:$0xff]
    %v9132 = vld [vmem:[#allocation3 + $0xad0] sm:$0xff]
    %v9133 = vld [vmem:[#allocation3 + $0xad8] sm:$0xff]
    %v9134 = vld [vmem:[#allocation3 + $0xae0] sm:$0xff]
    %v9135 = vld [vmem:[#allocation3 + $0xae8] sm:$0xff]
    %v9136 = vld [vmem:[#allocation3 + $0xaf0] sm:$0xff]
    %v9137 = vld [vmem:[#allocation3 + $0xaf8] sm:$0xff]
    %v9154 = vunpack.c.l.b16 %v9122
    %v9155 = vunpack.c.h.b16 %v9122
    %v9156 = vunpack.c.l.b16 %v9123
    %v9157 = vunpack.c.h.b16 %v9123
    %v9158 = vunpack.c.l.b16 %v9124
    %v9159 = vunpack.c.h.b16 %v9124
    %v9160 = vunpack.c.l.b16 %v9125
    %v9161 = vunpack.c.h.b16 %v9125
    %v9162 = vunpack.c.l.b16 %v9126
    %v9163 = vunpack.c.h.b16 %v9126
    %v9164 = vunpack.c.l.b16 %v9127
    %v9165 = vunpack.c.h.b16 %v9127
    %v9166 = vunpack.c.l.b16 %v9128
    %v9167 = vunpack.c.h.b16 %v9128
    %v9168 = vunpack.c.l.b16 %v9129
    %v9169 = vunpack.c.h.b16 %v9129
    %v9170 = vunpack.c.l.b16 %v9130
    %v9171 = vunpack.c.h.b16 %v9130
    %v9172 = vunpack.c.l.b16 %v9131
    %v9173 = vunpack.c.h.b16 %v9131
    %v9174 = vunpack.c.l.b16 %v9132
    %v9175 = vunpack.c.h.b16 %v9132
    %v9176 = vunpack.c.l.b16 %v9133
    %v9177 = vunpack.c.h.b16 %v9133
    %v9178 = vunpack.c.l.b16 %v9134
    %v9179 = vunpack.c.h.b16 %v9134
    %v9180 = vunpack.c.l.b16 %v9135
    %v9181 = vunpack.c.h.b16 %v9135
    %v9182 = vunpack.c.l.b16 %v9136
    %v9183 = vunpack.c.h.b16 %v9136
    %v9184 = vunpack.c.l.b16 %v9137
    %v9185 = vunpack.c.h.b16 %v9137
    %v9186 = vpack.c.b16 %v9158, %v9154
    %v9187 = vpack.c.b16 %v9159, %v9155
    %v9188 = vpack.c.b16 %v9160, %v9156
    %v9189 = vpack.c.b16 %v9161, %v9157
    %v9190 = vpack.c.b16 %v9166, %v9162
    %v9191 = vpack.c.b16 %v9167, %v9163
    %v9192 = vpack.c.b16 %v9168, %v9164
    %v9193 = vpack.c.b16 %v9169, %v9165
    %v9194 = vpack.c.b16 %v9174, %v9170
    %v9195 = vpack.c.b16 %v9175, %v9171
    %v9196 = vpack.c.b16 %v9176, %v9172
    %v9197 = vpack.c.b16 %v9177, %v9173
    %v9198 = vpack.c.b16 %v9182, %v9178
    %v9199 = vpack.c.b16 %v9183, %v9179
    %v9200 = vpack.c.b16 %v9184, %v9180
    %v9201 = vpack.c.b16 %v9185, %v9181
    %v9219 = vsel %vm5092, %v9121, 0
    %9221 = vmatprep.subr.bf16.mxu0 0
    %9222 = vmatpush1.bf16.msra.mxu0 0
    %9223 = vmatprep.subr.bf16.mxu0 0
    %9224 = vmatpush1.bf16.msra.mxu0 0
    %9225 = vmatprep.subr.bf16.mxu0 0
    %9226 = vmatpush1.bf16.msra.mxu0 0
    %9227 = vmatprep.subr.bf16.mxu0 0
    %9228 = vmatpush1.bf16.msra.mxu0 0
    %9229 = vmatprep.subr.bf16.mxu0 %v9199
    %9230 = vmatpush1.bf16.msra.mxu0 %v9198
    %9231 = vmatprep.subr.bf16.mxu0 %v9195
    %9232 = vmatpush1.bf16.msra.mxu0 %v9194
    %9233 = vmatprep.subr.bf16.mxu0 %v9191
    %9234 = vmatpush1.bf16.msra.mxu0 %v9190
    %9235 = vmatprep.subr.bf16.mxu0 %v9187
    %9236 = vmatpush1.bf16.msra.mxu0 %v9186
    %9237 = vmatprep.subr.bf16.mxu0 0
    %9238 = vmatpush2.bf16.msra.mxu0 0
    %9239 = vmatprep.subr.bf16.mxu0 0
    %9240 = vmatpush2.bf16.msra.mxu0 0
    %9241 = vmatprep.subr.bf16.mxu0 0
    %9242 = vmatpush2.bf16.msra.mxu0 0
    %9243 = vmatprep.subr.bf16.mxu0 0
    %9244 = vmatpush2.bf16.msra.mxu0 0
    %9245 = vmatprep.subr.bf16.mxu0 0
    %9246 = vmatpush2.bf16.msra.mxu0 0
    %9247 = vmatprep.subr.bf16.mxu0 0
    %9248 = vmatpush2.bf16.msra.mxu0 0
    %9249 = vmatprep.subr.bf16.mxu0 0
    %9250 = vmatpush2.bf16.msra.mxu0 0
    %9251 = vmatprep.subr.bf16.mxu0 0
    %9252 = vmatpush2.bf16.msra.mxu0 0
    %9253 = vmatprep.mubr.bf16.mxu0 0
    %9254 = vmatmul.mubr.bf16.gmra.mxu0 %v9219
    %v9255 = vpop.f32.mrf.mxu0
    %v9256 = vadd.f32 0.0, %v9255
    %v9257 = vpop.f32.mrf.mxu0
    %v9258 = vadd.f32 0.0, %v9257
    %v9259 = vpop.f32.mrf.mxu0
    %v9260 = vpop.f32.mrf.mxu0
    %9261 = vdwg.mxu0
    %9262 = vmatprep.subr.bf16.mxu0 0
    %9263 = vmatpush1.bf16.msra.mxu0 0
    %9264 = vmatprep.subr.bf16.mxu0 0
    %9265 = vmatpush1.bf16.msra.mxu0 0
    %9266 = vmatprep.subr.bf16.mxu0 0
    %9267 = vmatpush1.bf16.msra.mxu0 0
    %9268 = vmatprep.subr.bf16.mxu0 0
    %9269 = vmatpush1.bf16.msra.mxu0 0
    %9270 = vmatprep.subr.bf16.mxu0 %v9201
    %9271 = vmatpush1.bf16.msra.mxu0 %v9200
    %9272 = vmatprep.subr.bf16.mxu0 %v9197
    %9273 = vmatpush1.bf16.msra.mxu0 %v9196
    %9274 = vmatprep.subr.bf16.mxu0 %v9193
    %9275 = vmatpush1.bf16.msra.mxu0 %v9192
    %9276 = vmatprep.subr.bf16.mxu0 %v9189
    %9277 = vmatpush1.bf16.msra.mxu0 %v9188
    %9278 = vmatprep.subr.bf16.mxu0 0
    %9279 = vmatpush2.bf16.msra.mxu0 0
    %9280 = vmatprep.subr.bf16.mxu0 0
    %9281 = vmatpush2.bf16.msra.mxu0 0
    %9282 = vmatprep.subr.bf16.mxu0 0
    %9283 = vmatpush2.bf16.msra.mxu0 0
    %9284 = vmatprep.subr.bf16.mxu0 0
    %9285 = vmatpush2.bf16.msra.mxu0 0
    %9286 = vmatprep.subr.bf16.mxu0 0
    %9287 = vmatpush2.bf16.msra.mxu0 0
    %9288 = vmatprep.subr.bf16.mxu0 0
    %9289 = vmatpush2.bf16.msra.mxu0 0
    %9290 = vmatprep.subr.bf16.mxu0 0
    %9291 = vmatpush2.bf16.msra.mxu0 0
    %9292 = vmatprep.subr.bf16.mxu0 0
    %9293 = vmatpush2.bf16.msra.mxu0 0
    %9294 = vmatprep.mubr.bf16.mxu0 0
    %9295 = vmatmul.mubr.bf16.gmra.mxu0 %v9219
    %v9296 = vpop.f32.mrf.mxu0
    %v9297 = vadd.f32 0.0, %v9296
    %v9298 = vpop.f32.mrf.mxu0
    %v9299 = vadd.f32 0.0, %v9298
    %v9300 = vpop.f32.mrf.mxu0
    %v9301 = vpop.f32.mrf.mxu0
    %9302 = vdwg.mxu0
    %v9303 = vadd.f32 %v9115, %v9256
    %v9304 = vadd.f32 %v9116, %v9258
    %v9305 = vadd.f32 %v9117, %v9297
    %v9306 = vadd.f32 %v9118, %v9299
    %s9307 = scalar_lea.vmem [#allocation12], 22
    %v9308 = vld [vmem:[%s9307] ss:$24 sm:$0x3]
    %v9309 = vpack.c.bf16 %v9308, %v9308
    %v9310 = vld [vmem:[#allocation3 + $0xb00] sm:$0xff]
    %v9311 = vld [vmem:[#allocation3 + $0xb08] sm:$0xff]
    %v9312 = vld [vmem:[#allocation3 + $0xb10] sm:$0xff]
    %v9313 = vld [vmem:[#allocation3 + $0xb18] sm:$0xff]
    %v9314 = vld [vmem:[#allocation3 + $0xb20] sm:$0xff]
    %v9315 = vld [vmem:[#allocation3 + $0xb28] sm:$0xff]
    %v9316 = vld [vmem:[#allocation3 + $0xb30] sm:$0xff]
    %v9317 = vld [vmem:[#allocation3 + $0xb38] sm:$0xff]
    %v9318 = vld [vmem:[#allocation3 + $0xb40] sm:$0xff]
    %v9319 = vld [vmem:[#allocation3 + $0xb48] sm:$0xff]
    %v9320 = vld [vmem:[#allocation3 + $0xb50] sm:$0xff]
    %v9321 = vld [vmem:[#allocation3 + $0xb58] sm:$0xff]
    %v9322 = vld [vmem:[#allocation3 + $0xb60] sm:$0xff]
    %v9323 = vld [vmem:[#allocation3 + $0xb68] sm:$0xff]
    %v9324 = vld [vmem:[#allocation3 + $0xb70] sm:$0xff]
    %v9325 = vld [vmem:[#allocation3 + $0xb78] sm:$0xff]
    %v9342 = vunpack.c.l.b16 %v9310
    %v9343 = vunpack.c.h.b16 %v9310
    %v9344 = vunpack.c.l.b16 %v9311
    %v9345 = vunpack.c.h.b16 %v9311
    %v9346 = vunpack.c.l.b16 %v9312
    %v9347 = vunpack.c.h.b16 %v9312
    %v9348 = vunpack.c.l.b16 %v9313
    %v9349 = vunpack.c.h.b16 %v9313
    %v9350 = vunpack.c.l.b16 %v9314
    %v9351 = vunpack.c.h.b16 %v9314
    %v9352 = vunpack.c.l.b16 %v9315
    %v9353 = vunpack.c.h.b16 %v9315
    %v9354 = vunpack.c.l.b16 %v9316
    %v9355 = vunpack.c.h.b16 %v9316
    %v9356 = vunpack.c.l.b16 %v9317
    %v9357 = vunpack.c.h.b16 %v9317
    %v9358 = vunpack.c.l.b16 %v9318
    %v9359 = vunpack.c.h.b16 %v9318
    %v9360 = vunpack.c.l.b16 %v9319
    %v9361 = vunpack.c.h.b16 %v9319
    %v9362 = vunpack.c.l.b16 %v9320
    %v9363 = vunpack.c.h.b16 %v9320
    %v9364 = vunpack.c.l.b16 %v9321
    %v9365 = vunpack.c.h.b16 %v9321
    %v9366 = vunpack.c.l.b16 %v9322
    %v9367 = vunpack.c.h.b16 %v9322
    %v9368 = vunpack.c.l.b16 %v9323
    %v9369 = vunpack.c.h.b16 %v9323
    %v9370 = vunpack.c.l.b16 %v9324
    %v9371 = vunpack.c.h.b16 %v9324
    %v9372 = vunpack.c.l.b16 %v9325
    %v9373 = vunpack.c.h.b16 %v9325
    %v9374 = vpack.c.b16 %v9346, %v9342
    %v9375 = vpack.c.b16 %v9347, %v9343
    %v9376 = vpack.c.b16 %v9348, %v9344
    %v9377 = vpack.c.b16 %v9349, %v9345
    %v9378 = vpack.c.b16 %v9354, %v9350
    %v9379 = vpack.c.b16 %v9355, %v9351
    %v9380 = vpack.c.b16 %v9356, %v9352
    %v9381 = vpack.c.b16 %v9357, %v9353
    %v9382 = vpack.c.b16 %v9362, %v9358
    %v9383 = vpack.c.b16 %v9363, %v9359
    %v9384 = vpack.c.b16 %v9364, %v9360
    %v9385 = vpack.c.b16 %v9365, %v9361
    %v9386 = vpack.c.b16 %v9370, %v9366
    %v9387 = vpack.c.b16 %v9371, %v9367
    %v9388 = vpack.c.b16 %v9372, %v9368
    %v9389 = vpack.c.b16 %v9373, %v9369
    %v9407 = vsel %vm5092, %v9309, 0
    %9409 = vmatprep.subr.bf16.mxu0 0
    %9410 = vmatpush1.bf16.msra.mxu0 0
    %9411 = vmatprep.subr.bf16.mxu0 0
    %9412 = vmatpush1.bf16.msra.mxu0 0
    %9413 = vmatprep.subr.bf16.mxu0 0
    %9414 = vmatpush1.bf16.msra.mxu0 0
    %9415 = vmatprep.subr.bf16.mxu0 0
    %9416 = vmatpush1.bf16.msra.mxu0 0
    %9417 = vmatprep.subr.bf16.mxu0 %v9387
    %9418 = vmatpush1.bf16.msra.mxu0 %v9386
    %9419 = vmatprep.subr.bf16.mxu0 %v9383
    %9420 = vmatpush1.bf16.msra.mxu0 %v9382
    %9421 = vmatprep.subr.bf16.mxu0 %v9379
    %9422 = vmatpush1.bf16.msra.mxu0 %v9378
    %9423 = vmatprep.subr.bf16.mxu0 %v9375
    %9424 = vmatpush1.bf16.msra.mxu0 %v9374
    %9425 = vmatprep.subr.bf16.mxu0 0
    %9426 = vmatpush2.bf16.msra.mxu0 0
    %9427 = vmatprep.subr.bf16.mxu0 0
    %9428 = vmatpush2.bf16.msra.mxu0 0
    %9429 = vmatprep.subr.bf16.mxu0 0
    %9430 = vmatpush2.bf16.msra.mxu0 0
    %9431 = vmatprep.subr.bf16.mxu0 0
    %9432 = vmatpush2.bf16.msra.mxu0 0
    %9433 = vmatprep.subr.bf16.mxu0 0
    %9434 = vmatpush2.bf16.msra.mxu0 0
    %9435 = vmatprep.subr.bf16.mxu0 0
    %9436 = vmatpush2.bf16.msra.mxu0 0
    %9437 = vmatprep.subr.bf16.mxu0 0
    %9438 = vmatpush2.bf16.msra.mxu0 0
    %9439 = vmatprep.subr.bf16.mxu0 0
    %9440 = vmatpush2.bf16.msra.mxu0 0
    %9441 = vmatprep.mubr.bf16.mxu0 0
    %9442 = vmatmul.mubr.bf16.gmra.mxu0 %v9407
    %v9443 = vpop.f32.mrf.mxu0
    %v9444 = vadd.f32 0.0, %v9443
    %v9445 = vpop.f32.mrf.mxu0
    %v9446 = vadd.f32 0.0, %v9445
    %v9447 = vpop.f32.mrf.mxu0
    %v9448 = vpop.f32.mrf.mxu0
    %9449 = vdwg.mxu0
    %9450 = vmatprep.subr.bf16.mxu0 0
    %9451 = vmatpush1.bf16.msra.mxu0 0
    %9452 = vmatprep.subr.bf16.mxu0 0
    %9453 = vmatpush1.bf16.msra.mxu0 0
    %9454 = vmatprep.subr.bf16.mxu0 0
    %9455 = vmatpush1.bf16.msra.mxu0 0
    %9456 = vmatprep.subr.bf16.mxu0 0
    %9457 = vmatpush1.bf16.msra.mxu0 0
    %9458 = vmatprep.subr.bf16.mxu0 %v9389
    %9459 = vmatpush1.bf16.msra.mxu0 %v9388
    %9460 = vmatprep.subr.bf16.mxu0 %v9385
    %9461 = vmatpush1.bf16.msra.mxu0 %v9384
    %9462 = vmatprep.subr.bf16.mxu0 %v9381
    %9463 = vmatpush1.bf16.msra.mxu0 %v9380
    %9464 = vmatprep.subr.bf16.mxu0 %v9377
    %9465 = vmatpush1.bf16.msra.mxu0 %v9376
    %9466 = vmatprep.subr.bf16.mxu0 0
    %9467 = vmatpush2.bf16.msra.mxu0 0
    %9468 = vmatprep.subr.bf16.mxu0 0
    %9469 = vmatpush2.bf16.msra.mxu0 0
    %9470 = vmatprep.subr.bf16.mxu0 0
    %9471 = vmatpush2.bf16.msra.mxu0 0
    %9472 = vmatprep.subr.bf16.mxu0 0
    %9473 = vmatpush2.bf16.msra.mxu0 0
    %9474 = vmatprep.subr.bf16.mxu0 0
    %9475 = vmatpush2.bf16.msra.mxu0 0
    %9476 = vmatprep.subr.bf16.mxu0 0
    %9477 = vmatpush2.bf16.msra.mxu0 0
    %9478 = vmatprep.subr.bf16.mxu0 0
    %9479 = vmatpush2.bf16.msra.mxu0 0
    %9480 = vmatprep.subr.bf16.mxu0 0
    %9481 = vmatpush2.bf16.msra.mxu0 0
    %9482 = vmatprep.mubr.bf16.mxu0 0
    %9483 = vmatmul.mubr.bf16.gmra.mxu0 %v9407
    %v9484 = vpop.f32.mrf.mxu0
    %v9485 = vadd.f32 0.0, %v9484
    %v9486 = vpop.f32.mrf.mxu0
    %v9487 = vadd.f32 0.0, %v9486
    %v9488 = vpop.f32.mrf.mxu0
    %v9489 = vpop.f32.mrf.mxu0
    %9490 = vdwg.mxu0
    %v9491 = vadd.f32 %v9303, %v9444
    %v9492 = vadd.f32 %v9304, %v9446
    %v9493 = vadd.f32 %v9305, %v9485
    %v9494 = vadd.f32 %v9306, %v9487
    %s9495 = scalar_lea.vmem [#allocation12], 23
    %v9496 = vld [vmem:[%s9495] ss:$24 sm:$0x3]
    %v9497 = vpack.c.bf16 %v9496, %v9496
    %v9498 = vld [vmem:[#allocation3 + $0xb80] sm:$0xff]
    %v9499 = vld [vmem:[#allocation3 + $0xb88] sm:$0xff]
    %v9500 = vld [vmem:[#allocation3 + $0xb90] sm:$0xff]
    %v9501 = vld [vmem:[#allocation3 + $0xb98] sm:$0xff]
    %v9502 = vld [vmem:[#allocation3 + $0xba0] sm:$0xff]
    %v9503 = vld [vmem:[#allocation3 + $0xba8] sm:$0xff]
    %v9504 = vld [vmem:[#allocation3 + $0xbb0] sm:$0xff]
    %v9505 = vld [vmem:[#allocation3 + $0xbb8] sm:$0xff]
    %v9506 = vld [vmem:[#allocation3 + $0xbc0] sm:$0xff]
    %v9507 = vld [vmem:[#allocation3 + $0xbc8] sm:$0xff]
    %v9508 = vld [vmem:[#allocation3 + $0xbd0] sm:$0xff]
    %v9509 = vld [vmem:[#allocation3 + $0xbd8] sm:$0xff]
    %v9510 = vld [vmem:[#allocation3 + $0xbe0] sm:$0xff]
    %v9511 = vld [vmem:[#allocation3 + $0xbe8] sm:$0xff]
    %v9512 = vld [vmem:[#allocation3 + $0xbf0] sm:$0xff]
    %v9513 = vld [vmem:[#allocation3 + $0xbf8] sm:$0xff]
    %v9530 = vunpack.c.l.b16 %v9498
    %v9531 = vunpack.c.h.b16 %v9498
    %v9532 = vunpack.c.l.b16 %v9499
    %v9533 = vunpack.c.h.b16 %v9499
    %v9534 = vunpack.c.l.b16 %v9500
    %v9535 = vunpack.c.h.b16 %v9500
    %v9536 = vunpack.c.l.b16 %v9501
    %v9537 = vunpack.c.h.b16 %v9501
    %v9538 = vunpack.c.l.b16 %v9502
    %v9539 = vunpack.c.h.b16 %v9502
    %v9540 = vunpack.c.l.b16 %v9503
    %v9541 = vunpack.c.h.b16 %v9503
    %v9542 = vunpack.c.l.b16 %v9504
    %v9543 = vunpack.c.h.b16 %v9504
    %v9544 = vunpack.c.l.b16 %v9505
    %v9545 = vunpack.c.h.b16 %v9505
    %v9546 = vunpack.c.l.b16 %v9506
    %v9547 = vunpack.c.h.b16 %v9506
    %v9548 = vunpack.c.l.b16 %v9507
    %v9549 = vunpack.c.h.b16 %v9507
    %v9550 = vunpack.c.l.b16 %v9508
    %v9551 = vunpack.c.h.b16 %v9508
    %v9552 = vunpack.c.l.b16 %v9509
    %v9553 = vunpack.c.h.b16 %v9509
    %v9554 = vunpack.c.l.b16 %v9510
    %v9555 = vunpack.c.h.b16 %v9510
    %v9556 = vunpack.c.l.b16 %v9511
    %v9557 = vunpack.c.h.b16 %v9511
    %v9558 = vunpack.c.l.b16 %v9512
    %v9559 = vunpack.c.h.b16 %v9512
    %v9560 = vunpack.c.l.b16 %v9513
    %v9561 = vunpack.c.h.b16 %v9513
    %v9562 = vpack.c.b16 %v9534, %v9530
    %v9563 = vpack.c.b16 %v9535, %v9531
    %v9564 = vpack.c.b16 %v9536, %v9532
    %v9565 = vpack.c.b16 %v9537, %v9533
    %v9566 = vpack.c.b16 %v9542, %v9538
    %v9567 = vpack.c.b16 %v9543, %v9539
    %v9568 = vpack.c.b16 %v9544, %v9540
    %v9569 = vpack.c.b16 %v9545, %v9541
    %v9570 = vpack.c.b16 %v9550, %v9546
    %v9571 = vpack.c.b16 %v9551, %v9547
    %v9572 = vpack.c.b16 %v9552, %v9548
    %v9573 = vpack.c.b16 %v9553, %v9549
    %v9574 = vpack.c.b16 %v9558, %v9554
    %v9575 = vpack.c.b16 %v9559, %v9555
    %v9576 = vpack.c.b16 %v9560, %v9556
    %v9577 = vpack.c.b16 %v9561, %v9557
    %v9595 = vsel %vm5092, %v9497, 0
    %9597 = vmatprep.subr.bf16.mxu0 0
    %9598 = vmatpush1.bf16.msra.mxu0 0
    %9599 = vmatprep.subr.bf16.mxu0 0
    %9600 = vmatpush1.bf16.msra.mxu0 0
    %9601 = vmatprep.subr.bf16.mxu0 0
    %9602 = vmatpush1.bf16.msra.mxu0 0
    %9603 = vmatprep.subr.bf16.mxu0 0
    %9604 = vmatpush1.bf16.msra.mxu0 0
    %9605 = vmatprep.subr.bf16.mxu0 %v9575
    %9606 = vmatpush1.bf16.msra.mxu0 %v9574
    %9607 = vmatprep.subr.bf16.mxu0 %v9571
    %9608 = vmatpush1.bf16.msra.mxu0 %v9570
    %9609 = vmatprep.subr.bf16.mxu0 %v9567
    %9610 = vmatpush1.bf16.msra.mxu0 %v9566
    %9611 = vmatprep.subr.bf16.mxu0 %v9563
    %9612 = vmatpush1.bf16.msra.mxu0 %v9562
    %9613 = vmatprep.subr.bf16.mxu0 0
    %9614 = vmatpush2.bf16.msra.mxu0 0
    %9615 = vmatprep.subr.bf16.mxu0 0
    %9616 = vmatpush2.bf16.msra.mxu0 0
    %9617 = vmatprep.subr.bf16.mxu0 0
    %9618 = vmatpush2.bf16.msra.mxu0 0
    %9619 = vmatprep.subr.bf16.mxu0 0
    %9620 = vmatpush2.bf16.msra.mxu0 0
    %9621 = vmatprep.subr.bf16.mxu0 0
    %9622 = vmatpush2.bf16.msra.mxu0 0
    %9623 = vmatprep.subr.bf16.mxu0 0
    %9624 = vmatpush2.bf16.msra.mxu0 0
    %9625 = vmatprep.subr.bf16.mxu0 0
    %9626 = vmatpush2.bf16.msra.mxu0 0
    %9627 = vmatprep.subr.bf16.mxu0 0
    %9628 = vmatpush2.bf16.msra.mxu0 0
    %9629 = vmatprep.mubr.bf16.mxu0 0
    %9630 = vmatmul.mubr.bf16.gmra.mxu0 %v9595
    %v9631 = vpop.f32.mrf.mxu0
    %v9632 = vadd.f32 0.0, %v9631
    %v9633 = vpop.f32.mrf.mxu0
    %v9634 = vadd.f32 0.0, %v9633
    %v9635 = vpop.f32.mrf.mxu0
    %v9636 = vpop.f32.mrf.mxu0
    %9637 = vdwg.mxu0
    %9638 = vmatprep.subr.bf16.mxu0 0
    %9639 = vmatpush1.bf16.msra.mxu0 0
    %9640 = vmatprep.subr.bf16.mxu0 0
    %9641 = vmatpush1.bf16.msra.mxu0 0
    %9642 = vmatprep.subr.bf16.mxu0 0
    %9643 = vmatpush1.bf16.msra.mxu0 0
    %9644 = vmatprep.subr.bf16.mxu0 0
    %9645 = vmatpush1.bf16.msra.mxu0 0
    %9646 = vmatprep.subr.bf16.mxu0 %v9577
    %9647 = vmatpush1.bf16.msra.mxu0 %v9576
    %9648 = vmatprep.subr.bf16.mxu0 %v9573
    %9649 = vmatpush1.bf16.msra.mxu0 %v9572
    %9650 = vmatprep.subr.bf16.mxu0 %v9569
    %9651 = vmatpush1.bf16.msra.mxu0 %v9568
    %9652 = vmatprep.subr.bf16.mxu0 %v9565
    %9653 = vmatpush1.bf16.msra.mxu0 %v9564
    %9654 = vmatprep.subr.bf16.mxu0 0
    %9655 = vmatpush2.bf16.msra.mxu0 0
    %9656 = vmatprep.subr.bf16.mxu0 0
    %9657 = vmatpush2.bf16.msra.mxu0 0
    %9658 = vmatprep.subr.bf16.mxu0 0
    %9659 = vmatpush2.bf16.msra.mxu0 0
    %9660 = vmatprep.subr.bf16.mxu0 0
    %9661 = vmatpush2.bf16.msra.mxu0 0
    %9662 = vmatprep.subr.bf16.mxu0 0
    %9663 = vmatpush2.bf16.msra.mxu0 0
    %9664 = vmatprep.subr.bf16.mxu0 0
    %9665 = vmatpush2.bf16.msra.mxu0 0
    %9666 = vmatprep.subr.bf16.mxu0 0
    %9667 = vmatpush2.bf16.msra.mxu0 0
    %9668 = vmatprep.subr.bf16.mxu0 0
    %9669 = vmatpush2.bf16.msra.mxu0 0
    %9670 = vmatprep.mubr.bf16.mxu0 0
    %9671 = vmatmul.mubr.bf16.gmra.mxu0 %v9595
    %v9672 = vpop.f32.mrf.mxu0
    %v9673 = vadd.f32 0.0, %v9672
    %v9674 = vpop.f32.mrf.mxu0
    %v9675 = vadd.f32 0.0, %v9674
    %v9676 = vpop.f32.mrf.mxu0
    %v9677 = vpop.f32.mrf.mxu0
    %9678 = vdwg.mxu0
    %v9679 = vadd.f32 %v9491, %v9632
    %v9680 = vadd.f32 %v9492, %v9634
    %v9681 = vadd.f32 %v9493, %v9673
    %v9682 = vadd.f32 %v9494, %v9675
    %v9683 = vmax.f32 %v9679, 0.0
    %v9684 = vmax.f32 %v9680, 0.0
    %v9685 = vmax.f32 %v9681, 0.0
    %v9686 = vmax.f32 %v9682, 0.0
    %s9687 = smul.u32 4, 64
    %s9688 = smul.u32 %s9687, 2
    %s9689 = sshll.u32 %s9688, 4
    %9690 = dma.done %s523, %s9689
    %v9691 = vpack.c.bf16 %v9683, %v9683
    %v9692 = vpack.c.bf16 %v9684, %v9684
    %v9693 = vpack.c.bf16 %v9685, %v9685
    %v9694 = vpack.c.bf16 %v9686, %v9686
    %v9695 = vld [vmem:[#allocation4] sm:$0xff]
    %v9696 = vld [vmem:[#allocation4 + $0x8] sm:$0xff]
    %v9697 = vld [vmem:[#allocation4 + $0x10] sm:$0xff]
    %v9698 = vld [vmem:[#allocation4 + $0x18] sm:$0xff]
    %v9699 = vld [vmem:[#allocation4 + $0x20] sm:$0xff]
    %v9700 = vld [vmem:[#allocation4 + $0x28] sm:$0xff]
    %v9701 = vld [vmem:[#allocation4 + $0x30] sm:$0xff]
    %v9702 = vld [vmem:[#allocation4 + $0x38] sm:$0xff]
    %v9703 = vld [vmem:[#allocation4 + $0x40] sm:$0xff]
    %v9704 = vld [vmem:[#allocation4 + $0x48] sm:$0xff]
    %v9705 = vld [vmem:[#allocation4 + $0x50] sm:$0xff]
    %v9706 = vld [vmem:[#allocation4 + $0x58] sm:$0xff]
    %v9707 = vld [vmem:[#allocation4 + $0x60] sm:$0xff]
    %v9708 = vld [vmem:[#allocation4 + $0x68] sm:$0xff]
    %v9709 = vld [vmem:[#allocation4 + $0x70] sm:$0xff]
    %v9710 = vld [vmem:[#allocation4 + $0x78] sm:$0xff]
    %v9711 = vld [vmem:[#allocation4 + $0x80] sm:$0xff]
    %v9712 = vld [vmem:[#allocation4 + $0x88] sm:$0xff]
    %v9713 = vld [vmem:[#allocation4 + $0x90] sm:$0xff]
    %v9714 = vld [vmem:[#allocation4 + $0x98] sm:$0xff]
    %v9715 = vld [vmem:[#allocation4 + $0xa0] sm:$0xff]
    %v9716 = vld [vmem:[#allocation4 + $0xa8] sm:$0xff]
    %v9717 = vld [vmem:[#allocation4 + $0xb0] sm:$0xff]
    %v9718 = vld [vmem:[#allocation4 + $0xb8] sm:$0xff]
    %v9719 = vld [vmem:[#allocation4 + $0xc0] sm:$0xff]
    %v9720 = vld [vmem:[#allocation4 + $0xc8] sm:$0xff]
    %v9721 = vld [vmem:[#allocation4 + $0xd0] sm:$0xff]
    %v9722 = vld [vmem:[#allocation4 + $0xd8] sm:$0xff]
    %v9723 = vld [vmem:[#allocation4 + $0xe0] sm:$0xff]
    %v9724 = vld [vmem:[#allocation4 + $0xe8] sm:$0xff]
    %v9725 = vld [vmem:[#allocation4 + $0xf0] sm:$0xff]
    %v9726 = vld [vmem:[#allocation4 + $0xf8] sm:$0xff]
    %v9727 = vld [vmem:[#allocation4 + $0x100] sm:$0xff]
    %v9728 = vld [vmem:[#allocation4 + $0x108] sm:$0xff]
    %v9729 = vld [vmem:[#allocation4 + $0x110] sm:$0xff]
    %v9730 = vld [vmem:[#allocation4 + $0x118] sm:$0xff]
    %v9731 = vld [vmem:[#allocation4 + $0x120] sm:$0xff]
    %v9732 = vld [vmem:[#allocation4 + $0x128] sm:$0xff]
    %v9733 = vld [vmem:[#allocation4 + $0x130] sm:$0xff]
    %v9734 = vld [vmem:[#allocation4 + $0x138] sm:$0xff]
    %v9735 = vld [vmem:[#allocation4 + $0x140] sm:$0xff]
    %v9736 = vld [vmem:[#allocation4 + $0x148] sm:$0xff]
    %v9737 = vld [vmem:[#allocation4 + $0x150] sm:$0xff]
    %v9738 = vld [vmem:[#allocation4 + $0x158] sm:$0xff]
    %v9739 = vld [vmem:[#allocation4 + $0x160] sm:$0xff]
    %v9740 = vld [vmem:[#allocation4 + $0x168] sm:$0xff]
    %v9741 = vld [vmem:[#allocation4 + $0x170] sm:$0xff]
    %v9742 = vld [vmem:[#allocation4 + $0x178] sm:$0xff]
    %v9743 = vld [vmem:[#allocation4 + $0x180] sm:$0xff]
    %v9744 = vld [vmem:[#allocation4 + $0x188] sm:$0xff]
    %v9745 = vld [vmem:[#allocation4 + $0x190] sm:$0xff]
    %v9746 = vld [vmem:[#allocation4 + $0x198] sm:$0xff]
    %v9747 = vld [vmem:[#allocation4 + $0x1a0] sm:$0xff]
    %v9748 = vld [vmem:[#allocation4 + $0x1a8] sm:$0xff]
    %v9749 = vld [vmem:[#allocation4 + $0x1b0] sm:$0xff]
    %v9750 = vld [vmem:[#allocation4 + $0x1b8] sm:$0xff]
    %v9751 = vld [vmem:[#allocation4 + $0x1c0] sm:$0xff]
    %v9752 = vld [vmem:[#allocation4 + $0x1c8] sm:$0xff]
    %v9753 = vld [vmem:[#allocation4 + $0x1d0] sm:$0xff]
    %v9754 = vld [vmem:[#allocation4 + $0x1d8] sm:$0xff]
    %v9755 = vld [vmem:[#allocation4 + $0x1e0] sm:$0xff]
    %v9756 = vld [vmem:[#allocation4 + $0x1e8] sm:$0xff]
    %v9757 = vld [vmem:[#allocation4 + $0x1f0] sm:$0xff]
    %v9758 = vld [vmem:[#allocation4 + $0x1f8] sm:$0xff]
    %v9759 = vld [vmem:[#allocation20] sm:$0x3]
    %v9761 = vlaneseq
    %v9762 = vshrl.u32 %v9761, 7
    %v9763 = vsub.s32 0, %v9762
    %v9764 = vrot.slane %v9759, %v9763
    %v9765 = vlaneseq
    %v9766 = vshrl.u32 %v9765, 7
    %v9767 = vsub.s32 1, %v9766
    %v9768 = vrot.slane %v9759, %v9767
    %v9835 = vunpack.c.l.b16 %v9695
    %v9836 = vunpack.c.h.b16 %v9695
    %v9837 = vunpack.c.l.b16 %v9696
    %v9838 = vunpack.c.h.b16 %v9696
    %v9839 = vunpack.c.l.b16 %v9697
    %v9840 = vunpack.c.h.b16 %v9697
    %v9841 = vunpack.c.l.b16 %v9698
    %v9842 = vunpack.c.h.b16 %v9698
    %v9843 = vunpack.c.l.b16 %v9699
    %v9844 = vunpack.c.h.b16 %v9699
    %v9845 = vunpack.c.l.b16 %v9700
    %v9846 = vunpack.c.h.b16 %v9700
    %v9847 = vunpack.c.l.b16 %v9701
    %v9848 = vunpack.c.h.b16 %v9701
    %v9849 = vunpack.c.l.b16 %v9702
    %v9850 = vunpack.c.h.b16 %v9702
    %v9851 = vunpack.c.l.b16 %v9703
    %v9852 = vunpack.c.h.b16 %v9703
    %v9853 = vunpack.c.l.b16 %v9704
    %v9854 = vunpack.c.h.b16 %v9704
    %v9855 = vunpack.c.l.b16 %v9705
    %v9856 = vunpack.c.h.b16 %v9705
    %v9857 = vunpack.c.l.b16 %v9706
    %v9858 = vunpack.c.h.b16 %v9706
    %v9859 = vunpack.c.l.b16 %v9707
    %v9860 = vunpack.c.h.b16 %v9707
    %v9861 = vunpack.c.l.b16 %v9708
    %v9862 = vunpack.c.h.b16 %v9708
    %v9863 = vunpack.c.l.b16 %v9709
    %v9864 = vunpack.c.h.b16 %v9709
    %v9865 = vunpack.c.l.b16 %v9710
    %v9866 = vunpack.c.h.b16 %v9710
    %v9867 = vunpack.c.l.b16 %v9711
    %v9868 = vunpack.c.h.b16 %v9711
    %v9869 = vunpack.c.l.b16 %v9712
    %v9870 = vunpack.c.h.b16 %v9712
    %v9871 = vunpack.c.l.b16 %v9713
    %v9872 = vunpack.c.h.b16 %v9713
    %v9873 = vunpack.c.l.b16 %v9714
    %v9874 = vunpack.c.h.b16 %v9714
    %v9875 = vunpack.c.l.b16 %v9715
    %v9876 = vunpack.c.h.b16 %v9715
    %v9877 = vunpack.c.l.b16 %v9716
    %v9878 = vunpack.c.h.b16 %v9716
    %v9879 = vunpack.c.l.b16 %v9717
    %v9880 = vunpack.c.h.b16 %v9717
    %v9881 = vunpack.c.l.b16 %v9718
    %v9882 = vunpack.c.h.b16 %v9718
    %v9883 = vunpack.c.l.b16 %v9719
    %v9884 = vunpack.c.h.b16 %v9719
    %v9885 = vunpack.c.l.b16 %v9720
    %v9886 = vunpack.c.h.b16 %v9720
    %v9887 = vunpack.c.l.b16 %v9721
    %v9888 = vunpack.c.h.b16 %v9721
    %v9889 = vunpack.c.l.b16 %v9722
    %v9890 = vunpack.c.h.b16 %v9722
    %v9891 = vunpack.c.l.b16 %v9723
    %v9892 = vunpack.c.h.b16 %v9723
    %v9893 = vunpack.c.l.b16 %v9724
    %v9894 = vunpack.c.h.b16 %v9724
    %v9895 = vunpack.c.l.b16 %v9725
    %v9896 = vunpack.c.h.b16 %v9725
    %v9897 = vunpack.c.l.b16 %v9726
    %v9898 = vunpack.c.h.b16 %v9726
    %v9899 = vunpack.c.l.b16 %v9727
    %v9900 = vunpack.c.h.b16 %v9727
    %v9901 = vunpack.c.l.b16 %v9728
    %v9902 = vunpack.c.h.b16 %v9728
    %v9903 = vunpack.c.l.b16 %v9729
    %v9904 = vunpack.c.h.b16 %v9729
    %v9905 = vunpack.c.l.b16 %v9730
    %v9906 = vunpack.c.h.b16 %v9730
    %v9907 = vunpack.c.l.b16 %v9731
    %v9908 = vunpack.c.h.b16 %v9731
    %v9909 = vunpack.c.l.b16 %v9732
    %v9910 = vunpack.c.h.b16 %v9732
    %v9911 = vunpack.c.l.b16 %v9733
    %v9912 = vunpack.c.h.b16 %v9733
    %v9913 = vunpack.c.l.b16 %v9734
    %v9914 = vunpack.c.h.b16 %v9734
    %v9915 = vunpack.c.l.b16 %v9735
    %v9916 = vunpack.c.h.b16 %v9735
    %v9917 = vunpack.c.l.b16 %v9736
    %v9918 = vunpack.c.h.b16 %v9736
    %v9919 = vunpack.c.l.b16 %v9737
    %v9920 = vunpack.c.h.b16 %v9737
    %v9921 = vunpack.c.l.b16 %v9738
    %v9922 = vunpack.c.h.b16 %v9738
    %v9923 = vunpack.c.l.b16 %v9739
    %v9924 = vunpack.c.h.b16 %v9739
    %v9925 = vunpack.c.l.b16 %v9740
    %v9926 = vunpack.c.h.b16 %v9740
    %v9927 = vunpack.c.l.b16 %v9741
    %v9928 = vunpack.c.h.b16 %v9741
    %v9929 = vunpack.c.l.b16 %v9742
    %v9930 = vunpack.c.h.b16 %v9742
    %v9931 = vunpack.c.l.b16 %v9743
    %v9932 = vunpack.c.h.b16 %v9743
    %v9933 = vunpack.c.l.b16 %v9744
    %v9934 = vunpack.c.h.b16 %v9744
    %v9935 = vunpack.c.l.b16 %v9745
    %v9936 = vunpack.c.h.b16 %v9745
    %v9937 = vunpack.c.l.b16 %v9746
    %v9938 = vunpack.c.h.b16 %v9746
    %v9939 = vunpack.c.l.b16 %v9747
    %v9940 = vunpack.c.h.b16 %v9747
    %v9941 = vunpack.c.l.b16 %v9748
    %v9942 = vunpack.c.h.b16 %v9748
    %v9943 = vunpack.c.l.b16 %v9749
    %v9944 = vunpack.c.h.b16 %v9749
    %v9945 = vunpack.c.l.b16 %v9750
    %v9946 = vunpack.c.h.b16 %v9750
    %v9947 = vunpack.c.l.b16 %v9751
    %v9948 = vunpack.c.h.b16 %v9751
    %v9949 = vunpack.c.l.b16 %v9752
    %v9950 = vunpack.c.h.b16 %v9752
    %v9951 = vunpack.c.l.b16 %v9753
    %v9952 = vunpack.c.h.b16 %v9753
    %v9953 = vunpack.c.l.b16 %v9754
    %v9954 = vunpack.c.h.b16 %v9754
    %v9955 = vunpack.c.l.b16 %v9755
    %v9956 = vunpack.c.h.b16 %v9755
    %v9957 = vunpack.c.l.b16 %v9756
    %v9958 = vunpack.c.h.b16 %v9756
    %v9959 = vunpack.c.l.b16 %v9757
    %v9960 = vunpack.c.h.b16 %v9757
    %v9961 = vunpack.c.l.b16 %v9758
    %v9962 = vunpack.c.h.b16 %v9758
    %v9963 = vpack.c.b16 %v9837, %v9835
    %v9964 = vpack.c.b16 %v9838, %v9836
    %v9965 = vpack.c.b16 %v9841, %v9839
    %v9966 = vpack.c.b16 %v9842, %v9840
    %v9967 = vpack.c.b16 %v9845, %v9843
    %v9968 = vpack.c.b16 %v9846, %v9844
    %v9969 = vpack.c.b16 %v9849, %v9847
    %v9970 = vpack.c.b16 %v9850, %v9848
    %v9971 = vpack.c.b16 %v9853, %v9851
    %v9972 = vpack.c.b16 %v9854, %v9852
    %v9973 = vpack.c.b16 %v9857, %v9855
    %v9974 = vpack.c.b16 %v9858, %v9856
    %v9975 = vpack.c.b16 %v9861, %v9859
    %v9976 = vpack.c.b16 %v9862, %v9860
    %v9977 = vpack.c.b16 %v9865, %v9863
    %v9978 = vpack.c.b16 %v9866, %v9864
    %v9979 = vpack.c.b16 %v9869, %v9867
    %v9980 = vpack.c.b16 %v9870, %v9868
    %v9981 = vpack.c.b16 %v9873, %v9871
    %v9982 = vpack.c.b16 %v9874, %v9872
    %v9983 = vpack.c.b16 %v9877, %v9875
    %v9984 = vpack.c.b16 %v9878, %v9876
    %v9985 = vpack.c.b16 %v9881, %v9879
    %v9986 = vpack.c.b16 %v9882, %v9880
    %v9987 = vpack.c.b16 %v9885, %v9883
    %v9988 = vpack.c.b16 %v9886, %v9884
    %v9989 = vpack.c.b16 %v9889, %v9887
    %v9990 = vpack.c.b16 %v9890, %v9888
    %v9991 = vpack.c.b16 %v9893, %v9891
    %v9992 = vpack.c.b16 %v9894, %v9892
    %v9993 = vpack.c.b16 %v9897, %v9895
    %v9994 = vpack.c.b16 %v9898, %v9896
    %v9995 = vpack.c.b16 %v9901, %v9899
    %v9996 = vpack.c.b16 %v9902, %v9900
    %v9997 = vpack.c.b16 %v9905, %v9903
    %v9998 = vpack.c.b16 %v9906, %v9904
    %v9999 = vpack.c.b16 %v9909, %v9907
    %v10000 = vpack.c.b16 %v9910, %v9908
    %v10001 = vpack.c.b16 %v9913, %v9911
    %v10002 = vpack.c.b16 %v9914, %v9912
    %v10003 = vpack.c.b16 %v9917, %v9915
    %v10004 = vpack.c.b16 %v9918, %v9916
    %v10005 = vpack.c.b16 %v9921, %v9919
    %v10006 = vpack.c.b16 %v9922, %v9920
    %v10007 = vpack.c.b16 %v9925, %v9923
    %v10008 = vpack.c.b16 %v9926, %v9924
    %v10009 = vpack.c.b16 %v9929, %v9927
    %v10010 = vpack.c.b16 %v9930, %v9928
    %v10011 = vpack.c.b16 %v9933, %v9931
    %v10012 = vpack.c.b16 %v9934, %v9932
    %v10013 = vpack.c.b16 %v9937, %v9935
    %v10014 = vpack.c.b16 %v9938, %v9936
    %v10015 = vpack.c.b16 %v9941, %v9939
    %v10016 = vpack.c.b16 %v9942, %v9940
    %v10017 = vpack.c.b16 %v9945, %v9943
    %v10018 = vpack.c.b16 %v9946, %v9944
    %v10019 = vpack.c.b16 %v9949, %v9947
    %v10020 = vpack.c.b16 %v9950, %v9948
    %v10021 = vpack.c.b16 %v9953, %v9951
    %v10022 = vpack.c.b16 %v9954, %v9952
    %v10023 = vpack.c.b16 %v9957, %v9955
    %v10024 = vpack.c.b16 %v9958, %v9956
    %v10025 = vpack.c.b16 %v9961, %v9959
    %v10026 = vpack.c.b16 %v9962, %v9960
    %10091 = vmatprep.subr.bf16.mxu0 %v9978
    %10092 = vmatpush1.bf16.msra.mxu0 %v9977
    %10093 = vmatprep.subr.bf16.mxu0 %v9976
    %10094 = vmatpush1.bf16.msra.mxu0 %v9975
    %10095 = vmatprep.subr.bf16.mxu0 %v9974
    %10096 = vmatpush1.bf16.msra.mxu0 %v9973
    %10097 = vmatprep.subr.bf16.mxu0 %v9972
    %10098 = vmatpush1.bf16.msra.mxu0 %v9971
    %10099 = vmatprep.subr.bf16.mxu0 %v9970
    %10100 = vmatpush1.bf16.msra.mxu0 %v9969
    %10101 = vmatprep.subr.bf16.mxu0 %v9968
    %10102 = vmatpush1.bf16.msra.mxu0 %v9967
    %10103 = vmatprep.subr.bf16.mxu0 %v9966
    %10104 = vmatpush1.bf16.msra.mxu0 %v9965
    %10105 = vmatprep.subr.bf16.mxu0 %v9964
    %10106 = vmatpush1.bf16.msra.mxu0 %v9963
    %10107 = vmatprep.subr.bf16.mxu0 %v9994
    %10108 = vmatpush2.bf16.msra.mxu0 %v9993
    %10109 = vmatprep.subr.bf16.mxu0 %v9992
    %10110 = vmatpush2.bf16.msra.mxu0 %v9991
    %10111 = vmatprep.subr.bf16.mxu0 %v9990
    %10112 = vmatpush2.bf16.msra.mxu0 %v9989
    %10113 = vmatprep.subr.bf16.mxu0 %v9988
    %10114 = vmatpush2.bf16.msra.mxu0 %v9987
    %10115 = vmatprep.subr.bf16.mxu0 %v9986
    %10116 = vmatpush2.bf16.msra.mxu0 %v9985
    %10117 = vmatprep.subr.bf16.mxu0 %v9984
    %10118 = vmatpush2.bf16.msra.mxu0 %v9983
    %10119 = vmatprep.subr.bf16.mxu0 %v9982
    %10120 = vmatpush2.bf16.msra.mxu0 %v9981
    %10121 = vmatprep.subr.bf16.mxu0 %v9980
    %10122 = vmatpush2.bf16.msra.mxu0 %v9979
    %10123 = vmatprep.mubr.bf16.mxu0 %v9692
    %10124 = vmatmul.mubr.bf16.gmra.mxu0 %v9691
    %v10125 = vpop.f32.mrf.mxu0
    %v10126 = vadd.f32 %v9764, %v10125
    %v10127 = vpop.f32.mrf.mxu0
    %v10128 = vadd.f32 %v9768, %v10127
    %v10129 = vpop.f32.mrf.mxu0
    %v10130 = vpop.f32.mrf.mxu0
    %10131 = vdwg.mxu0
    %10132 = vmatprep.subr.bf16.mxu0 %v10010
    %10133 = vmatpush1.bf16.msra.mxu0 %v10009
    %10134 = vmatprep.subr.bf16.mxu0 %v10008
    %10135 = vmatpush1.bf16.msra.mxu0 %v10007
    %10136 = vmatprep.subr.bf16.mxu0 %v10006
    %10137 = vmatpush1.bf16.msra.mxu0 %v10005
    %10138 = vmatprep.subr.bf16.mxu0 %v10004
    %10139 = vmatpush1.bf16.msra.mxu0 %v10003
    %10140 = vmatprep.subr.bf16.mxu0 %v10002
    %10141 = vmatpush1.bf16.msra.mxu0 %v10001
    %10142 = vmatprep.subr.bf16.mxu0 %v10000
    %10143 = vmatpush1.bf16.msra.mxu0 %v9999
    %10144 = vmatprep.subr.bf16.mxu0 %v9998
    %10145 = vmatpush1.bf16.msra.mxu0 %v9997
    %10146 = vmatprep.subr.bf16.mxu0 %v9996
    %10147 = vmatpush1.bf16.msra.mxu0 %v9995
    %10148 = vmatprep.subr.bf16.mxu0 %v10026
    %10149 = vmatpush2.bf16.msra.mxu0 %v10025
    %10150 = vmatprep.subr.bf16.mxu0 %v10024
    %10151 = vmatpush2.bf16.msra.mxu0 %v10023
    %10152 = vmatprep.subr.bf16.mxu0 %v10022
    %10153 = vmatpush2.bf16.msra.mxu0 %v10021
    %10154 = vmatprep.subr.bf16.mxu0 %v10020
    %10155 = vmatpush2.bf16.msra.mxu0 %v10019
    %10156 = vmatprep.subr.bf16.mxu0 %v10018
    %10157 = vmatpush2.bf16.msra.mxu0 %v10017
    %10158 = vmatprep.subr.bf16.mxu0 %v10016
    %10159 = vmatpush2.bf16.msra.mxu0 %v10015
    %10160 = vmatprep.subr.bf16.mxu0 %v10014
    %10161 = vmatpush2.bf16.msra.mxu0 %v10013
    %10162 = vmatprep.subr.bf16.mxu0 %v10012
    %10163 = vmatpush2.bf16.msra.mxu0 %v10011
    %10164 = vmatprep.mubr.bf16.mxu0 %v9694
    %10165 = vmatmul.mubr.bf16.gmra.mxu0 %v9693
    %v10166 = vpop.f32.mrf.mxu0
    %v10167 = vadd.f32 %v10126, %v10166
    %v10168 = vpop.f32.mrf.mxu0
    %v10169 = vadd.f32 %v10128, %v10168
    %v10170 = vpop.f32.mrf.mxu0
    %v10171 = vpop.f32.mrf.mxu0
    %10172 = vdwg.mxu0
    %v10173 = vmax.f32 %v10167, 0.0
    %v10174 = vmax.f32 %v10169, 0.0
    %s10175 = smul.u32 4, 32
    %s10176 = smul.u32 %s10175, 2
    %s10177 = sshll.u32 %s10176, 4
    %10178 = dma.done %s535, %s10177
    %v10179 = vpack.c.bf16 %v10173, %v10173
    %v10180 = vpack.c.bf16 %v10174, %v10174
    %v10181 = vld [vmem:[#allocation5] sm:$0xff]
    %v10182 = vld [vmem:[#allocation5 + $0x8] sm:$0xff]
    %v10183 = vld [vmem:[#allocation5 + $0x10] sm:$0xff]
    %v10184 = vld [vmem:[#allocation5 + $0x18] sm:$0xff]
    %v10185 = vld [vmem:[#allocation5 + $0x20] sm:$0xff]
    %v10186 = vld [vmem:[#allocation5 + $0x28] sm:$0xff]
    %v10187 = vld [vmem:[#allocation5 + $0x30] sm:$0xff]
    %v10188 = vld [vmem:[#allocation5 + $0x38] sm:$0xff]
    %v10189 = vld [vmem:[#allocation5 + $0x40] sm:$0xff]
    %v10190 = vld [vmem:[#allocation5 + $0x48] sm:$0xff]
    %v10191 = vld [vmem:[#allocation5 + $0x50] sm:$0xff]
    %v10192 = vld [vmem:[#allocation5 + $0x58] sm:$0xff]
    %v10193 = vld [vmem:[#allocation5 + $0x60] sm:$0xff]
    %v10194 = vld [vmem:[#allocation5 + $0x68] sm:$0xff]
    %v10195 = vld [vmem:[#allocation5 + $0x70] sm:$0xff]
    %v10196 = vld [vmem:[#allocation5 + $0x78] sm:$0xff]
    %v10197 = vld [vmem:[#allocation5 + $0x80] sm:$0xff]
    %v10198 = vld [vmem:[#allocation5 + $0x88] sm:$0xff]
    %v10199 = vld [vmem:[#allocation5 + $0x90] sm:$0xff]
    %v10200 = vld [vmem:[#allocation5 + $0x98] sm:$0xff]
    %v10201 = vld [vmem:[#allocation5 + $0xa0] sm:$0xff]
    %v10202 = vld [vmem:[#allocation5 + $0xa8] sm:$0xff]
    %v10203 = vld [vmem:[#allocation5 + $0xb0] sm:$0xff]
    %v10204 = vld [vmem:[#allocation5 + $0xb8] sm:$0xff]
    %v10205 = vld [vmem:[#allocation5 + $0xc0] sm:$0xff]
    %v10206 = vld [vmem:[#allocation5 + $0xc8] sm:$0xff]
    %v10207 = vld [vmem:[#allocation5 + $0xd0] sm:$0xff]
    %v10208 = vld [vmem:[#allocation5 + $0xd8] sm:$0xff]
    %v10209 = vld [vmem:[#allocation5 + $0xe0] sm:$0xff]
    %v10210 = vld [vmem:[#allocation5 + $0xe8] sm:$0xff]
    %v10211 = vld [vmem:[#allocation5 + $0xf0] sm:$0xff]
    %v10212 = vld [vmem:[#allocation5 + $0xf8] sm:$0xff]
    %v10213 = vld [vmem:[#allocation21] sm:$0x3]
    %v10215 = vlaneseq
    %v10216 = vshrl.u32 %v10215, 7
    %v10217 = vsub.s32 0, %v10216
    %v10218 = vrot.slane %v10213, %v10217
    %v10219 = vlaneseq
    %v10220 = vshrl.u32 %v10219, 7
    %v10221 = vsub.s32 1, %v10220
    %v10222 = vrot.slane %v10213, %v10221
    %v10257 = vunpack.c.l.b16 %v10181
    %v10258 = vunpack.c.h.b16 %v10181
    %v10259 = vunpack.c.l.b16 %v10182
    %v10260 = vunpack.c.h.b16 %v10182
    %v10261 = vunpack.c.l.b16 %v10183
    %v10262 = vunpack.c.h.b16 %v10183
    %v10263 = vunpack.c.l.b16 %v10184
    %v10264 = vunpack.c.h.b16 %v10184
    %v10265 = vunpack.c.l.b16 %v10185
    %v10266 = vunpack.c.h.b16 %v10185
    %v10267 = vunpack.c.l.b16 %v10186
    %v10268 = vunpack.c.h.b16 %v10186
    %v10269 = vunpack.c.l.b16 %v10187
    %v10270 = vunpack.c.h.b16 %v10187
    %v10271 = vunpack.c.l.b16 %v10188
    %v10272 = vunpack.c.h.b16 %v10188
    %v10273 = vunpack.c.l.b16 %v10189
    %v10274 = vunpack.c.h.b16 %v10189
    %v10275 = vunpack.c.l.b16 %v10190
    %v10276 = vunpack.c.h.b16 %v10190
    %v10277 = vunpack.c.l.b16 %v10191
    %v10278 = vunpack.c.h.b16 %v10191
    %v10279 = vunpack.c.l.b16 %v10192
    %v10280 = vunpack.c.h.b16 %v10192
    %v10281 = vunpack.c.l.b16 %v10193
    %v10282 = vunpack.c.h.b16 %v10193
    %v10283 = vunpack.c.l.b16 %v10194
    %v10284 = vunpack.c.h.b16 %v10194
    %v10285 = vunpack.c.l.b16 %v10195
    %v10286 = vunpack.c.h.b16 %v10195
    %v10287 = vunpack.c.l.b16 %v10196
    %v10288 = vunpack.c.h.b16 %v10196
    %v10289 = vunpack.c.l.b16 %v10197
    %v10290 = vunpack.c.h.b16 %v10197
    %v10291 = vunpack.c.l.b16 %v10198
    %v10292 = vunpack.c.h.b16 %v10198
    %v10293 = vunpack.c.l.b16 %v10199
    %v10294 = vunpack.c.h.b16 %v10199
    %v10295 = vunpack.c.l.b16 %v10200
    %v10296 = vunpack.c.h.b16 %v10200
    %v10297 = vunpack.c.l.b16 %v10201
    %v10298 = vunpack.c.h.b16 %v10201
    %v10299 = vunpack.c.l.b16 %v10202
    %v10300 = vunpack.c.h.b16 %v10202
    %v10301 = vunpack.c.l.b16 %v10203
    %v10302 = vunpack.c.h.b16 %v10203
    %v10303 = vunpack.c.l.b16 %v10204
    %v10304 = vunpack.c.h.b16 %v10204
    %v10305 = vunpack.c.l.b16 %v10205
    %v10306 = vunpack.c.h.b16 %v10205
    %v10307 = vunpack.c.l.b16 %v10206
    %v10308 = vunpack.c.h.b16 %v10206
    %v10309 = vunpack.c.l.b16 %v10207
    %v10310 = vunpack.c.h.b16 %v10207
    %v10311 = vunpack.c.l.b16 %v10208
    %v10312 = vunpack.c.h.b16 %v10208
    %v10313 = vunpack.c.l.b16 %v10209
    %v10314 = vunpack.c.h.b16 %v10209
    %v10315 = vunpack.c.l.b16 %v10210
    %v10316 = vunpack.c.h.b16 %v10210
    %v10317 = vunpack.c.l.b16 %v10211
    %v10318 = vunpack.c.h.b16 %v10211
    %v10319 = vunpack.c.l.b16 %v10212
    %v10320 = vunpack.c.h.b16 %v10212
    %v10321 = vpack.c.b16 %v10259, %v10257
    %v10322 = vpack.c.b16 %v10260, %v10258
    %v10323 = vpack.c.b16 %v10263, %v10261
    %v10324 = vpack.c.b16 %v10264, %v10262
    %v10325 = vpack.c.b16 %v10267, %v10265
    %v10326 = vpack.c.b16 %v10268, %v10266
    %v10327 = vpack.c.b16 %v10271, %v10269
    %v10328 = vpack.c.b16 %v10272, %v10270
    %v10329 = vpack.c.b16 %v10275, %v10273
    %v10330 = vpack.c.b16 %v10276, %v10274
    %v10331 = vpack.c.b16 %v10279, %v10277
    %v10332 = vpack.c.b16 %v10280, %v10278
    %v10333 = vpack.c.b16 %v10283, %v10281
    %v10334 = vpack.c.b16 %v10284, %v10282
    %v10335 = vpack.c.b16 %v10287, %v10285
    %v10336 = vpack.c.b16 %v10288, %v10286
    %v10337 = vpack.c.b16 %v10291, %v10289
    %v10338 = vpack.c.b16 %v10292, %v10290
    %v10339 = vpack.c.b16 %v10295, %v10293
    %v10340 = vpack.c.b16 %v10296, %v10294
    %v10341 = vpack.c.b16 %v10299, %v10297
    %v10342 = vpack.c.b16 %v10300, %v10298
    %v10343 = vpack.c.b16 %v10303, %v10301
    %v10344 = vpack.c.b16 %v10304, %v10302
    %v10345 = vpack.c.b16 %v10307, %v10305
    %v10346 = vpack.c.b16 %v10308, %v10306
    %v10347 = vpack.c.b16 %v10311, %v10309
    %v10348 = vpack.c.b16 %v10312, %v10310
    %v10349 = vpack.c.b16 %v10315, %v10313
    %v10350 = vpack.c.b16 %v10316, %v10314
    %v10351 = vpack.c.b16 %v10319, %v10317
    %v10352 = vpack.c.b16 %v10320, %v10318
    %10385 = vmatprep.subr.bf16.mxu0 %v10336
    %10386 = vmatpush1.bf16.msra.mxu0 %v10335
    %10387 = vmatprep.subr.bf16.mxu0 %v10334
    %10388 = vmatpush1.bf16.msra.mxu0 %v10333
    %10389 = vmatprep.subr.bf16.mxu0 %v10332
    %10390 = vmatpush1.bf16.msra.mxu0 %v10331
    %10391 = vmatprep.subr.bf16.mxu0 %v10330
    %10392 = vmatpush1.bf16.msra.mxu0 %v10329
    %10393 = vmatprep.subr.bf16.mxu0 %v10328
    %10394 = vmatpush1.bf16.msra.mxu0 %v10327
    %10395 = vmatprep.subr.bf16.mxu0 %v10326
    %10396 = vmatpush1.bf16.msra.mxu0 %v10325
    %10397 = vmatprep.subr.bf16.mxu0 %v10324
    %10398 = vmatpush1.bf16.msra.mxu0 %v10323
    %10399 = vmatprep.subr.bf16.mxu0 %v10322
    %10400 = vmatpush1.bf16.msra.mxu0 %v10321
    %10401 = vmatprep.subr.bf16.mxu0 %v10352
    %10402 = vmatpush2.bf16.msra.mxu0 %v10351
    %10403 = vmatprep.subr.bf16.mxu0 %v10350
    %10404 = vmatpush2.bf16.msra.mxu0 %v10349
    %10405 = vmatprep.subr.bf16.mxu0 %v10348
    %10406 = vmatpush2.bf16.msra.mxu0 %v10347
    %10407 = vmatprep.subr.bf16.mxu0 %v10346
    %10408 = vmatpush2.bf16.msra.mxu0 %v10345
    %10409 = vmatprep.subr.bf16.mxu0 %v10344
    %10410 = vmatpush2.bf16.msra.mxu0 %v10343
    %10411 = vmatprep.subr.bf16.mxu0 %v10342
    %10412 = vmatpush2.bf16.msra.mxu0 %v10341
    %10413 = vmatprep.subr.bf16.mxu0 %v10340
    %10414 = vmatpush2.bf16.msra.mxu0 %v10339
    %10415 = vmatprep.subr.bf16.mxu0 %v10338
    %10416 = vmatpush2.bf16.msra.mxu0 %v10337
    %10417 = vmatprep.mubr.bf16.mxu0 %v10180
    %10418 = vmatmul.mubr.bf16.gmra.mxu0 %v10179
    %v10419 = vpop.f32.mrf.mxu0
    %v10420 = vadd.f32 %v10218, %v10419
    %v10421 = vpop.f32.mrf.mxu0
    %v10422 = vadd.f32 %v10222, %v10421
    %v10423 = vpop.f32.mrf.mxu0
    %v10424 = vpop.f32.mrf.mxu0
    %10425 = vdwg.mxu0
    %v10426 = vmax.f32 %v10420, 0.0
    %v10427 = vmax.f32 %v10422, 0.0
    %s10428 = smul.u32 %s10175, 1
    %s10429 = sshll.u32 %s10428, 4
    %10430 = dma.done %s547, %s10429
    %v10431 = vpack.c.bf16 %v10426, %v10426
    %v10432 = vpack.c.bf16 %v10427, %v10427
    %v10433 = vld [vmem:[#allocation6] sm:$0xf]
    %v10434 = vld [vmem:[#allocation6 + $0x4] sm:$0xf]
    %v10435 = vld [vmem:[#allocation6 + $0x8] sm:$0xf]
    %v10436 = vld [vmem:[#allocation6 + $0xc] sm:$0xf]
    %v10437 = vld [vmem:[#allocation6 + $0x10] sm:$0xf]
    %v10438 = vld [vmem:[#allocation6 + $0x14] sm:$0xf]
    %v10439 = vld [vmem:[#allocation6 + $0x18] sm:$0xf]
    %v10440 = vld [vmem:[#allocation6 + $0x1c] sm:$0xf]
    %v10441 = vld [vmem:[#allocation6 + $0x20] sm:$0xf]
    %v10442 = vld [vmem:[#allocation6 + $0x24] sm:$0xf]
    %v10443 = vld [vmem:[#allocation6 + $0x28] sm:$0xf]
    %v10444 = vld [vmem:[#allocation6 + $0x2c] sm:$0xf]
    %v10445 = vld [vmem:[#allocation6 + $0x30] sm:$0xf]
    %v10446 = vld [vmem:[#allocation6 + $0x34] sm:$0xf]
    %v10447 = vld [vmem:[#allocation6 + $0x38] sm:$0xf]
    %v10448 = vld [vmem:[#allocation6 + $0x3c] sm:$0xf]
    %v10449 = vld [vmem:[#allocation6 + $0x40] sm:$0xf]
    %v10450 = vld [vmem:[#allocation6 + $0x44] sm:$0xf]
    %v10451 = vld [vmem:[#allocation6 + $0x48] sm:$0xf]
    %v10452 = vld [vmem:[#allocation6 + $0x4c] sm:$0xf]
    %v10453 = vld [vmem:[#allocation6 + $0x50] sm:$0xf]
    %v10454 = vld [vmem:[#allocation6 + $0x54] sm:$0xf]
    %v10455 = vld [vmem:[#allocation6 + $0x58] sm:$0xf]
    %v10456 = vld [vmem:[#allocation6 + $0x5c] sm:$0xf]
    %v10457 = vld [vmem:[#allocation6 + $0x60] sm:$0xf]
    %v10458 = vld [vmem:[#allocation6 + $0x64] sm:$0xf]
    %v10459 = vld [vmem:[#allocation6 + $0x68] sm:$0xf]
    %v10460 = vld [vmem:[#allocation6 + $0x6c] sm:$0xf]
    %v10461 = vld [vmem:[#allocation6 + $0x70] sm:$0xf]
    %v10462 = vld [vmem:[#allocation6 + $0x74] sm:$0xf]
    %v10463 = vld [vmem:[#allocation6 + $0x78] sm:$0xf]
    %v10464 = vld [vmem:[#allocation6 + $0x7c] sm:$0xf]
    %v10465 = vld [vmem:[#allocation23] sm:$0x1]
    %v10467 = vlaneseq
    %v10468 = vshrl.u32 %v10467, 7
    %v10469 = vsub.s32 0, %v10468
    %v10470 = vrot.slane %v10465, %v10469
    %v10504 = vunpack.c.l.b16 %v10433
    %v10505 = vunpack.c.l.b16 %v10434
    %v10506 = vunpack.c.l.b16 %v10435
    %v10507 = vunpack.c.l.b16 %v10436
    %v10508 = vunpack.c.l.b16 %v10437
    %v10509 = vunpack.c.l.b16 %v10438
    %v10510 = vunpack.c.l.b16 %v10439
    %v10511 = vunpack.c.l.b16 %v10440
    %v10512 = vunpack.c.l.b16 %v10441
    %v10513 = vunpack.c.l.b16 %v10442
    %v10514 = vunpack.c.l.b16 %v10443
    %v10515 = vunpack.c.l.b16 %v10444
    %v10516 = vunpack.c.l.b16 %v10445
    %v10517 = vunpack.c.l.b16 %v10446
    %v10518 = vunpack.c.l.b16 %v10447
    %v10519 = vunpack.c.l.b16 %v10448
    %v10520 = vunpack.c.l.b16 %v10449
    %v10521 = vunpack.c.l.b16 %v10450
    %v10522 = vunpack.c.l.b16 %v10451
    %v10523 = vunpack.c.l.b16 %v10452
    %v10524 = vunpack.c.l.b16 %v10453
    %v10525 = vunpack.c.l.b16 %v10454
    %v10526 = vunpack.c.l.b16 %v10455
    %v10527 = vunpack.c.l.b16 %v10456
    %v10528 = vunpack.c.l.b16 %v10457
    %v10529 = vunpack.c.l.b16 %v10458
    %v10530 = vunpack.c.l.b16 %v10459
    %v10531 = vunpack.c.l.b16 %v10460
    %v10532 = vunpack.c.l.b16 %v10461
    %v10533 = vunpack.c.l.b16 %v10462
    %v10534 = vunpack.c.l.b16 %v10463
    %v10535 = vunpack.c.l.b16 %v10464
    %v10536 = vpack.c.b16 %v10505, %v10504
    %v10537 = vpack.c.b16 %v10507, %v10506
    %v10538 = vpack.c.b16 %v10509, %v10508
    %v10539 = vpack.c.b16 %v10511, %v10510
    %v10540 = vpack.c.b16 %v10513, %v10512
    %v10541 = vpack.c.b16 %v10515, %v10514
    %v10542 = vpack.c.b16 %v10517, %v10516
    %v10543 = vpack.c.b16 %v10519, %v10518
    %v10544 = vpack.c.b16 %v10521, %v10520
    %v10545 = vpack.c.b16 %v10523, %v10522
    %v10546 = vpack.c.b16 %v10525, %v10524
    %v10547 = vpack.c.b16 %v10527, %v10526
    %v10548 = vpack.c.b16 %v10529, %v10528
    %v10549 = vpack.c.b16 %v10531, %v10530
    %v10550 = vpack.c.b16 %v10533, %v10532
    %v10551 = vpack.c.b16 %v10535, %v10534
    %10568 = vmatprep.subr.bf16.mxu0 0
    %10569 = vmatpush1.bf16.msra.mxu0 %v10543
    %10570 = vmatprep.subr.bf16.mxu0 0
    %10571 = vmatpush1.bf16.msra.mxu0 %v10542
    %10572 = vmatprep.subr.bf16.mxu0 0
    %10573 = vmatpush1.bf16.msra.mxu0 %v10541
    %10574 = vmatprep.subr.bf16.mxu0 0
    %10575 = vmatpush1.bf16.msra.mxu0 %v10540
    %10576 = vmatprep.subr.bf16.mxu0 0
    %10577 = vmatpush1.bf16.msra.mxu0 %v10539
    %10578 = vmatprep.subr.bf16.mxu0 0
    %10579 = vmatpush1.bf16.msra.mxu0 %v10538
    %10580 = vmatprep.subr.bf16.mxu0 0
    %10581 = vmatpush1.bf16.msra.mxu0 %v10537
    %10582 = vmatprep.subr.bf16.mxu0 0
    %10583 = vmatpush1.bf16.msra.mxu0 %v10536
    %10584 = vmatprep.subr.bf16.mxu0 0
    %10585 = vmatpush2.bf16.msra.mxu0 %v10551
    %10586 = vmatprep.subr.bf16.mxu0 0
    %10587 = vmatpush2.bf16.msra.mxu0 %v10550
    %10588 = vmatprep.subr.bf16.mxu0 0
    %10589 = vmatpush2.bf16.msra.mxu0 %v10549
    %10590 = vmatprep.subr.bf16.mxu0 0
    %10591 = vmatpush2.bf16.msra.mxu0 %v10548
    %10592 = vmatprep.subr.bf16.mxu0 0
    %10593 = vmatpush2.bf16.msra.mxu0 %v10547
    %10594 = vmatprep.subr.bf16.mxu0 0
    %10595 = vmatpush2.bf16.msra.mxu0 %v10546
    %10596 = vmatprep.subr.bf16.mxu0 0
    %10597 = vmatpush2.bf16.msra.mxu0 %v10545
    %10598 = vmatprep.subr.bf16.mxu0 0
    %10599 = vmatpush2.bf16.msra.mxu0 %v10544
    %10600 = vmatprep.mubr.bf16.mxu0 %v10432
    %10601 = vmatmul.mubr.bf16.gmra.mxu0 %v10431
    %v10602 = vpop.f32.mrf.mxu0
    %v10603 = vadd.f32 %v10470, %v10602
    %v10604 = vpop.f32.mrf.mxu0
    %v10605 = vpop.f32.mrf.mxu0
    %v10606 = vpop.f32.mrf.mxu0
    %10607 = vdwg.mxu0
    %10608 = vst [vmem:[%s13] sm:$0x3] %v10603
    // Predicated region
    $region112: #{mol_filter_forward.1} parent=1 // pred_check
      _
    $region113: #{mol_filter_forward.1} parent=1 // pred_check_branch
      %10610 = sbr.rel (0) target = $region115
    $region114: #{mol_filter_forward.1} parent=1 // pred_region
      _
    $region115: #{mol_filter_forward.1} parent=1 // pred_fallthru
      _
    // Predicated region
    $region116: #{mol_filter_forward.1} parent=1 // pred_check
      _
    $region117: #{mol_filter_forward.1} parent=1 // pred_check_branch
      %10612 = sbr.rel (0) target = $region119
    $region118: #{mol_filter_forward.1} parent=1 // pred_region
      _
    $region119: #{mol_filter_forward.1} parent=1 // pred_fallthru
      _
    %10613 = vsyncpa [#allocation14], 1
    %10614 = vsyncpa [#allocation16], 1
    %10615 = vsyncpa [#allocation19], 1
    %10616 = vsyncpa [#allocation22], 1
  %10617 = vsyncmov [#allocation7]
  %s10618 = vpop.sfrf %10617
  %p10619 = scmp.eq.s32.totalorder %s10618, 0
  %p10620 = pneg %p10619
  %10622 = shalt.err (%p10620)
  %s10623 = scalar_lea.sflag [#allocation7], 1
  %10624 = vsyncmov %s10623
  %s10625 = vpop.sfrf %10624
  %p10626 = scmp.eq.s32.totalorder %s10625, 0
  %p10627 = pneg %p10626
  %10629 = shalt.err (%p10627)
  %s10630 = scalar_lea.sflag [#allocation7], 2
  %10631 = vsyncmov %s10630
  %s10632 = vpop.sfrf %10631
  %p10633 = scmp.eq.s32.totalorder %s10632, 0
  %p10634 = pneg %p10633
  %10636 = shalt.err (%p10634)
  %s10637 = scalar_lea.sflag [#allocation7], 3
  %10638 = vsyncmov %s10637
  %s10639 = vpop.sfrf %10638
  %p10640 = scmp.eq.s32.totalorder %s10639, 0
  %p10641 = pneg %p10640
  %10643 = shalt.err (%p10641)
  %s10644 = scalar_lea.sflag [#allocation7], 4
  %10645 = vsyncmov %s10644
  %s10646 = vpop.sfrf %10645
  %p10647 = scmp.eq.s32.totalorder %s10646, 0
  %p10648 = pneg %p10647
  %10650 = shalt.err (%p10648)

</llo_original>
